<compile_context>
chip_gen: v5e
topology: v5e:2x2
jax: 0.10.0
libtpu: 0.0.40
codegen_flags: <defaults>
</compile_context>

<pallas_src>
import jax
import jax.numpy as jnp
from jax.experimental import pallas as pl
from jax.experimental.pallas import tpu as pltpu


# Logical sizes from the PyTorch module.
N_IN = 3 * 60 * 80      # 14400 (fc1 in_features)
H1 = 120
H2 = 84
N_OUT = 2

# Padded sizes for TPU lane layout (hidden/output lane dims -> 128).
H1_P = 128
H2_P = 128
OUT_P = 128


def _round_up(n, m):
    return ((n + m - 1) // m) * m


def _pad_to(x, shape):
    return jnp.pad(x, [(0, t - s) for s, t in zip(x.shape, shape)])


def _choose_tile_m(n):
    """Pick tile_m from {8,16,32,64,128}: prefer larger tiles (fewer grid steps)
    but cap wasted padded batch rows at <= 25% of the real batch."""
    tile_m, n_pad = 8, _round_up(n, 8)
    for t in (16, 32, 64, 128):
        p = _round_up(n, t)
        if p == n_pad or (p - n) <= n // 4:
            tile_m, n_pad = t, p
    return tile_m, n_pad


def mlp_kernel(x_ref, w1_ref, b1_ref, w2_ref, b2_ref, w3_ref, b3_ref, o_ref):
    # fc1: cast x to bf16 in-kernel (no wrapper pass over x), f32 MXU accumulation.
    x = x_ref[...].astype(jnp.bfloat16)
    h1 = jnp.dot(x, w1_ref[...], preferred_element_type=jnp.float32) + b1_ref[...]
    h1 = jnp.maximum(h1, 0.0)
    # fc2 / fc3 epilogue: bf16 weights + activations, f32 accumulation.
    h2 = jnp.dot(h1.astype(jnp.bfloat16), w2_ref[...],
                 preferred_element_type=jnp.float32) + b2_ref[...]
    h2 = jnp.maximum(h2, 0.0)
    o_ref[...] = (jnp.dot(h2.astype(jnp.bfloat16), w3_ref[...],
                          preferred_element_type=jnp.float32)
                  + b3_ref[...]).astype(o_ref.dtype)


def prepare_params(params):
    """One-time padding + dtype cast of the logical f32 params for the kernel."""
    w1, b1, w2, b2, w3, b3 = params
    # TODO(synk): on v5e/v6e, int8 w1 (per-output-column dequant scales applied
    # before the b1 add) would halve the dominant HBM stream; v7x has no int MXU
    # path (fp8 e4m3 is the analogue there). bf16 is the portable default here.
    w1p = _pad_to(w1, (N_IN, H1_P)).astype(jnp.bfloat16)
    b1p = _pad_to(b1, (1, H1_P)).astype(jnp.float32)
    w2p = _pad_to(w2, (H1_P, H2_P)).astype(jnp.bfloat16)
    b2p = _pad_to(b2, (1, H2_P)).astype(jnp.float32)
    w3p = _pad_to(w3, (H2_P, OUT_P)).astype(jnp.bfloat16)
    b3p = _pad_to(b3, (1, OUT_P)).astype(jnp.float32)
    return (w1p, b1p, w2p, b2p, w3p, b3p)


@jax.jit
def cnn_network_forward(x_nchw, prepared_params):
    w1p, b1p, w2p, b2p, w3p, b3p = prepared_params
    n = x_nchw.shape[0]

    # Flatten NCHW -> [N, C*H*W] (== torch.flatten(x, 1)); pad only the batch dim.
    x_flat = x_nchw.reshape(n, -1)
    tile_m, n_pad = _choose_tile_m(n)
    if n_pad != n:
        x_flat = jnp.pad(x_flat, ((0, n_pad - n), (0, 0)))
    mb = n_pad // tile_m

    out = pl.pallas_call(
        mlp_kernel,
        out_shape=jax.ShapeDtypeStruct((n_pad, OUT_P), jnp.float32),
        grid_spec=pl.GridSpec(
            grid=(mb,),
            in_specs=[
                pl.BlockSpec((tile_m, N_IN), lambda m: (m, 0)),   # x tile (f32, full K)
                pl.BlockSpec((N_IN, H1_P), lambda m: (0, 0)),     # w1 (bf16, fetched once)
                pl.BlockSpec((1, H1_P), lambda m: (0, 0)),        # b1
                pl.BlockSpec((H1_P, H2_P), lambda m: (0, 0)),     # w2
                pl.BlockSpec((1, H2_P), lambda m: (0, 0)),        # b2
                pl.BlockSpec((H2_P, OUT_P), lambda m: (0, 0)),    # w3
                pl.BlockSpec((1, OUT_P), lambda m: (0, 0)),       # b3
            ],
            out_specs=pl.BlockSpec((tile_m, OUT_P), lambda m: (m, 0)),
        ),
        compiler_params=pltpu.CompilerParams(
            dimension_semantics=("parallel",),
            vmem_limit_bytes=40 * 1024 * 1024,   # ~22 MB used at tile_m=128; v7x-safe
        ),
    )(x_flat, w1p, b1p, w2p, b2p, w3p, b3p)

    return out[:n, :N_OUT]


def init_params(key):
    """Deterministic synthetic init (PyTorch-style uniform bounds 1/sqrt(fan_in))."""
    ks = jax.random.split(key, 6)

    def linear(kw, kb, fan_in, fan_out):
        bound = 1.0 / jnp.sqrt(fan_in)
        w = jax.random.uniform(kw, (fan_in, fan_out), jnp.float32, -bound, bound)
        b = jax.random.uniform(kb, (1, fan_out), jnp.float32, -bound, bound)
        return w, b

    w1, b1 = linear(ks[0], ks[1], N_IN, H1)
    w2, b2 = linear(ks[2], ks[3], H1, H2)
    w3, b3 = linear(ks[4], ks[5], H2, N_OUT)
    # conv1/conv2 parameters exist in the torch module but are unused by forward().
    return (w1, b1, w2, b2, w3, b3)


if __name__ == "__main__":
    key = jax.random.PRNGKey(0)
    k_x, k_p = jax.random.split(key)

    # Input implied by fc1: [N, 3, 60, 80]  (small batch = 2)
    x = jax.random.normal(k_x, (2, 3, 60, 80), dtype=jnp.float32)
    params = init_params(k_p)
    prepared = prepare_params(params)

    out = cnn_network_forward(x, prepared)
    out = jax.block_until_ready(out)

    # Pure-JAX reference mirroring the kernel's bf16 quantization (f32 accumulation),
    # so only accumulation-order differences remain.
    w1, b1, w2, b2, w3, b3 = params
    xq = x.reshape(x.shape[0], -1).astype(jnp.bfloat16)
    h1 = jnp.maximum(jnp.dot(xq, w1.astype(jnp.bfloat16),
                             preferred_element_type=jnp.float32) + b1, 0.0)
    h2 = jnp.maximum(jnp.dot(h1.astype(jnp.bfloat16), w2.astype(jnp.bfloat16),
                             preferred_element_type=jnp.float32) + b2, 0.0)
    ref = jnp.dot(h2.astype(jnp.bfloat16), w3.astype(jnp.bfloat16),
                  preferred_element_type=jnp.float32) + b3

    assert out.shape == (2, 2)
    assert jnp.allclose(out, ref, atol=2e-2, rtol=2e-2), (out, ref)

    print("KERNEL_OK")
</pallas_src>

<mosaic_0001>
module attributes {stable_mosaic.version = 11 : i64} {
  func.func @mlp_kernel(%arg0: i32, %arg1: memref<8x14400xf32, #tpu.memory_space<vmem>>, %arg2: memref<14400x128xbf16, #tpu.memory_space<vmem>>, %arg3: memref<1x128xf32, #tpu.memory_space<vmem>>, %arg4: memref<128x128xbf16, #tpu.memory_space<vmem>>, %arg5: memref<1x128xf32, #tpu.memory_space<vmem>>, %arg6: memref<128x128xbf16, #tpu.memory_space<vmem>>, %arg7: memref<1x128xf32, #tpu.memory_space<vmem>>, %arg8: memref<8x128xf32, #tpu.memory_space<vmem>>) attributes {dimension_semantics = [#tpu.dimension_semantics<parallel>], iteration_bounds = array<i64: 1>, scalar_prefetch = 0 : i64, scratch_operands = 0 : i64, tpu.core_type = #tpu.core_type<tc>, window_params = [{transform_indices = @transform_0, window_bounds = array<i64: 8, 14400>}, {pipeline_mode = #tpu.pipeline_mode<synchronous>, transform_indices = @transform_1, window_bounds = array<i64: 14400, 128>}, {pipeline_mode = #tpu.pipeline_mode<synchronous>, transform_indices = @transform_2, window_bounds = array<i64: 1, 128>}, {pipeline_mode = #tpu.pipeline_mode<synchronous>, transform_indices = @transform_3, window_bounds = array<i64: 128, 128>}, {pipeline_mode = #tpu.pipeline_mode<synchronous>, transform_indices = @transform_4, window_bounds = array<i64: 1, 128>}, {pipeline_mode = #tpu.pipeline_mode<synchronous>, transform_indices = @transform_5, window_bounds = array<i64: 128, 128>}, {pipeline_mode = #tpu.pipeline_mode<synchronous>, transform_indices = @transform_6, window_bounds = array<i64: 1, 128>}, {transform_indices = @transform_7, window_bounds = array<i64: 8, 128>}]} {
    %c0 = arith.constant 0 : index
    %c0_0 = arith.constant 0 : index
    %0 = vector.load %arg1[%c0, %c0_0] : memref<8x14400xf32, #tpu.memory_space<vmem>>, vector<8x14400xf32>
    %1 = arith.truncf %0 : vector<8x14400xf32> to vector<8x14400xbf16>
    %c0_1 = arith.constant 0 : index
    %c0_2 = arith.constant 0 : index
    %2 = vector.load %arg2[%c0_1, %c0_2] : memref<14400x128xbf16, #tpu.memory_space<vmem>>, vector<14400x128xbf16>
    %cst = arith.constant dense<0.000000e+00> : vector<8x128xf32>
    %3 = tpu.matmul %1, %2, %cst {dimension_numbers = #tpu.dot_dimension_numbers<[1], [0], [0], [1], [0, 0, 1, 1], [], []>} : vector<8x14400xbf16>, vector<14400x128xbf16>, vector<8x128xf32> -> vector<8x128xf32>
    %c0_3 = arith.constant 0 : index
    %c0_4 = arith.constant 0 : index
    %4 = vector.load %arg3[%c0_3, %c0_4] : memref<1x128xf32, #tpu.memory_space<vmem>>, vector<1x128xf32>
    %5 = vector.broadcast %4 : vector<1x128xf32> to vector<8x128xf32>
    %6 = arith.addf %3, %5 : vector<8x128xf32>
    %cst_5 = arith.constant 0.000000e+00 : f32
    %7 = vector.broadcast %cst_5 : f32 to vector<8x128xf32>
    %8 = arith.maximumf %6, %7 : vector<8x128xf32>
    %9 = arith.truncf %8 : vector<8x128xf32> to vector<8x128xbf16>
    %c0_6 = arith.constant 0 : index
    %c0_7 = arith.constant 0 : index
    %10 = vector.load %arg4[%c0_6, %c0_7] : memref<128x128xbf16, #tpu.memory_space<vmem>>, vector<128x128xbf16>
    %cst_8 = arith.constant dense<0.000000e+00> : vector<8x128xf32>
    %11 = tpu.matmul %9, %10, %cst_8 {dimension_numbers = #tpu.dot_dimension_numbers<[1], [0], [0], [1], [0, 0, 1, 1], [], []>} : vector<8x128xbf16>, vector<128x128xbf16>, vector<8x128xf32> -> vector<8x128xf32>
    %c0_9 = arith.constant 0 : index
    %c0_10 = arith.constant 0 : index
    %12 = vector.load %arg5[%c0_9, %c0_10] : memref<1x128xf32, #tpu.memory_space<vmem>>, vector<1x128xf32>
    %13 = vector.broadcast %12 : vector<1x128xf32> to vector<8x128xf32>
    %14 = arith.addf %11, %13 : vector<8x128xf32>
    %cst_11 = arith.constant 0.000000e+00 : f32
    %15 = vector.broadcast %cst_11 : f32 to vector<8x128xf32>
    %16 = arith.maximumf %14, %15 : vector<8x128xf32>
    %17 = arith.truncf %16 : vector<8x128xf32> to vector<8x128xbf16>
    %c0_12 = arith.constant 0 : index
    %c0_13 = arith.constant 0 : index
    %18 = vector.load %arg6[%c0_12, %c0_13] : memref<128x128xbf16, #tpu.memory_space<vmem>>, vector<128x128xbf16>
    %cst_14 = arith.constant dense<0.000000e+00> : vector<8x128xf32>
    %19 = tpu.matmul %17, %18, %cst_14 {dimension_numbers = #tpu.dot_dimension_numbers<[1], [0], [0], [1], [0, 0, 1, 1], [], []>} : vector<8x128xbf16>, vector<128x128xbf16>, vector<8x128xf32> -> vector<8x128xf32>
    %c0_15 = arith.constant 0 : index
    %c0_16 = arith.constant 0 : index
    %20 = vector.load %arg7[%c0_15, %c0_16] : memref<1x128xf32, #tpu.memory_space<vmem>>, vector<1x128xf32>
    %21 = vector.broadcast %20 : vector<1x128xf32> to vector<8x128xf32>
    %22 = arith.addf %19, %21 : vector<8x128xf32>
    %c0_17 = arith.constant 0 : index
    %c0_18 = arith.constant 0 : index
    %23 = vector.load %arg8[%c0_17, %c0_18] : memref<8x128xf32, #tpu.memory_space<vmem>>, vector<8x128xf32>
    tpu.vector_store %arg8[%c0_17, %c0_18], %22 {strides = array<i32>} : memref<8x128xf32, #tpu.memory_space<vmem>>, vector<8x128xf32>,
    return
  }
  func.func @transform_0(%arg0: i32) -> (i32, i32) {
    %c0_i32 = arith.constant 0 : i32
    %c0_i32_0 = arith.constant 0 : i32
    return %arg0, %c0_i32 : i32, i32
  }
  func.func @transform_1(%arg0: i32) -> (i32, i32) {
    %c0_i32 = arith.constant 0 : i32
    %c0_i32_0 = arith.constant 0 : i32
    %c0_i32_1 = arith.constant 0 : i32
    return %c0_i32, %c0_i32_0 : i32, i32
  }
  func.func @transform_2(%arg0: i32) -> (i32, i32) {
    %c0_i32 = arith.constant 0 : i32
    %c0_i32_0 = arith.constant 0 : i32
    %c0_i32_1 = arith.constant 0 : i32
    return %c0_i32, %c0_i32_0 : i32, i32
  }
  func.func @transform_3(%arg0: i32) -> (i32, i32) {
    %c0_i32 = arith.constant 0 : i32
    %c0_i32_0 = arith.constant 0 : i32
    %c0_i32_1 = arith.constant 0 : i32
    return %c0_i32, %c0_i32_0 : i32, i32
  }
  func.func @transform_4(%arg0: i32) -> (i32, i32) {
    %c0_i32 = arith.constant 0 : i32
    %c0_i32_0 = arith.constant 0 : i32
    %c0_i32_1 = arith.constant 0 : i32
    return %c0_i32, %c0_i32_0 : i32, i32
  }
  func.func @transform_5(%arg0: i32) -> (i32, i32) {
    %c0_i32 = arith.constant 0 : i32
    %c0_i32_0 = arith.constant 0 : i32
    %c0_i32_1 = arith.constant 0 : i32
    return %c0_i32, %c0_i32_0 : i32, i32
  }
  func.func @transform_6(%arg0: i32) -> (i32, i32) {
    %c0_i32 = arith.constant 0 : i32
    %c0_i32_0 = arith.constant 0 : i32
    %c0_i32_1 = arith.constant 0 : i32
    return %c0_i32, %c0_i32_0 : i32, i32
  }
  func.func @transform_7(%arg0: i32) -> (i32, i32) {
    %c0_i32 = arith.constant 0 : i32
    %c0_i32_0 = arith.constant 0 : i32
    return %arg0, %c0_i32 : i32, i32
  }
}

</mosaic_0001>

<llo_original>
// kernel: cnn_network_forward.1
$region0: #{cnn_network_forward.1}
  #allocation0 [shape = 'u32[]', space=smem, size = 0x4, offset = 0x4, fixed_abs, tag = 'smem constant byte address 0x4 - core index']
  #allocation1 [shape = 'u32[72,128]{1,0:T(1,128)}', space=vmem, size = 0x9000, scoped, tag = 'internal scratch']
  %s0 = inlined_call_operand.vmem [shape: f32[8,14400], index: 0, kind: input, shape index: {}]
  %s1 = inlined_call_operand.hbm [shape: bf16[14400,128], index: 1, kind: input, shape index: {}]
  %s2 = inlined_call_operand.hbm [shape: f32[1,128], index: 2, kind: input, shape index: {}]
  %s3 = inlined_call_operand.hbm [shape: bf16[128,128], index: 3, kind: input, shape index: {}]
  %s4 = inlined_call_operand.hbm [shape: f32[1,128], index: 4, kind: input, shape index: {}]
  %s5 = inlined_call_operand.hbm [shape: bf16[128,128], index: 5, kind: input, shape index: {}]
  %s6 = inlined_call_operand.hbm [shape: f32[1,128], index: 6, kind: input, shape index: {}]
  %s7 = inlined_call_operand.vmem [shape: f32[8,128], index: 7, kind: output, shape index: {}]
  %s8 = sld [smem:[#allocation0]]
  $region62: #{cnn_network_forward.1} parent=0
    _
  %s10 = ssub.s32 1, %s8
  %s11 = scalar_select 0, %s10, %s8
  $region1: #{cnn_network_forward.1} parent=0
    #allocation2 [shape = 'u8[3686400]{0}', space=vmem, size = 0x384000, scoped, tag = 'input window, operand 1, single buffered']
    #allocation3 [shape = 's32[1]{0}', space=sflag, size = 0x4, scoped, tag = 'scoped memory for cnn_network_forward.1']
    #allocation4 [shape = 'u8[512]{0}', space=vmem, size = 0x400, scoped, tag = 'input window, operand 2, single buffered']
    #allocation5 [shape = 's32[1]{0}', space=sflag, size = 0x4, scoped, tag = 'scoped memory for cnn_network_forward.1']
    #allocation6 [shape = 'u8[32768]{0}', space=vmem, size = 0x8000, scoped, tag = 'input window, operand 3, single buffered']
    #allocation7 [shape = 'u8[512]{0}', space=vmem, size = 0x400, scoped, tag = 'input window, operand 4, single buffered']
    #allocation8 [shape = 's32[1]{0}', space=sflag, size = 0x4, scoped, tag = 'scoped memory for cnn_network_forward.1']
    #allocation9 [shape = 'u8[32768]{0}', space=vmem, size = 0x8000, scoped, tag = 'input window, operand 5, single buffered']
    #allocation10 [shape = 'u8[512]{0}', space=vmem, size = 0x400, scoped, tag = 'input window, operand 6, single buffered']
    #allocation11 [shape = 's32[1]{0}', space=sflag, size = 0x4, scoped, tag = 'scoped memory for cnn_network_forward.1']
    %12 = vsyncpa [#allocation3], 0
    %13 = vsyncpa [#allocation5], 0
    %14 = vsyncpa [#allocation8], 0
    %15 = vsyncpa [#allocation11], 0
    // Predicated region
    $region2: #{cnn_network_forward.1} parent=1 // pred_check
      _
    $region3: #{cnn_network_forward.1} parent=1 // pred_check_branch
      %17 = sbr.rel (0) target = $region5
    $region4: #{cnn_network_forward.1} parent=1 // pred_region
      _
    $region5: #{cnn_network_forward.1} parent=1 // pred_fallthru
      _
    // Predicated region
    $region6: #{cnn_network_forward.1} parent=1 // pred_check
      _
    $region7: #{cnn_network_forward.1} parent=1 // pred_check_branch
      %19 = sbr.rel (0) target = $region9
    $region8: #{cnn_network_forward.1} parent=1 // pred_region
      %21 = vsyncadd [#allocation3], 0
      %s22 = sshll.u32 %s1, 4
      %s23 = int_to_ptr.hbm [resolvable:$true] %s22
      %s24 = sshll.u32 [#allocation2], 4
      %s25 = int_to_ptr.vmem [resolvable:$true] %s24
      %30 = dma.hbm_to_vmem [thread:$0]  %s23, 115200, %s25, [#allocation3], 64, 64, 4
    $region9: #{cnn_network_forward.1} parent=1 // pred_fallthru
      _
    // Predicated region
    $region10: #{cnn_network_forward.1} parent=1 // pred_check
      _
    $region11: #{cnn_network_forward.1} parent=1 // pred_check_branch
      %32 = sbr.rel (0) target = $region13
    $region12: #{cnn_network_forward.1} parent=1 // pred_region
      %34 = vsyncadd [#allocation5], 0
      %s36 = sshll.u32 %s2, 4
      %s37 = int_to_ptr.hbm [resolvable:$true] %s36
      %s38 = sshll.u32 [#allocation4], 4
      %s39 = int_to_ptr.vmem [resolvable:$true] %s38
      %41 = dma.hbm_to_vmem [thread:$0]  %s37, 16, %s39, [#allocation5]
    $region13: #{cnn_network_forward.1} parent=1 // pred_fallthru
      _
    // Predicated region
    $region14: #{cnn_network_forward.1} parent=1 // pred_check
      _
    $region15: #{cnn_network_forward.1} parent=1 // pred_check_branch
      %43 = sbr.rel (0) target = $region17
    $region16: #{cnn_network_forward.1} parent=1 // pred_region
      %45 = vsyncadd [#allocation5], 0
      %s46 = sshll.u32 %s3, 4
      %s47 = int_to_ptr.hbm [resolvable:$true] %s46
      %s48 = sshll.u32 [#allocation6], 4
      %s49 = int_to_ptr.vmem [resolvable:$true] %s48
      %54 = dma.hbm_to_vmem [thread:$0]  %s47, 1024, %s49, [#allocation5], 64, 64, 4
    $region17: #{cnn_network_forward.1} parent=1 // pred_fallthru
      _
    // Predicated region
    $region18: #{cnn_network_forward.1} parent=1 // pred_check
      _
    $region19: #{cnn_network_forward.1} parent=1 // pred_check_branch
      %56 = sbr.rel (0) target = $region21
    $region20: #{cnn_network_forward.1} parent=1 // pred_region
      %58 = vsyncadd [#allocation8], 0
      %s60 = sshll.u32 %s4, 4
      %s61 = int_to_ptr.hbm [resolvable:$true] %s60
      %s62 = sshll.u32 [#allocation7], 4
      %s63 = int_to_ptr.vmem [resolvable:$true] %s62
      %65 = dma.hbm_to_vmem [thread:$0]  %s61, 16, %s63, [#allocation8]
    $region21: #{cnn_network_forward.1} parent=1 // pred_fallthru
      _
    // Predicated region
    $region22: #{cnn_network_forward.1} parent=1 // pred_check
      _
    $region23: #{cnn_network_forward.1} parent=1 // pred_check_branch
      %67 = sbr.rel (0) target = $region25
    $region24: #{cnn_network_forward.1} parent=1 // pred_region
      %69 = vsyncadd [#allocation8], 0
      %s70 = sshll.u32 %s5, 4
      %s71 = int_to_ptr.hbm [resolvable:$true] %s70
      %s72 = sshll.u32 [#allocation9], 4
      %s73 = int_to_ptr.vmem [resolvable:$true] %s72
      %78 = dma.hbm_to_vmem [thread:$0]  %s71, 1024, %s73, [#allocation8], 64, 64, 4
    $region25: #{cnn_network_forward.1} parent=1 // pred_fallthru
      _
    // Predicated region
    $region26: #{cnn_network_forward.1} parent=1 // pred_check
      _
    $region27: #{cnn_network_forward.1} parent=1 // pred_check_branch
      %80 = sbr.rel (0) target = $region29
    $region28: #{cnn_network_forward.1} parent=1 // pred_region
      %82 = vsyncadd [#allocation11], 0
      %s84 = sshll.u32 %s6, 4
      %s85 = int_to_ptr.hbm [resolvable:$true] %s84
      %s86 = sshll.u32 [#allocation10], 4
      %s87 = int_to_ptr.vmem [resolvable:$true] %s86
      %89 = dma.hbm_to_vmem [thread:$0]  %s85, 16, %s87, [#allocation11]
    $region29: #{cnn_network_forward.1} parent=1 // pred_fallthru
      _
    // Predicated region
    $region30: #{cnn_network_forward.1} parent=1 // pred_check
      _
    $region31: #{cnn_network_forward.1} parent=1 // pred_check_branch
      %91 = sbr.rel (0) target = $region33
    $region32: #{cnn_network_forward.1} parent=1 // pred_region
      %93 = dma.done [#allocation3], 115200
    $region33: #{cnn_network_forward.1} parent=1 // pred_fallthru
      _
    // Predicated region
    $region34: #{cnn_network_forward.1} parent=1 // pred_check
      _
    $region35: #{cnn_network_forward.1} parent=1 // pred_check_branch
      %95 = sbr.rel (0) target = $region37
    $region36: #{cnn_network_forward.1} parent=1 // pred_region
      %97 = dma.done [#allocation5], 16
    $region37: #{cnn_network_forward.1} parent=1 // pred_fallthru
      _
    // Predicated region
    $region38: #{cnn_network_forward.1} parent=1 // pred_check
      _
    $region39: #{cnn_network_forward.1} parent=1 // pred_check_branch
      %99 = sbr.rel (0) target = $region41
    $region40: #{cnn_network_forward.1} parent=1 // pred_region
      %101 = dma.done [#allocation5], 1024
    $region41: #{cnn_network_forward.1} parent=1 // pred_fallthru
      _
    // Predicated region
    $region42: #{cnn_network_forward.1} parent=1 // pred_check
      _
    $region43: #{cnn_network_forward.1} parent=1 // pred_check_branch
      %103 = sbr.rel (0) target = $region45
    $region44: #{cnn_network_forward.1} parent=1 // pred_region
      %105 = dma.done [#allocation8], 16
    $region45: #{cnn_network_forward.1} parent=1 // pred_fallthru
      _
    // Predicated region
    $region46: #{cnn_network_forward.1} parent=1 // pred_check
      _
    $region47: #{cnn_network_forward.1} parent=1 // pred_check_branch
      %107 = sbr.rel (0) target = $region49
    $region48: #{cnn_network_forward.1} parent=1 // pred_region
      %109 = dma.done [#allocation8], 1024
    $region49: #{cnn_network_forward.1} parent=1 // pred_fallthru
      _
    // Predicated region
    $region50: #{cnn_network_forward.1} parent=1 // pred_check
      _
    $region51: #{cnn_network_forward.1} parent=1 // pred_check_branch
      %111 = sbr.rel (0) target = $region53
    $region52: #{cnn_network_forward.1} parent=1 // pred_region
      %113 = dma.done [#allocation11], 16
    $region53: #{cnn_network_forward.1} parent=1 // pred_fallthru
      _
    %v115 = vld [vmem:[%s0] sm:$0xff]
    %v116 = vld [vmem:[%s0 + $0x8] sm:$0xff]
    %v117 = vld [vmem:[%s0 + $0x10] sm:$0xff]
    %v118 = vld [vmem:[%s0 + $0x18] sm:$0xff]
    %v119 = vld [vmem:[%s0 + $0x20] sm:$0xff]
    %v120 = vld [vmem:[%s0 + $0x28] sm:$0xff]
    %v121 = vld [vmem:[%s0 + $0x30] sm:$0xff]
    %v122 = vld [vmem:[%s0 + $0x38] sm:$0xff]
    %v123 = vld [vmem:[%s0 + $0x40] sm:$0xff]
    %v124 = vld [vmem:[%s0 + $0x48] sm:$0xff]
    %v125 = vld [vmem:[%s0 + $0x50] sm:$0xff]
    %v126 = vld [vmem:[%s0 + $0x58] sm:$0xff]
    %v127 = vld [vmem:[%s0 + $0x60] sm:$0xff]
    %v128 = vld [vmem:[%s0 + $0x68] sm:$0xff]
    %v129 = vld [vmem:[%s0 + $0x70] sm:$0xff]
    %v130 = vld [vmem:[%s0 + $0x78] sm:$0xff]
    %v131 = vld [vmem:[%s0 + $0x80] sm:$0xff]
    %v132 = vld [vmem:[%s0 + $0x88] sm:$0xff]
    %v133 = vld [vmem:[%s0 + $0x90] sm:$0xff]
    %v134 = vld [vmem:[%s0 + $0x98] sm:$0xff]
    %v135 = vld [vmem:[%s0 + $0xa0] sm:$0xff]
    %v136 = vld [vmem:[%s0 + $0xa8] sm:$0xff]
    %v137 = vld [vmem:[%s0 + $0xb0] sm:$0xff]
    %v138 = vld [vmem:[%s0 + $0xb8] sm:$0xff]
    %v139 = vld [vmem:[%s0 + $0xc0] sm:$0xff]
    %v140 = vld [vmem:[%s0 + $0xc8] sm:$0xff]
    %v141 = vld [vmem:[%s0 + $0xd0] sm:$0xff]
    %v142 = vld [vmem:[%s0 + $0xd8] sm:$0xff]
    %v143 = vld [vmem:[%s0 + $0xe0] sm:$0xff]
    %v144 = vld [vmem:[%s0 + $0xe8] sm:$0xff]
    %v145 = vld [vmem:[%s0 + $0xf0] sm:$0xff]
    %v146 = vld [vmem:[%s0 + $0xf8] sm:$0xff]
    %v147 = vld [vmem:[%s0 + $0x100] sm:$0xff]
    %v148 = vld [vmem:[%s0 + $0x108] sm:$0xff]
    %v149 = vld [vmem:[%s0 + $0x110] sm:$0xff]
    %v150 = vld [vmem:[%s0 + $0x118] sm:$0xff]
    %v151 = vld [vmem:[%s0 + $0x120] sm:$0xff]
    %v152 = vld [vmem:[%s0 + $0x128] sm:$0xff]
    %v153 = vld [vmem:[%s0 + $0x130] sm:$0xff]
    %v154 = vld [vmem:[%s0 + $0x138] sm:$0xff]
    %v155 = vld [vmem:[%s0 + $0x140] sm:$0xff]
    %v156 = vld [vmem:[%s0 + $0x148] sm:$0xff]
    %v157 = vld [vmem:[%s0 + $0x150] sm:$0xff]
    %v158 = vld [vmem:[%s0 + $0x158] sm:$0xff]
    %v159 = vld [vmem:[%s0 + $0x160] sm:$0xff]
    %v160 = vld [vmem:[%s0 + $0x168] sm:$0xff]
    %v161 = vld [vmem:[%s0 + $0x170] sm:$0xff]
    %v162 = vld [vmem:[%s0 + $0x178] sm:$0xff]
    %v163 = vld [vmem:[%s0 + $0x180] sm:$0xff]
    %v164 = vld [vmem:[%s0 + $0x188] sm:$0xff]
    %v165 = vld [vmem:[%s0 + $0x190] sm:$0xff]
    %v166 = vld [vmem:[%s0 + $0x198] sm:$0xff]
    %v167 = vld [vmem:[%s0 + $0x1a0] sm:$0xff]
    %v168 = vld [vmem:[%s0 + $0x1a8] sm:$0xff]
    %v169 = vld [vmem:[%s0 + $0x1b0] sm:$0xff]
    %v170 = vld [vmem:[%s0 + $0x1b8] sm:$0xff]
    %v171 = vld [vmem:[%s0 + $0x1c0] sm:$0xff]
    %v172 = vld [vmem:[%s0 + $0x1c8] sm:$0xff]
    %v173 = vld [vmem:[%s0 + $0x1d0] sm:$0xff]
    %v174 = vld [vmem:[%s0 + $0x1d8] sm:$0xff]
    %v175 = vld [vmem:[%s0 + $0x1e0] sm:$0xff]
    %v176 = vld [vmem:[%s0 + $0x1e8] sm:$0xff]
    %v177 = vld [vmem:[%s0 + $0x1f0] sm:$0xff]
    %v178 = vld [vmem:[%s0 + $0x1f8] sm:$0xff]
    %v179 = vld [vmem:[%s0 + $0x200] sm:$0xff]
    %v180 = vld [vmem:[%s0 + $0x208] sm:$0xff]
    %v181 = vld [vmem:[%s0 + $0x210] sm:$0xff]
    %v182 = vld [vmem:[%s0 + $0x218] sm:$0xff]
    %v183 = vld [vmem:[%s0 + $0x220] sm:$0xff]
    %v184 = vld [vmem:[%s0 + $0x228] sm:$0xff]
    %v185 = vld [vmem:[%s0 + $0x230] sm:$0xff]
    %v186 = vld [vmem:[%s0 + $0x238] sm:$0xff]
    %v187 = vld [vmem:[%s0 + $0x240] sm:$0xff]
    %v188 = vld [vmem:[%s0 + $0x248] sm:$0xff]
    %v189 = vld [vmem:[%s0 + $0x250] sm:$0xff]
    %v190 = vld [vmem:[%s0 + $0x258] sm:$0xff]
    %v191 = vld [vmem:[%s0 + $0x260] sm:$0xff]
    %v192 = vld [vmem:[%s0 + $0x268] sm:$0xff]
    %v193 = vld [vmem:[%s0 + $0x270] sm:$0xff]
    %v194 = vld [vmem:[%s0 + $0x278] sm:$0xff]
    %v195 = vld [vmem:[%s0 + $0x280] sm:$0xff]
    %v196 = vld [vmem:[%s0 + $0x288] sm:$0xff]
    %v197 = vld [vmem:[%s0 + $0x290] sm:$0xff]
    %v198 = vld [vmem:[%s0 + $0x298] sm:$0xff]
    %v199 = vld [vmem:[%s0 + $0x2a0] sm:$0xff]
    %v200 = vld [vmem:[%s0 + $0x2a8] sm:$0xff]
    %v201 = vld [vmem:[%s0 + $0x2b0] sm:$0xff]
    %v202 = vld [vmem:[%s0 + $0x2b8] sm:$0xff]
    %v203 = vld [vmem:[%s0 + $0x2c0] sm:$0xff]
    %v204 = vld [vmem:[%s0 + $0x2c8] sm:$0xff]
    %v205 = vld [vmem:[%s0 + $0x2d0] sm:$0xff]
    %v206 = vld [vmem:[%s0 + $0x2d8] sm:$0xff]
    %v207 = vld [vmem:[%s0 + $0x2e0] sm:$0xff]
    %v208 = vld [vmem:[%s0 + $0x2e8] sm:$0xff]
    %v209 = vld [vmem:[%s0 + $0x2f0] sm:$0xff]
    %v210 = vld [vmem:[%s0 + $0x2f8] sm:$0xff]
    %v211 = vld [vmem:[%s0 + $0x300] sm:$0xff]
    %v212 = vld [vmem:[%s0 + $0x308] sm:$0xff]
    %v213 = vld [vmem:[%s0 + $0x310] sm:$0xff]
    %v214 = vld [vmem:[%s0 + $0x318] sm:$0xff]
    %v215 = vld [vmem:[%s0 + $0x320] sm:$0xff]
    %v216 = vld [vmem:[%s0 + $0x328] sm:$0xff]
    %v217 = vld [vmem:[%s0 + $0x330] sm:$0xff]
    %v218 = vld [vmem:[%s0 + $0x338] sm:$0xff]
    %v219 = vld [vmem:[%s0 + $0x340] sm:$0xff]
    %v220 = vld [vmem:[%s0 + $0x348] sm:$0xff]
    %v221 = vld [vmem:[%s0 + $0x350] sm:$0xff]
    %v222 = vld [vmem:[%s0 + $0x358] sm:$0xff]
    %v223 = vld [vmem:[%s0 + $0x360] sm:$0xff]
    %v224 = vld [vmem:[%s0 + $0x368] sm:$0xff]
    %v225 = vld [vmem:[%s0 + $0x370] sm:$0xff]
    %v226 = vld [vmem:[%s0 + $0x378] sm:$0xff]
    %v227 = vld [vmem:[%s0 + $0x380] sm:$0xff]
    %v228 = vpack.c.bf16 %v115, %v115
    %v229 = vpack.c.bf16 %v116, %v116
    %v230 = vpack.c.bf16 %v117, %v117
    %v231 = vpack.c.bf16 %v118, %v118
    %v232 = vpack.c.bf16 %v119, %v119
    %v233 = vpack.c.bf16 %v120, %v120
    %v234 = vpack.c.bf16 %v121, %v121
    %v235 = vpack.c.bf16 %v122, %v122
    %v236 = vpack.c.bf16 %v123, %v123
    %v237 = vpack.c.bf16 %v124, %v124
    %v238 = vpack.c.bf16 %v125, %v125
    %v239 = vpack.c.bf16 %v126, %v126
    %v240 = vpack.c.bf16 %v127, %v127
    %v241 = vpack.c.bf16 %v128, %v128
    %v242 = vpack.c.bf16 %v129, %v129
    %v243 = vpack.c.bf16 %v130, %v130
    %v244 = vpack.c.bf16 %v131, %v131
    %v245 = vpack.c.bf16 %v132, %v132
    %v246 = vpack.c.bf16 %v133, %v133
    %v247 = vpack.c.bf16 %v134, %v134
    %v248 = vpack.c.bf16 %v135, %v135
    %v249 = vpack.c.bf16 %v136, %v136
    %v250 = vpack.c.bf16 %v137, %v137
    %v251 = vpack.c.bf16 %v138, %v138
    %v252 = vpack.c.bf16 %v139, %v139
    %v253 = vpack.c.bf16 %v140, %v140
    %v254 = vpack.c.bf16 %v141, %v141
    %v255 = vpack.c.bf16 %v142, %v142
    %v256 = vpack.c.bf16 %v143, %v143
    %v257 = vpack.c.bf16 %v144, %v144
    %v258 = vpack.c.bf16 %v145, %v145
    %v259 = vpack.c.bf16 %v146, %v146
    %v260 = vpack.c.bf16 %v147, %v147
    %v261 = vpack.c.bf16 %v148, %v148
    %v262 = vpack.c.bf16 %v149, %v149
    %v263 = vpack.c.bf16 %v150, %v150
    %v264 = vpack.c.bf16 %v151, %v151
    %v265 = vpack.c.bf16 %v152, %v152
    %v266 = vpack.c.bf16 %v153, %v153
    %v267 = vpack.c.bf16 %v154, %v154
    %v268 = vpack.c.bf16 %v155, %v155
    %v269 = vpack.c.bf16 %v156, %v156
    %v270 = vpack.c.bf16 %v157, %v157
    %v271 = vpack.c.bf16 %v158, %v158
    %v272 = vpack.c.bf16 %v159, %v159
    %v273 = vpack.c.bf16 %v160, %v160
    %v274 = vpack.c.bf16 %v161, %v161
    %v275 = vpack.c.bf16 %v162, %v162
    %v276 = vpack.c.bf16 %v163, %v163
    %v277 = vpack.c.bf16 %v164, %v164
    %v278 = vpack.c.bf16 %v165, %v165
    %v279 = vpack.c.bf16 %v166, %v166
    %v280 = vpack.c.bf16 %v167, %v167
    %v281 = vpack.c.bf16 %v168, %v168
    %v282 = vpack.c.bf16 %v169, %v169
    %v283 = vpack.c.bf16 %v170, %v170
    %v284 = vpack.c.bf16 %v171, %v171
    %v285 = vpack.c.bf16 %v172, %v172
    %v286 = vpack.c.bf16 %v173, %v173
    %v287 = vpack.c.bf16 %v174, %v174
    %v288 = vpack.c.bf16 %v175, %v175
    %v289 = vpack.c.bf16 %v176, %v176
    %v290 = vpack.c.bf16 %v177, %v177
    %v291 = vpack.c.bf16 %v178, %v178
    %v292 = vpack.c.bf16 %v179, %v179
    %v293 = vpack.c.bf16 %v180, %v180
    %v294 = vpack.c.bf16 %v181, %v181
    %v295 = vpack.c.bf16 %v182, %v182
    %v296 = vpack.c.bf16 %v183, %v183
    %v297 = vpack.c.bf16 %v184, %v184
    %v298 = vpack.c.bf16 %v185, %v185
    %v299 = vpack.c.bf16 %v186, %v186
    %v300 = vpack.c.bf16 %v187, %v187
    %v301 = vpack.c.bf16 %v188, %v188
    %v302 = vpack.c.bf16 %v189, %v189
    %v303 = vpack.c.bf16 %v190, %v190
    %v304 = vpack.c.bf16 %v191, %v191
    %v305 = vpack.c.bf16 %v192, %v192
    %v306 = vpack.c.bf16 %v193, %v193
    %v307 = vpack.c.bf16 %v194, %v194
    %v308 = vpack.c.bf16 %v195, %v195
    %v309 = vpack.c.bf16 %v196, %v196
    %v310 = vpack.c.bf16 %v197, %v197
    %v311 = vpack.c.bf16 %v198, %v198
    %v312 = vpack.c.bf16 %v199, %v199
    %v313 = vpack.c.bf16 %v200, %v200
    %v314 = vpack.c.bf16 %v201, %v201
    %v315 = vpack.c.bf16 %v202, %v202
    %v316 = vpack.c.bf16 %v203, %v203
    %v317 = vpack.c.bf16 %v204, %v204
    %v318 = vpack.c.bf16 %v205, %v205
    %v319 = vpack.c.bf16 %v206, %v206
    %v320 = vpack.c.bf16 %v207, %v207
    %v321 = vpack.c.bf16 %v208, %v208
    %v322 = vpack.c.bf16 %v209, %v209
    %v323 = vpack.c.bf16 %v210, %v210
    %v324 = vpack.c.bf16 %v211, %v211
    %v325 = vpack.c.bf16 %v212, %v212
    %v326 = vpack.c.bf16 %v213, %v213
    %v327 = vpack.c.bf16 %v214, %v214
    %v328 = vpack.c.bf16 %v215, %v215
    %v329 = vpack.c.bf16 %v216, %v216
    %v330 = vpack.c.bf16 %v217, %v217
    %v331 = vpack.c.bf16 %v218, %v218
    %v332 = vpack.c.bf16 %v219, %v219
    %v333 = vpack.c.bf16 %v220, %v220
    %v334 = vpack.c.bf16 %v221, %v221
    %v335 = vpack.c.bf16 %v222, %v222
    %v336 = vpack.c.bf16 %v223, %v223
    %v337 = vpack.c.bf16 %v224, %v224
    %v338 = vpack.c.bf16 %v225, %v225
    %v339 = vpack.c.bf16 %v226, %v226
    %v340 = vpack.c.bf16 %v227, %v227
    %v341 = vld [vmem:[#allocation2] sm:$0xf]
    %v342 = vld [vmem:[#allocation2 + $0x4] sm:$0xf]
    %v343 = vld [vmem:[#allocation2 + $0x8] sm:$0xf]
    %v344 = vld [vmem:[#allocation2 + $0xc] sm:$0xf]
    %v345 = vld [vmem:[#allocation2 + $0x10] sm:$0xf]
    %v346 = vld [vmem:[#allocation2 + $0x14] sm:$0xf]
    %v347 = vld [vmem:[#allocation2 + $0x18] sm:$0xf]
    %v348 = vld [vmem:[#allocation2 + $0x1c] sm:$0xf]
    %v349 = vld [vmem:[#allocation2 + $0x20] sm:$0xf]
    %v350 = vld [vmem:[#allocation2 + $0x24] sm:$0xf]
    %v351 = vld [vmem:[#allocation2 + $0x28] sm:$0xf]
    %v352 = vld [vmem:[#allocation2 + $0x2c] sm:$0xf]
    %v353 = vld [vmem:[#allocation2 + $0x30] sm:$0xf]
    %v354 = vld [vmem:[#allocation2 + $0x34] sm:$0xf]
    %v355 = vld [vmem:[#allocation2 + $0x38] sm:$0xf]
    %v356 = vld [vmem:[#allocation2 + $0x3c] sm:$0xf]
    %v357 = vld [vmem:[#allocation2 + $0x40] sm:$0xf]
    %v358 = vld [vmem:[#allocation2 + $0x44] sm:$0xf]
    %v359 = vld [vmem:[#allocation2 + $0x48] sm:$0xf]
    %v360 = vld [vmem:[#allocation2 + $0x4c] sm:$0xf]
    %v361 = vld [vmem:[#allocation2 + $0x50] sm:$0xf]
    %v362 = vld [vmem:[#allocation2 + $0x54] sm:$0xf]
    %v363 = vld [vmem:[#allocation2 + $0x58] sm:$0xf]
    %v364 = vld [vmem:[#allocation2 + $0x5c] sm:$0xf]
    %v365 = vld [vmem:[#allocation2 + $0x60] sm:$0xf]
    %v366 = vld [vmem:[#allocation2 + $0x64] sm:$0xf]
    %v367 = vld [vmem:[#allocation2 + $0x68] sm:$0xf]
    %v368 = vld [vmem:[#allocation2 + $0x6c] sm:$0xf]
    %v369 = vld [vmem:[#allocation2 + $0x70] sm:$0xf]
    %v370 = vld [vmem:[#allocation2 + $0x74] sm:$0xf]
    %v371 = vld [vmem:[#allocation2 + $0x78] sm:$0xf]
    %v372 = vld [vmem:[#allocation2 + $0x7c] sm:$0xf]
    %v373 = vld [vmem:[#allocation2 + $0x80] sm:$0xf]
    %v374 = vld [vmem:[#allocation2 + $0x84] sm:$0xf]
    %v375 = vld [vmem:[#allocation2 + $0x88] sm:$0xf]
    %v376 = vld [vmem:[#allocation2 + $0x8c] sm:$0xf]
    %v377 = vld [vmem:[#allocation2 + $0x90] sm:$0xf]
    %v378 = vld [vmem:[#allocation2 + $0x94] sm:$0xf]
    %v379 = vld [vmem:[#allocation2 + $0x98] sm:$0xf]
    %v380 = vld [vmem:[#allocation2 + $0x9c] sm:$0xf]
    %v381 = vld [vmem:[#allocation2 + $0xa0] sm:$0xf]
    %v382 = vld [vmem:[#allocation2 + $0xa4] sm:$0xf]
    %v383 = vld [vmem:[#allocation2 + $0xa8] sm:$0xf]
    %v384 = vld [vmem:[#allocation2 + $0xac] sm:$0xf]
    %v385 = vld [vmem:[#allocation2 + $0xb0] sm:$0xf]
    %v386 = vld [vmem:[#allocation2 + $0xb4] sm:$0xf]
    %v387 = vld [vmem:[#allocation2 + $0xb8] sm:$0xf]
    %v388 = vld [vmem:[#allocation2 + $0xbc] sm:$0xf]
    %v389 = vld [vmem:[#allocation2 + $0xc0] sm:$0xf]
    %v390 = vld [vmem:[#allocation2 + $0xc4] sm:$0xf]
    %v391 = vld [vmem:[#allocation2 + $0xc8] sm:$0xf]
    %v392 = vld [vmem:[#allocation2 + $0xcc] sm:$0xf]
    %v393 = vld [vmem:[#allocation2 + $0xd0] sm:$0xf]
    %v394 = vld [vmem:[#allocation2 + $0xd4] sm:$0xf]
    %v395 = vld [vmem:[#allocation2 + $0xd8] sm:$0xf]
    %v396 = vld [vmem:[#allocation2 + $0xdc] sm:$0xf]
    %v397 = vld [vmem:[#allocation2 + $0xe0] sm:$0xf]
    %v398 = vld [vmem:[#allocation2 + $0xe4] sm:$0xf]
    %v399 = vld [vmem:[#allocation2 + $0xe8] sm:$0xf]
    %v400 = vld [vmem:[#allocation2 + $0xec] sm:$0xf]
    %v401 = vld [vmem:[#allocation2 + $0xf0] sm:$0xf]
    %v402 = vld [vmem:[#allocation2 + $0xf4] sm:$0xf]
    %v403 = vld [vmem:[#allocation2 + $0xf8] sm:$0xf]
    %v404 = vld [vmem:[#allocation2 + $0xfc] sm:$0xf]
    %v405 = vld [vmem:[#allocation2 + $0x100] sm:$0xf]
    %v406 = vld [vmem:[#allocation2 + $0x104] sm:$0xf]
    %v407 = vld [vmem:[#allocation2 + $0x108] sm:$0xf]
    %v408 = vld [vmem:[#allocation2 + $0x10c] sm:$0xf]
    %v409 = vld [vmem:[#allocation2 + $0x110] sm:$0xf]
    %v410 = vld [vmem:[#allocation2 + $0x114] sm:$0xf]
    %v411 = vld [vmem:[#allocation2 + $0x118] sm:$0xf]
    %v412 = vld [vmem:[#allocation2 + $0x11c] sm:$0xf]
    %v413 = vld [vmem:[#allocation2 + $0x120] sm:$0xf]
    %v414 = vld [vmem:[#allocation2 + $0x124] sm:$0xf]
    %v415 = vld [vmem:[#allocation2 + $0x128] sm:$0xf]
    %v416 = vld [vmem:[#allocation2 + $0x12c] sm:$0xf]
    %v417 = vld [vmem:[#allocation2 + $0x130] sm:$0xf]
    %v418 = vld [vmem:[#allocation2 + $0x134] sm:$0xf]
    %v419 = vld [vmem:[#allocation2 + $0x138] sm:$0xf]
    %v420 = vld [vmem:[#allocation2 + $0x13c] sm:$0xf]
    %v421 = vld [vmem:[#allocation2 + $0x140] sm:$0xf]
    %v422 = vld [vmem:[#allocation2 + $0x144] sm:$0xf]
    %v423 = vld [vmem:[#allocation2 + $0x148] sm:$0xf]
    %v424 = vld [vmem:[#allocation2 + $0x14c] sm:$0xf]
    %v425 = vld [vmem:[#allocation2 + $0x150] sm:$0xf]
    %v426 = vld [vmem:[#allocation2 + $0x154] sm:$0xf]
    %v427 = vld [vmem:[#allocation2 + $0x158] sm:$0xf]
    %v428 = vld [vmem:[#allocation2 + $0x15c] sm:$0xf]
    %v429 = vld [vmem:[#allocation2 + $0x160] sm:$0xf]
    %v430 = vld [vmem:[#allocation2 + $0x164] sm:$0xf]
    %v431 = vld [vmem:[#allocation2 + $0x168] sm:$0xf]
    %v432 = vld [vmem:[#allocation2 + $0x16c] sm:$0xf]
    %v433 = vld [vmem:[#allocation2 + $0x170] sm:$0xf]
    %v434 = vld [vmem:[#allocation2 + $0x174] sm:$0xf]
    %v435 = vld [vmem:[#allocation2 + $0x178] sm:$0xf]
    %v436 = vld [vmem:[#allocation2 + $0x17c] sm:$0xf]
    %v437 = vld [vmem:[#allocation2 + $0x180] sm:$0xf]
    %v438 = vld [vmem:[#allocation2 + $0x184] sm:$0xf]
    %v439 = vld [vmem:[#allocation2 + $0x188] sm:$0xf]
    %v440 = vld [vmem:[#allocation2 + $0x18c] sm:$0xf]
    %v441 = vld [vmem:[#allocation2 + $0x190] sm:$0xf]
    %v442 = vld [vmem:[#allocation2 + $0x194] sm:$0xf]
    %v443 = vld [vmem:[#allocation2 + $0x198] sm:$0xf]
    %v444 = vld [vmem:[#allocation2 + $0x19c] sm:$0xf]
    %v445 = vld [vmem:[#allocation2 + $0x1a0] sm:$0xf]
    %v446 = vld [vmem:[#allocation2 + $0x1a4] sm:$0xf]
    %v447 = vld [vmem:[#allocation2 + $0x1a8] sm:$0xf]
    %v448 = vld [vmem:[#allocation2 + $0x1ac] sm:$0xf]
    %v449 = vld [vmem:[#allocation2 + $0x1b0] sm:$0xf]
    %v450 = vld [vmem:[#allocation2 + $0x1b4] sm:$0xf]
    %v451 = vld [vmem:[#allocation2 + $0x1b8] sm:$0xf]
    %v452 = vld [vmem:[#allocation2 + $0x1bc] sm:$0xf]
    %v453 = vld [vmem:[#allocation2 + $0x1c0] sm:$0xf]
    %v454 = vld [vmem:[#allocation2 + $0x1c4] sm:$0xf]
    %v455 = vld [vmem:[#allocation2 + $0x1c8] sm:$0xf]
    %v456 = vld [vmem:[#allocation2 + $0x1cc] sm:$0xf]
    %v457 = vld [vmem:[#allocation2 + $0x1d0] sm:$0xf]
    %v458 = vld [vmem:[#allocation2 + $0x1d4] sm:$0xf]
    %v459 = vld [vmem:[#allocation2 + $0x1d8] sm:$0xf]
    %v460 = vld [vmem:[#allocation2 + $0x1dc] sm:$0xf]
    %v461 = vld [vmem:[#allocation2 + $0x1e0] sm:$0xf]
    %v462 = vld [vmem:[#allocation2 + $0x1e4] sm:$0xf]
    %v463 = vld [vmem:[#allocation2 + $0x1e8] sm:$0xf]
    %v464 = vld [vmem:[#allocation2 + $0x1ec] sm:$0xf]
    %v465 = vld [vmem:[#allocation2 + $0x1f0] sm:$0xf]
    %v466 = vld [vmem:[#allocation2 + $0x1f4] sm:$0xf]
    %v467 = vld [vmem:[#allocation2 + $0x1f8] sm:$0xf]
    %v468 = vld [vmem:[#allocation2 + $0x1fc] sm:$0xf]
    %v469 = vld [vmem:[#allocation2 + $0x200] sm:$0xf]
    %v470 = vld [vmem:[#allocation2 + $0x204] sm:$0xf]
    %v471 = vld [vmem:[#allocation2 + $0x208] sm:$0xf]
    %v472 = vld [vmem:[#allocation2 + $0x20c] sm:$0xf]
    %v473 = vld [vmem:[#allocation2 + $0x210] sm:$0xf]
    %v474 = vld [vmem:[#allocation2 + $0x214] sm:$0xf]
    %v475 = vld [vmem:[#allocation2 + $0x218] sm:$0xf]
    %v476 = vld [vmem:[#allocation2 + $0x21c] sm:$0xf]
    %v477 = vld [vmem:[#allocation2 + $0x220] sm:$0xf]
    %v478 = vld [vmem:[#allocation2 + $0x224] sm:$0xf]
    %v479 = vld [vmem:[#allocation2 + $0x228] sm:$0xf]
    %v480 = vld [vmem:[#allocation2 + $0x22c] sm:$0xf]
    %v481 = vld [vmem:[#allocation2 + $0x230] sm:$0xf]
    %v482 = vld [vmem:[#allocation2 + $0x234] sm:$0xf]
    %v483 = vld [vmem:[#allocation2 + $0x238] sm:$0xf]
    %v484 = vld [vmem:[#allocation2 + $0x23c] sm:$0xf]
    %v485 = vld [vmem:[#allocation2 + $0x240] sm:$0xf]
    %v486 = vld [vmem:[#allocation2 + $0x244] sm:$0xf]
    %v487 = vld [vmem:[#allocation2 + $0x248] sm:$0xf]
    %v488 = vld [vmem:[#allocation2 + $0x24c] sm:$0xf]
    %v489 = vld [vmem:[#allocation2 + $0x250] sm:$0xf]
    %v490 = vld [vmem:[#allocation2 + $0x254] sm:$0xf]
    %v491 = vld [vmem:[#allocation2 + $0x258] sm:$0xf]
    %v492 = vld [vmem:[#allocation2 + $0x25c] sm:$0xf]
    %v493 = vld [vmem:[#allocation2 + $0x260] sm:$0xf]
    %v494 = vld [vmem:[#allocation2 + $0x264] sm:$0xf]
    %v495 = vld [vmem:[#allocation2 + $0x268] sm:$0xf]
    %v496 = vld [vmem:[#allocation2 + $0x26c] sm:$0xf]
    %v497 = vld [vmem:[#allocation2 + $0x270] sm:$0xf]
    %v498 = vld [vmem:[#allocation2 + $0x274] sm:$0xf]
    %v499 = vld [vmem:[#allocation2 + $0x278] sm:$0xf]
    %v500 = vld [vmem:[#allocation2 + $0x27c] sm:$0xf]
    %v501 = vld [vmem:[#allocation2 + $0x280] sm:$0xf]
    %v502 = vld [vmem:[#allocation2 + $0x284] sm:$0xf]
    %v503 = vld [vmem:[#allocation2 + $0x288] sm:$0xf]
    %v504 = vld [vmem:[#allocation2 + $0x28c] sm:$0xf]
    %v505 = vld [vmem:[#allocation2 + $0x290] sm:$0xf]
    %v506 = vld [vmem:[#allocation2 + $0x294] sm:$0xf]
    %v507 = vld [vmem:[#allocation2 + $0x298] sm:$0xf]
    %v508 = vld [vmem:[#allocation2 + $0x29c] sm:$0xf]
    %v509 = vld [vmem:[#allocation2 + $0x2a0] sm:$0xf]
    %v510 = vld [vmem:[#allocation2 + $0x2a4] sm:$0xf]
    %v511 = vld [vmem:[#allocation2 + $0x2a8] sm:$0xf]
    %v512 = vld [vmem:[#allocation2 + $0x2ac] sm:$0xf]
    %v513 = vld [vmem:[#allocation2 + $0x2b0] sm:$0xf]
    %v514 = vld [vmem:[#allocation2 + $0x2b4] sm:$0xf]
    %v515 = vld [vmem:[#allocation2 + $0x2b8] sm:$0xf]
    %v516 = vld [vmem:[#allocation2 + $0x2bc] sm:$0xf]
    %v517 = vld [vmem:[#allocation2 + $0x2c0] sm:$0xf]
    %v518 = vld [vmem:[#allocation2 + $0x2c4] sm:$0xf]
    %v519 = vld [vmem:[#allocation2 + $0x2c8] sm:$0xf]
    %v520 = vld [vmem:[#allocation2 + $0x2cc] sm:$0xf]
    %v521 = vld [vmem:[#allocation2 + $0x2d0] sm:$0xf]
    %v522 = vld [vmem:[#allocation2 + $0x2d4] sm:$0xf]
    %v523 = vld [vmem:[#allocation2 + $0x2d8] sm:$0xf]
    %v524 = vld [vmem:[#allocation2 + $0x2dc] sm:$0xf]
    %v525 = vld [vmem:[#allocation2 + $0x2e0] sm:$0xf]
    %v526 = vld [vmem:[#allocation2 + $0x2e4] sm:$0xf]
    %v527 = vld [vmem:[#allocation2 + $0x2e8] sm:$0xf]
    %v528 = vld [vmem:[#allocation2 + $0x2ec] sm:$0xf]
    %v529 = vld [vmem:[#allocation2 + $0x2f0] sm:$0xf]
    %v530 = vld [vmem:[#allocation2 + $0x2f4] sm:$0xf]
    %v531 = vld [vmem:[#allocation2 + $0x2f8] sm:$0xf]
    %v532 = vld [vmem:[#allocation2 + $0x2fc] sm:$0xf]
    %v533 = vld [vmem:[#allocation2 + $0x300] sm:$0xf]
    %v534 = vld [vmem:[#allocation2 + $0x304] sm:$0xf]
    %v535 = vld [vmem:[#allocation2 + $0x308] sm:$0xf]
    %v536 = vld [vmem:[#allocation2 + $0x30c] sm:$0xf]
    %v537 = vld [vmem:[#allocation2 + $0x310] sm:$0xf]
    %v538 = vld [vmem:[#allocation2 + $0x314] sm:$0xf]
    %v539 = vld [vmem:[#allocation2 + $0x318] sm:$0xf]
    %v540 = vld [vmem:[#allocation2 + $0x31c] sm:$0xf]
    %v541 = vld [vmem:[#allocation2 + $0x320] sm:$0xf]
    %v542 = vld [vmem:[#allocation2 + $0x324] sm:$0xf]
    %v543 = vld [vmem:[#allocation2 + $0x328] sm:$0xf]
    %v544 = vld [vmem:[#allocation2 + $0x32c] sm:$0xf]
    %v545 = vld [vmem:[#allocation2 + $0x330] sm:$0xf]
    %v546 = vld [vmem:[#allocation2 + $0x334] sm:$0xf]
    %v547 = vld [vmem:[#allocation2 + $0x338] sm:$0xf]
    %v548 = vld [vmem:[#allocation2 + $0x33c] sm:$0xf]
    %v549 = vld [vmem:[#allocation2 + $0x340] sm:$0xf]
    %v550 = vld [vmem:[#allocation2 + $0x344] sm:$0xf]
    %v551 = vld [vmem:[#allocation2 + $0x348] sm:$0xf]
    %v552 = vld [vmem:[#allocation2 + $0x34c] sm:$0xf]
    %v553 = vld [vmem:[#allocation2 + $0x350] sm:$0xf]
    %v554 = vld [vmem:[#allocation2 + $0x354] sm:$0xf]
    %v555 = vld [vmem:[#allocation2 + $0x358] sm:$0xf]
    %v556 = vld [vmem:[#allocation2 + $0x35c] sm:$0xf]
    %v557 = vld [vmem:[#allocation2 + $0x360] sm:$0xf]
    %v558 = vld [vmem:[#allocation2 + $0x364] sm:$0xf]
    %v559 = vld [vmem:[#allocation2 + $0x368] sm:$0xf]
    %v560 = vld [vmem:[#allocation2 + $0x36c] sm:$0xf]
    %v561 = vld [vmem:[#allocation2 + $0x370] sm:$0xf]
    %v562 = vld [vmem:[#allocation2 + $0x374] sm:$0xf]
    %v563 = vld [vmem:[#allocation2 + $0x378] sm:$0xf]
    %v564 = vld [vmem:[#allocation2 + $0x37c] sm:$0xf]
    %v565 = vld [vmem:[#allocation2 + $0x380] sm:$0xf]
    %v566 = vld [vmem:[#allocation2 + $0x384] sm:$0xf]
    %v567 = vld [vmem:[#allocation2 + $0x388] sm:$0xf]
    %v568 = vld [vmem:[#allocation2 + $0x38c] sm:$0xf]
    %v569 = vld [vmem:[#allocation2 + $0x390] sm:$0xf]
    %v570 = vld [vmem:[#allocation2 + $0x394] sm:$0xf]
    %v571 = vld [vmem:[#allocation2 + $0x398] sm:$0xf]
    %v572 = vld [vmem:[#allocation2 + $0x39c] sm:$0xf]
    %v573 = vld [vmem:[#allocation2 + $0x3a0] sm:$0xf]
    %v574 = vld [vmem:[#allocation2 + $0x3a4] sm:$0xf]
    %v575 = vld [vmem:[#allocation2 + $0x3a8] sm:$0xf]
    %v576 = vld [vmem:[#allocation2 + $0x3ac] sm:$0xf]
    %v577 = vld [vmem:[#allocation2 + $0x3b0] sm:$0xf]
    %v578 = vld [vmem:[#allocation2 + $0x3b4] sm:$0xf]
    %v579 = vld [vmem:[#allocation2 + $0x3b8] sm:$0xf]
    %v580 = vld [vmem:[#allocation2 + $0x3bc] sm:$0xf]
    %v581 = vld [vmem:[#allocation2 + $0x3c0] sm:$0xf]
    %v582 = vld [vmem:[#allocation2 + $0x3c4] sm:$0xf]
    %v583 = vld [vmem:[#allocation2 + $0x3c8] sm:$0xf]
    %v584 = vld [vmem:[#allocation2 + $0x3cc] sm:$0xf]
    %v585 = vld [vmem:[#allocation2 + $0x3d0] sm:$0xf]
    %v586 = vld [vmem:[#allocation2 + $0x3d4] sm:$0xf]
    %v587 = vld [vmem:[#allocation2 + $0x3d8] sm:$0xf]
    %v588 = vld [vmem:[#allocation2 + $0x3dc] sm:$0xf]
    %v589 = vld [vmem:[#allocation2 + $0x3e0] sm:$0xf]
    %v590 = vld [vmem:[#allocation2 + $0x3e4] sm:$0xf]
    %v591 = vld [vmem:[#allocation2 + $0x3e8] sm:$0xf]
    %v592 = vld [vmem:[#allocation2 + $0x3ec] sm:$0xf]
    %v593 = vld [vmem:[#allocation2 + $0x3f0] sm:$0xf]
    %v594 = vld [vmem:[#allocation2 + $0x3f4] sm:$0xf]
    %v595 = vld [vmem:[#allocation2 + $0x3f8] sm:$0xf]
    %v596 = vld [vmem:[#allocation2 + $0x3fc] sm:$0xf]
    %v597 = vld [vmem:[#allocation2 + $0x400] sm:$0xf]
    %v598 = vld [vmem:[#allocation2 + $0x404] sm:$0xf]
    %v599 = vld [vmem:[#allocation2 + $0x408] sm:$0xf]
    %v600 = vld [vmem:[#allocation2 + $0x40c] sm:$0xf]
    %v601 = vld [vmem:[#allocation2 + $0x410] sm:$0xf]
    %v602 = vld [vmem:[#allocation2 + $0x414] sm:$0xf]
    %v603 = vld [vmem:[#allocation2 + $0x418] sm:$0xf]
    %v604 = vld [vmem:[#allocation2 + $0x41c] sm:$0xf]
    %v605 = vld [vmem:[#allocation2 + $0x420] sm:$0xf]
    %v606 = vld [vmem:[#allocation2 + $0x424] sm:$0xf]
    %v607 = vld [vmem:[#allocation2 + $0x428] sm:$0xf]
    %v608 = vld [vmem:[#allocation2 + $0x42c] sm:$0xf]
    %v609 = vld [vmem:[#allocation2 + $0x430] sm:$0xf]
    %v610 = vld [vmem:[#allocation2 + $0x434] sm:$0xf]
    %v611 = vld [vmem:[#allocation2 + $0x438] sm:$0xf]
    %v612 = vld [vmem:[#allocation2 + $0x43c] sm:$0xf]
    %v613 = vld [vmem:[#allocation2 + $0x440] sm:$0xf]
    %v614 = vld [vmem:[#allocation2 + $0x444] sm:$0xf]
    %v615 = vld [vmem:[#allocation2 + $0x448] sm:$0xf]
    %v616 = vld [vmem:[#allocation2 + $0x44c] sm:$0xf]
    %v617 = vld [vmem:[#allocation2 + $0x450] sm:$0xf]
    %v618 = vld [vmem:[#allocation2 + $0x454] sm:$0xf]
    %v619 = vld [vmem:[#allocation2 + $0x458] sm:$0xf]
    %v620 = vld [vmem:[#allocation2 + $0x45c] sm:$0xf]
    %v621 = vld [vmem:[#allocation2 + $0x460] sm:$0xf]
    %v622 = vld [vmem:[#allocation2 + $0x464] sm:$0xf]
    %v623 = vld [vmem:[#allocation2 + $0x468] sm:$0xf]
    %v624 = vld [vmem:[#allocation2 + $0x46c] sm:$0xf]
    %v625 = vld [vmem:[#allocation2 + $0x470] sm:$0xf]
    %v626 = vld [vmem:[#allocation2 + $0x474] sm:$0xf]
    %v627 = vld [vmem:[#allocation2 + $0x478] sm:$0xf]
    %v628 = vld [vmem:[#allocation2 + $0x47c] sm:$0xf]
    %v629 = vld [vmem:[#allocation2 + $0x480] sm:$0xf]
    %v630 = vld [vmem:[#allocation2 + $0x484] sm:$0xf]
    %v631 = vld [vmem:[#allocation2 + $0x488] sm:$0xf]
    %v632 = vld [vmem:[#allocation2 + $0x48c] sm:$0xf]
    %v633 = vld [vmem:[#allocation2 + $0x490] sm:$0xf]
    %v634 = vld [vmem:[#allocation2 + $0x494] sm:$0xf]
    %v635 = vld [vmem:[#allocation2 + $0x498] sm:$0xf]
    %v636 = vld [vmem:[#allocation2 + $0x49c] sm:$0xf]
    %v637 = vld [vmem:[#allocation2 + $0x4a0] sm:$0xf]
    %v638 = vld [vmem:[#allocation2 + $0x4a4] sm:$0xf]
    %v639 = vld [vmem:[#allocation2 + $0x4a8] sm:$0xf]
    %v640 = vld [vmem:[#allocation2 + $0x4ac] sm:$0xf]
    %v641 = vld [vmem:[#allocation2 + $0x4b0] sm:$0xf]
    %v642 = vld [vmem:[#allocation2 + $0x4b4] sm:$0xf]
    %v643 = vld [vmem:[#allocation2 + $0x4b8] sm:$0xf]
    %v644 = vld [vmem:[#allocation2 + $0x4bc] sm:$0xf]
    %v645 = vld [vmem:[#allocation2 + $0x4c0] sm:$0xf]
    %v646 = vld [vmem:[#allocation2 + $0x4c4] sm:$0xf]
    %v647 = vld [vmem:[#allocation2 + $0x4c8] sm:$0xf]
    %v648 = vld [vmem:[#allocation2 + $0x4cc] sm:$0xf]
    %v649 = vld [vmem:[#allocation2 + $0x4d0] sm:$0xf]
    %v650 = vld [vmem:[#allocation2 + $0x4d4] sm:$0xf]
    %v651 = vld [vmem:[#allocation2 + $0x4d8] sm:$0xf]
    %v652 = vld [vmem:[#allocation2 + $0x4dc] sm:$0xf]
    %v653 = vld [vmem:[#allocation2 + $0x4e0] sm:$0xf]
    %v654 = vld [vmem:[#allocation2 + $0x4e4] sm:$0xf]
    %v655 = vld [vmem:[#allocation2 + $0x4e8] sm:$0xf]
    %v656 = vld [vmem:[#allocation2 + $0x4ec] sm:$0xf]
    %v657 = vld [vmem:[#allocation2 + $0x4f0] sm:$0xf]
    %v658 = vld [vmem:[#allocation2 + $0x4f4] sm:$0xf]
    %v659 = vld [vmem:[#allocation2 + $0x4f8] sm:$0xf]
    %v660 = vld [vmem:[#allocation2 + $0x4fc] sm:$0xf]
    %v661 = vld [vmem:[#allocation2 + $0x500] sm:$0xf]
    %v662 = vld [vmem:[#allocation2 + $0x504] sm:$0xf]
    %v663 = vld [vmem:[#allocation2 + $0x508] sm:$0xf]
    %v664 = vld [vmem:[#allocation2 + $0x50c] sm:$0xf]
    %v665 = vld [vmem:[#allocation2 + $0x510] sm:$0xf]
    %v666 = vld [vmem:[#allocation2 + $0x514] sm:$0xf]
    %v667 = vld [vmem:[#allocation2 + $0x518] sm:$0xf]
    %v668 = vld [vmem:[#allocation2 + $0x51c] sm:$0xf]
    %v669 = vld [vmem:[#allocation2 + $0x520] sm:$0xf]
    %v670 = vld [vmem:[#allocation2 + $0x524] sm:$0xf]
    %v671 = vld [vmem:[#allocation2 + $0x528] sm:$0xf]
    %v672 = vld [vmem:[#allocation2 + $0x52c] sm:$0xf]
    %v673 = vld [vmem:[#allocation2 + $0x530] sm:$0xf]
    %v674 = vld [vmem:[#allocation2 + $0x534] sm:$0xf]
    %v675 = vld [vmem:[#allocation2 + $0x538] sm:$0xf]
    %v676 = vld [vmem:[#allocation2 + $0x53c] sm:$0xf]
    %v677 = vld [vmem:[#allocation2 + $0x540] sm:$0xf]
    %v678 = vld [vmem:[#allocation2 + $0x544] sm:$0xf]
    %v679 = vld [vmem:[#allocation2 + $0x548] sm:$0xf]
    %v680 = vld [vmem:[#allocation2 + $0x54c] sm:$0xf]
    %v681 = vld [vmem:[#allocation2 + $0x550] sm:$0xf]
    %v682 = vld [vmem:[#allocation2 + $0x554] sm:$0xf]
    %v683 = vld [vmem:[#allocation2 + $0x558] sm:$0xf]
    %v684 = vld [vmem:[#allocation2 + $0x55c] sm:$0xf]
    %v685 = vld [vmem:[#allocation2 + $0x560] sm:$0xf]
    %v686 = vld [vmem:[#allocation2 + $0x564] sm:$0xf]
    %v687 = vld [vmem:[#allocation2 + $0x568] sm:$0xf]
    %v688 = vld [vmem:[#allocation2 + $0x56c] sm:$0xf]
    %v689 = vld [vmem:[#allocation2 + $0x570] sm:$0xf]
    %v690 = vld [vmem:[#allocation2 + $0x574] sm:$0xf]
    %v691 = vld [vmem:[#allocation2 + $0x578] sm:$0xf]
    %v692 = vld [vmem:[#allocation2 + $0x57c] sm:$0xf]
    %v693 = vld [vmem:[#allocation2 + $0x580] sm:$0xf]
    %v694 = vld [vmem:[#allocation2 + $0x584] sm:$0xf]
    %v695 = vld [vmem:[#allocation2 + $0x588] sm:$0xf]
    %v696 = vld [vmem:[#allocation2 + $0x58c] sm:$0xf]
    %v697 = vld [vmem:[#allocation2 + $0x590] sm:$0xf]
    %v698 = vld [vmem:[#allocation2 + $0x594] sm:$0xf]
    %v699 = vld [vmem:[#allocation2 + $0x598] sm:$0xf]
    %v700 = vld [vmem:[#allocation2 + $0x59c] sm:$0xf]
    %v701 = vld [vmem:[#allocation2 + $0x5a0] sm:$0xf]
    %v702 = vld [vmem:[#allocation2 + $0x5a4] sm:$0xf]
    %v703 = vld [vmem:[#allocation2 + $0x5a8] sm:$0xf]
    %v704 = vld [vmem:[#allocation2 + $0x5ac] sm:$0xf]
    %v705 = vld [vmem:[#allocation2 + $0x5b0] sm:$0xf]
    %v706 = vld [vmem:[#allocation2 + $0x5b4] sm:$0xf]
    %v707 = vld [vmem:[#allocation2 + $0x5b8] sm:$0xf]
    %v708 = vld [vmem:[#allocation2 + $0x5bc] sm:$0xf]
    %v709 = vld [vmem:[#allocation2 + $0x5c0] sm:$0xf]
    %v710 = vld [vmem:[#allocation2 + $0x5c4] sm:$0xf]
    %v711 = vld [vmem:[#allocation2 + $0x5c8] sm:$0xf]
    %v712 = vld [vmem:[#allocation2 + $0x5cc] sm:$0xf]
    %v713 = vld [vmem:[#allocation2 + $0x5d0] sm:$0xf]
    %v714 = vld [vmem:[#allocation2 + $0x5d4] sm:$0xf]
    %v715 = vld [vmem:[#allocation2 + $0x5d8] sm:$0xf]
    %v716 = vld [vmem:[#allocation2 + $0x5dc] sm:$0xf]
    %v717 = vld [vmem:[#allocation2 + $0x5e0] sm:$0xf]
    %v718 = vld [vmem:[#allocation2 + $0x5e4] sm:$0xf]
    %v719 = vld [vmem:[#allocation2 + $0x5e8] sm:$0xf]
    %v720 = vld [vmem:[#allocation2 + $0x5ec] sm:$0xf]
    %v721 = vld [vmem:[#allocation2 + $0x5f0] sm:$0xf]
    %v722 = vld [vmem:[#allocation2 + $0x5f4] sm:$0xf]
    %v723 = vld [vmem:[#allocation2 + $0x5f8] sm:$0xf]
    %v724 = vld [vmem:[#allocation2 + $0x5fc] sm:$0xf]
    %v725 = vld [vmem:[#allocation2 + $0x600] sm:$0xf]
    %v726 = vld [vmem:[#allocation2 + $0x604] sm:$0xf]
    %v727 = vld [vmem:[#allocation2 + $0x608] sm:$0xf]
    %v728 = vld [vmem:[#allocation2 + $0x60c] sm:$0xf]
    %v729 = vld [vmem:[#allocation2 + $0x610] sm:$0xf]
    %v730 = vld [vmem:[#allocation2 + $0x614] sm:$0xf]
    %v731 = vld [vmem:[#allocation2 + $0x618] sm:$0xf]
    %v732 = vld [vmem:[#allocation2 + $0x61c] sm:$0xf]
    %v733 = vld [vmem:[#allocation2 + $0x620] sm:$0xf]
    %v734 = vld [vmem:[#allocation2 + $0x624] sm:$0xf]
    %v735 = vld [vmem:[#allocation2 + $0x628] sm:$0xf]
    %v736 = vld [vmem:[#allocation2 + $0x62c] sm:$0xf]
    %v737 = vld [vmem:[#allocation2 + $0x630] sm:$0xf]
    %v738 = vld [vmem:[#allocation2 + $0x634] sm:$0xf]
    %v739 = vld [vmem:[#allocation2 + $0x638] sm:$0xf]
    %v740 = vld [vmem:[#allocation2 + $0x63c] sm:$0xf]
    %v741 = vld [vmem:[#allocation2 + $0x640] sm:$0xf]
    %v742 = vld [vmem:[#allocation2 + $0x644] sm:$0xf]
    %v743 = vld [vmem:[#allocation2 + $0x648] sm:$0xf]
    %v744 = vld [vmem:[#allocation2 + $0x64c] sm:$0xf]
    %v745 = vld [vmem:[#allocation2 + $0x650] sm:$0xf]
    %v746 = vld [vmem:[#allocation2 + $0x654] sm:$0xf]
    %v747 = vld [vmem:[#allocation2 + $0x658] sm:$0xf]
    %v748 = vld [vmem:[#allocation2 + $0x65c] sm:$0xf]
    %v749 = vld [vmem:[#allocation2 + $0x660] sm:$0xf]
    %v750 = vld [vmem:[#allocation2 + $0x664] sm:$0xf]
    %v751 = vld [vmem:[#allocation2 + $0x668] sm:$0xf]
    %v752 = vld [vmem:[#allocation2 + $0x66c] sm:$0xf]
    %v753 = vld [vmem:[#allocation2 + $0x670] sm:$0xf]
    %v754 = vld [vmem:[#allocation2 + $0x674] sm:$0xf]
    %v755 = vld [vmem:[#allocation2 + $0x678] sm:$0xf]
    %v756 = vld [vmem:[#allocation2 + $0x67c] sm:$0xf]
    %v757 = vld [vmem:[#allocation2 + $0x680] sm:$0xf]
    %v758 = vld [vmem:[#allocation2 + $0x684] sm:$0xf]
    %v759 = vld [vmem:[#allocation2 + $0x688] sm:$0xf]
    %v760 = vld [vmem:[#allocation2 + $0x68c] sm:$0xf]
    %v761 = vld [vmem:[#allocation2 + $0x690] sm:$0xf]
    %v762 = vld [vmem:[#allocation2 + $0x694] sm:$0xf]
    %v763 = vld [vmem:[#allocation2 + $0x698] sm:$0xf]
    %v764 = vld [vmem:[#allocation2 + $0x69c] sm:$0xf]
    %v765 = vld [vmem:[#allocation2 + $0x6a0] sm:$0xf]
    %v766 = vld [vmem:[#allocation2 + $0x6a4] sm:$0xf]
    %v767 = vld [vmem:[#allocation2 + $0x6a8] sm:$0xf]
    %v768 = vld [vmem:[#allocation2 + $0x6ac] sm:$0xf]
    %v769 = vld [vmem:[#allocation2 + $0x6b0] sm:$0xf]
    %v770 = vld [vmem:[#allocation2 + $0x6b4] sm:$0xf]
    %v771 = vld [vmem:[#allocation2 + $0x6b8] sm:$0xf]
    %v772 = vld [vmem:[#allocation2 + $0x6bc] sm:$0xf]
    %v773 = vld [vmem:[#allocation2 + $0x6c0] sm:$0xf]
    %v774 = vld [vmem:[#allocation2 + $0x6c4] sm:$0xf]
    %v775 = vld [vmem:[#allocation2 + $0x6c8] sm:$0xf]
    %v776 = vld [vmem:[#allocation2 + $0x6cc] sm:$0xf]
    %v777 = vld [vmem:[#allocation2 + $0x6d0] sm:$0xf]
    %v778 = vld [vmem:[#allocation2 + $0x6d4] sm:$0xf]
    %v779 = vld [vmem:[#allocation2 + $0x6d8] sm:$0xf]
    %v780 = vld [vmem:[#allocation2 + $0x6dc] sm:$0xf]
    %v781 = vld [vmem:[#allocation2 + $0x6e0] sm:$0xf]
    %v782 = vld [vmem:[#allocation2 + $0x6e4] sm:$0xf]
    %v783 = vld [vmem:[#allocation2 + $0x6e8] sm:$0xf]
    %v784 = vld [vmem:[#allocation2 + $0x6ec] sm:$0xf]
    %v785 = vld [vmem:[#allocation2 + $0x6f0] sm:$0xf]
    %v786 = vld [vmem:[#allocation2 + $0x6f4] sm:$0xf]
    %v787 = vld [vmem:[#allocation2 + $0x6f8] sm:$0xf]
    %v788 = vld [vmem:[#allocation2 + $0x6fc] sm:$0xf]
    %v789 = vld [vmem:[#allocation2 + $0x700] sm:$0xf]
    %v790 = vld [vmem:[#allocation2 + $0x704] sm:$0xf]
    %v791 = vld [vmem:[#allocation2 + $0x708] sm:$0xf]
    %v792 = vld [vmem:[#allocation2 + $0x70c] sm:$0xf]
    %v793 = vld [vmem:[#allocation2 + $0x710] sm:$0xf]
    %v794 = vld [vmem:[#allocation2 + $0x714] sm:$0xf]
    %v795 = vld [vmem:[#allocation2 + $0x718] sm:$0xf]
    %v796 = vld [vmem:[#allocation2 + $0x71c] sm:$0xf]
    %v797 = vld [vmem:[#allocation2 + $0x720] sm:$0xf]
    %v798 = vld [vmem:[#allocation2 + $0x724] sm:$0xf]
    %v799 = vld [vmem:[#allocation2 + $0x728] sm:$0xf]
    %v800 = vld [vmem:[#allocation2 + $0x72c] sm:$0xf]
    %v801 = vld [vmem:[#allocation2 + $0x730] sm:$0xf]
    %v802 = vld [vmem:[#allocation2 + $0x734] sm:$0xf]
    %v803 = vld [vmem:[#allocation2 + $0x738] sm:$0xf]
    %v804 = vld [vmem:[#allocation2 + $0x73c] sm:$0xf]
    %v805 = vld [vmem:[#allocation2 + $0x740] sm:$0xf]
    %v806 = vld [vmem:[#allocation2 + $0x744] sm:$0xf]
    %v807 = vld [vmem:[#allocation2 + $0x748] sm:$0xf]
    %v808 = vld [vmem:[#allocation2 + $0x74c] sm:$0xf]
    %v809 = vld [vmem:[#allocation2 + $0x750] sm:$0xf]
    %v810 = vld [vmem:[#allocation2 + $0x754] sm:$0xf]
    %v811 = vld [vmem:[#allocation2 + $0x758] sm:$0xf]
    %v812 = vld [vmem:[#allocation2 + $0x75c] sm:$0xf]
    %v813 = vld [vmem:[#allocation2 + $0x760] sm:$0xf]
    %v814 = vld [vmem:[#allocation2 + $0x764] sm:$0xf]
    %v815 = vld [vmem:[#allocation2 + $0x768] sm:$0xf]
    %v816 = vld [vmem:[#allocation2 + $0x76c] sm:$0xf]
    %v817 = vld [vmem:[#allocation2 + $0x770] sm:$0xf]
    %v818 = vld [vmem:[#allocation2 + $0x774] sm:$0xf]
    %v819 = vld [vmem:[#allocation2 + $0x778] sm:$0xf]
    %v820 = vld [vmem:[#allocation2 + $0x77c] sm:$0xf]
    %v821 = vld [vmem:[#allocation2 + $0x780] sm:$0xf]
    %v822 = vld [vmem:[#allocation2 + $0x784] sm:$0xf]
    %v823 = vld [vmem:[#allocation2 + $0x788] sm:$0xf]
    %v824 = vld [vmem:[#allocation2 + $0x78c] sm:$0xf]
    %v825 = vld [vmem:[#allocation2 + $0x790] sm:$0xf]
    %v826 = vld [vmem:[#allocation2 + $0x794] sm:$0xf]
    %v827 = vld [vmem:[#allocation2 + $0x798] sm:$0xf]
    %v828 = vld [vmem:[#allocation2 + $0x79c] sm:$0xf]
    %v829 = vld [vmem:[#allocation2 + $0x7a0] sm:$0xf]
    %v830 = vld [vmem:[#allocation2 + $0x7a4] sm:$0xf]
    %v831 = vld [vmem:[#allocation2 + $0x7a8] sm:$0xf]
    %v832 = vld [vmem:[#allocation2 + $0x7ac] sm:$0xf]
    %v833 = vld [vmem:[#allocation2 + $0x7b0] sm:$0xf]
    %v834 = vld [vmem:[#allocation2 + $0x7b4] sm:$0xf]
    %v835 = vld [vmem:[#allocation2 + $0x7b8] sm:$0xf]
    %v836 = vld [vmem:[#allocation2 + $0x7bc] sm:$0xf]
    %v837 = vld [vmem:[#allocation2 + $0x7c0] sm:$0xf]
    %v838 = vld [vmem:[#allocation2 + $0x7c4] sm:$0xf]
    %v839 = vld [vmem:[#allocation2 + $0x7c8] sm:$0xf]
    %v840 = vld [vmem:[#allocation2 + $0x7cc] sm:$0xf]
    %v841 = vld [vmem:[#allocation2 + $0x7d0] sm:$0xf]
    %v842 = vld [vmem:[#allocation2 + $0x7d4] sm:$0xf]
    %v843 = vld [vmem:[#allocation2 + $0x7d8] sm:$0xf]
    %v844 = vld [vmem:[#allocation2 + $0x7dc] sm:$0xf]
    %v845 = vld [vmem:[#allocation2 + $0x7e0] sm:$0xf]
    %v846 = vld [vmem:[#allocation2 + $0x7e4] sm:$0xf]
    %v847 = vld [vmem:[#allocation2 + $0x7e8] sm:$0xf]
    %v848 = vld [vmem:[#allocation2 + $0x7ec] sm:$0xf]
    %v849 = vld [vmem:[#allocation2 + $0x7f0] sm:$0xf]
    %v850 = vld [vmem:[#allocation2 + $0x7f4] sm:$0xf]
    %v851 = vld [vmem:[#allocation2 + $0x7f8] sm:$0xf]
    %v852 = vld [vmem:[#allocation2 + $0x7fc] sm:$0xf]
    %v853 = vld [vmem:[#allocation2 + $0x800] sm:$0xf]
    %v854 = vld [vmem:[#allocation2 + $0x804] sm:$0xf]
    %v855 = vld [vmem:[#allocation2 + $0x808] sm:$0xf]
    %v856 = vld [vmem:[#allocation2 + $0x80c] sm:$0xf]
    %v857 = vld [vmem:[#allocation2 + $0x810] sm:$0xf]
    %v858 = vld [vmem:[#allocation2 + $0x814] sm:$0xf]
    %v859 = vld [vmem:[#allocation2 + $0x818] sm:$0xf]
    %v860 = vld [vmem:[#allocation2 + $0x81c] sm:$0xf]
    %v861 = vld [vmem:[#allocation2 + $0x820] sm:$0xf]
    %v862 = vld [vmem:[#allocation2 + $0x824] sm:$0xf]
    %v863 = vld [vmem:[#allocation2 + $0x828] sm:$0xf]
    %v864 = vld [vmem:[#allocation2 + $0x82c] sm:$0xf]
    %v865 = vld [vmem:[#allocation2 + $0x830] sm:$0xf]
    %v866 = vld [vmem:[#allocation2 + $0x834] sm:$0xf]
    %v867 = vld [vmem:[#allocation2 + $0x838] sm:$0xf]
    %v868 = vld [vmem:[#allocation2 + $0x83c] sm:$0xf]
    %v869 = vld [vmem:[#allocation2 + $0x840] sm:$0xf]
    %v870 = vld [vmem:[#allocation2 + $0x844] sm:$0xf]
    %v871 = vld [vmem:[#allocation2 + $0x848] sm:$0xf]
    %v872 = vld [vmem:[#allocation2 + $0x84c] sm:$0xf]
    %v873 = vld [vmem:[#allocation2 + $0x850] sm:$0xf]
    %v874 = vld [vmem:[#allocation2 + $0x854] sm:$0xf]
    %v875 = vld [vmem:[#allocation2 + $0x858] sm:$0xf]
    %v876 = vld [vmem:[#allocation2 + $0x85c] sm:$0xf]
    %v877 = vld [vmem:[#allocation2 + $0x860] sm:$0xf]
    %v878 = vld [vmem:[#allocation2 + $0x864] sm:$0xf]
    %v879 = vld [vmem:[#allocation2 + $0x868] sm:$0xf]
    %v880 = vld [vmem:[#allocation2 + $0x86c] sm:$0xf]
    %v881 = vld [vmem:[#allocation2 + $0x870] sm:$0xf]
    %v882 = vld [vmem:[#allocation2 + $0x874] sm:$0xf]
    %v883 = vld [vmem:[#allocation2 + $0x878] sm:$0xf]
    %v884 = vld [vmem:[#allocation2 + $0x87c] sm:$0xf]
    %v885 = vld [vmem:[#allocation2 + $0x880] sm:$0xf]
    %v886 = vld [vmem:[#allocation2 + $0x884] sm:$0xf]
    %v887 = vld [vmem:[#allocation2 + $0x888] sm:$0xf]
    %v888 = vld [vmem:[#allocation2 + $0x88c] sm:$0xf]
    %v889 = vld [vmem:[#allocation2 + $0x890] sm:$0xf]
    %v890 = vld [vmem:[#allocation2 + $0x894] sm:$0xf]
    %v891 = vld [vmem:[#allocation2 + $0x898] sm:$0xf]
    %v892 = vld [vmem:[#allocation2 + $0x89c] sm:$0xf]
    %v893 = vld [vmem:[#allocation2 + $0x8a0] sm:$0xf]
    %v894 = vld [vmem:[#allocation2 + $0x8a4] sm:$0xf]
    %v895 = vld [vmem:[#allocation2 + $0x8a8] sm:$0xf]
    %v896 = vld [vmem:[#allocation2 + $0x8ac] sm:$0xf]
    %v897 = vld [vmem:[#allocation2 + $0x8b0] sm:$0xf]
    %v898 = vld [vmem:[#allocation2 + $0x8b4] sm:$0xf]
    %v899 = vld [vmem:[#allocation2 + $0x8b8] sm:$0xf]
    %v900 = vld [vmem:[#allocation2 + $0x8bc] sm:$0xf]
    %v901 = vld [vmem:[#allocation2 + $0x8c0] sm:$0xf]
    %v902 = vld [vmem:[#allocation2 + $0x8c4] sm:$0xf]
    %v903 = vld [vmem:[#allocation2 + $0x8c8] sm:$0xf]
    %v904 = vld [vmem:[#allocation2 + $0x8cc] sm:$0xf]
    %v905 = vld [vmem:[#allocation2 + $0x8d0] sm:$0xf]
    %v906 = vld [vmem:[#allocation2 + $0x8d4] sm:$0xf]
    %v907 = vld [vmem:[#allocation2 + $0x8d8] sm:$0xf]
    %v908 = vld [vmem:[#allocation2 + $0x8dc] sm:$0xf]
    %v909 = vld [vmem:[#allocation2 + $0x8e0] sm:$0xf]
    %v910 = vld [vmem:[#allocation2 + $0x8e4] sm:$0xf]
    %v911 = vld [vmem:[#allocation2 + $0x8e8] sm:$0xf]
    %v912 = vld [vmem:[#allocation2 + $0x8ec] sm:$0xf]
    %v913 = vld [vmem:[#allocation2 + $0x8f0] sm:$0xf]
    %v914 = vld [vmem:[#allocation2 + $0x8f4] sm:$0xf]
    %v915 = vld [vmem:[#allocation2 + $0x8f8] sm:$0xf]
    %v916 = vld [vmem:[#allocation2 + $0x8fc] sm:$0xf]
    %v917 = vld [vmem:[#allocation2 + $0x900] sm:$0xf]
    %v918 = vld [vmem:[#allocation2 + $0x904] sm:$0xf]
    %v919 = vld [vmem:[#allocation2 + $0x908] sm:$0xf]
    %v920 = vld [vmem:[#allocation2 + $0x90c] sm:$0xf]
    %v921 = vld [vmem:[#allocation2 + $0x910] sm:$0xf]
    %v922 = vld [vmem:[#allocation2 + $0x914] sm:$0xf]
    %v923 = vld [vmem:[#allocation2 + $0x918] sm:$0xf]
    %v924 = vld [vmem:[#allocation2 + $0x91c] sm:$0xf]
    %v925 = vld [vmem:[#allocation2 + $0x920] sm:$0xf]
    %v926 = vld [vmem:[#allocation2 + $0x924] sm:$0xf]
    %v927 = vld [vmem:[#allocation2 + $0x928] sm:$0xf]
    %v928 = vld [vmem:[#allocation2 + $0x92c] sm:$0xf]
    %v929 = vld [vmem:[#allocation2 + $0x930] sm:$0xf]
    %v930 = vld [vmem:[#allocation2 + $0x934] sm:$0xf]
    %v931 = vld [vmem:[#allocation2 + $0x938] sm:$0xf]
    %v932 = vld [vmem:[#allocation2 + $0x93c] sm:$0xf]
    %v933 = vld [vmem:[#allocation2 + $0x940] sm:$0xf]
    %v934 = vld [vmem:[#allocation2 + $0x944] sm:$0xf]
    %v935 = vld [vmem:[#allocation2 + $0x948] sm:$0xf]
    %v936 = vld [vmem:[#allocation2 + $0x94c] sm:$0xf]
    %v937 = vld [vmem:[#allocation2 + $0x950] sm:$0xf]
    %v938 = vld [vmem:[#allocation2 + $0x954] sm:$0xf]
    %v939 = vld [vmem:[#allocation2 + $0x958] sm:$0xf]
    %v940 = vld [vmem:[#allocation2 + $0x95c] sm:$0xf]
    %v941 = vld [vmem:[#allocation2 + $0x960] sm:$0xf]
    %v942 = vld [vmem:[#allocation2 + $0x964] sm:$0xf]
    %v943 = vld [vmem:[#allocation2 + $0x968] sm:$0xf]
    %v944 = vld [vmem:[#allocation2 + $0x96c] sm:$0xf]
    %v945 = vld [vmem:[#allocation2 + $0x970] sm:$0xf]
    %v946 = vld [vmem:[#allocation2 + $0x974] sm:$0xf]
    %v947 = vld [vmem:[#allocation2 + $0x978] sm:$0xf]
    %v948 = vld [vmem:[#allocation2 + $0x97c] sm:$0xf]
    %v949 = vld [vmem:[#allocation2 + $0x980] sm:$0xf]
    %v950 = vld [vmem:[#allocation2 + $0x984] sm:$0xf]
    %v951 = vld [vmem:[#allocation2 + $0x988] sm:$0xf]
    %v952 = vld [vmem:[#allocation2 + $0x98c] sm:$0xf]
    %v953 = vld [vmem:[#allocation2 + $0x990] sm:$0xf]
    %v954 = vld [vmem:[#allocation2 + $0x994] sm:$0xf]
    %v955 = vld [vmem:[#allocation2 + $0x998] sm:$0xf]
    %v956 = vld [vmem:[#allocation2 + $0x99c] sm:$0xf]
    %v957 = vld [vmem:[#allocation2 + $0x9a0] sm:$0xf]
    %v958 = vld [vmem:[#allocation2 + $0x9a4] sm:$0xf]
    %v959 = vld [vmem:[#allocation2 + $0x9a8] sm:$0xf]
    %v960 = vld [vmem:[#allocation2 + $0x9ac] sm:$0xf]
    %v961 = vld [vmem:[#allocation2 + $0x9b0] sm:$0xf]
    %v962 = vld [vmem:[#allocation2 + $0x9b4] sm:$0xf]
    %v963 = vld [vmem:[#allocation2 + $0x9b8] sm:$0xf]
    %v964 = vld [vmem:[#allocation2 + $0x9bc] sm:$0xf]
    %v965 = vld [vmem:[#allocation2 + $0x9c0] sm:$0xf]
    %v966 = vld [vmem:[#allocation2 + $0x9c4] sm:$0xf]
    %v967 = vld [vmem:[#allocation2 + $0x9c8] sm:$0xf]
    %v968 = vld [vmem:[#allocation2 + $0x9cc] sm:$0xf]
    %v969 = vld [vmem:[#allocation2 + $0x9d0] sm:$0xf]
    %v970 = vld [vmem:[#allocation2 + $0x9d4] sm:$0xf]
    %v971 = vld [vmem:[#allocation2 + $0x9d8] sm:$0xf]
    %v972 = vld [vmem:[#allocation2 + $0x9dc] sm:$0xf]
    %v973 = vld [vmem:[#allocation2 + $0x9e0] sm:$0xf]
    %v974 = vld [vmem:[#allocation2 + $0x9e4] sm:$0xf]
    %v975 = vld [vmem:[#allocation2 + $0x9e8] sm:$0xf]
    %v976 = vld [vmem:[#allocation2 + $0x9ec] sm:$0xf]
    %v977 = vld [vmem:[#allocation2 + $0x9f0] sm:$0xf]
    %v978 = vld [vmem:[#allocation2 + $0x9f4] sm:$0xf]
    %v979 = vld [vmem:[#allocation2 + $0x9f8] sm:$0xf]
    %v980 = vld [vmem:[#allocation2 + $0x9fc] sm:$0xf]
    %v981 = vld [vmem:[#allocation2 + $0xa00] sm:$0xf]
    %v982 = vld [vmem:[#allocation2 + $0xa04] sm:$0xf]
    %v983 = vld [vmem:[#allocation2 + $0xa08] sm:$0xf]
    %v984 = vld [vmem:[#allocation2 + $0xa0c] sm:$0xf]
    %v985 = vld [vmem:[#allocation2 + $0xa10] sm:$0xf]
    %v986 = vld [vmem:[#allocation2 + $0xa14] sm:$0xf]
    %v987 = vld [vmem:[#allocation2 + $0xa18] sm:$0xf]
    %v988 = vld [vmem:[#allocation2 + $0xa1c] sm:$0xf]
    %v989 = vld [vmem:[#allocation2 + $0xa20] sm:$0xf]
    %v990 = vld [vmem:[#allocation2 + $0xa24] sm:$0xf]
    %v991 = vld [vmem:[#allocation2 + $0xa28] sm:$0xf]
    %v992 = vld [vmem:[#allocation2 + $0xa2c] sm:$0xf]
    %v993 = vld [vmem:[#allocation2 + $0xa30] sm:$0xf]
    %v994 = vld [vmem:[#allocation2 + $0xa34] sm:$0xf]
    %v995 = vld [vmem:[#allocation2 + $0xa38] sm:$0xf]
    %v996 = vld [vmem:[#allocation2 + $0xa3c] sm:$0xf]
    %v997 = vld [vmem:[#allocation2 + $0xa40] sm:$0xf]
    %v998 = vld [vmem:[#allocation2 + $0xa44] sm:$0xf]
    %v999 = vld [vmem:[#allocation2 + $0xa48] sm:$0xf]
    %v1000 = vld [vmem:[#allocation2 + $0xa4c] sm:$0xf]
    %v1001 = vld [vmem:[#allocation2 + $0xa50] sm:$0xf]
    %v1002 = vld [vmem:[#allocation2 + $0xa54] sm:$0xf]
    %v1003 = vld [vmem:[#allocation2 + $0xa58] sm:$0xf]
    %v1004 = vld [vmem:[#allocation2 + $0xa5c] sm:$0xf]
    %v1005 = vld [vmem:[#allocation2 + $0xa60] sm:$0xf]
    %v1006 = vld [vmem:[#allocation2 + $0xa64] sm:$0xf]
    %v1007 = vld [vmem:[#allocation2 + $0xa68] sm:$0xf]
    %v1008 = vld [vmem:[#allocation2 + $0xa6c] sm:$0xf]
    %v1009 = vld [vmem:[#allocation2 + $0xa70] sm:$0xf]
    %v1010 = vld [vmem:[#allocation2 + $0xa74] sm:$0xf]
    %v1011 = vld [vmem:[#allocation2 + $0xa78] sm:$0xf]
    %v1012 = vld [vmem:[#allocation2 + $0xa7c] sm:$0xf]
    %v1013 = vld [vmem:[#allocation2 + $0xa80] sm:$0xf]
    %v1014 = vld [vmem:[#allocation2 + $0xa84] sm:$0xf]
    %v1015 = vld [vmem:[#allocation2 + $0xa88] sm:$0xf]
    %v1016 = vld [vmem:[#allocation2 + $0xa8c] sm:$0xf]
    %v1017 = vld [vmem:[#allocation2 + $0xa90] sm:$0xf]
    %v1018 = vld [vmem:[#allocation2 + $0xa94] sm:$0xf]
    %v1019 = vld [vmem:[#allocation2 + $0xa98] sm:$0xf]
    %v1020 = vld [vmem:[#allocation2 + $0xa9c] sm:$0xf]
    %v1021 = vld [vmem:[#allocation2 + $0xaa0] sm:$0xf]
    %v1022 = vld [vmem:[#allocation2 + $0xaa4] sm:$0xf]
    %v1023 = vld [vmem:[#allocation2 + $0xaa8] sm:$0xf]
    %v1024 = vld [vmem:[#allocation2 + $0xaac] sm:$0xf]
    %v1025 = vld [vmem:[#allocation2 + $0xab0] sm:$0xf]
    %v1026 = vld [vmem:[#allocation2 + $0xab4] sm:$0xf]
    %v1027 = vld [vmem:[#allocation2 + $0xab8] sm:$0xf]
    %v1028 = vld [vmem:[#allocation2 + $0xabc] sm:$0xf]
    %v1029 = vld [vmem:[#allocation2 + $0xac0] sm:$0xf]
    %v1030 = vld [vmem:[#allocation2 + $0xac4] sm:$0xf]
    %v1031 = vld [vmem:[#allocation2 + $0xac8] sm:$0xf]
    %v1032 = vld [vmem:[#allocation2 + $0xacc] sm:$0xf]
    %v1033 = vld [vmem:[#allocation2 + $0xad0] sm:$0xf]
    %v1034 = vld [vmem:[#allocation2 + $0xad4] sm:$0xf]
    %v1035 = vld [vmem:[#allocation2 + $0xad8] sm:$0xf]
    %v1036 = vld [vmem:[#allocation2 + $0xadc] sm:$0xf]
    %v1037 = vld [vmem:[#allocation2 + $0xae0] sm:$0xf]
    %v1038 = vld [vmem:[#allocation2 + $0xae4] sm:$0xf]
    %v1039 = vld [vmem:[#allocation2 + $0xae8] sm:$0xf]
    %v1040 = vld [vmem:[#allocation2 + $0xaec] sm:$0xf]
    %v1041 = vld [vmem:[#allocation2 + $0xaf0] sm:$0xf]
    %v1042 = vld [vmem:[#allocation2 + $0xaf4] sm:$0xf]
    %v1043 = vld [vmem:[#allocation2 + $0xaf8] sm:$0xf]
    %v1044 = vld [vmem:[#allocation2 + $0xafc] sm:$0xf]
    %v1045 = vld [vmem:[#allocation2 + $0xb00] sm:$0xf]
    %v1046 = vld [vmem:[#allocation2 + $0xb04] sm:$0xf]
    %v1047 = vld [vmem:[#allocation2 + $0xb08] sm:$0xf]
    %v1048 = vld [vmem:[#allocation2 + $0xb0c] sm:$0xf]
    %v1049 = vld [vmem:[#allocation2 + $0xb10] sm:$0xf]
    %v1050 = vld [vmem:[#allocation2 + $0xb14] sm:$0xf]
    %v1051 = vld [vmem:[#allocation2 + $0xb18] sm:$0xf]
    %v1052 = vld [vmem:[#allocation2 + $0xb1c] sm:$0xf]
    %v1053 = vld [vmem:[#allocation2 + $0xb20] sm:$0xf]
    %v1054 = vld [vmem:[#allocation2 + $0xb24] sm:$0xf]
    %v1055 = vld [vmem:[#allocation2 + $0xb28] sm:$0xf]
    %v1056 = vld [vmem:[#allocation2 + $0xb2c] sm:$0xf]
    %v1057 = vld [vmem:[#allocation2 + $0xb30] sm:$0xf]
    %v1058 = vld [vmem:[#allocation2 + $0xb34] sm:$0xf]
    %v1059 = vld [vmem:[#allocation2 + $0xb38] sm:$0xf]
    %v1060 = vld [vmem:[#allocation2 + $0xb3c] sm:$0xf]
    %v1061 = vld [vmem:[#allocation2 + $0xb40] sm:$0xf]
    %v1062 = vld [vmem:[#allocation2 + $0xb44] sm:$0xf]
    %v1063 = vld [vmem:[#allocation2 + $0xb48] sm:$0xf]
    %v1064 = vld [vmem:[#allocation2 + $0xb4c] sm:$0xf]
    %v1065 = vld [vmem:[#allocation2 + $0xb50] sm:$0xf]
    %v1066 = vld [vmem:[#allocation2 + $0xb54] sm:$0xf]
    %v1067 = vld [vmem:[#allocation2 + $0xb58] sm:$0xf]
    %v1068 = vld [vmem:[#allocation2 + $0xb5c] sm:$0xf]
    %v1069 = vld [vmem:[#allocation2 + $0xb60] sm:$0xf]
    %v1070 = vld [vmem:[#allocation2 + $0xb64] sm:$0xf]
    %v1071 = vld [vmem:[#allocation2 + $0xb68] sm:$0xf]
    %v1072 = vld [vmem:[#allocation2 + $0xb6c] sm:$0xf]
    %v1073 = vld [vmem:[#allocation2 + $0xb70] sm:$0xf]
    %v1074 = vld [vmem:[#allocation2 + $0xb74] sm:$0xf]
    %v1075 = vld [vmem:[#allocation2 + $0xb78] sm:$0xf]
    %v1076 = vld [vmem:[#allocation2 + $0xb7c] sm:$0xf]
    %v1077 = vld [vmem:[#allocation2 + $0xb80] sm:$0xf]
    %v1078 = vld [vmem:[#allocation2 + $0xb84] sm:$0xf]
    %v1079 = vld [vmem:[#allocation2 + $0xb88] sm:$0xf]
    %v1080 = vld [vmem:[#allocation2 + $0xb8c] sm:$0xf]
    %v1081 = vld [vmem:[#allocation2 + $0xb90] sm:$0xf]
    %v1082 = vld [vmem:[#allocation2 + $0xb94] sm:$0xf]
    %v1083 = vld [vmem:[#allocation2 + $0xb98] sm:$0xf]
    %v1084 = vld [vmem:[#allocation2 + $0xb9c] sm:$0xf]
    %v1085 = vld [vmem:[#allocation2 + $0xba0] sm:$0xf]
    %v1086 = vld [vmem:[#allocation2 + $0xba4] sm:$0xf]
    %v1087 = vld [vmem:[#allocation2 + $0xba8] sm:$0xf]
    %v1088 = vld [vmem:[#allocation2 + $0xbac] sm:$0xf]
    %v1089 = vld [vmem:[#allocation2 + $0xbb0] sm:$0xf]
    %v1090 = vld [vmem:[#allocation2 + $0xbb4] sm:$0xf]
    %v1091 = vld [vmem:[#allocation2 + $0xbb8] sm:$0xf]
    %v1092 = vld [vmem:[#allocation2 + $0xbbc] sm:$0xf]
    %v1093 = vld [vmem:[#allocation2 + $0xbc0] sm:$0xf]
    %v1094 = vld [vmem:[#allocation2 + $0xbc4] sm:$0xf]
    %v1095 = vld [vmem:[#allocation2 + $0xbc8] sm:$0xf]
    %v1096 = vld [vmem:[#allocation2 + $0xbcc] sm:$0xf]
    %v1097 = vld [vmem:[#allocation2 + $0xbd0] sm:$0xf]
    %v1098 = vld [vmem:[#allocation2 + $0xbd4] sm:$0xf]
    %v1099 = vld [vmem:[#allocation2 + $0xbd8] sm:$0xf]
    %v1100 = vld [vmem:[#allocation2 + $0xbdc] sm:$0xf]
    %v1101 = vld [vmem:[#allocation2 + $0xbe0] sm:$0xf]
    %v1102 = vld [vmem:[#allocation2 + $0xbe4] sm:$0xf]
    %v1103 = vld [vmem:[#allocation2 + $0xbe8] sm:$0xf]
    %v1104 = vld [vmem:[#allocation2 + $0xbec] sm:$0xf]
    %v1105 = vld [vmem:[#allocation2 + $0xbf0] sm:$0xf]
    %v1106 = vld [vmem:[#allocation2 + $0xbf4] sm:$0xf]
    %v1107 = vld [vmem:[#allocation2 + $0xbf8] sm:$0xf]
    %v1108 = vld [vmem:[#allocation2 + $0xbfc] sm:$0xf]
    %v1109 = vld [vmem:[#allocation2 + $0xc00] sm:$0xf]
    %v1110 = vld [vmem:[#allocation2 + $0xc04] sm:$0xf]
    %v1111 = vld [vmem:[#allocation2 + $0xc08] sm:$0xf]
    %v1112 = vld [vmem:[#allocation2 + $0xc0c] sm:$0xf]
    %v1113 = vld [vmem:[#allocation2 + $0xc10] sm:$0xf]
    %v1114 = vld [vmem:[#allocation2 + $0xc14] sm:$0xf]
    %v1115 = vld [vmem:[#allocation2 + $0xc18] sm:$0xf]
    %v1116 = vld [vmem:[#allocation2 + $0xc1c] sm:$0xf]
    %v1117 = vld [vmem:[#allocation2 + $0xc20] sm:$0xf]
    %v1118 = vld [vmem:[#allocation2 + $0xc24] sm:$0xf]
    %v1119 = vld [vmem:[#allocation2 + $0xc28] sm:$0xf]
    %v1120 = vld [vmem:[#allocation2 + $0xc2c] sm:$0xf]
    %v1121 = vld [vmem:[#allocation2 + $0xc30] sm:$0xf]
    %v1122 = vld [vmem:[#allocation2 + $0xc34] sm:$0xf]
    %v1123 = vld [vmem:[#allocation2 + $0xc38] sm:$0xf]
    %v1124 = vld [vmem:[#allocation2 + $0xc3c] sm:$0xf]
    %v1125 = vld [vmem:[#allocation2 + $0xc40] sm:$0xf]
    %v1126 = vld [vmem:[#allocation2 + $0xc44] sm:$0xf]
    %v1127 = vld [vmem:[#allocation2 + $0xc48] sm:$0xf]
    %v1128 = vld [vmem:[#allocation2 + $0xc4c] sm:$0xf]
    %v1129 = vld [vmem:[#allocation2 + $0xc50] sm:$0xf]
    %v1130 = vld [vmem:[#allocation2 + $0xc54] sm:$0xf]
    %v1131 = vld [vmem:[#allocation2 + $0xc58] sm:$0xf]
    %v1132 = vld [vmem:[#allocation2 + $0xc5c] sm:$0xf]
    %v1133 = vld [vmem:[#allocation2 + $0xc60] sm:$0xf]
    %v1134 = vld [vmem:[#allocation2 + $0xc64] sm:$0xf]
    %v1135 = vld [vmem:[#allocation2 + $0xc68] sm:$0xf]
    %v1136 = vld [vmem:[#allocation2 + $0xc6c] sm:$0xf]
    %v1137 = vld [vmem:[#allocation2 + $0xc70] sm:$0xf]
    %v1138 = vld [vmem:[#allocation2 + $0xc74] sm:$0xf]
    %v1139 = vld [vmem:[#allocation2 + $0xc78] sm:$0xf]
    %v1140 = vld [vmem:[#allocation2 + $0xc7c] sm:$0xf]
    %v1141 = vld [vmem:[#allocation2 + $0xc80] sm:$0xf]
    %v1142 = vld [vmem:[#allocation2 + $0xc84] sm:$0xf]
    %v1143 = vld [vmem:[#allocation2 + $0xc88] sm:$0xf]
    %v1144 = vld [vmem:[#allocation2 + $0xc8c] sm:$0xf]
    %v1145 = vld [vmem:[#allocation2 + $0xc90] sm:$0xf]
    %v1146 = vld [vmem:[#allocation2 + $0xc94] sm:$0xf]
    %v1147 = vld [vmem:[#allocation2 + $0xc98] sm:$0xf]
    %v1148 = vld [vmem:[#allocation2 + $0xc9c] sm:$0xf]
    %v1149 = vld [vmem:[#allocation2 + $0xca0] sm:$0xf]
    %v1150 = vld [vmem:[#allocation2 + $0xca4] sm:$0xf]
    %v1151 = vld [vmem:[#allocation2 + $0xca8] sm:$0xf]
    %v1152 = vld [vmem:[#allocation2 + $0xcac] sm:$0xf]
    %v1153 = vld [vmem:[#allocation2 + $0xcb0] sm:$0xf]
    %v1154 = vld [vmem:[#allocation2 + $0xcb4] sm:$0xf]
    %v1155 = vld [vmem:[#allocation2 + $0xcb8] sm:$0xf]
    %v1156 = vld [vmem:[#allocation2 + $0xcbc] sm:$0xf]
    %v1157 = vld [vmem:[#allocation2 + $0xcc0] sm:$0xf]
    %v1158 = vld [vmem:[#allocation2 + $0xcc4] sm:$0xf]
    %v1159 = vld [vmem:[#allocation2 + $0xcc8] sm:$0xf]
    %v1160 = vld [vmem:[#allocation2 + $0xccc] sm:$0xf]
    %v1161 = vld [vmem:[#allocation2 + $0xcd0] sm:$0xf]
    %v1162 = vld [vmem:[#allocation2 + $0xcd4] sm:$0xf]
    %v1163 = vld [vmem:[#allocation2 + $0xcd8] sm:$0xf]
    %v1164 = vld [vmem:[#allocation2 + $0xcdc] sm:$0xf]
    %v1165 = vld [vmem:[#allocation2 + $0xce0] sm:$0xf]
    %v1166 = vld [vmem:[#allocation2 + $0xce4] sm:$0xf]
    %v1167 = vld [vmem:[#allocation2 + $0xce8] sm:$0xf]
    %v1168 = vld [vmem:[#allocation2 + $0xcec] sm:$0xf]
    %v1169 = vld [vmem:[#allocation2 + $0xcf0] sm:$0xf]
    %v1170 = vld [vmem:[#allocation2 + $0xcf4] sm:$0xf]
    %v1171 = vld [vmem:[#allocation2 + $0xcf8] sm:$0xf]
    %v1172 = vld [vmem:[#allocation2 + $0xcfc] sm:$0xf]
    %v1173 = vld [vmem:[#allocation2 + $0xd00] sm:$0xf]
    %v1174 = vld [vmem:[#allocation2 + $0xd04] sm:$0xf]
    %v1175 = vld [vmem:[#allocation2 + $0xd08] sm:$0xf]
    %v1176 = vld [vmem:[#allocation2 + $0xd0c] sm:$0xf]
    %v1177 = vld [vmem:[#allocation2 + $0xd10] sm:$0xf]
    %v1178 = vld [vmem:[#allocation2 + $0xd14] sm:$0xf]
    %v1179 = vld [vmem:[#allocation2 + $0xd18] sm:$0xf]
    %v1180 = vld [vmem:[#allocation2 + $0xd1c] sm:$0xf]
    %v1181 = vld [vmem:[#allocation2 + $0xd20] sm:$0xf]
    %v1182 = vld [vmem:[#allocation2 + $0xd24] sm:$0xf]
    %v1183 = vld [vmem:[#allocation2 + $0xd28] sm:$0xf]
    %v1184 = vld [vmem:[#allocation2 + $0xd2c] sm:$0xf]
    %v1185 = vld [vmem:[#allocation2 + $0xd30] sm:$0xf]
    %v1186 = vld [vmem:[#allocation2 + $0xd34] sm:$0xf]
    %v1187 = vld [vmem:[#allocation2 + $0xd38] sm:$0xf]
    %v1188 = vld [vmem:[#allocation2 + $0xd3c] sm:$0xf]
    %v1189 = vld [vmem:[#allocation2 + $0xd40] sm:$0xf]
    %v1190 = vld [vmem:[#allocation2 + $0xd44] sm:$0xf]
    %v1191 = vld [vmem:[#allocation2 + $0xd48] sm:$0xf]
    %v1192 = vld [vmem:[#allocation2 + $0xd4c] sm:$0xf]
    %v1193 = vld [vmem:[#allocation2 + $0xd50] sm:$0xf]
    %v1194 = vld [vmem:[#allocation2 + $0xd54] sm:$0xf]
    %v1195 = vld [vmem:[#allocation2 + $0xd58] sm:$0xf]
    %v1196 = vld [vmem:[#allocation2 + $0xd5c] sm:$0xf]
    %v1197 = vld [vmem:[#allocation2 + $0xd60] sm:$0xf]
    %v1198 = vld [vmem:[#allocation2 + $0xd64] sm:$0xf]
    %v1199 = vld [vmem:[#allocation2 + $0xd68] sm:$0xf]
    %v1200 = vld [vmem:[#allocation2 + $0xd6c] sm:$0xf]
    %v1201 = vld [vmem:[#allocation2 + $0xd70] sm:$0xf]
    %v1202 = vld [vmem:[#allocation2 + $0xd74] sm:$0xf]
    %v1203 = vld [vmem:[#allocation2 + $0xd78] sm:$0xf]
    %v1204 = vld [vmem:[#allocation2 + $0xd7c] sm:$0xf]
    %v1205 = vld [vmem:[#allocation2 + $0xd80] sm:$0xf]
    %v1206 = vld [vmem:[#allocation2 + $0xd84] sm:$0xf]
    %v1207 = vld [vmem:[#allocation2 + $0xd88] sm:$0xf]
    %v1208 = vld [vmem:[#allocation2 + $0xd8c] sm:$0xf]
    %v1209 = vld [vmem:[#allocation2 + $0xd90] sm:$0xf]
    %v1210 = vld [vmem:[#allocation2 + $0xd94] sm:$0xf]
    %v1211 = vld [vmem:[#allocation2 + $0xd98] sm:$0xf]
    %v1212 = vld [vmem:[#allocation2 + $0xd9c] sm:$0xf]
    %v1213 = vld [vmem:[#allocation2 + $0xda0] sm:$0xf]
    %v1214 = vld [vmem:[#allocation2 + $0xda4] sm:$0xf]
    %v1215 = vld [vmem:[#allocation2 + $0xda8] sm:$0xf]
    %v1216 = vld [vmem:[#allocation2 + $0xdac] sm:$0xf]
    %v1217 = vld [vmem:[#allocation2 + $0xdb0] sm:$0xf]
    %v1218 = vld [vmem:[#allocation2 + $0xdb4] sm:$0xf]
    %v1219 = vld [vmem:[#allocation2 + $0xdb8] sm:$0xf]
    %v1220 = vld [vmem:[#allocation2 + $0xdbc] sm:$0xf]
    %v1221 = vld [vmem:[#allocation2 + $0xdc0] sm:$0xf]
    %v1222 = vld [vmem:[#allocation2 + $0xdc4] sm:$0xf]
    %v1223 = vld [vmem:[#allocation2 + $0xdc8] sm:$0xf]
    %v1224 = vld [vmem:[#allocation2 + $0xdcc] sm:$0xf]
    %v1225 = vld [vmem:[#allocation2 + $0xdd0] sm:$0xf]
    %v1226 = vld [vmem:[#allocation2 + $0xdd4] sm:$0xf]
    %v1227 = vld [vmem:[#allocation2 + $0xdd8] sm:$0xf]
    %v1228 = vld [vmem:[#allocation2 + $0xddc] sm:$0xf]
    %v1229 = vld [vmem:[#allocation2 + $0xde0] sm:$0xf]
    %v1230 = vld [vmem:[#allocation2 + $0xde4] sm:$0xf]
    %v1231 = vld [vmem:[#allocation2 + $0xde8] sm:$0xf]
    %v1232 = vld [vmem:[#allocation2 + $0xdec] sm:$0xf]
    %v1233 = vld [vmem:[#allocation2 + $0xdf0] sm:$0xf]
    %v1234 = vld [vmem:[#allocation2 + $0xdf4] sm:$0xf]
    %v1235 = vld [vmem:[#allocation2 + $0xdf8] sm:$0xf]
    %v1236 = vld [vmem:[#allocation2 + $0xdfc] sm:$0xf]
    %v1237 = vld [vmem:[#allocation2 + $0xe00] sm:$0xf]
    %v1238 = vld [vmem:[#allocation2 + $0xe04] sm:$0xf]
    %v1239 = vld [vmem:[#allocation2 + $0xe08] sm:$0xf]
    %v1240 = vld [vmem:[#allocation2 + $0xe0c] sm:$0xf]
    %v1241 = vld [vmem:[#allocation2 + $0xe10] sm:$0xf]
    %v1242 = vld [vmem:[#allocation2 + $0xe14] sm:$0xf]
    %v1243 = vld [vmem:[#allocation2 + $0xe18] sm:$0xf]
    %v1244 = vld [vmem:[#allocation2 + $0xe1c] sm:$0xf]
    %v1245 = vld [vmem:[#allocation2 + $0xe20] sm:$0xf]
    %v1246 = vld [vmem:[#allocation2 + $0xe24] sm:$0xf]
    %v1247 = vld [vmem:[#allocation2 + $0xe28] sm:$0xf]
    %v1248 = vld [vmem:[#allocation2 + $0xe2c] sm:$0xf]
    %v1249 = vld [vmem:[#allocation2 + $0xe30] sm:$0xf]
    %v1250 = vld [vmem:[#allocation2 + $0xe34] sm:$0xf]
    %v1251 = vld [vmem:[#allocation2 + $0xe38] sm:$0xf]
    %v1252 = vld [vmem:[#allocation2 + $0xe3c] sm:$0xf]
    %v1253 = vld [vmem:[#allocation2 + $0xe40] sm:$0xf]
    %v1254 = vld [vmem:[#allocation2 + $0xe44] sm:$0xf]
    %v1255 = vld [vmem:[#allocation2 + $0xe48] sm:$0xf]
    %v1256 = vld [vmem:[#allocation2 + $0xe4c] sm:$0xf]
    %v1257 = vld [vmem:[#allocation2 + $0xe50] sm:$0xf]
    %v1258 = vld [vmem:[#allocation2 + $0xe54] sm:$0xf]
    %v1259 = vld [vmem:[#allocation2 + $0xe58] sm:$0xf]
    %v1260 = vld [vmem:[#allocation2 + $0xe5c] sm:$0xf]
    %v1261 = vld [vmem:[#allocation2 + $0xe60] sm:$0xf]
    %v1262 = vld [vmem:[#allocation2 + $0xe64] sm:$0xf]
    %v1263 = vld [vmem:[#allocation2 + $0xe68] sm:$0xf]
    %v1264 = vld [vmem:[#allocation2 + $0xe6c] sm:$0xf]
    %v1265 = vld [vmem:[#allocation2 + $0xe70] sm:$0xf]
    %v1266 = vld [vmem:[#allocation2 + $0xe74] sm:$0xf]
    %v1267 = vld [vmem:[#allocation2 + $0xe78] sm:$0xf]
    %v1268 = vld [vmem:[#allocation2 + $0xe7c] sm:$0xf]
    %v1269 = vld [vmem:[#allocation2 + $0xe80] sm:$0xf]
    %v1270 = vld [vmem:[#allocation2 + $0xe84] sm:$0xf]
    %v1271 = vld [vmem:[#allocation2 + $0xe88] sm:$0xf]
    %v1272 = vld [vmem:[#allocation2 + $0xe8c] sm:$0xf]
    %v1273 = vld [vmem:[#allocation2 + $0xe90] sm:$0xf]
    %v1274 = vld [vmem:[#allocation2 + $0xe94] sm:$0xf]
    %v1275 = vld [vmem:[#allocation2 + $0xe98] sm:$0xf]
    %v1276 = vld [vmem:[#allocation2 + $0xe9c] sm:$0xf]
    %v1277 = vld [vmem:[#allocation2 + $0xea0] sm:$0xf]
    %v1278 = vld [vmem:[#allocation2 + $0xea4] sm:$0xf]
    %v1279 = vld [vmem:[#allocation2 + $0xea8] sm:$0xf]
    %v1280 = vld [vmem:[#allocation2 + $0xeac] sm:$0xf]
    %v1281 = vld [vmem:[#allocation2 + $0xeb0] sm:$0xf]
    %v1282 = vld [vmem:[#allocation2 + $0xeb4] sm:$0xf]
    %v1283 = vld [vmem:[#allocation2 + $0xeb8] sm:$0xf]
    %v1284 = vld [vmem:[#allocation2 + $0xebc] sm:$0xf]
    %v1285 = vld [vmem:[#allocation2 + $0xec0] sm:$0xf]
    %v1286 = vld [vmem:[#allocation2 + $0xec4] sm:$0xf]
    %v1287 = vld [vmem:[#allocation2 + $0xec8] sm:$0xf]
    %v1288 = vld [vmem:[#allocation2 + $0xecc] sm:$0xf]
    %v1289 = vld [vmem:[#allocation2 + $0xed0] sm:$0xf]
    %v1290 = vld [vmem:[#allocation2 + $0xed4] sm:$0xf]
    %v1291 = vld [vmem:[#allocation2 + $0xed8] sm:$0xf]
    %v1292 = vld [vmem:[#allocation2 + $0xedc] sm:$0xf]
    %v1293 = vld [vmem:[#allocation2 + $0xee0] sm:$0xf]
    %v1294 = vld [vmem:[#allocation2 + $0xee4] sm:$0xf]
    %v1295 = vld [vmem:[#allocation2 + $0xee8] sm:$0xf]
    %v1296 = vld [vmem:[#allocation2 + $0xeec] sm:$0xf]
    %v1297 = vld [vmem:[#allocation2 + $0xef0] sm:$0xf]
    %v1298 = vld [vmem:[#allocation2 + $0xef4] sm:$0xf]
    %v1299 = vld [vmem:[#allocation2 + $0xef8] sm:$0xf]
    %v1300 = vld [vmem:[#allocation2 + $0xefc] sm:$0xf]
    %v1301 = vld [vmem:[#allocation2 + $0xf00] sm:$0xf]
    %v1302 = vld [vmem:[#allocation2 + $0xf04] sm:$0xf]
    %v1303 = vld [vmem:[#allocation2 + $0xf08] sm:$0xf]
    %v1304 = vld [vmem:[#allocation2 + $0xf0c] sm:$0xf]
    %v1305 = vld [vmem:[#allocation2 + $0xf10] sm:$0xf]
    %v1306 = vld [vmem:[#allocation2 + $0xf14] sm:$0xf]
    %v1307 = vld [vmem:[#allocation2 + $0xf18] sm:$0xf]
    %v1308 = vld [vmem:[#allocation2 + $0xf1c] sm:$0xf]
    %v1309 = vld [vmem:[#allocation2 + $0xf20] sm:$0xf]
    %v1310 = vld [vmem:[#allocation2 + $0xf24] sm:$0xf]
    %v1311 = vld [vmem:[#allocation2 + $0xf28] sm:$0xf]
    %v1312 = vld [vmem:[#allocation2 + $0xf2c] sm:$0xf]
    %v1313 = vld [vmem:[#allocation2 + $0xf30] sm:$0xf]
    %v1314 = vld [vmem:[#allocation2 + $0xf34] sm:$0xf]
    %v1315 = vld [vmem:[#allocation2 + $0xf38] sm:$0xf]
    %v1316 = vld [vmem:[#allocation2 + $0xf3c] sm:$0xf]
    %v1317 = vld [vmem:[#allocation2 + $0xf40] sm:$0xf]
    %v1318 = vld [vmem:[#allocation2 + $0xf44] sm:$0xf]
    %v1319 = vld [vmem:[#allocation2 + $0xf48] sm:$0xf]
    %v1320 = vld [vmem:[#allocation2 + $0xf4c] sm:$0xf]
    %v1321 = vld [vmem:[#allocation2 + $0xf50] sm:$0xf]
    %v1322 = vld [vmem:[#allocation2 + $0xf54] sm:$0xf]
    %v1323 = vld [vmem:[#allocation2 + $0xf58] sm:$0xf]
    %v1324 = vld [vmem:[#allocation2 + $0xf5c] sm:$0xf]
    %v1325 = vld [vmem:[#allocation2 + $0xf60] sm:$0xf]
    %v1326 = vld [vmem:[#allocation2 + $0xf64] sm:$0xf]
    %v1327 = vld [vmem:[#allocation2 + $0xf68] sm:$0xf]
    %v1328 = vld [vmem:[#allocation2 + $0xf6c] sm:$0xf]
    %v1329 = vld [vmem:[#allocation2 + $0xf70] sm:$0xf]
    %v1330 = vld [vmem:[#allocation2 + $0xf74] sm:$0xf]
    %v1331 = vld [vmem:[#allocation2 + $0xf78] sm:$0xf]
    %v1332 = vld [vmem:[#allocation2 + $0xf7c] sm:$0xf]
    %v1333 = vld [vmem:[#allocation2 + $0xf80] sm:$0xf]
    %v1334 = vld [vmem:[#allocation2 + $0xf84] sm:$0xf]
    %v1335 = vld [vmem:[#allocation2 + $0xf88] sm:$0xf]
    %v1336 = vld [vmem:[#allocation2 + $0xf8c] sm:$0xf]
    %v1337 = vld [vmem:[#allocation2 + $0xf90] sm:$0xf]
    %v1338 = vld [vmem:[#allocation2 + $0xf94] sm:$0xf]
    %v1339 = vld [vmem:[#allocation2 + $0xf98] sm:$0xf]
    %v1340 = vld [vmem:[#allocation2 + $0xf9c] sm:$0xf]
    %v1341 = vld [vmem:[#allocation2 + $0xfa0] sm:$0xf]
    %v1342 = vld [vmem:[#allocation2 + $0xfa4] sm:$0xf]
    %v1343 = vld [vmem:[#allocation2 + $0xfa8] sm:$0xf]
    %v1344 = vld [vmem:[#allocation2 + $0xfac] sm:$0xf]
    %v1345 = vld [vmem:[#allocation2 + $0xfb0] sm:$0xf]
    %v1346 = vld [vmem:[#allocation2 + $0xfb4] sm:$0xf]
    %v1347 = vld [vmem:[#allocation2 + $0xfb8] sm:$0xf]
    %v1348 = vld [vmem:[#allocation2 + $0xfbc] sm:$0xf]
    %v1349 = vld [vmem:[#allocation2 + $0xfc0] sm:$0xf]
    %v1350 = vld [vmem:[#allocation2 + $0xfc4] sm:$0xf]
    %v1351 = vld [vmem:[#allocation2 + $0xfc8] sm:$0xf]
    %v1352 = vld [vmem:[#allocation2 + $0xfcc] sm:$0xf]
    %v1353 = vld [vmem:[#allocation2 + $0xfd0] sm:$0xf]
    %v1354 = vld [vmem:[#allocation2 + $0xfd4] sm:$0xf]
    %v1355 = vld [vmem:[#allocation2 + $0xfd8] sm:$0xf]
    %v1356 = vld [vmem:[#allocation2 + $0xfdc] sm:$0xf]
    %v1357 = vld [vmem:[#allocation2 + $0xfe0] sm:$0xf]
    %v1358 = vld [vmem:[#allocation2 + $0xfe4] sm:$0xf]
    %v1359 = vld [vmem:[#allocation2 + $0xfe8] sm:$0xf]
    %v1360 = vld [vmem:[#allocation2 + $0xfec] sm:$0xf]
    %v1361 = vld [vmem:[#allocation2 + $0xff0] sm:$0xf]
    %v1362 = vld [vmem:[#allocation2 + $0xff4] sm:$0xf]
    %v1363 = vld [vmem:[#allocation2 + $0xff8] sm:$0xf]
    %v1364 = vld [vmem:[#allocation2 + $0xffc] sm:$0xf]
    %v1365 = vld [vmem:[#allocation2 + $0x1000] sm:$0xf]
    %v1366 = vld [vmem:[#allocation2 + $0x1004] sm:$0xf]
    %v1367 = vld [vmem:[#allocation2 + $0x1008] sm:$0xf]
    %v1368 = vld [vmem:[#allocation2 + $0x100c] sm:$0xf]
    %v1369 = vld [vmem:[#allocation2 + $0x1010] sm:$0xf]
    %v1370 = vld [vmem:[#allocation2 + $0x1014] sm:$0xf]
    %v1371 = vld [vmem:[#allocation2 + $0x1018] sm:$0xf]
    %v1372 = vld [vmem:[#allocation2 + $0x101c] sm:$0xf]
    %v1373 = vld [vmem:[#allocation2 + $0x1020] sm:$0xf]
    %v1374 = vld [vmem:[#allocation2 + $0x1024] sm:$0xf]
    %v1375 = vld [vmem:[#allocation2 + $0x1028] sm:$0xf]
    %v1376 = vld [vmem:[#allocation2 + $0x102c] sm:$0xf]
    %v1377 = vld [vmem:[#allocation2 + $0x1030] sm:$0xf]
    %v1378 = vld [vmem:[#allocation2 + $0x1034] sm:$0xf]
    %v1379 = vld [vmem:[#allocation2 + $0x1038] sm:$0xf]
    %v1380 = vld [vmem:[#allocation2 + $0x103c] sm:$0xf]
    %v1381 = vld [vmem:[#allocation2 + $0x1040] sm:$0xf]
    %v1382 = vld [vmem:[#allocation2 + $0x1044] sm:$0xf]
    %v1383 = vld [vmem:[#allocation2 + $0x1048] sm:$0xf]
    %v1384 = vld [vmem:[#allocation2 + $0x104c] sm:$0xf]
    %v1385 = vld [vmem:[#allocation2 + $0x1050] sm:$0xf]
    %v1386 = vld [vmem:[#allocation2 + $0x1054] sm:$0xf]
    %v1387 = vld [vmem:[#allocation2 + $0x1058] sm:$0xf]
    %v1388 = vld [vmem:[#allocation2 + $0x105c] sm:$0xf]
    %v1389 = vld [vmem:[#allocation2 + $0x1060] sm:$0xf]
    %v1390 = vld [vmem:[#allocation2 + $0x1064] sm:$0xf]
    %v1391 = vld [vmem:[#allocation2 + $0x1068] sm:$0xf]
    %v1392 = vld [vmem:[#allocation2 + $0x106c] sm:$0xf]
    %v1393 = vld [vmem:[#allocation2 + $0x1070] sm:$0xf]
    %v1394 = vld [vmem:[#allocation2 + $0x1074] sm:$0xf]
    %v1395 = vld [vmem:[#allocation2 + $0x1078] sm:$0xf]
    %v1396 = vld [vmem:[#allocation2 + $0x107c] sm:$0xf]
    %v1397 = vld [vmem:[#allocation2 + $0x1080] sm:$0xf]
    %v1398 = vld [vmem:[#allocation2 + $0x1084] sm:$0xf]
    %v1399 = vld [vmem:[#allocation2 + $0x1088] sm:$0xf]
    %v1400 = vld [vmem:[#allocation2 + $0x108c] sm:$0xf]
    %v1401 = vld [vmem:[#allocation2 + $0x1090] sm:$0xf]
    %v1402 = vld [vmem:[#allocation2 + $0x1094] sm:$0xf]
    %v1403 = vld [vmem:[#allocation2 + $0x1098] sm:$0xf]
    %v1404 = vld [vmem:[#allocation2 + $0x109c] sm:$0xf]
    %v1405 = vld [vmem:[#allocation2 + $0x10a0] sm:$0xf]
    %v1406 = vld [vmem:[#allocation2 + $0x10a4] sm:$0xf]
    %v1407 = vld [vmem:[#allocation2 + $0x10a8] sm:$0xf]
    %v1408 = vld [vmem:[#allocation2 + $0x10ac] sm:$0xf]
    %v1409 = vld [vmem:[#allocation2 + $0x10b0] sm:$0xf]
    %v1410 = vld [vmem:[#allocation2 + $0x10b4] sm:$0xf]
    %v1411 = vld [vmem:[#allocation2 + $0x10b8] sm:$0xf]
    %v1412 = vld [vmem:[#allocation2 + $0x10bc] sm:$0xf]
    %v1413 = vld [vmem:[#allocation2 + $0x10c0] sm:$0xf]
    %v1414 = vld [vmem:[#allocation2 + $0x10c4] sm:$0xf]
    %v1415 = vld [vmem:[#allocation2 + $0x10c8] sm:$0xf]
    %v1416 = vld [vmem:[#allocation2 + $0x10cc] sm:$0xf]
    %v1417 = vld [vmem:[#allocation2 + $0x10d0] sm:$0xf]
    %v1418 = vld [vmem:[#allocation2 + $0x10d4] sm:$0xf]
    %v1419 = vld [vmem:[#allocation2 + $0x10d8] sm:$0xf]
    %v1420 = vld [vmem:[#allocation2 + $0x10dc] sm:$0xf]
    %v1421 = vld [vmem:[#allocation2 + $0x10e0] sm:$0xf]
    %v1422 = vld [vmem:[#allocation2 + $0x10e4] sm:$0xf]
    %v1423 = vld [vmem:[#allocation2 + $0x10e8] sm:$0xf]
    %v1424 = vld [vmem:[#allocation2 + $0x10ec] sm:$0xf]
    %v1425 = vld [vmem:[#allocation2 + $0x10f0] sm:$0xf]
    %v1426 = vld [vmem:[#allocation2 + $0x10f4] sm:$0xf]
    %v1427 = vld [vmem:[#allocation2 + $0x10f8] sm:$0xf]
    %v1428 = vld [vmem:[#allocation2 + $0x10fc] sm:$0xf]
    %v1429 = vld [vmem:[#allocation2 + $0x1100] sm:$0xf]
    %v1430 = vld [vmem:[#allocation2 + $0x1104] sm:$0xf]
    %v1431 = vld [vmem:[#allocation2 + $0x1108] sm:$0xf]
    %v1432 = vld [vmem:[#allocation2 + $0x110c] sm:$0xf]
    %v1433 = vld [vmem:[#allocation2 + $0x1110] sm:$0xf]
    %v1434 = vld [vmem:[#allocation2 + $0x1114] sm:$0xf]
    %v1435 = vld [vmem:[#allocation2 + $0x1118] sm:$0xf]
    %v1436 = vld [vmem:[#allocation2 + $0x111c] sm:$0xf]
    %v1437 = vld [vmem:[#allocation2 + $0x1120] sm:$0xf]
    %v1438 = vld [vmem:[#allocation2 + $0x1124] sm:$0xf]
    %v1439 = vld [vmem:[#allocation2 + $0x1128] sm:$0xf]
    %v1440 = vld [vmem:[#allocation2 + $0x112c] sm:$0xf]
    %v1441 = vld [vmem:[#allocation2 + $0x1130] sm:$0xf]
    %v1442 = vld [vmem:[#allocation2 + $0x1134] sm:$0xf]
    %v1443 = vld [vmem:[#allocation2 + $0x1138] sm:$0xf]
    %v1444 = vld [vmem:[#allocation2 + $0x113c] sm:$0xf]
    %v1445 = vld [vmem:[#allocation2 + $0x1140] sm:$0xf]
    %v1446 = vld [vmem:[#allocation2 + $0x1144] sm:$0xf]
    %v1447 = vld [vmem:[#allocation2 + $0x1148] sm:$0xf]
    %v1448 = vld [vmem:[#allocation2 + $0x114c] sm:$0xf]
    %v1449 = vld [vmem:[#allocation2 + $0x1150] sm:$0xf]
    %v1450 = vld [vmem:[#allocation2 + $0x1154] sm:$0xf]
    %v1451 = vld [vmem:[#allocation2 + $0x1158] sm:$0xf]
    %v1452 = vld [vmem:[#allocation2 + $0x115c] sm:$0xf]
    %v1453 = vld [vmem:[#allocation2 + $0x1160] sm:$0xf]
    %v1454 = vld [vmem:[#allocation2 + $0x1164] sm:$0xf]
    %v1455 = vld [vmem:[#allocation2 + $0x1168] sm:$0xf]
    %v1456 = vld [vmem:[#allocation2 + $0x116c] sm:$0xf]
    %v1457 = vld [vmem:[#allocation2 + $0x1170] sm:$0xf]
    %v1458 = vld [vmem:[#allocation2 + $0x1174] sm:$0xf]
    %v1459 = vld [vmem:[#allocation2 + $0x1178] sm:$0xf]
    %v1460 = vld [vmem:[#allocation2 + $0x117c] sm:$0xf]
    %v1461 = vld [vmem:[#allocation2 + $0x1180] sm:$0xf]
    %v1462 = vld [vmem:[#allocation2 + $0x1184] sm:$0xf]
    %v1463 = vld [vmem:[#allocation2 + $0x1188] sm:$0xf]
    %v1464 = vld [vmem:[#allocation2 + $0x118c] sm:$0xf]
    %v1465 = vld [vmem:[#allocation2 + $0x1190] sm:$0xf]
    %v1466 = vld [vmem:[#allocation2 + $0x1194] sm:$0xf]
    %v1467 = vld [vmem:[#allocation2 + $0x1198] sm:$0xf]
    %v1468 = vld [vmem:[#allocation2 + $0x119c] sm:$0xf]
    %v1469 = vld [vmem:[#allocation2 + $0x11a0] sm:$0xf]
    %v1470 = vld [vmem:[#allocation2 + $0x11a4] sm:$0xf]
    %v1471 = vld [vmem:[#allocation2 + $0x11a8] sm:$0xf]
    %v1472 = vld [vmem:[#allocation2 + $0x11ac] sm:$0xf]
    %v1473 = vld [vmem:[#allocation2 + $0x11b0] sm:$0xf]
    %v1474 = vld [vmem:[#allocation2 + $0x11b4] sm:$0xf]
    %v1475 = vld [vmem:[#allocation2 + $0x11b8] sm:$0xf]
    %v1476 = vld [vmem:[#allocation2 + $0x11bc] sm:$0xf]
    %v1477 = vld [vmem:[#allocation2 + $0x11c0] sm:$0xf]
    %v1478 = vld [vmem:[#allocation2 + $0x11c4] sm:$0xf]
    %v1479 = vld [vmem:[#allocation2 + $0x11c8] sm:$0xf]
    %v1480 = vld [vmem:[#allocation2 + $0x11cc] sm:$0xf]
    %v1481 = vld [vmem:[#allocation2 + $0x11d0] sm:$0xf]
    %v1482 = vld [vmem:[#allocation2 + $0x11d4] sm:$0xf]
    %v1483 = vld [vmem:[#allocation2 + $0x11d8] sm:$0xf]
    %v1484 = vld [vmem:[#allocation2 + $0x11dc] sm:$0xf]
    %v1485 = vld [vmem:[#allocation2 + $0x11e0] sm:$0xf]
    %v1486 = vld [vmem:[#allocation2 + $0x11e4] sm:$0xf]
    %v1487 = vld [vmem:[#allocation2 + $0x11e8] sm:$0xf]
    %v1488 = vld [vmem:[#allocation2 + $0x11ec] sm:$0xf]
    %v1489 = vld [vmem:[#allocation2 + $0x11f0] sm:$0xf]
    %v1490 = vld [vmem:[#allocation2 + $0x11f4] sm:$0xf]
    %v1491 = vld [vmem:[#allocation2 + $0x11f8] sm:$0xf]
    %v1492 = vld [vmem:[#allocation2 + $0x11fc] sm:$0xf]
    %v1493 = vld [vmem:[#allocation2 + $0x1200] sm:$0xf]
    %v1494 = vld [vmem:[#allocation2 + $0x1204] sm:$0xf]
    %v1495 = vld [vmem:[#allocation2 + $0x1208] sm:$0xf]
    %v1496 = vld [vmem:[#allocation2 + $0x120c] sm:$0xf]
    %v1497 = vld [vmem:[#allocation2 + $0x1210] sm:$0xf]
    %v1498 = vld [vmem:[#allocation2 + $0x1214] sm:$0xf]
    %v1499 = vld [vmem:[#allocation2 + $0x1218] sm:$0xf]
    %v1500 = vld [vmem:[#allocation2 + $0x121c] sm:$0xf]
    %v1501 = vld [vmem:[#allocation2 + $0x1220] sm:$0xf]
    %v1502 = vld [vmem:[#allocation2 + $0x1224] sm:$0xf]
    %v1503 = vld [vmem:[#allocation2 + $0x1228] sm:$0xf]
    %v1504 = vld [vmem:[#allocation2 + $0x122c] sm:$0xf]
    %v1505 = vld [vmem:[#allocation2 + $0x1230] sm:$0xf]
    %v1506 = vld [vmem:[#allocation2 + $0x1234] sm:$0xf]
    %v1507 = vld [vmem:[#allocation2 + $0x1238] sm:$0xf]
    %v1508 = vld [vmem:[#allocation2 + $0x123c] sm:$0xf]
    %v1509 = vld [vmem:[#allocation2 + $0x1240] sm:$0xf]
    %v1510 = vld [vmem:[#allocation2 + $0x1244] sm:$0xf]
    %v1511 = vld [vmem:[#allocation2 + $0x1248] sm:$0xf]
    %v1512 = vld [vmem:[#allocation2 + $0x124c] sm:$0xf]
    %v1513 = vld [vmem:[#allocation2 + $0x1250] sm:$0xf]
    %v1514 = vld [vmem:[#allocation2 + $0x1254] sm:$0xf]
    %v1515 = vld [vmem:[#allocation2 + $0x1258] sm:$0xf]
    %v1516 = vld [vmem:[#allocation2 + $0x125c] sm:$0xf]
    %v1517 = vld [vmem:[#allocation2 + $0x1260] sm:$0xf]
    %v1518 = vld [vmem:[#allocation2 + $0x1264] sm:$0xf]
    %v1519 = vld [vmem:[#allocation2 + $0x1268] sm:$0xf]
    %v1520 = vld [vmem:[#allocation2 + $0x126c] sm:$0xf]
    %v1521 = vld [vmem:[#allocation2 + $0x1270] sm:$0xf]
    %v1522 = vld [vmem:[#allocation2 + $0x1274] sm:$0xf]
    %v1523 = vld [vmem:[#allocation2 + $0x1278] sm:$0xf]
    %v1524 = vld [vmem:[#allocation2 + $0x127c] sm:$0xf]
    %v1525 = vld [vmem:[#allocation2 + $0x1280] sm:$0xf]
    %v1526 = vld [vmem:[#allocation2 + $0x1284] sm:$0xf]
    %v1527 = vld [vmem:[#allocation2 + $0x1288] sm:$0xf]
    %v1528 = vld [vmem:[#allocation2 + $0x128c] sm:$0xf]
    %v1529 = vld [vmem:[#allocation2 + $0x1290] sm:$0xf]
    %v1530 = vld [vmem:[#allocation2 + $0x1294] sm:$0xf]
    %v1531 = vld [vmem:[#allocation2 + $0x1298] sm:$0xf]
    %v1532 = vld [vmem:[#allocation2 + $0x129c] sm:$0xf]
    %v1533 = vld [vmem:[#allocation2 + $0x12a0] sm:$0xf]
    %v1534 = vld [vmem:[#allocation2 + $0x12a4] sm:$0xf]
    %v1535 = vld [vmem:[#allocation2 + $0x12a8] sm:$0xf]
    %v1536 = vld [vmem:[#allocation2 + $0x12ac] sm:$0xf]
    %v1537 = vld [vmem:[#allocation2 + $0x12b0] sm:$0xf]
    %v1538 = vld [vmem:[#allocation2 + $0x12b4] sm:$0xf]
    %v1539 = vld [vmem:[#allocation2 + $0x12b8] sm:$0xf]
    %v1540 = vld [vmem:[#allocation2 + $0x12bc] sm:$0xf]
    %v1541 = vld [vmem:[#allocation2 + $0x12c0] sm:$0xf]
    %v1542 = vld [vmem:[#allocation2 + $0x12c4] sm:$0xf]
    %v1543 = vld [vmem:[#allocation2 + $0x12c8] sm:$0xf]
    %v1544 = vld [vmem:[#allocation2 + $0x12cc] sm:$0xf]
    %v1545 = vld [vmem:[#allocation2 + $0x12d0] sm:$0xf]
    %v1546 = vld [vmem:[#allocation2 + $0x12d4] sm:$0xf]
    %v1547 = vld [vmem:[#allocation2 + $0x12d8] sm:$0xf]
    %v1548 = vld [vmem:[#allocation2 + $0x12dc] sm:$0xf]
    %v1549 = vld [vmem:[#allocation2 + $0x12e0] sm:$0xf]
    %v1550 = vld [vmem:[#allocation2 + $0x12e4] sm:$0xf]
    %v1551 = vld [vmem:[#allocation2 + $0x12e8] sm:$0xf]
    %v1552 = vld [vmem:[#allocation2 + $0x12ec] sm:$0xf]
    %v1553 = vld [vmem:[#allocation2 + $0x12f0] sm:$0xf]
    %v1554 = vld [vmem:[#allocation2 + $0x12f4] sm:$0xf]
    %v1555 = vld [vmem:[#allocation2 + $0x12f8] sm:$0xf]
    %v1556 = vld [vmem:[#allocation2 + $0x12fc] sm:$0xf]
    %v1557 = vld [vmem:[#allocation2 + $0x1300] sm:$0xf]
    %v1558 = vld [vmem:[#allocation2 + $0x1304] sm:$0xf]
    %v1559 = vld [vmem:[#allocation2 + $0x1308] sm:$0xf]
    %v1560 = vld [vmem:[#allocation2 + $0x130c] sm:$0xf]
    %v1561 = vld [vmem:[#allocation2 + $0x1310] sm:$0xf]
    %v1562 = vld [vmem:[#allocation2 + $0x1314] sm:$0xf]
    %v1563 = vld [vmem:[#allocation2 + $0x1318] sm:$0xf]
    %v1564 = vld [vmem:[#allocation2 + $0x131c] sm:$0xf]
    %v1565 = vld [vmem:[#allocation2 + $0x1320] sm:$0xf]
    %v1566 = vld [vmem:[#allocation2 + $0x1324] sm:$0xf]
    %v1567 = vld [vmem:[#allocation2 + $0x1328] sm:$0xf]
    %v1568 = vld [vmem:[#allocation2 + $0x132c] sm:$0xf]
    %v1569 = vld [vmem:[#allocation2 + $0x1330] sm:$0xf]
    %v1570 = vld [vmem:[#allocation2 + $0x1334] sm:$0xf]
    %v1571 = vld [vmem:[#allocation2 + $0x1338] sm:$0xf]
    %v1572 = vld [vmem:[#allocation2 + $0x133c] sm:$0xf]
    %v1573 = vld [vmem:[#allocation2 + $0x1340] sm:$0xf]
    %v1574 = vld [vmem:[#allocation2 + $0x1344] sm:$0xf]
    %v1575 = vld [vmem:[#allocation2 + $0x1348] sm:$0xf]
    %v1576 = vld [vmem:[#allocation2 + $0x134c] sm:$0xf]
    %v1577 = vld [vmem:[#allocation2 + $0x1350] sm:$0xf]
    %v1578 = vld [vmem:[#allocation2 + $0x1354] sm:$0xf]
    %v1579 = vld [vmem:[#allocation2 + $0x1358] sm:$0xf]
    %v1580 = vld [vmem:[#allocation2 + $0x135c] sm:$0xf]
    %v1581 = vld [vmem:[#allocation2 + $0x1360] sm:$0xf]
    %v1582 = vld [vmem:[#allocation2 + $0x1364] sm:$0xf]
    %v1583 = vld [vmem:[#allocation2 + $0x1368] sm:$0xf]
    %v1584 = vld [vmem:[#allocation2 + $0x136c] sm:$0xf]
    %v1585 = vld [vmem:[#allocation2 + $0x1370] sm:$0xf]
    %v1586 = vld [vmem:[#allocation2 + $0x1374] sm:$0xf]
    %v1587 = vld [vmem:[#allocation2 + $0x1378] sm:$0xf]
    %v1588 = vld [vmem:[#allocation2 + $0x137c] sm:$0xf]
    %v1589 = vld [vmem:[#allocation2 + $0x1380] sm:$0xf]
    %v1590 = vld [vmem:[#allocation2 + $0x1384] sm:$0xf]
    %v1591 = vld [vmem:[#allocation2 + $0x1388] sm:$0xf]
    %v1592 = vld [vmem:[#allocation2 + $0x138c] sm:$0xf]
    %v1593 = vld [vmem:[#allocation2 + $0x1390] sm:$0xf]
    %v1594 = vld [vmem:[#allocation2 + $0x1394] sm:$0xf]
    %v1595 = vld [vmem:[#allocation2 + $0x1398] sm:$0xf]
    %v1596 = vld [vmem:[#allocation2 + $0x139c] sm:$0xf]
    %v1597 = vld [vmem:[#allocation2 + $0x13a0] sm:$0xf]
    %v1598 = vld [vmem:[#allocation2 + $0x13a4] sm:$0xf]
    %v1599 = vld [vmem:[#allocation2 + $0x13a8] sm:$0xf]
    %v1600 = vld [vmem:[#allocation2 + $0x13ac] sm:$0xf]
    %v1601 = vld [vmem:[#allocation2 + $0x13b0] sm:$0xf]
    %v1602 = vld [vmem:[#allocation2 + $0x13b4] sm:$0xf]
    %v1603 = vld [vmem:[#allocation2 + $0x13b8] sm:$0xf]
    %v1604 = vld [vmem:[#allocation2 + $0x13bc] sm:$0xf]
    %v1605 = vld [vmem:[#allocation2 + $0x13c0] sm:$0xf]
    %v1606 = vld [vmem:[#allocation2 + $0x13c4] sm:$0xf]
    %v1607 = vld [vmem:[#allocation2 + $0x13c8] sm:$0xf]
    %v1608 = vld [vmem:[#allocation2 + $0x13cc] sm:$0xf]
    %v1609 = vld [vmem:[#allocation2 + $0x13d0] sm:$0xf]
    %v1610 = vld [vmem:[#allocation2 + $0x13d4] sm:$0xf]
    %v1611 = vld [vmem:[#allocation2 + $0x13d8] sm:$0xf]
    %v1612 = vld [vmem:[#allocation2 + $0x13dc] sm:$0xf]
    %v1613 = vld [vmem:[#allocation2 + $0x13e0] sm:$0xf]
    %v1614 = vld [vmem:[#allocation2 + $0x13e4] sm:$0xf]
    %v1615 = vld [vmem:[#allocation2 + $0x13e8] sm:$0xf]
    %v1616 = vld [vmem:[#allocation2 + $0x13ec] sm:$0xf]
    %v1617 = vld [vmem:[#allocation2 + $0x13f0] sm:$0xf]
    %v1618 = vld [vmem:[#allocation2 + $0x13f4] sm:$0xf]
    %v1619 = vld [vmem:[#allocation2 + $0x13f8] sm:$0xf]
    %v1620 = vld [vmem:[#allocation2 + $0x13fc] sm:$0xf]
    %v1621 = vld [vmem:[#allocation2 + $0x1400] sm:$0xf]
    %v1622 = vld [vmem:[#allocation2 + $0x1404] sm:$0xf]
    %v1623 = vld [vmem:[#allocation2 + $0x1408] sm:$0xf]
    %v1624 = vld [vmem:[#allocation2 + $0x140c] sm:$0xf]
    %v1625 = vld [vmem:[#allocation2 + $0x1410] sm:$0xf]
    %v1626 = vld [vmem:[#allocation2 + $0x1414] sm:$0xf]
    %v1627 = vld [vmem:[#allocation2 + $0x1418] sm:$0xf]
    %v1628 = vld [vmem:[#allocation2 + $0x141c] sm:$0xf]
    %v1629 = vld [vmem:[#allocation2 + $0x1420] sm:$0xf]
    %v1630 = vld [vmem:[#allocation2 + $0x1424] sm:$0xf]
    %v1631 = vld [vmem:[#allocation2 + $0x1428] sm:$0xf]
    %v1632 = vld [vmem:[#allocation2 + $0x142c] sm:$0xf]
    %v1633 = vld [vmem:[#allocation2 + $0x1430] sm:$0xf]
    %v1634 = vld [vmem:[#allocation2 + $0x1434] sm:$0xf]
    %v1635 = vld [vmem:[#allocation2 + $0x1438] sm:$0xf]
    %v1636 = vld [vmem:[#allocation2 + $0x143c] sm:$0xf]
    %v1637 = vld [vmem:[#allocation2 + $0x1440] sm:$0xf]
    %v1638 = vld [vmem:[#allocation2 + $0x1444] sm:$0xf]
    %v1639 = vld [vmem:[#allocation2 + $0x1448] sm:$0xf]
    %v1640 = vld [vmem:[#allocation2 + $0x144c] sm:$0xf]
    %v1641 = vld [vmem:[#allocation2 + $0x1450] sm:$0xf]
    %v1642 = vld [vmem:[#allocation2 + $0x1454] sm:$0xf]
    %v1643 = vld [vmem:[#allocation2 + $0x1458] sm:$0xf]
    %v1644 = vld [vmem:[#allocation2 + $0x145c] sm:$0xf]
    %v1645 = vld [vmem:[#allocation2 + $0x1460] sm:$0xf]
    %v1646 = vld [vmem:[#allocation2 + $0x1464] sm:$0xf]
    %v1647 = vld [vmem:[#allocation2 + $0x1468] sm:$0xf]
    %v1648 = vld [vmem:[#allocation2 + $0x146c] sm:$0xf]
    %v1649 = vld [vmem:[#allocation2 + $0x1470] sm:$0xf]
    %v1650 = vld [vmem:[#allocation2 + $0x1474] sm:$0xf]
    %v1651 = vld [vmem:[#allocation2 + $0x1478] sm:$0xf]
    %v1652 = vld [vmem:[#allocation2 + $0x147c] sm:$0xf]
    %v1653 = vld [vmem:[#allocation2 + $0x1480] sm:$0xf]
    %v1654 = vld [vmem:[#allocation2 + $0x1484] sm:$0xf]
    %v1655 = vld [vmem:[#allocation2 + $0x1488] sm:$0xf]
    %v1656 = vld [vmem:[#allocation2 + $0x148c] sm:$0xf]
    %v1657 = vld [vmem:[#allocation2 + $0x1490] sm:$0xf]
    %v1658 = vld [vmem:[#allocation2 + $0x1494] sm:$0xf]
    %v1659 = vld [vmem:[#allocation2 + $0x1498] sm:$0xf]
    %v1660 = vld [vmem:[#allocation2 + $0x149c] sm:$0xf]
    %v1661 = vld [vmem:[#allocation2 + $0x14a0] sm:$0xf]
    %v1662 = vld [vmem:[#allocation2 + $0x14a4] sm:$0xf]
    %v1663 = vld [vmem:[#allocation2 + $0x14a8] sm:$0xf]
    %v1664 = vld [vmem:[#allocation2 + $0x14ac] sm:$0xf]
    %v1665 = vld [vmem:[#allocation2 + $0x14b0] sm:$0xf]
    %v1666 = vld [vmem:[#allocation2 + $0x14b4] sm:$0xf]
    %v1667 = vld [vmem:[#allocation2 + $0x14b8] sm:$0xf]
    %v1668 = vld [vmem:[#allocation2 + $0x14bc] sm:$0xf]
    %v1669 = vld [vmem:[#allocation2 + $0x14c0] sm:$0xf]
    %v1670 = vld [vmem:[#allocation2 + $0x14c4] sm:$0xf]
    %v1671 = vld [vmem:[#allocation2 + $0x14c8] sm:$0xf]
    %v1672 = vld [vmem:[#allocation2 + $0x14cc] sm:$0xf]
    %v1673 = vld [vmem:[#allocation2 + $0x14d0] sm:$0xf]
    %v1674 = vld [vmem:[#allocation2 + $0x14d4] sm:$0xf]
    %v1675 = vld [vmem:[#allocation2 + $0x14d8] sm:$0xf]
    %v1676 = vld [vmem:[#allocation2 + $0x14dc] sm:$0xf]
    %v1677 = vld [vmem:[#allocation2 + $0x14e0] sm:$0xf]
    %v1678 = vld [vmem:[#allocation2 + $0x14e4] sm:$0xf]
    %v1679 = vld [vmem:[#allocation2 + $0x14e8] sm:$0xf]
    %v1680 = vld [vmem:[#allocation2 + $0x14ec] sm:$0xf]
    %v1681 = vld [vmem:[#allocation2 + $0x14f0] sm:$0xf]
    %v1682 = vld [vmem:[#allocation2 + $0x14f4] sm:$0xf]
    %v1683 = vld [vmem:[#allocation2 + $0x14f8] sm:$0xf]
    %v1684 = vld [vmem:[#allocation2 + $0x14fc] sm:$0xf]
    %v1685 = vld [vmem:[#allocation2 + $0x1500] sm:$0xf]
    %v1686 = vld [vmem:[#allocation2 + $0x1504] sm:$0xf]
    %v1687 = vld [vmem:[#allocation2 + $0x1508] sm:$0xf]
    %v1688 = vld [vmem:[#allocation2 + $0x150c] sm:$0xf]
    %v1689 = vld [vmem:[#allocation2 + $0x1510] sm:$0xf]
    %v1690 = vld [vmem:[#allocation2 + $0x1514] sm:$0xf]
    %v1691 = vld [vmem:[#allocation2 + $0x1518] sm:$0xf]
    %v1692 = vld [vmem:[#allocation2 + $0x151c] sm:$0xf]
    %v1693 = vld [vmem:[#allocation2 + $0x1520] sm:$0xf]
    %v1694 = vld [vmem:[#allocation2 + $0x1524] sm:$0xf]
    %v1695 = vld [vmem:[#allocation2 + $0x1528] sm:$0xf]
    %v1696 = vld [vmem:[#allocation2 + $0x152c] sm:$0xf]
    %v1697 = vld [vmem:[#allocation2 + $0x1530] sm:$0xf]
    %v1698 = vld [vmem:[#allocation2 + $0x1534] sm:$0xf]
    %v1699 = vld [vmem:[#allocation2 + $0x1538] sm:$0xf]
    %v1700 = vld [vmem:[#allocation2 + $0x153c] sm:$0xf]
    %v1701 = vld [vmem:[#allocation2 + $0x1540] sm:$0xf]
    %v1702 = vld [vmem:[#allocation2 + $0x1544] sm:$0xf]
    %v1703 = vld [vmem:[#allocation2 + $0x1548] sm:$0xf]
    %v1704 = vld [vmem:[#allocation2 + $0x154c] sm:$0xf]
    %v1705 = vld [vmem:[#allocation2 + $0x1550] sm:$0xf]
    %v1706 = vld [vmem:[#allocation2 + $0x1554] sm:$0xf]
    %v1707 = vld [vmem:[#allocation2 + $0x1558] sm:$0xf]
    %v1708 = vld [vmem:[#allocation2 + $0x155c] sm:$0xf]
    %v1709 = vld [vmem:[#allocation2 + $0x1560] sm:$0xf]
    %v1710 = vld [vmem:[#allocation2 + $0x1564] sm:$0xf]
    %v1711 = vld [vmem:[#allocation2 + $0x1568] sm:$0xf]
    %v1712 = vld [vmem:[#allocation2 + $0x156c] sm:$0xf]
    %v1713 = vld [vmem:[#allocation2 + $0x1570] sm:$0xf]
    %v1714 = vld [vmem:[#allocation2 + $0x1574] sm:$0xf]
    %v1715 = vld [vmem:[#allocation2 + $0x1578] sm:$0xf]
    %v1716 = vld [vmem:[#allocation2 + $0x157c] sm:$0xf]
    %v1717 = vld [vmem:[#allocation2 + $0x1580] sm:$0xf]
    %v1718 = vld [vmem:[#allocation2 + $0x1584] sm:$0xf]
    %v1719 = vld [vmem:[#allocation2 + $0x1588] sm:$0xf]
    %v1720 = vld [vmem:[#allocation2 + $0x158c] sm:$0xf]
    %v1721 = vld [vmem:[#allocation2 + $0x1590] sm:$0xf]
    %v1722 = vld [vmem:[#allocation2 + $0x1594] sm:$0xf]
    %v1723 = vld [vmem:[#allocation2 + $0x1598] sm:$0xf]
    %v1724 = vld [vmem:[#allocation2 + $0x159c] sm:$0xf]
    %v1725 = vld [vmem:[#allocation2 + $0x15a0] sm:$0xf]
    %v1726 = vld [vmem:[#allocation2 + $0x15a4] sm:$0xf]
    %v1727 = vld [vmem:[#allocation2 + $0x15a8] sm:$0xf]
    %v1728 = vld [vmem:[#allocation2 + $0x15ac] sm:$0xf]
    %v1729 = vld [vmem:[#allocation2 + $0x15b0] sm:$0xf]
    %v1730 = vld [vmem:[#allocation2 + $0x15b4] sm:$0xf]
    %v1731 = vld [vmem:[#allocation2 + $0x15b8] sm:$0xf]
    %v1732 = vld [vmem:[#allocation2 + $0x15bc] sm:$0xf]
    %v1733 = vld [vmem:[#allocation2 + $0x15c0] sm:$0xf]
    %v1734 = vld [vmem:[#allocation2 + $0x15c4] sm:$0xf]
    %v1735 = vld [vmem:[#allocation2 + $0x15c8] sm:$0xf]
    %v1736 = vld [vmem:[#allocation2 + $0x15cc] sm:$0xf]
    %v1737 = vld [vmem:[#allocation2 + $0x15d0] sm:$0xf]
    %v1738 = vld [vmem:[#allocation2 + $0x15d4] sm:$0xf]
    %v1739 = vld [vmem:[#allocation2 + $0x15d8] sm:$0xf]
    %v1740 = vld [vmem:[#allocation2 + $0x15dc] sm:$0xf]
    %v1741 = vld [vmem:[#allocation2 + $0x15e0] sm:$0xf]
    %v1742 = vld [vmem:[#allocation2 + $0x15e4] sm:$0xf]
    %v1743 = vld [vmem:[#allocation2 + $0x15e8] sm:$0xf]
    %v1744 = vld [vmem:[#allocation2 + $0x15ec] sm:$0xf]
    %v1745 = vld [vmem:[#allocation2 + $0x15f0] sm:$0xf]
    %v1746 = vld [vmem:[#allocation2 + $0x15f4] sm:$0xf]
    %v1747 = vld [vmem:[#allocation2 + $0x15f8] sm:$0xf]
    %v1748 = vld [vmem:[#allocation2 + $0x15fc] sm:$0xf]
    %v1749 = vld [vmem:[#allocation2 + $0x1600] sm:$0xf]
    %v1750 = vld [vmem:[#allocation2 + $0x1604] sm:$0xf]
    %v1751 = vld [vmem:[#allocation2 + $0x1608] sm:$0xf]
    %v1752 = vld [vmem:[#allocation2 + $0x160c] sm:$0xf]
    %v1753 = vld [vmem:[#allocation2 + $0x1610] sm:$0xf]
    %v1754 = vld [vmem:[#allocation2 + $0x1614] sm:$0xf]
    %v1755 = vld [vmem:[#allocation2 + $0x1618] sm:$0xf]
    %v1756 = vld [vmem:[#allocation2 + $0x161c] sm:$0xf]
    %v1757 = vld [vmem:[#allocation2 + $0x1620] sm:$0xf]
    %v1758 = vld [vmem:[#allocation2 + $0x1624] sm:$0xf]
    %v1759 = vld [vmem:[#allocation2 + $0x1628] sm:$0xf]
    %v1760 = vld [vmem:[#allocation2 + $0x162c] sm:$0xf]
    %v1761 = vld [vmem:[#allocation2 + $0x1630] sm:$0xf]
    %v1762 = vld [vmem:[#allocation2 + $0x1634] sm:$0xf]
    %v1763 = vld [vmem:[#allocation2 + $0x1638] sm:$0xf]
    %v1764 = vld [vmem:[#allocation2 + $0x163c] sm:$0xf]
    %v1765 = vld [vmem:[#allocation2 + $0x1640] sm:$0xf]
    %v1766 = vld [vmem:[#allocation2 + $0x1644] sm:$0xf]
    %v1767 = vld [vmem:[#allocation2 + $0x1648] sm:$0xf]
    %v1768 = vld [vmem:[#allocation2 + $0x164c] sm:$0xf]
    %v1769 = vld [vmem:[#allocation2 + $0x1650] sm:$0xf]
    %v1770 = vld [vmem:[#allocation2 + $0x1654] sm:$0xf]
    %v1771 = vld [vmem:[#allocation2 + $0x1658] sm:$0xf]
    %v1772 = vld [vmem:[#allocation2 + $0x165c] sm:$0xf]
    %v1773 = vld [vmem:[#allocation2 + $0x1660] sm:$0xf]
    %v1774 = vld [vmem:[#allocation2 + $0x1664] sm:$0xf]
    %v1775 = vld [vmem:[#allocation2 + $0x1668] sm:$0xf]
    %v1776 = vld [vmem:[#allocation2 + $0x166c] sm:$0xf]
    %v1777 = vld [vmem:[#allocation2 + $0x1670] sm:$0xf]
    %v1778 = vld [vmem:[#allocation2 + $0x1674] sm:$0xf]
    %v1779 = vld [vmem:[#allocation2 + $0x1678] sm:$0xf]
    %v1780 = vld [vmem:[#allocation2 + $0x167c] sm:$0xf]
    %v1781 = vld [vmem:[#allocation2 + $0x1680] sm:$0xf]
    %v1782 = vld [vmem:[#allocation2 + $0x1684] sm:$0xf]
    %v1783 = vld [vmem:[#allocation2 + $0x1688] sm:$0xf]
    %v1784 = vld [vmem:[#allocation2 + $0x168c] sm:$0xf]
    %v1785 = vld [vmem:[#allocation2 + $0x1690] sm:$0xf]
    %v1786 = vld [vmem:[#allocation2 + $0x1694] sm:$0xf]
    %v1787 = vld [vmem:[#allocation2 + $0x1698] sm:$0xf]
    %v1788 = vld [vmem:[#allocation2 + $0x169c] sm:$0xf]
    %v1789 = vld [vmem:[#allocation2 + $0x16a0] sm:$0xf]
    %v1790 = vld [vmem:[#allocation2 + $0x16a4] sm:$0xf]
    %v1791 = vld [vmem:[#allocation2 + $0x16a8] sm:$0xf]
    %v1792 = vld [vmem:[#allocation2 + $0x16ac] sm:$0xf]
    %v1793 = vld [vmem:[#allocation2 + $0x16b0] sm:$0xf]
    %v1794 = vld [vmem:[#allocation2 + $0x16b4] sm:$0xf]
    %v1795 = vld [vmem:[#allocation2 + $0x16b8] sm:$0xf]
    %v1796 = vld [vmem:[#allocation2 + $0x16bc] sm:$0xf]
    %v1797 = vld [vmem:[#allocation2 + $0x16c0] sm:$0xf]
    %v1798 = vld [vmem:[#allocation2 + $0x16c4] sm:$0xf]
    %v1799 = vld [vmem:[#allocation2 + $0x16c8] sm:$0xf]
    %v1800 = vld [vmem:[#allocation2 + $0x16cc] sm:$0xf]
    %v1801 = vld [vmem:[#allocation2 + $0x16d0] sm:$0xf]
    %v1802 = vld [vmem:[#allocation2 + $0x16d4] sm:$0xf]
    %v1803 = vld [vmem:[#allocation2 + $0x16d8] sm:$0xf]
    %v1804 = vld [vmem:[#allocation2 + $0x16dc] sm:$0xf]
    %v1805 = vld [vmem:[#allocation2 + $0x16e0] sm:$0xf]
    %v1806 = vld [vmem:[#allocation2 + $0x16e4] sm:$0xf]
    %v1807 = vld [vmem:[#allocation2 + $0x16e8] sm:$0xf]
    %v1808 = vld [vmem:[#allocation2 + $0x16ec] sm:$0xf]
    %v1809 = vld [vmem:[#allocation2 + $0x16f0] sm:$0xf]
    %v1810 = vld [vmem:[#allocation2 + $0x16f4] sm:$0xf]
    %v1811 = vld [vmem:[#allocation2 + $0x16f8] sm:$0xf]
    %v1812 = vld [vmem:[#allocation2 + $0x16fc] sm:$0xf]
    %v1813 = vld [vmem:[#allocation2 + $0x1700] sm:$0xf]
    %v1814 = vld [vmem:[#allocation2 + $0x1704] sm:$0xf]
    %v1815 = vld [vmem:[#allocation2 + $0x1708] sm:$0xf]
    %v1816 = vld [vmem:[#allocation2 + $0x170c] sm:$0xf]
    %v1817 = vld [vmem:[#allocation2 + $0x1710] sm:$0xf]
    %v1818 = vld [vmem:[#allocation2 + $0x1714] sm:$0xf]
    %v1819 = vld [vmem:[#allocation2 + $0x1718] sm:$0xf]
    %v1820 = vld [vmem:[#allocation2 + $0x171c] sm:$0xf]
    %v1821 = vld [vmem:[#allocation2 + $0x1720] sm:$0xf]
    %v1822 = vld [vmem:[#allocation2 + $0x1724] sm:$0xf]
    %v1823 = vld [vmem:[#allocation2 + $0x1728] sm:$0xf]
    %v1824 = vld [vmem:[#allocation2 + $0x172c] sm:$0xf]
    %v1825 = vld [vmem:[#allocation2 + $0x1730] sm:$0xf]
    %v1826 = vld [vmem:[#allocation2 + $0x1734] sm:$0xf]
    %v1827 = vld [vmem:[#allocation2 + $0x1738] sm:$0xf]
    %v1828 = vld [vmem:[#allocation2 + $0x173c] sm:$0xf]
    %v1829 = vld [vmem:[#allocation2 + $0x1740] sm:$0xf]
    %v1830 = vld [vmem:[#allocation2 + $0x1744] sm:$0xf]
    %v1831 = vld [vmem:[#allocation2 + $0x1748] sm:$0xf]
    %v1832 = vld [vmem:[#allocation2 + $0x174c] sm:$0xf]
    %v1833 = vld [vmem:[#allocation2 + $0x1750] sm:$0xf]
    %v1834 = vld [vmem:[#allocation2 + $0x1754] sm:$0xf]
    %v1835 = vld [vmem:[#allocation2 + $0x1758] sm:$0xf]
    %v1836 = vld [vmem:[#allocation2 + $0x175c] sm:$0xf]
    %v1837 = vld [vmem:[#allocation2 + $0x1760] sm:$0xf]
    %v1838 = vld [vmem:[#allocation2 + $0x1764] sm:$0xf]
    %v1839 = vld [vmem:[#allocation2 + $0x1768] sm:$0xf]
    %v1840 = vld [vmem:[#allocation2 + $0x176c] sm:$0xf]
    %v1841 = vld [vmem:[#allocation2 + $0x1770] sm:$0xf]
    %v1842 = vld [vmem:[#allocation2 + $0x1774] sm:$0xf]
    %v1843 = vld [vmem:[#allocation2 + $0x1778] sm:$0xf]
    %v1844 = vld [vmem:[#allocation2 + $0x177c] sm:$0xf]
    %v1845 = vld [vmem:[#allocation2 + $0x1780] sm:$0xf]
    %v1846 = vld [vmem:[#allocation2 + $0x1784] sm:$0xf]
    %v1847 = vld [vmem:[#allocation2 + $0x1788] sm:$0xf]
    %v1848 = vld [vmem:[#allocation2 + $0x178c] sm:$0xf]
    %v1849 = vld [vmem:[#allocation2 + $0x1790] sm:$0xf]
    %v1850 = vld [vmem:[#allocation2 + $0x1794] sm:$0xf]
    %v1851 = vld [vmem:[#allocation2 + $0x1798] sm:$0xf]
    %v1852 = vld [vmem:[#allocation2 + $0x179c] sm:$0xf]
    %v1853 = vld [vmem:[#allocation2 + $0x17a0] sm:$0xf]
    %v1854 = vld [vmem:[#allocation2 + $0x17a4] sm:$0xf]
    %v1855 = vld [vmem:[#allocation2 + $0x17a8] sm:$0xf]
    %v1856 = vld [vmem:[#allocation2 + $0x17ac] sm:$0xf]
    %v1857 = vld [vmem:[#allocation2 + $0x17b0] sm:$0xf]
    %v1858 = vld [vmem:[#allocation2 + $0x17b4] sm:$0xf]
    %v1859 = vld [vmem:[#allocation2 + $0x17b8] sm:$0xf]
    %v1860 = vld [vmem:[#allocation2 + $0x17bc] sm:$0xf]
    %v1861 = vld [vmem:[#allocation2 + $0x17c0] sm:$0xf]
    %v1862 = vld [vmem:[#allocation2 + $0x17c4] sm:$0xf]
    %v1863 = vld [vmem:[#allocation2 + $0x17c8] sm:$0xf]
    %v1864 = vld [vmem:[#allocation2 + $0x17cc] sm:$0xf]
    %v1865 = vld [vmem:[#allocation2 + $0x17d0] sm:$0xf]
    %v1866 = vld [vmem:[#allocation2 + $0x17d4] sm:$0xf]
    %v1867 = vld [vmem:[#allocation2 + $0x17d8] sm:$0xf]
    %v1868 = vld [vmem:[#allocation2 + $0x17dc] sm:$0xf]
    %v1869 = vld [vmem:[#allocation2 + $0x17e0] sm:$0xf]
    %v1870 = vld [vmem:[#allocation2 + $0x17e4] sm:$0xf]
    %v1871 = vld [vmem:[#allocation2 + $0x17e8] sm:$0xf]
    %v1872 = vld [vmem:[#allocation2 + $0x17ec] sm:$0xf]
    %v1873 = vld [vmem:[#allocation2 + $0x17f0] sm:$0xf]
    %v1874 = vld [vmem:[#allocation2 + $0x17f4] sm:$0xf]
    %v1875 = vld [vmem:[#allocation2 + $0x17f8] sm:$0xf]
    %v1876 = vld [vmem:[#allocation2 + $0x17fc] sm:$0xf]
    %v1877 = vld [vmem:[#allocation2 + $0x1800] sm:$0xf]
    %v1878 = vld [vmem:[#allocation2 + $0x1804] sm:$0xf]
    %v1879 = vld [vmem:[#allocation2 + $0x1808] sm:$0xf]
    %v1880 = vld [vmem:[#allocation2 + $0x180c] sm:$0xf]
    %v1881 = vld [vmem:[#allocation2 + $0x1810] sm:$0xf]
    %v1882 = vld [vmem:[#allocation2 + $0x1814] sm:$0xf]
    %v1883 = vld [vmem:[#allocation2 + $0x1818] sm:$0xf]
    %v1884 = vld [vmem:[#allocation2 + $0x181c] sm:$0xf]
    %v1885 = vld [vmem:[#allocation2 + $0x1820] sm:$0xf]
    %v1886 = vld [vmem:[#allocation2 + $0x1824] sm:$0xf]
    %v1887 = vld [vmem:[#allocation2 + $0x1828] sm:$0xf]
    %v1888 = vld [vmem:[#allocation2 + $0x182c] sm:$0xf]
    %v1889 = vld [vmem:[#allocation2 + $0x1830] sm:$0xf]
    %v1890 = vld [vmem:[#allocation2 + $0x1834] sm:$0xf]
    %v1891 = vld [vmem:[#allocation2 + $0x1838] sm:$0xf]
    %v1892 = vld [vmem:[#allocation2 + $0x183c] sm:$0xf]
    %v1893 = vld [vmem:[#allocation2 + $0x1840] sm:$0xf]
    %v1894 = vld [vmem:[#allocation2 + $0x1844] sm:$0xf]
    %v1895 = vld [vmem:[#allocation2 + $0x1848] sm:$0xf]
    %v1896 = vld [vmem:[#allocation2 + $0x184c] sm:$0xf]
    %v1897 = vld [vmem:[#allocation2 + $0x1850] sm:$0xf]
    %v1898 = vld [vmem:[#allocation2 + $0x1854] sm:$0xf]
    %v1899 = vld [vmem:[#allocation2 + $0x1858] sm:$0xf]
    %v1900 = vld [vmem:[#allocation2 + $0x185c] sm:$0xf]
    %v1901 = vld [vmem:[#allocation2 + $0x1860] sm:$0xf]
    %v1902 = vld [vmem:[#allocation2 + $0x1864] sm:$0xf]
    %v1903 = vld [vmem:[#allocation2 + $0x1868] sm:$0xf]
    %v1904 = vld [vmem:[#allocation2 + $0x186c] sm:$0xf]
    %v1905 = vld [vmem:[#allocation2 + $0x1870] sm:$0xf]
    %v1906 = vld [vmem:[#allocation2 + $0x1874] sm:$0xf]
    %v1907 = vld [vmem:[#allocation2 + $0x1878] sm:$0xf]
    %v1908 = vld [vmem:[#allocation2 + $0x187c] sm:$0xf]
    %v1909 = vld [vmem:[#allocation2 + $0x1880] sm:$0xf]
    %v1910 = vld [vmem:[#allocation2 + $0x1884] sm:$0xf]
    %v1911 = vld [vmem:[#allocation2 + $0x1888] sm:$0xf]
    %v1912 = vld [vmem:[#allocation2 + $0x188c] sm:$0xf]
    %v1913 = vld [vmem:[#allocation2 + $0x1890] sm:$0xf]
    %v1914 = vld [vmem:[#allocation2 + $0x1894] sm:$0xf]
    %v1915 = vld [vmem:[#allocation2 + $0x1898] sm:$0xf]
    %v1916 = vld [vmem:[#allocation2 + $0x189c] sm:$0xf]
    %v1917 = vld [vmem:[#allocation2 + $0x18a0] sm:$0xf]
    %v1918 = vld [vmem:[#allocation2 + $0x18a4] sm:$0xf]
    %v1919 = vld [vmem:[#allocation2 + $0x18a8] sm:$0xf]
    %v1920 = vld [vmem:[#allocation2 + $0x18ac] sm:$0xf]
    %v1921 = vld [vmem:[#allocation2 + $0x18b0] sm:$0xf]
    %v1922 = vld [vmem:[#allocation2 + $0x18b4] sm:$0xf]
    %v1923 = vld [vmem:[#allocation2 + $0x18b8] sm:$0xf]
    %v1924 = vld [vmem:[#allocation2 + $0x18bc] sm:$0xf]
    %v1925 = vld [vmem:[#allocation2 + $0x18c0] sm:$0xf]
    %v1926 = vld [vmem:[#allocation2 + $0x18c4] sm:$0xf]
    %v1927 = vld [vmem:[#allocation2 + $0x18c8] sm:$0xf]
    %v1928 = vld [vmem:[#allocation2 + $0x18cc] sm:$0xf]
    %v1929 = vld [vmem:[#allocation2 + $0x18d0] sm:$0xf]
    %v1930 = vld [vmem:[#allocation2 + $0x18d4] sm:$0xf]
    %v1931 = vld [vmem:[#allocation2 + $0x18d8] sm:$0xf]
    %v1932 = vld [vmem:[#allocation2 + $0x18dc] sm:$0xf]
    %v1933 = vld [vmem:[#allocation2 + $0x18e0] sm:$0xf]
    %v1934 = vld [vmem:[#allocation2 + $0x18e4] sm:$0xf]
    %v1935 = vld [vmem:[#allocation2 + $0x18e8] sm:$0xf]
    %v1936 = vld [vmem:[#allocation2 + $0x18ec] sm:$0xf]
    %v1937 = vld [vmem:[#allocation2 + $0x18f0] sm:$0xf]
    %v1938 = vld [vmem:[#allocation2 + $0x18f4] sm:$0xf]
    %v1939 = vld [vmem:[#allocation2 + $0x18f8] sm:$0xf]
    %v1940 = vld [vmem:[#allocation2 + $0x18fc] sm:$0xf]
    %v1941 = vld [vmem:[#allocation2 + $0x1900] sm:$0xf]
    %v1942 = vld [vmem:[#allocation2 + $0x1904] sm:$0xf]
    %v1943 = vld [vmem:[#allocation2 + $0x1908] sm:$0xf]
    %v1944 = vld [vmem:[#allocation2 + $0x190c] sm:$0xf]
    %v1945 = vld [vmem:[#allocation2 + $0x1910] sm:$0xf]
    %v1946 = vld [vmem:[#allocation2 + $0x1914] sm:$0xf]
    %v1947 = vld [vmem:[#allocation2 + $0x1918] sm:$0xf]
    %v1948 = vld [vmem:[#allocation2 + $0x191c] sm:$0xf]
    %v1949 = vld [vmem:[#allocation2 + $0x1920] sm:$0xf]
    %v1950 = vld [vmem:[#allocation2 + $0x1924] sm:$0xf]
    %v1951 = vld [vmem:[#allocation2 + $0x1928] sm:$0xf]
    %v1952 = vld [vmem:[#allocation2 + $0x192c] sm:$0xf]
    %v1953 = vld [vmem:[#allocation2 + $0x1930] sm:$0xf]
    %v1954 = vld [vmem:[#allocation2 + $0x1934] sm:$0xf]
    %v1955 = vld [vmem:[#allocation2 + $0x1938] sm:$0xf]
    %v1956 = vld [vmem:[#allocation2 + $0x193c] sm:$0xf]
    %v1957 = vld [vmem:[#allocation2 + $0x1940] sm:$0xf]
    %v1958 = vld [vmem:[#allocation2 + $0x1944] sm:$0xf]
    %v1959 = vld [vmem:[#allocation2 + $0x1948] sm:$0xf]
    %v1960 = vld [vmem:[#allocation2 + $0x194c] sm:$0xf]
    %v1961 = vld [vmem:[#allocation2 + $0x1950] sm:$0xf]
    %v1962 = vld [vmem:[#allocation2 + $0x1954] sm:$0xf]
    %v1963 = vld [vmem:[#allocation2 + $0x1958] sm:$0xf]
    %v1964 = vld [vmem:[#allocation2 + $0x195c] sm:$0xf]
    %v1965 = vld [vmem:[#allocation2 + $0x1960] sm:$0xf]
    %v1966 = vld [vmem:[#allocation2 + $0x1964] sm:$0xf]
    %v1967 = vld [vmem:[#allocation2 + $0x1968] sm:$0xf]
    %v1968 = vld [vmem:[#allocation2 + $0x196c] sm:$0xf]
    %v1969 = vld [vmem:[#allocation2 + $0x1970] sm:$0xf]
    %v1970 = vld [vmem:[#allocation2 + $0x1974] sm:$0xf]
    %v1971 = vld [vmem:[#allocation2 + $0x1978] sm:$0xf]
    %v1972 = vld [vmem:[#allocation2 + $0x197c] sm:$0xf]
    %v1973 = vld [vmem:[#allocation2 + $0x1980] sm:$0xf]
    %v1974 = vld [vmem:[#allocation2 + $0x1984] sm:$0xf]
    %v1975 = vld [vmem:[#allocation2 + $0x1988] sm:$0xf]
    %v1976 = vld [vmem:[#allocation2 + $0x198c] sm:$0xf]
    %v1977 = vld [vmem:[#allocation2 + $0x1990] sm:$0xf]
    %v1978 = vld [vmem:[#allocation2 + $0x1994] sm:$0xf]
    %v1979 = vld [vmem:[#allocation2 + $0x1998] sm:$0xf]
    %v1980 = vld [vmem:[#allocation2 + $0x199c] sm:$0xf]
    %v1981 = vld [vmem:[#allocation2 + $0x19a0] sm:$0xf]
    %v1982 = vld [vmem:[#allocation2 + $0x19a4] sm:$0xf]
    %v1983 = vld [vmem:[#allocation2 + $0x19a8] sm:$0xf]
    %v1984 = vld [vmem:[#allocation2 + $0x19ac] sm:$0xf]
    %v1985 = vld [vmem:[#allocation2 + $0x19b0] sm:$0xf]
    %v1986 = vld [vmem:[#allocation2 + $0x19b4] sm:$0xf]
    %v1987 = vld [vmem:[#allocation2 + $0x19b8] sm:$0xf]
    %v1988 = vld [vmem:[#allocation2 + $0x19bc] sm:$0xf]
    %v1989 = vld [vmem:[#allocation2 + $0x19c0] sm:$0xf]
    %v1990 = vld [vmem:[#allocation2 + $0x19c4] sm:$0xf]
    %v1991 = vld [vmem:[#allocation2 + $0x19c8] sm:$0xf]
    %v1992 = vld [vmem:[#allocation2 + $0x19cc] sm:$0xf]
    %v1993 = vld [vmem:[#allocation2 + $0x19d0] sm:$0xf]
    %v1994 = vld [vmem:[#allocation2 + $0x19d4] sm:$0xf]
    %v1995 = vld [vmem:[#allocation2 + $0x19d8] sm:$0xf]
    %v1996 = vld [vmem:[#allocation2 + $0x19dc] sm:$0xf]
    %v1997 = vld [vmem:[#allocation2 + $0x19e0] sm:$0xf]
    %v1998 = vld [vmem:[#allocation2 + $0x19e4] sm:$0xf]
    %v1999 = vld [vmem:[#allocation2 + $0x19e8] sm:$0xf]
    %v2000 = vld [vmem:[#allocation2 + $0x19ec] sm:$0xf]
    %v2001 = vld [vmem:[#allocation2 + $0x19f0] sm:$0xf]
    %v2002 = vld [vmem:[#allocation2 + $0x19f4] sm:$0xf]
    %v2003 = vld [vmem:[#allocation2 + $0x19f8] sm:$0xf]
    %v2004 = vld [vmem:[#allocation2 + $0x19fc] sm:$0xf]
    %v2005 = vld [vmem:[#allocation2 + $0x1a00] sm:$0xf]
    %v2006 = vld [vmem:[#allocation2 + $0x1a04] sm:$0xf]
    %v2007 = vld [vmem:[#allocation2 + $0x1a08] sm:$0xf]
    %v2008 = vld [vmem:[#allocation2 + $0x1a0c] sm:$0xf]
    %v2009 = vld [vmem:[#allocation2 + $0x1a10] sm:$0xf]
    %v2010 = vld [vmem:[#allocation2 + $0x1a14] sm:$0xf]
    %v2011 = vld [vmem:[#allocation2 + $0x1a18] sm:$0xf]
    %v2012 = vld [vmem:[#allocation2 + $0x1a1c] sm:$0xf]
    %v2013 = vld [vmem:[#allocation2 + $0x1a20] sm:$0xf]
    %v2014 = vld [vmem:[#allocation2 + $0x1a24] sm:$0xf]
    %v2015 = vld [vmem:[#allocation2 + $0x1a28] sm:$0xf]
    %v2016 = vld [vmem:[#allocation2 + $0x1a2c] sm:$0xf]
    %v2017 = vld [vmem:[#allocation2 + $0x1a30] sm:$0xf]
    %v2018 = vld [vmem:[#allocation2 + $0x1a34] sm:$0xf]
    %v2019 = vld [vmem:[#allocation2 + $0x1a38] sm:$0xf]
    %v2020 = vld [vmem:[#allocation2 + $0x1a3c] sm:$0xf]
    %v2021 = vld [vmem:[#allocation2 + $0x1a40] sm:$0xf]
    %v2022 = vld [vmem:[#allocation2 + $0x1a44] sm:$0xf]
    %v2023 = vld [vmem:[#allocation2 + $0x1a48] sm:$0xf]
    %v2024 = vld [vmem:[#allocation2 + $0x1a4c] sm:$0xf]
    %v2025 = vld [vmem:[#allocation2 + $0x1a50] sm:$0xf]
    %v2026 = vld [vmem:[#allocation2 + $0x1a54] sm:$0xf]
    %v2027 = vld [vmem:[#allocation2 + $0x1a58] sm:$0xf]
    %v2028 = vld [vmem:[#allocation2 + $0x1a5c] sm:$0xf]
    %v2029 = vld [vmem:[#allocation2 + $0x1a60] sm:$0xf]
    %v2030 = vld [vmem:[#allocation2 + $0x1a64] sm:$0xf]
    %v2031 = vld [vmem:[#allocation2 + $0x1a68] sm:$0xf]
    %v2032 = vld [vmem:[#allocation2 + $0x1a6c] sm:$0xf]
    %v2033 = vld [vmem:[#allocation2 + $0x1a70] sm:$0xf]
    %v2034 = vld [vmem:[#allocation2 + $0x1a74] sm:$0xf]
    %v2035 = vld [vmem:[#allocation2 + $0x1a78] sm:$0xf]
    %v2036 = vld [vmem:[#allocation2 + $0x1a7c] sm:$0xf]
    %v2037 = vld [vmem:[#allocation2 + $0x1a80] sm:$0xf]
    %v2038 = vld [vmem:[#allocation2 + $0x1a84] sm:$0xf]
    %v2039 = vld [vmem:[#allocation2 + $0x1a88] sm:$0xf]
    %v2040 = vld [vmem:[#allocation2 + $0x1a8c] sm:$0xf]
    %v2041 = vld [vmem:[#allocation2 + $0x1a90] sm:$0xf]
    %v2042 = vld [vmem:[#allocation2 + $0x1a94] sm:$0xf]
    %v2043 = vld [vmem:[#allocation2 + $0x1a98] sm:$0xf]
    %v2044 = vld [vmem:[#allocation2 + $0x1a9c] sm:$0xf]
    %v2045 = vld [vmem:[#allocation2 + $0x1aa0] sm:$0xf]
    %v2046 = vld [vmem:[#allocation2 + $0x1aa4] sm:$0xf]
    %v2047 = vld [vmem:[#allocation2 + $0x1aa8] sm:$0xf]
    %v2048 = vld [vmem:[#allocation2 + $0x1aac] sm:$0xf]
    %v2049 = vld [vmem:[#allocation2 + $0x1ab0] sm:$0xf]
    %v2050 = vld [vmem:[#allocation2 + $0x1ab4] sm:$0xf]
    %v2051 = vld [vmem:[#allocation2 + $0x1ab8] sm:$0xf]
    %v2052 = vld [vmem:[#allocation2 + $0x1abc] sm:$0xf]
    %v2053 = vld [vmem:[#allocation2 + $0x1ac0] sm:$0xf]
    %v2054 = vld [vmem:[#allocation2 + $0x1ac4] sm:$0xf]
    %v2055 = vld [vmem:[#allocation2 + $0x1ac8] sm:$0xf]
    %v2056 = vld [vmem:[#allocation2 + $0x1acc] sm:$0xf]
    %v2057 = vld [vmem:[#allocation2 + $0x1ad0] sm:$0xf]
    %v2058 = vld [vmem:[#allocation2 + $0x1ad4] sm:$0xf]
    %v2059 = vld [vmem:[#allocation2 + $0x1ad8] sm:$0xf]
    %v2060 = vld [vmem:[#allocation2 + $0x1adc] sm:$0xf]
    %v2061 = vld [vmem:[#allocation2 + $0x1ae0] sm:$0xf]
    %v2062 = vld [vmem:[#allocation2 + $0x1ae4] sm:$0xf]
    %v2063 = vld [vmem:[#allocation2 + $0x1ae8] sm:$0xf]
    %v2064 = vld [vmem:[#allocation2 + $0x1aec] sm:$0xf]
    %v2065 = vld [vmem:[#allocation2 + $0x1af0] sm:$0xf]
    %v2066 = vld [vmem:[#allocation2 + $0x1af4] sm:$0xf]
    %v2067 = vld [vmem:[#allocation2 + $0x1af8] sm:$0xf]
    %v2068 = vld [vmem:[#allocation2 + $0x1afc] sm:$0xf]
    %v2069 = vld [vmem:[#allocation2 + $0x1b00] sm:$0xf]
    %v2070 = vld [vmem:[#allocation2 + $0x1b04] sm:$0xf]
    %v2071 = vld [vmem:[#allocation2 + $0x1b08] sm:$0xf]
    %v2072 = vld [vmem:[#allocation2 + $0x1b0c] sm:$0xf]
    %v2073 = vld [vmem:[#allocation2 + $0x1b10] sm:$0xf]
    %v2074 = vld [vmem:[#allocation2 + $0x1b14] sm:$0xf]
    %v2075 = vld [vmem:[#allocation2 + $0x1b18] sm:$0xf]
    %v2076 = vld [vmem:[#allocation2 + $0x1b1c] sm:$0xf]
    %v2077 = vld [vmem:[#allocation2 + $0x1b20] sm:$0xf]
    %v2078 = vld [vmem:[#allocation2 + $0x1b24] sm:$0xf]
    %v2079 = vld [vmem:[#allocation2 + $0x1b28] sm:$0xf]
    %v2080 = vld [vmem:[#allocation2 + $0x1b2c] sm:$0xf]
    %v2081 = vld [vmem:[#allocation2 + $0x1b30] sm:$0xf]
    %v2082 = vld [vmem:[#allocation2 + $0x1b34] sm:$0xf]
    %v2083 = vld [vmem:[#allocation2 + $0x1b38] sm:$0xf]
    %v2084 = vld [vmem:[#allocation2 + $0x1b3c] sm:$0xf]
    %v2085 = vld [vmem:[#allocation2 + $0x1b40] sm:$0xf]
    %v2086 = vld [vmem:[#allocation2 + $0x1b44] sm:$0xf]
    %v2087 = vld [vmem:[#allocation2 + $0x1b48] sm:$0xf]
    %v2088 = vld [vmem:[#allocation2 + $0x1b4c] sm:$0xf]
    %v2089 = vld [vmem:[#allocation2 + $0x1b50] sm:$0xf]
    %v2090 = vld [vmem:[#allocation2 + $0x1b54] sm:$0xf]
    %v2091 = vld [vmem:[#allocation2 + $0x1b58] sm:$0xf]
    %v2092 = vld [vmem:[#allocation2 + $0x1b5c] sm:$0xf]
    %v2093 = vld [vmem:[#allocation2 + $0x1b60] sm:$0xf]
    %v2094 = vld [vmem:[#allocation2 + $0x1b64] sm:$0xf]
    %v2095 = vld [vmem:[#allocation2 + $0x1b68] sm:$0xf]
    %v2096 = vld [vmem:[#allocation2 + $0x1b6c] sm:$0xf]
    %v2097 = vld [vmem:[#allocation2 + $0x1b70] sm:$0xf]
    %v2098 = vld [vmem:[#allocation2 + $0x1b74] sm:$0xf]
    %v2099 = vld [vmem:[#allocation2 + $0x1b78] sm:$0xf]
    %v2100 = vld [vmem:[#allocation2 + $0x1b7c] sm:$0xf]
    %v2101 = vld [vmem:[#allocation2 + $0x1b80] sm:$0xf]
    %v2102 = vld [vmem:[#allocation2 + $0x1b84] sm:$0xf]
    %v2103 = vld [vmem:[#allocation2 + $0x1b88] sm:$0xf]
    %v2104 = vld [vmem:[#allocation2 + $0x1b8c] sm:$0xf]
    %v2105 = vld [vmem:[#allocation2 + $0x1b90] sm:$0xf]
    %v2106 = vld [vmem:[#allocation2 + $0x1b94] sm:$0xf]
    %v2107 = vld [vmem:[#allocation2 + $0x1b98] sm:$0xf]
    %v2108 = vld [vmem:[#allocation2 + $0x1b9c] sm:$0xf]
    %v2109 = vld [vmem:[#allocation2 + $0x1ba0] sm:$0xf]
    %v2110 = vld [vmem:[#allocation2 + $0x1ba4] sm:$0xf]
    %v2111 = vld [vmem:[#allocation2 + $0x1ba8] sm:$0xf]
    %v2112 = vld [vmem:[#allocation2 + $0x1bac] sm:$0xf]
    %v2113 = vld [vmem:[#allocation2 + $0x1bb0] sm:$0xf]
    %v2114 = vld [vmem:[#allocation2 + $0x1bb4] sm:$0xf]
    %v2115 = vld [vmem:[#allocation2 + $0x1bb8] sm:$0xf]
    %v2116 = vld [vmem:[#allocation2 + $0x1bbc] sm:$0xf]
    %v2117 = vld [vmem:[#allocation2 + $0x1bc0] sm:$0xf]
    %v2118 = vld [vmem:[#allocation2 + $0x1bc4] sm:$0xf]
    %v2119 = vld [vmem:[#allocation2 + $0x1bc8] sm:$0xf]
    %v2120 = vld [vmem:[#allocation2 + $0x1bcc] sm:$0xf]
    %v2121 = vld [vmem:[#allocation2 + $0x1bd0] sm:$0xf]
    %v2122 = vld [vmem:[#allocation2 + $0x1bd4] sm:$0xf]
    %v2123 = vld [vmem:[#allocation2 + $0x1bd8] sm:$0xf]
    %v2124 = vld [vmem:[#allocation2 + $0x1bdc] sm:$0xf]
    %v2125 = vld [vmem:[#allocation2 + $0x1be0] sm:$0xf]
    %v2126 = vld [vmem:[#allocation2 + $0x1be4] sm:$0xf]
    %v2127 = vld [vmem:[#allocation2 + $0x1be8] sm:$0xf]
    %v2128 = vld [vmem:[#allocation2 + $0x1bec] sm:$0xf]
    %v2129 = vld [vmem:[#allocation2 + $0x1bf0] sm:$0xf]
    %v2130 = vld [vmem:[#allocation2 + $0x1bf4] sm:$0xf]
    %v2131 = vld [vmem:[#allocation2 + $0x1bf8] sm:$0xf]
    %v2132 = vld [vmem:[#allocation2 + $0x1bfc] sm:$0xf]
    %v2133 = vld [vmem:[#allocation2 + $0x1c00] sm:$0xf]
    %v2134 = vld [vmem:[#allocation2 + $0x1c04] sm:$0xf]
    %v2135 = vld [vmem:[#allocation2 + $0x1c08] sm:$0xf]
    %v2136 = vld [vmem:[#allocation2 + $0x1c0c] sm:$0xf]
    %v2137 = vld [vmem:[#allocation2 + $0x1c10] sm:$0xf]
    %v2138 = vld [vmem:[#allocation2 + $0x1c14] sm:$0xf]
    %v2139 = vld [vmem:[#allocation2 + $0x1c18] sm:$0xf]
    %v2140 = vld [vmem:[#allocation2 + $0x1c1c] sm:$0xf]
    %v2141 = vld [vmem:[#allocation4] sm:$0x1]
    %v2143 = vperm.slane %v2141, 0
    %v3945 = vunpack.c.l.b16 %v341
    %v3946 = vunpack.c.l.b16 %v342
    %v3947 = vunpack.c.l.b16 %v343
    %v3948 = vunpack.c.l.b16 %v344
    %v3949 = vunpack.c.l.b16 %v345
    %v3950 = vunpack.c.l.b16 %v346
    %v3951 = vunpack.c.l.b16 %v347
    %v3952 = vunpack.c.l.b16 %v348
    %v3953 = vunpack.c.l.b16 %v349
    %v3954 = vunpack.c.l.b16 %v350
    %v3955 = vunpack.c.l.b16 %v351
    %v3956 = vunpack.c.l.b16 %v352
    %v3957 = vunpack.c.l.b16 %v353
    %v3958 = vunpack.c.l.b16 %v354
    %v3959 = vunpack.c.l.b16 %v355
    %v3960 = vunpack.c.l.b16 %v356
    %v3961 = vunpack.c.l.b16 %v357
    %v3962 = vunpack.c.l.b16 %v358
    %v3963 = vunpack.c.l.b16 %v359
    %v3964 = vunpack.c.l.b16 %v360
    %v3965 = vunpack.c.l.b16 %v361
    %v3966 = vunpack.c.l.b16 %v362
    %v3967 = vunpack.c.l.b16 %v363
    %v3968 = vunpack.c.l.b16 %v364
    %v3969 = vunpack.c.l.b16 %v365
    %v3970 = vunpack.c.l.b16 %v366
    %v3971 = vunpack.c.l.b16 %v367
    %v3972 = vunpack.c.l.b16 %v368
    %v3973 = vunpack.c.l.b16 %v369
    %v3974 = vunpack.c.l.b16 %v370
    %v3975 = vunpack.c.l.b16 %v371
    %v3976 = vunpack.c.l.b16 %v372
    %v3977 = vunpack.c.l.b16 %v373
    %v3978 = vunpack.c.l.b16 %v374
    %v3979 = vunpack.c.l.b16 %v375
    %v3980 = vunpack.c.l.b16 %v376
    %v3981 = vunpack.c.l.b16 %v377
    %v3982 = vunpack.c.l.b16 %v378
    %v3983 = vunpack.c.l.b16 %v379
    %v3984 = vunpack.c.l.b16 %v380
    %v3985 = vunpack.c.l.b16 %v381
    %v3986 = vunpack.c.l.b16 %v382
    %v3987 = vunpack.c.l.b16 %v383
    %v3988 = vunpack.c.l.b16 %v384
    %v3989 = vunpack.c.l.b16 %v385
    %v3990 = vunpack.c.l.b16 %v386
    %v3991 = vunpack.c.l.b16 %v387
    %v3992 = vunpack.c.l.b16 %v388
    %v3993 = vunpack.c.l.b16 %v389
    %v3994 = vunpack.c.l.b16 %v390
    %v3995 = vunpack.c.l.b16 %v391
    %v3996 = vunpack.c.l.b16 %v392
    %v3997 = vunpack.c.l.b16 %v393
    %v3998 = vunpack.c.l.b16 %v394
    %v3999 = vunpack.c.l.b16 %v395
    %v4000 = vunpack.c.l.b16 %v396
    %v4001 = vunpack.c.l.b16 %v397
    %v4002 = vunpack.c.l.b16 %v398
    %v4003 = vunpack.c.l.b16 %v399
    %v4004 = vunpack.c.l.b16 %v400
    %v4005 = vunpack.c.l.b16 %v401
    %v4006 = vunpack.c.l.b16 %v402
    %v4007 = vunpack.c.l.b16 %v403
    %v4008 = vunpack.c.l.b16 %v404
    %v4009 = vunpack.c.l.b16 %v405
    %v4010 = vunpack.c.l.b16 %v406
    %v4011 = vunpack.c.l.b16 %v407
    %v4012 = vunpack.c.l.b16 %v408
    %v4013 = vunpack.c.l.b16 %v409
    %v4014 = vunpack.c.l.b16 %v410
    %v4015 = vunpack.c.l.b16 %v411
    %v4016 = vunpack.c.l.b16 %v412
    %v4017 = vunpack.c.l.b16 %v413
    %v4018 = vunpack.c.l.b16 %v414
    %v4019 = vunpack.c.l.b16 %v415
    %v4020 = vunpack.c.l.b16 %v416
    %v4021 = vunpack.c.l.b16 %v417
    %v4022 = vunpack.c.l.b16 %v418
    %v4023 = vunpack.c.l.b16 %v419
    %v4024 = vunpack.c.l.b16 %v420
    %v4025 = vunpack.c.l.b16 %v421
    %v4026 = vunpack.c.l.b16 %v422
    %v4027 = vunpack.c.l.b16 %v423
    %v4028 = vunpack.c.l.b16 %v424
    %v4029 = vunpack.c.l.b16 %v425
    %v4030 = vunpack.c.l.b16 %v426
    %v4031 = vunpack.c.l.b16 %v427
    %v4032 = vunpack.c.l.b16 %v428
    %v4033 = vunpack.c.l.b16 %v429
    %v4034 = vunpack.c.l.b16 %v430
    %v4035 = vunpack.c.l.b16 %v431
    %v4036 = vunpack.c.l.b16 %v432
    %v4037 = vunpack.c.l.b16 %v433
    %v4038 = vunpack.c.l.b16 %v434
    %v4039 = vunpack.c.l.b16 %v435
    %v4040 = vunpack.c.l.b16 %v436
    %v4041 = vunpack.c.l.b16 %v437
    %v4042 = vunpack.c.l.b16 %v438
    %v4043 = vunpack.c.l.b16 %v439
    %v4044 = vunpack.c.l.b16 %v440
    %v4045 = vunpack.c.l.b16 %v441
    %v4046 = vunpack.c.l.b16 %v442
    %v4047 = vunpack.c.l.b16 %v443
    %v4048 = vunpack.c.l.b16 %v444
    %v4049 = vunpack.c.l.b16 %v445
    %v4050 = vunpack.c.l.b16 %v446
    %v4051 = vunpack.c.l.b16 %v447
    %v4052 = vunpack.c.l.b16 %v448
    %v4053 = vunpack.c.l.b16 %v449
    %v4054 = vunpack.c.l.b16 %v450
    %v4055 = vunpack.c.l.b16 %v451
    %v4056 = vunpack.c.l.b16 %v452
    %v4057 = vunpack.c.l.b16 %v453
    %v4058 = vunpack.c.l.b16 %v454
    %v4059 = vunpack.c.l.b16 %v455
    %v4060 = vunpack.c.l.b16 %v456
    %v4061 = vunpack.c.l.b16 %v457
    %v4062 = vunpack.c.l.b16 %v458
    %v4063 = vunpack.c.l.b16 %v459
    %v4064 = vunpack.c.l.b16 %v460
    %v4065 = vunpack.c.l.b16 %v461
    %v4066 = vunpack.c.l.b16 %v462
    %v4067 = vunpack.c.l.b16 %v463
    %v4068 = vunpack.c.l.b16 %v464
    %v4069 = vunpack.c.l.b16 %v465
    %v4070 = vunpack.c.l.b16 %v466
    %v4071 = vunpack.c.l.b16 %v467
    %v4072 = vunpack.c.l.b16 %v468
    %v4073 = vunpack.c.l.b16 %v469
    %v4074 = vunpack.c.l.b16 %v470
    %v4075 = vunpack.c.l.b16 %v471
    %v4076 = vunpack.c.l.b16 %v472
    %v4077 = vunpack.c.l.b16 %v473
    %v4078 = vunpack.c.l.b16 %v474
    %v4079 = vunpack.c.l.b16 %v475
    %v4080 = vunpack.c.l.b16 %v476
    %v4081 = vunpack.c.l.b16 %v477
    %v4082 = vunpack.c.l.b16 %v478
    %v4083 = vunpack.c.l.b16 %v479
    %v4084 = vunpack.c.l.b16 %v480
    %v4085 = vunpack.c.l.b16 %v481
    %v4086 = vunpack.c.l.b16 %v482
    %v4087 = vunpack.c.l.b16 %v483
    %v4088 = vunpack.c.l.b16 %v484
    %v4089 = vunpack.c.l.b16 %v485
    %v4090 = vunpack.c.l.b16 %v486
    %v4091 = vunpack.c.l.b16 %v487
    %v4092 = vunpack.c.l.b16 %v488
    %v4093 = vunpack.c.l.b16 %v489
    %v4094 = vunpack.c.l.b16 %v490
    %v4095 = vunpack.c.l.b16 %v491
    %v4096 = vunpack.c.l.b16 %v492
    %v4097 = vunpack.c.l.b16 %v493
    %v4098 = vunpack.c.l.b16 %v494
    %v4099 = vunpack.c.l.b16 %v495
    %v4100 = vunpack.c.l.b16 %v496
    %v4101 = vunpack.c.l.b16 %v497
    %v4102 = vunpack.c.l.b16 %v498
    %v4103 = vunpack.c.l.b16 %v499
    %v4104 = vunpack.c.l.b16 %v500
    %v4105 = vunpack.c.l.b16 %v501
    %v4106 = vunpack.c.l.b16 %v502
    %v4107 = vunpack.c.l.b16 %v503
    %v4108 = vunpack.c.l.b16 %v504
    %v4109 = vunpack.c.l.b16 %v505
    %v4110 = vunpack.c.l.b16 %v506
    %v4111 = vunpack.c.l.b16 %v507
    %v4112 = vunpack.c.l.b16 %v508
    %v4113 = vunpack.c.l.b16 %v509
    %v4114 = vunpack.c.l.b16 %v510
    %v4115 = vunpack.c.l.b16 %v511
    %v4116 = vunpack.c.l.b16 %v512
    %v4117 = vunpack.c.l.b16 %v513
    %v4118 = vunpack.c.l.b16 %v514
    %v4119 = vunpack.c.l.b16 %v515
    %v4120 = vunpack.c.l.b16 %v516
    %v4121 = vunpack.c.l.b16 %v517
    %v4122 = vunpack.c.l.b16 %v518
    %v4123 = vunpack.c.l.b16 %v519
    %v4124 = vunpack.c.l.b16 %v520
    %v4125 = vunpack.c.l.b16 %v521
    %v4126 = vunpack.c.l.b16 %v522
    %v4127 = vunpack.c.l.b16 %v523
    %v4128 = vunpack.c.l.b16 %v524
    %v4129 = vunpack.c.l.b16 %v525
    %v4130 = vunpack.c.l.b16 %v526
    %v4131 = vunpack.c.l.b16 %v527
    %v4132 = vunpack.c.l.b16 %v528
    %v4133 = vunpack.c.l.b16 %v529
    %v4134 = vunpack.c.l.b16 %v530
    %v4135 = vunpack.c.l.b16 %v531
    %v4136 = vunpack.c.l.b16 %v532
    %v4137 = vunpack.c.l.b16 %v533
    %v4138 = vunpack.c.l.b16 %v534
    %v4139 = vunpack.c.l.b16 %v535
    %v4140 = vunpack.c.l.b16 %v536
    %v4141 = vunpack.c.l.b16 %v537
    %v4142 = vunpack.c.l.b16 %v538
    %v4143 = vunpack.c.l.b16 %v539
    %v4144 = vunpack.c.l.b16 %v540
    %v4145 = vunpack.c.l.b16 %v541
    %v4146 = vunpack.c.l.b16 %v542
    %v4147 = vunpack.c.l.b16 %v543
    %v4148 = vunpack.c.l.b16 %v544
    %v4149 = vunpack.c.l.b16 %v545
    %v4150 = vunpack.c.l.b16 %v546
    %v4151 = vunpack.c.l.b16 %v547
    %v4152 = vunpack.c.l.b16 %v548
    %v4153 = vunpack.c.l.b16 %v549
    %v4154 = vunpack.c.l.b16 %v550
    %v4155 = vunpack.c.l.b16 %v551
    %v4156 = vunpack.c.l.b16 %v552
    %v4157 = vunpack.c.l.b16 %v553
    %v4158 = vunpack.c.l.b16 %v554
    %v4159 = vunpack.c.l.b16 %v555
    %v4160 = vunpack.c.l.b16 %v556
    %v4161 = vunpack.c.l.b16 %v557
    %v4162 = vunpack.c.l.b16 %v558
    %v4163 = vunpack.c.l.b16 %v559
    %v4164 = vunpack.c.l.b16 %v560
    %v4165 = vunpack.c.l.b16 %v561
    %v4166 = vunpack.c.l.b16 %v562
    %v4167 = vunpack.c.l.b16 %v563
    %v4168 = vunpack.c.l.b16 %v564
    %v4169 = vunpack.c.l.b16 %v565
    %v4170 = vunpack.c.l.b16 %v566
    %v4171 = vunpack.c.l.b16 %v567
    %v4172 = vunpack.c.l.b16 %v568
    %v4173 = vunpack.c.l.b16 %v569
    %v4174 = vunpack.c.l.b16 %v570
    %v4175 = vunpack.c.l.b16 %v571
    %v4176 = vunpack.c.l.b16 %v572
    %v4177 = vunpack.c.l.b16 %v573
    %v4178 = vunpack.c.l.b16 %v574
    %v4179 = vunpack.c.l.b16 %v575
    %v4180 = vunpack.c.l.b16 %v576
    %v4181 = vunpack.c.l.b16 %v577
    %v4182 = vunpack.c.l.b16 %v578
    %v4183 = vunpack.c.l.b16 %v579
    %v4184 = vunpack.c.l.b16 %v580
    %v4185 = vunpack.c.l.b16 %v581
    %v4186 = vunpack.c.l.b16 %v582
    %v4187 = vunpack.c.l.b16 %v583
    %v4188 = vunpack.c.l.b16 %v584
    %v4189 = vunpack.c.l.b16 %v585
    %v4190 = vunpack.c.l.b16 %v586
    %v4191 = vunpack.c.l.b16 %v587
    %v4192 = vunpack.c.l.b16 %v588
    %v4193 = vunpack.c.l.b16 %v589
    %v4194 = vunpack.c.l.b16 %v590
    %v4195 = vunpack.c.l.b16 %v591
    %v4196 = vunpack.c.l.b16 %v592
    %v4197 = vunpack.c.l.b16 %v593
    %v4198 = vunpack.c.l.b16 %v594
    %v4199 = vunpack.c.l.b16 %v595
    %v4200 = vunpack.c.l.b16 %v596
    %v4201 = vunpack.c.l.b16 %v597
    %v4202 = vunpack.c.l.b16 %v598
    %v4203 = vunpack.c.l.b16 %v599
    %v4204 = vunpack.c.l.b16 %v600
    %v4205 = vunpack.c.l.b16 %v601
    %v4206 = vunpack.c.l.b16 %v602
    %v4207 = vunpack.c.l.b16 %v603
    %v4208 = vunpack.c.l.b16 %v604
    %v4209 = vunpack.c.l.b16 %v605
    %v4210 = vunpack.c.l.b16 %v606
    %v4211 = vunpack.c.l.b16 %v607
    %v4212 = vunpack.c.l.b16 %v608
    %v4213 = vunpack.c.l.b16 %v609
    %v4214 = vunpack.c.l.b16 %v610
    %v4215 = vunpack.c.l.b16 %v611
    %v4216 = vunpack.c.l.b16 %v612
    %v4217 = vunpack.c.l.b16 %v613
    %v4218 = vunpack.c.l.b16 %v614
    %v4219 = vunpack.c.l.b16 %v615
    %v4220 = vunpack.c.l.b16 %v616
    %v4221 = vunpack.c.l.b16 %v617
    %v4222 = vunpack.c.l.b16 %v618
    %v4223 = vunpack.c.l.b16 %v619
    %v4224 = vunpack.c.l.b16 %v620
    %v4225 = vunpack.c.l.b16 %v621
    %v4226 = vunpack.c.l.b16 %v622
    %v4227 = vunpack.c.l.b16 %v623
    %v4228 = vunpack.c.l.b16 %v624
    %v4229 = vunpack.c.l.b16 %v625
    %v4230 = vunpack.c.l.b16 %v626
    %v4231 = vunpack.c.l.b16 %v627
    %v4232 = vunpack.c.l.b16 %v628
    %v4233 = vunpack.c.l.b16 %v629
    %v4234 = vunpack.c.l.b16 %v630
    %v4235 = vunpack.c.l.b16 %v631
    %v4236 = vunpack.c.l.b16 %v632
    %v4237 = vunpack.c.l.b16 %v633
    %v4238 = vunpack.c.l.b16 %v634
    %v4239 = vunpack.c.l.b16 %v635
    %v4240 = vunpack.c.l.b16 %v636
    %v4241 = vunpack.c.l.b16 %v637
    %v4242 = vunpack.c.l.b16 %v638
    %v4243 = vunpack.c.l.b16 %v639
    %v4244 = vunpack.c.l.b16 %v640
    %v4245 = vunpack.c.l.b16 %v641
    %v4246 = vunpack.c.l.b16 %v642
    %v4247 = vunpack.c.l.b16 %v643
    %v4248 = vunpack.c.l.b16 %v644
    %v4249 = vunpack.c.l.b16 %v645
    %v4250 = vunpack.c.l.b16 %v646
    %v4251 = vunpack.c.l.b16 %v647
    %v4252 = vunpack.c.l.b16 %v648
    %v4253 = vunpack.c.l.b16 %v649
    %v4254 = vunpack.c.l.b16 %v650
    %v4255 = vunpack.c.l.b16 %v651
    %v4256 = vunpack.c.l.b16 %v652
    %v4257 = vunpack.c.l.b16 %v653
    %v4258 = vunpack.c.l.b16 %v654
    %v4259 = vunpack.c.l.b16 %v655
    %v4260 = vunpack.c.l.b16 %v656
    %v4261 = vunpack.c.l.b16 %v657
    %v4262 = vunpack.c.l.b16 %v658
    %v4263 = vunpack.c.l.b16 %v659
    %v4264 = vunpack.c.l.b16 %v660
    %v4265 = vunpack.c.l.b16 %v661
    %v4266 = vunpack.c.l.b16 %v662
    %v4267 = vunpack.c.l.b16 %v663
    %v4268 = vunpack.c.l.b16 %v664
    %v4269 = vunpack.c.l.b16 %v665
    %v4270 = vunpack.c.l.b16 %v666
    %v4271 = vunpack.c.l.b16 %v667
    %v4272 = vunpack.c.l.b16 %v668
    %v4273 = vunpack.c.l.b16 %v669
    %v4274 = vunpack.c.l.b16 %v670
    %v4275 = vunpack.c.l.b16 %v671
    %v4276 = vunpack.c.l.b16 %v672
    %v4277 = vunpack.c.l.b16 %v673
    %v4278 = vunpack.c.l.b16 %v674
    %v4279 = vunpack.c.l.b16 %v675
    %v4280 = vunpack.c.l.b16 %v676
    %v4281 = vunpack.c.l.b16 %v677
    %v4282 = vunpack.c.l.b16 %v678
    %v4283 = vunpack.c.l.b16 %v679
    %v4284 = vunpack.c.l.b16 %v680
    %v4285 = vunpack.c.l.b16 %v681
    %v4286 = vunpack.c.l.b16 %v682
    %v4287 = vunpack.c.l.b16 %v683
    %v4288 = vunpack.c.l.b16 %v684
    %v4289 = vunpack.c.l.b16 %v685
    %v4290 = vunpack.c.l.b16 %v686
    %v4291 = vunpack.c.l.b16 %v687
    %v4292 = vunpack.c.l.b16 %v688
    %v4293 = vunpack.c.l.b16 %v689
    %v4294 = vunpack.c.l.b16 %v690
    %v4295 = vunpack.c.l.b16 %v691
    %v4296 = vunpack.c.l.b16 %v692
    %v4297 = vunpack.c.l.b16 %v693
    %v4298 = vunpack.c.l.b16 %v694
    %v4299 = vunpack.c.l.b16 %v695
    %v4300 = vunpack.c.l.b16 %v696
    %v4301 = vunpack.c.l.b16 %v697
    %v4302 = vunpack.c.l.b16 %v698
    %v4303 = vunpack.c.l.b16 %v699
    %v4304 = vunpack.c.l.b16 %v700
    %v4305 = vunpack.c.l.b16 %v701
    %v4306 = vunpack.c.l.b16 %v702
    %v4307 = vunpack.c.l.b16 %v703
    %v4308 = vunpack.c.l.b16 %v704
    %v4309 = vunpack.c.l.b16 %v705
    %v4310 = vunpack.c.l.b16 %v706
    %v4311 = vunpack.c.l.b16 %v707
    %v4312 = vunpack.c.l.b16 %v708
    %v4313 = vunpack.c.l.b16 %v709
    %v4314 = vunpack.c.l.b16 %v710
    %v4315 = vunpack.c.l.b16 %v711
    %v4316 = vunpack.c.l.b16 %v712
    %v4317 = vunpack.c.l.b16 %v713
    %v4318 = vunpack.c.l.b16 %v714
    %v4319 = vunpack.c.l.b16 %v715
    %v4320 = vunpack.c.l.b16 %v716
    %v4321 = vunpack.c.l.b16 %v717
    %v4322 = vunpack.c.l.b16 %v718
    %v4323 = vunpack.c.l.b16 %v719
    %v4324 = vunpack.c.l.b16 %v720
    %v4325 = vunpack.c.l.b16 %v721
    %v4326 = vunpack.c.l.b16 %v722
    %v4327 = vunpack.c.l.b16 %v723
    %v4328 = vunpack.c.l.b16 %v724
    %v4329 = vunpack.c.l.b16 %v725
    %v4330 = vunpack.c.l.b16 %v726
    %v4331 = vunpack.c.l.b16 %v727
    %v4332 = vunpack.c.l.b16 %v728
    %v4333 = vunpack.c.l.b16 %v729
    %v4334 = vunpack.c.l.b16 %v730
    %v4335 = vunpack.c.l.b16 %v731
    %v4336 = vunpack.c.l.b16 %v732
    %v4337 = vunpack.c.l.b16 %v733
    %v4338 = vunpack.c.l.b16 %v734
    %v4339 = vunpack.c.l.b16 %v735
    %v4340 = vunpack.c.l.b16 %v736
    %v4341 = vunpack.c.l.b16 %v737
    %v4342 = vunpack.c.l.b16 %v738
    %v4343 = vunpack.c.l.b16 %v739
    %v4344 = vunpack.c.l.b16 %v740
    %v4345 = vunpack.c.l.b16 %v741
    %v4346 = vunpack.c.l.b16 %v742
    %v4347 = vunpack.c.l.b16 %v743
    %v4348 = vunpack.c.l.b16 %v744
    %v4349 = vunpack.c.l.b16 %v745
    %v4350 = vunpack.c.l.b16 %v746
    %v4351 = vunpack.c.l.b16 %v747
    %v4352 = vunpack.c.l.b16 %v748
    %v4353 = vunpack.c.l.b16 %v749
    %v4354 = vunpack.c.l.b16 %v750
    %v4355 = vunpack.c.l.b16 %v751
    %v4356 = vunpack.c.l.b16 %v752
    %v4357 = vunpack.c.l.b16 %v753
    %v4358 = vunpack.c.l.b16 %v754
    %v4359 = vunpack.c.l.b16 %v755
    %v4360 = vunpack.c.l.b16 %v756
    %v4361 = vunpack.c.l.b16 %v757
    %v4362 = vunpack.c.l.b16 %v758
    %v4363 = vunpack.c.l.b16 %v759
    %v4364 = vunpack.c.l.b16 %v760
    %v4365 = vunpack.c.l.b16 %v761
    %v4366 = vunpack.c.l.b16 %v762
    %v4367 = vunpack.c.l.b16 %v763
    %v4368 = vunpack.c.l.b16 %v764
    %v4369 = vunpack.c.l.b16 %v765
    %v4370 = vunpack.c.l.b16 %v766
    %v4371 = vunpack.c.l.b16 %v767
    %v4372 = vunpack.c.l.b16 %v768
    %v4373 = vunpack.c.l.b16 %v769
    %v4374 = vunpack.c.l.b16 %v770
    %v4375 = vunpack.c.l.b16 %v771
    %v4376 = vunpack.c.l.b16 %v772
    %v4377 = vunpack.c.l.b16 %v773
    %v4378 = vunpack.c.l.b16 %v774
    %v4379 = vunpack.c.l.b16 %v775
    %v4380 = vunpack.c.l.b16 %v776
    %v4381 = vunpack.c.l.b16 %v777
    %v4382 = vunpack.c.l.b16 %v778
    %v4383 = vunpack.c.l.b16 %v779
    %v4384 = vunpack.c.l.b16 %v780
    %v4385 = vunpack.c.l.b16 %v781
    %v4386 = vunpack.c.l.b16 %v782
    %v4387 = vunpack.c.l.b16 %v783
    %v4388 = vunpack.c.l.b16 %v784
    %v4389 = vunpack.c.l.b16 %v785
    %v4390 = vunpack.c.l.b16 %v786
    %v4391 = vunpack.c.l.b16 %v787
    %v4392 = vunpack.c.l.b16 %v788
    %v4393 = vunpack.c.l.b16 %v789
    %v4394 = vunpack.c.l.b16 %v790
    %v4395 = vunpack.c.l.b16 %v791
    %v4396 = vunpack.c.l.b16 %v792
    %v4397 = vunpack.c.l.b16 %v793
    %v4398 = vunpack.c.l.b16 %v794
    %v4399 = vunpack.c.l.b16 %v795
    %v4400 = vunpack.c.l.b16 %v796
    %v4401 = vunpack.c.l.b16 %v797
    %v4402 = vunpack.c.l.b16 %v798
    %v4403 = vunpack.c.l.b16 %v799
    %v4404 = vunpack.c.l.b16 %v800
    %v4405 = vunpack.c.l.b16 %v801
    %v4406 = vunpack.c.l.b16 %v802
    %v4407 = vunpack.c.l.b16 %v803
    %v4408 = vunpack.c.l.b16 %v804
    %v4409 = vunpack.c.l.b16 %v805
    %v4410 = vunpack.c.l.b16 %v806
    %v4411 = vunpack.c.l.b16 %v807
    %v4412 = vunpack.c.l.b16 %v808
    %v4413 = vunpack.c.l.b16 %v809
    %v4414 = vunpack.c.l.b16 %v810
    %v4415 = vunpack.c.l.b16 %v811
    %v4416 = vunpack.c.l.b16 %v812
    %v4417 = vunpack.c.l.b16 %v813
    %v4418 = vunpack.c.l.b16 %v814
    %v4419 = vunpack.c.l.b16 %v815
    %v4420 = vunpack.c.l.b16 %v816
    %v4421 = vunpack.c.l.b16 %v817
    %v4422 = vunpack.c.l.b16 %v818
    %v4423 = vunpack.c.l.b16 %v819
    %v4424 = vunpack.c.l.b16 %v820
    %v4425 = vunpack.c.l.b16 %v821
    %v4426 = vunpack.c.l.b16 %v822
    %v4427 = vunpack.c.l.b16 %v823
    %v4428 = vunpack.c.l.b16 %v824
    %v4429 = vunpack.c.l.b16 %v825
    %v4430 = vunpack.c.l.b16 %v826
    %v4431 = vunpack.c.l.b16 %v827
    %v4432 = vunpack.c.l.b16 %v828
    %v4433 = vunpack.c.l.b16 %v829
    %v4434 = vunpack.c.l.b16 %v830
    %v4435 = vunpack.c.l.b16 %v831
    %v4436 = vunpack.c.l.b16 %v832
    %v4437 = vunpack.c.l.b16 %v833
    %v4438 = vunpack.c.l.b16 %v834
    %v4439 = vunpack.c.l.b16 %v835
    %v4440 = vunpack.c.l.b16 %v836
    %v4441 = vunpack.c.l.b16 %v837
    %v4442 = vunpack.c.l.b16 %v838
    %v4443 = vunpack.c.l.b16 %v839
    %v4444 = vunpack.c.l.b16 %v840
    %v4445 = vunpack.c.l.b16 %v841
    %v4446 = vunpack.c.l.b16 %v842
    %v4447 = vunpack.c.l.b16 %v843
    %v4448 = vunpack.c.l.b16 %v844
    %v4449 = vunpack.c.l.b16 %v845
    %v4450 = vunpack.c.l.b16 %v846
    %v4451 = vunpack.c.l.b16 %v847
    %v4452 = vunpack.c.l.b16 %v848
    %v4453 = vunpack.c.l.b16 %v849
    %v4454 = vunpack.c.l.b16 %v850
    %v4455 = vunpack.c.l.b16 %v851
    %v4456 = vunpack.c.l.b16 %v852
    %v4457 = vunpack.c.l.b16 %v853
    %v4458 = vunpack.c.l.b16 %v854
    %v4459 = vunpack.c.l.b16 %v855
    %v4460 = vunpack.c.l.b16 %v856
    %v4461 = vunpack.c.l.b16 %v857
    %v4462 = vunpack.c.l.b16 %v858
    %v4463 = vunpack.c.l.b16 %v859
    %v4464 = vunpack.c.l.b16 %v860
    %v4465 = vunpack.c.l.b16 %v861
    %v4466 = vunpack.c.l.b16 %v862
    %v4467 = vunpack.c.l.b16 %v863
    %v4468 = vunpack.c.l.b16 %v864
    %v4469 = vunpack.c.l.b16 %v865
    %v4470 = vunpack.c.l.b16 %v866
    %v4471 = vunpack.c.l.b16 %v867
    %v4472 = vunpack.c.l.b16 %v868
    %v4473 = vunpack.c.l.b16 %v869
    %v4474 = vunpack.c.l.b16 %v870
    %v4475 = vunpack.c.l.b16 %v871
    %v4476 = vunpack.c.l.b16 %v872
    %v4477 = vunpack.c.l.b16 %v873
    %v4478 = vunpack.c.l.b16 %v874
    %v4479 = vunpack.c.l.b16 %v875
    %v4480 = vunpack.c.l.b16 %v876
    %v4481 = vunpack.c.l.b16 %v877
    %v4482 = vunpack.c.l.b16 %v878
    %v4483 = vunpack.c.l.b16 %v879
    %v4484 = vunpack.c.l.b16 %v880
    %v4485 = vunpack.c.l.b16 %v881
    %v4486 = vunpack.c.l.b16 %v882
    %v4487 = vunpack.c.l.b16 %v883
    %v4488 = vunpack.c.l.b16 %v884
    %v4489 = vunpack.c.l.b16 %v885
    %v4490 = vunpack.c.l.b16 %v886
    %v4491 = vunpack.c.l.b16 %v887
    %v4492 = vunpack.c.l.b16 %v888
    %v4493 = vunpack.c.l.b16 %v889
    %v4494 = vunpack.c.l.b16 %v890
    %v4495 = vunpack.c.l.b16 %v891
    %v4496 = vunpack.c.l.b16 %v892
    %v4497 = vunpack.c.l.b16 %v893
    %v4498 = vunpack.c.l.b16 %v894
    %v4499 = vunpack.c.l.b16 %v895
    %v4500 = vunpack.c.l.b16 %v896
    %v4501 = vunpack.c.l.b16 %v897
    %v4502 = vunpack.c.l.b16 %v898
    %v4503 = vunpack.c.l.b16 %v899
    %v4504 = vunpack.c.l.b16 %v900
    %v4505 = vunpack.c.l.b16 %v901
    %v4506 = vunpack.c.l.b16 %v902
    %v4507 = vunpack.c.l.b16 %v903
    %v4508 = vunpack.c.l.b16 %v904
    %v4509 = vunpack.c.l.b16 %v905
    %v4510 = vunpack.c.l.b16 %v906
    %v4511 = vunpack.c.l.b16 %v907
    %v4512 = vunpack.c.l.b16 %v908
    %v4513 = vunpack.c.l.b16 %v909
    %v4514 = vunpack.c.l.b16 %v910
    %v4515 = vunpack.c.l.b16 %v911
    %v4516 = vunpack.c.l.b16 %v912
    %v4517 = vunpack.c.l.b16 %v913
    %v4518 = vunpack.c.l.b16 %v914
    %v4519 = vunpack.c.l.b16 %v915
    %v4520 = vunpack.c.l.b16 %v916
    %v4521 = vunpack.c.l.b16 %v917
    %v4522 = vunpack.c.l.b16 %v918
    %v4523 = vunpack.c.l.b16 %v919
    %v4524 = vunpack.c.l.b16 %v920
    %v4525 = vunpack.c.l.b16 %v921
    %v4526 = vunpack.c.l.b16 %v922
    %v4527 = vunpack.c.l.b16 %v923
    %v4528 = vunpack.c.l.b16 %v924
    %v4529 = vunpack.c.l.b16 %v925
    %v4530 = vunpack.c.l.b16 %v926
    %v4531 = vunpack.c.l.b16 %v927
    %v4532 = vunpack.c.l.b16 %v928
    %v4533 = vunpack.c.l.b16 %v929
    %v4534 = vunpack.c.l.b16 %v930
    %v4535 = vunpack.c.l.b16 %v931
    %v4536 = vunpack.c.l.b16 %v932
    %v4537 = vunpack.c.l.b16 %v933
    %v4538 = vunpack.c.l.b16 %v934
    %v4539 = vunpack.c.l.b16 %v935
    %v4540 = vunpack.c.l.b16 %v936
    %v4541 = vunpack.c.l.b16 %v937
    %v4542 = vunpack.c.l.b16 %v938
    %v4543 = vunpack.c.l.b16 %v939
    %v4544 = vunpack.c.l.b16 %v940
    %v4545 = vunpack.c.l.b16 %v941
    %v4546 = vunpack.c.l.b16 %v942
    %v4547 = vunpack.c.l.b16 %v943
    %v4548 = vunpack.c.l.b16 %v944
    %v4549 = vunpack.c.l.b16 %v945
    %v4550 = vunpack.c.l.b16 %v946
    %v4551 = vunpack.c.l.b16 %v947
    %v4552 = vunpack.c.l.b16 %v948
    %v4553 = vunpack.c.l.b16 %v949
    %v4554 = vunpack.c.l.b16 %v950
    %v4555 = vunpack.c.l.b16 %v951
    %v4556 = vunpack.c.l.b16 %v952
    %v4557 = vunpack.c.l.b16 %v953
    %v4558 = vunpack.c.l.b16 %v954
    %v4559 = vunpack.c.l.b16 %v955
    %v4560 = vunpack.c.l.b16 %v956
    %v4561 = vunpack.c.l.b16 %v957
    %v4562 = vunpack.c.l.b16 %v958
    %v4563 = vunpack.c.l.b16 %v959
    %v4564 = vunpack.c.l.b16 %v960
    %v4565 = vunpack.c.l.b16 %v961
    %v4566 = vunpack.c.l.b16 %v962
    %v4567 = vunpack.c.l.b16 %v963
    %v4568 = vunpack.c.l.b16 %v964
    %v4569 = vunpack.c.l.b16 %v965
    %v4570 = vunpack.c.l.b16 %v966
    %v4571 = vunpack.c.l.b16 %v967
    %v4572 = vunpack.c.l.b16 %v968
    %v4573 = vunpack.c.l.b16 %v969
    %v4574 = vunpack.c.l.b16 %v970
    %v4575 = vunpack.c.l.b16 %v971
    %v4576 = vunpack.c.l.b16 %v972
    %v4577 = vunpack.c.l.b16 %v973
    %v4578 = vunpack.c.l.b16 %v974
    %v4579 = vunpack.c.l.b16 %v975
    %v4580 = vunpack.c.l.b16 %v976
    %v4581 = vunpack.c.l.b16 %v977
    %v4582 = vunpack.c.l.b16 %v978
    %v4583 = vunpack.c.l.b16 %v979
    %v4584 = vunpack.c.l.b16 %v980
    %v4585 = vunpack.c.l.b16 %v981
    %v4586 = vunpack.c.l.b16 %v982
    %v4587 = vunpack.c.l.b16 %v983
    %v4588 = vunpack.c.l.b16 %v984
    %v4589 = vunpack.c.l.b16 %v985
    %v4590 = vunpack.c.l.b16 %v986
    %v4591 = vunpack.c.l.b16 %v987
    %v4592 = vunpack.c.l.b16 %v988
    %v4593 = vunpack.c.l.b16 %v989
    %v4594 = vunpack.c.l.b16 %v990
    %v4595 = vunpack.c.l.b16 %v991
    %v4596 = vunpack.c.l.b16 %v992
    %v4597 = vunpack.c.l.b16 %v993
    %v4598 = vunpack.c.l.b16 %v994
    %v4599 = vunpack.c.l.b16 %v995
    %v4600 = vunpack.c.l.b16 %v996
    %v4601 = vunpack.c.l.b16 %v997
    %v4602 = vunpack.c.l.b16 %v998
    %v4603 = vunpack.c.l.b16 %v999
    %v4604 = vunpack.c.l.b16 %v1000
    %v4605 = vunpack.c.l.b16 %v1001
    %v4606 = vunpack.c.l.b16 %v1002
    %v4607 = vunpack.c.l.b16 %v1003
    %v4608 = vunpack.c.l.b16 %v1004
    %v4609 = vunpack.c.l.b16 %v1005
    %v4610 = vunpack.c.l.b16 %v1006
    %v4611 = vunpack.c.l.b16 %v1007
    %v4612 = vunpack.c.l.b16 %v1008
    %v4613 = vunpack.c.l.b16 %v1009
    %v4614 = vunpack.c.l.b16 %v1010
    %v4615 = vunpack.c.l.b16 %v1011
    %v4616 = vunpack.c.l.b16 %v1012
    %v4617 = vunpack.c.l.b16 %v1013
    %v4618 = vunpack.c.l.b16 %v1014
    %v4619 = vunpack.c.l.b16 %v1015
    %v4620 = vunpack.c.l.b16 %v1016
    %v4621 = vunpack.c.l.b16 %v1017
    %v4622 = vunpack.c.l.b16 %v1018
    %v4623 = vunpack.c.l.b16 %v1019
    %v4624 = vunpack.c.l.b16 %v1020
    %v4625 = vunpack.c.l.b16 %v1021
    %v4626 = vunpack.c.l.b16 %v1022
    %v4627 = vunpack.c.l.b16 %v1023
    %v4628 = vunpack.c.l.b16 %v1024
    %v4629 = vunpack.c.l.b16 %v1025
    %v4630 = vunpack.c.l.b16 %v1026
    %v4631 = vunpack.c.l.b16 %v1027
    %v4632 = vunpack.c.l.b16 %v1028
    %v4633 = vunpack.c.l.b16 %v1029
    %v4634 = vunpack.c.l.b16 %v1030
    %v4635 = vunpack.c.l.b16 %v1031
    %v4636 = vunpack.c.l.b16 %v1032
    %v4637 = vunpack.c.l.b16 %v1033
    %v4638 = vunpack.c.l.b16 %v1034
    %v4639 = vunpack.c.l.b16 %v1035
    %v4640 = vunpack.c.l.b16 %v1036
    %v4641 = vunpack.c.l.b16 %v1037
    %v4642 = vunpack.c.l.b16 %v1038
    %v4643 = vunpack.c.l.b16 %v1039
    %v4644 = vunpack.c.l.b16 %v1040
    %v4645 = vunpack.c.l.b16 %v1041
    %v4646 = vunpack.c.l.b16 %v1042
    %v4647 = vunpack.c.l.b16 %v1043
    %v4648 = vunpack.c.l.b16 %v1044
    %v4649 = vunpack.c.l.b16 %v1045
    %v4650 = vunpack.c.l.b16 %v1046
    %v4651 = vunpack.c.l.b16 %v1047
    %v4652 = vunpack.c.l.b16 %v1048
    %v4653 = vunpack.c.l.b16 %v1049
    %v4654 = vunpack.c.l.b16 %v1050
    %v4655 = vunpack.c.l.b16 %v1051
    %v4656 = vunpack.c.l.b16 %v1052
    %v4657 = vunpack.c.l.b16 %v1053
    %v4658 = vunpack.c.l.b16 %v1054
    %v4659 = vunpack.c.l.b16 %v1055
    %v4660 = vunpack.c.l.b16 %v1056
    %v4661 = vunpack.c.l.b16 %v1057
    %v4662 = vunpack.c.l.b16 %v1058
    %v4663 = vunpack.c.l.b16 %v1059
    %v4664 = vunpack.c.l.b16 %v1060
    %v4665 = vunpack.c.l.b16 %v1061
    %v4666 = vunpack.c.l.b16 %v1062
    %v4667 = vunpack.c.l.b16 %v1063
    %v4668 = vunpack.c.l.b16 %v1064
    %v4669 = vunpack.c.l.b16 %v1065
    %v4670 = vunpack.c.l.b16 %v1066
    %v4671 = vunpack.c.l.b16 %v1067
    %v4672 = vunpack.c.l.b16 %v1068
    %v4673 = vunpack.c.l.b16 %v1069
    %v4674 = vunpack.c.l.b16 %v1070
    %v4675 = vunpack.c.l.b16 %v1071
    %v4676 = vunpack.c.l.b16 %v1072
    %v4677 = vunpack.c.l.b16 %v1073
    %v4678 = vunpack.c.l.b16 %v1074
    %v4679 = vunpack.c.l.b16 %v1075
    %v4680 = vunpack.c.l.b16 %v1076
    %v4681 = vunpack.c.l.b16 %v1077
    %v4682 = vunpack.c.l.b16 %v1078
    %v4683 = vunpack.c.l.b16 %v1079
    %v4684 = vunpack.c.l.b16 %v1080
    %v4685 = vunpack.c.l.b16 %v1081
    %v4686 = vunpack.c.l.b16 %v1082
    %v4687 = vunpack.c.l.b16 %v1083
    %v4688 = vunpack.c.l.b16 %v1084
    %v4689 = vunpack.c.l.b16 %v1085
    %v4690 = vunpack.c.l.b16 %v1086
    %v4691 = vunpack.c.l.b16 %v1087
    %v4692 = vunpack.c.l.b16 %v1088
    %v4693 = vunpack.c.l.b16 %v1089
    %v4694 = vunpack.c.l.b16 %v1090
    %v4695 = vunpack.c.l.b16 %v1091
    %v4696 = vunpack.c.l.b16 %v1092
    %v4697 = vunpack.c.l.b16 %v1093
    %v4698 = vunpack.c.l.b16 %v1094
    %v4699 = vunpack.c.l.b16 %v1095
    %v4700 = vunpack.c.l.b16 %v1096
    %v4701 = vunpack.c.l.b16 %v1097
    %v4702 = vunpack.c.l.b16 %v1098
    %v4703 = vunpack.c.l.b16 %v1099
    %v4704 = vunpack.c.l.b16 %v1100
    %v4705 = vunpack.c.l.b16 %v1101
    %v4706 = vunpack.c.l.b16 %v1102
    %v4707 = vunpack.c.l.b16 %v1103
    %v4708 = vunpack.c.l.b16 %v1104
    %v4709 = vunpack.c.l.b16 %v1105
    %v4710 = vunpack.c.l.b16 %v1106
    %v4711 = vunpack.c.l.b16 %v1107
    %v4712 = vunpack.c.l.b16 %v1108
    %v4713 = vunpack.c.l.b16 %v1109
    %v4714 = vunpack.c.l.b16 %v1110
    %v4715 = vunpack.c.l.b16 %v1111
    %v4716 = vunpack.c.l.b16 %v1112
    %v4717 = vunpack.c.l.b16 %v1113
    %v4718 = vunpack.c.l.b16 %v1114
    %v4719 = vunpack.c.l.b16 %v1115
    %v4720 = vunpack.c.l.b16 %v1116
    %v4721 = vunpack.c.l.b16 %v1117
    %v4722 = vunpack.c.l.b16 %v1118
    %v4723 = vunpack.c.l.b16 %v1119
    %v4724 = vunpack.c.l.b16 %v1120
    %v4725 = vunpack.c.l.b16 %v1121
    %v4726 = vunpack.c.l.b16 %v1122
    %v4727 = vunpack.c.l.b16 %v1123
    %v4728 = vunpack.c.l.b16 %v1124
    %v4729 = vunpack.c.l.b16 %v1125
    %v4730 = vunpack.c.l.b16 %v1126
    %v4731 = vunpack.c.l.b16 %v1127
    %v4732 = vunpack.c.l.b16 %v1128
    %v4733 = vunpack.c.l.b16 %v1129
    %v4734 = vunpack.c.l.b16 %v1130
    %v4735 = vunpack.c.l.b16 %v1131
    %v4736 = vunpack.c.l.b16 %v1132
    %v4737 = vunpack.c.l.b16 %v1133
    %v4738 = vunpack.c.l.b16 %v1134
    %v4739 = vunpack.c.l.b16 %v1135
    %v4740 = vunpack.c.l.b16 %v1136
    %v4741 = vunpack.c.l.b16 %v1137
    %v4742 = vunpack.c.l.b16 %v1138
    %v4743 = vunpack.c.l.b16 %v1139
    %v4744 = vunpack.c.l.b16 %v1140
    %v4745 = vunpack.c.l.b16 %v1141
    %v4746 = vunpack.c.l.b16 %v1142
    %v4747 = vunpack.c.l.b16 %v1143
    %v4748 = vunpack.c.l.b16 %v1144
    %v4749 = vunpack.c.l.b16 %v1145
    %v4750 = vunpack.c.l.b16 %v1146
    %v4751 = vunpack.c.l.b16 %v1147
    %v4752 = vunpack.c.l.b16 %v1148
    %v4753 = vunpack.c.l.b16 %v1149
    %v4754 = vunpack.c.l.b16 %v1150
    %v4755 = vunpack.c.l.b16 %v1151
    %v4756 = vunpack.c.l.b16 %v1152
    %v4757 = vunpack.c.l.b16 %v1153
    %v4758 = vunpack.c.l.b16 %v1154
    %v4759 = vunpack.c.l.b16 %v1155
    %v4760 = vunpack.c.l.b16 %v1156
    %v4761 = vunpack.c.l.b16 %v1157
    %v4762 = vunpack.c.l.b16 %v1158
    %v4763 = vunpack.c.l.b16 %v1159
    %v4764 = vunpack.c.l.b16 %v1160
    %v4765 = vunpack.c.l.b16 %v1161
    %v4766 = vunpack.c.l.b16 %v1162
    %v4767 = vunpack.c.l.b16 %v1163
    %v4768 = vunpack.c.l.b16 %v1164
    %v4769 = vunpack.c.l.b16 %v1165
    %v4770 = vunpack.c.l.b16 %v1166
    %v4771 = vunpack.c.l.b16 %v1167
    %v4772 = vunpack.c.l.b16 %v1168
    %v4773 = vunpack.c.l.b16 %v1169
    %v4774 = vunpack.c.l.b16 %v1170
    %v4775 = vunpack.c.l.b16 %v1171
    %v4776 = vunpack.c.l.b16 %v1172
    %v4777 = vunpack.c.l.b16 %v1173
    %v4778 = vunpack.c.l.b16 %v1174
    %v4779 = vunpack.c.l.b16 %v1175
    %v4780 = vunpack.c.l.b16 %v1176
    %v4781 = vunpack.c.l.b16 %v1177
    %v4782 = vunpack.c.l.b16 %v1178
    %v4783 = vunpack.c.l.b16 %v1179
    %v4784 = vunpack.c.l.b16 %v1180
    %v4785 = vunpack.c.l.b16 %v1181
    %v4786 = vunpack.c.l.b16 %v1182
    %v4787 = vunpack.c.l.b16 %v1183
    %v4788 = vunpack.c.l.b16 %v1184
    %v4789 = vunpack.c.l.b16 %v1185
    %v4790 = vunpack.c.l.b16 %v1186
    %v4791 = vunpack.c.l.b16 %v1187
    %v4792 = vunpack.c.l.b16 %v1188
    %v4793 = vunpack.c.l.b16 %v1189
    %v4794 = vunpack.c.l.b16 %v1190
    %v4795 = vunpack.c.l.b16 %v1191
    %v4796 = vunpack.c.l.b16 %v1192
    %v4797 = vunpack.c.l.b16 %v1193
    %v4798 = vunpack.c.l.b16 %v1194
    %v4799 = vunpack.c.l.b16 %v1195
    %v4800 = vunpack.c.l.b16 %v1196
    %v4801 = vunpack.c.l.b16 %v1197
    %v4802 = vunpack.c.l.b16 %v1198
    %v4803 = vunpack.c.l.b16 %v1199
    %v4804 = vunpack.c.l.b16 %v1200
    %v4805 = vunpack.c.l.b16 %v1201
    %v4806 = vunpack.c.l.b16 %v1202
    %v4807 = vunpack.c.l.b16 %v1203
    %v4808 = vunpack.c.l.b16 %v1204
    %v4809 = vunpack.c.l.b16 %v1205
    %v4810 = vunpack.c.l.b16 %v1206
    %v4811 = vunpack.c.l.b16 %v1207
    %v4812 = vunpack.c.l.b16 %v1208
    %v4813 = vunpack.c.l.b16 %v1209
    %v4814 = vunpack.c.l.b16 %v1210
    %v4815 = vunpack.c.l.b16 %v1211
    %v4816 = vunpack.c.l.b16 %v1212
    %v4817 = vunpack.c.l.b16 %v1213
    %v4818 = vunpack.c.l.b16 %v1214
    %v4819 = vunpack.c.l.b16 %v1215
    %v4820 = vunpack.c.l.b16 %v1216
    %v4821 = vunpack.c.l.b16 %v1217
    %v4822 = vunpack.c.l.b16 %v1218
    %v4823 = vunpack.c.l.b16 %v1219
    %v4824 = vunpack.c.l.b16 %v1220
    %v4825 = vunpack.c.l.b16 %v1221
    %v4826 = vunpack.c.l.b16 %v1222
    %v4827 = vunpack.c.l.b16 %v1223
    %v4828 = vunpack.c.l.b16 %v1224
    %v4829 = vunpack.c.l.b16 %v1225
    %v4830 = vunpack.c.l.b16 %v1226
    %v4831 = vunpack.c.l.b16 %v1227
    %v4832 = vunpack.c.l.b16 %v1228
    %v4833 = vunpack.c.l.b16 %v1229
    %v4834 = vunpack.c.l.b16 %v1230
    %v4835 = vunpack.c.l.b16 %v1231
    %v4836 = vunpack.c.l.b16 %v1232
    %v4837 = vunpack.c.l.b16 %v1233
    %v4838 = vunpack.c.l.b16 %v1234
    %v4839 = vunpack.c.l.b16 %v1235
    %v4840 = vunpack.c.l.b16 %v1236
    %v4841 = vunpack.c.l.b16 %v1237
    %v4842 = vunpack.c.l.b16 %v1238
    %v4843 = vunpack.c.l.b16 %v1239
    %v4844 = vunpack.c.l.b16 %v1240
    %v4845 = vunpack.c.l.b16 %v1241
    %v4846 = vunpack.c.l.b16 %v1242
    %v4847 = vunpack.c.l.b16 %v1243
    %v4848 = vunpack.c.l.b16 %v1244
    %v4849 = vunpack.c.l.b16 %v1245
    %v4850 = vunpack.c.l.b16 %v1246
    %v4851 = vunpack.c.l.b16 %v1247
    %v4852 = vunpack.c.l.b16 %v1248
    %v4853 = vunpack.c.l.b16 %v1249
    %v4854 = vunpack.c.l.b16 %v1250
    %v4855 = vunpack.c.l.b16 %v1251
    %v4856 = vunpack.c.l.b16 %v1252
    %v4857 = vunpack.c.l.b16 %v1253
    %v4858 = vunpack.c.l.b16 %v1254
    %v4859 = vunpack.c.l.b16 %v1255
    %v4860 = vunpack.c.l.b16 %v1256
    %v4861 = vunpack.c.l.b16 %v1257
    %v4862 = vunpack.c.l.b16 %v1258
    %v4863 = vunpack.c.l.b16 %v1259
    %v4864 = vunpack.c.l.b16 %v1260
    %v4865 = vunpack.c.l.b16 %v1261
    %v4866 = vunpack.c.l.b16 %v1262
    %v4867 = vunpack.c.l.b16 %v1263
    %v4868 = vunpack.c.l.b16 %v1264
    %v4869 = vunpack.c.l.b16 %v1265
    %v4870 = vunpack.c.l.b16 %v1266
    %v4871 = vunpack.c.l.b16 %v1267
    %v4872 = vunpack.c.l.b16 %v1268
    %v4873 = vunpack.c.l.b16 %v1269
    %v4874 = vunpack.c.l.b16 %v1270
    %v4875 = vunpack.c.l.b16 %v1271
    %v4876 = vunpack.c.l.b16 %v1272
    %v4877 = vunpack.c.l.b16 %v1273
    %v4878 = vunpack.c.l.b16 %v1274
    %v4879 = vunpack.c.l.b16 %v1275
    %v4880 = vunpack.c.l.b16 %v1276
    %v4881 = vunpack.c.l.b16 %v1277
    %v4882 = vunpack.c.l.b16 %v1278
    %v4883 = vunpack.c.l.b16 %v1279
    %v4884 = vunpack.c.l.b16 %v1280
    %v4885 = vunpack.c.l.b16 %v1281
    %v4886 = vunpack.c.l.b16 %v1282
    %v4887 = vunpack.c.l.b16 %v1283
    %v4888 = vunpack.c.l.b16 %v1284
    %v4889 = vunpack.c.l.b16 %v1285
    %v4890 = vunpack.c.l.b16 %v1286
    %v4891 = vunpack.c.l.b16 %v1287
    %v4892 = vunpack.c.l.b16 %v1288
    %v4893 = vunpack.c.l.b16 %v1289
    %v4894 = vunpack.c.l.b16 %v1290
    %v4895 = vunpack.c.l.b16 %v1291
    %v4896 = vunpack.c.l.b16 %v1292
    %v4897 = vunpack.c.l.b16 %v1293
    %v4898 = vunpack.c.l.b16 %v1294
    %v4899 = vunpack.c.l.b16 %v1295
    %v4900 = vunpack.c.l.b16 %v1296
    %v4901 = vunpack.c.l.b16 %v1297
    %v4902 = vunpack.c.l.b16 %v1298
    %v4903 = vunpack.c.l.b16 %v1299
    %v4904 = vunpack.c.l.b16 %v1300
    %v4905 = vunpack.c.l.b16 %v1301
    %v4906 = vunpack.c.l.b16 %v1302
    %v4907 = vunpack.c.l.b16 %v1303
    %v4908 = vunpack.c.l.b16 %v1304
    %v4909 = vunpack.c.l.b16 %v1305
    %v4910 = vunpack.c.l.b16 %v1306
    %v4911 = vunpack.c.l.b16 %v1307
    %v4912 = vunpack.c.l.b16 %v1308
    %v4913 = vunpack.c.l.b16 %v1309
    %v4914 = vunpack.c.l.b16 %v1310
    %v4915 = vunpack.c.l.b16 %v1311
    %v4916 = vunpack.c.l.b16 %v1312
    %v4917 = vunpack.c.l.b16 %v1313
    %v4918 = vunpack.c.l.b16 %v1314
    %v4919 = vunpack.c.l.b16 %v1315
    %v4920 = vunpack.c.l.b16 %v1316
    %v4921 = vunpack.c.l.b16 %v1317
    %v4922 = vunpack.c.l.b16 %v1318
    %v4923 = vunpack.c.l.b16 %v1319
    %v4924 = vunpack.c.l.b16 %v1320
    %v4925 = vunpack.c.l.b16 %v1321
    %v4926 = vunpack.c.l.b16 %v1322
    %v4927 = vunpack.c.l.b16 %v1323
    %v4928 = vunpack.c.l.b16 %v1324
    %v4929 = vunpack.c.l.b16 %v1325
    %v4930 = vunpack.c.l.b16 %v1326
    %v4931 = vunpack.c.l.b16 %v1327
    %v4932 = vunpack.c.l.b16 %v1328
    %v4933 = vunpack.c.l.b16 %v1329
    %v4934 = vunpack.c.l.b16 %v1330
    %v4935 = vunpack.c.l.b16 %v1331
    %v4936 = vunpack.c.l.b16 %v1332
    %v4937 = vunpack.c.l.b16 %v1333
    %v4938 = vunpack.c.l.b16 %v1334
    %v4939 = vunpack.c.l.b16 %v1335
    %v4940 = vunpack.c.l.b16 %v1336
    %v4941 = vunpack.c.l.b16 %v1337
    %v4942 = vunpack.c.l.b16 %v1338
    %v4943 = vunpack.c.l.b16 %v1339
    %v4944 = vunpack.c.l.b16 %v1340
    %v4945 = vunpack.c.l.b16 %v1341
    %v4946 = vunpack.c.l.b16 %v1342
    %v4947 = vunpack.c.l.b16 %v1343
    %v4948 = vunpack.c.l.b16 %v1344
    %v4949 = vunpack.c.l.b16 %v1345
    %v4950 = vunpack.c.l.b16 %v1346
    %v4951 = vunpack.c.l.b16 %v1347
    %v4952 = vunpack.c.l.b16 %v1348
    %v4953 = vunpack.c.l.b16 %v1349
    %v4954 = vunpack.c.l.b16 %v1350
    %v4955 = vunpack.c.l.b16 %v1351
    %v4956 = vunpack.c.l.b16 %v1352
    %v4957 = vunpack.c.l.b16 %v1353
    %v4958 = vunpack.c.l.b16 %v1354
    %v4959 = vunpack.c.l.b16 %v1355
    %v4960 = vunpack.c.l.b16 %v1356
    %v4961 = vunpack.c.l.b16 %v1357
    %v4962 = vunpack.c.l.b16 %v1358
    %v4963 = vunpack.c.l.b16 %v1359
    %v4964 = vunpack.c.l.b16 %v1360
    %v4965 = vunpack.c.l.b16 %v1361
    %v4966 = vunpack.c.l.b16 %v1362
    %v4967 = vunpack.c.l.b16 %v1363
    %v4968 = vunpack.c.l.b16 %v1364
    %v4969 = vunpack.c.l.b16 %v1365
    %v4970 = vunpack.c.l.b16 %v1366
    %v4971 = vunpack.c.l.b16 %v1367
    %v4972 = vunpack.c.l.b16 %v1368
    %v4973 = vunpack.c.l.b16 %v1369
    %v4974 = vunpack.c.l.b16 %v1370
    %v4975 = vunpack.c.l.b16 %v1371
    %v4976 = vunpack.c.l.b16 %v1372
    %v4977 = vunpack.c.l.b16 %v1373
    %v4978 = vunpack.c.l.b16 %v1374
    %v4979 = vunpack.c.l.b16 %v1375
    %v4980 = vunpack.c.l.b16 %v1376
    %v4981 = vunpack.c.l.b16 %v1377
    %v4982 = vunpack.c.l.b16 %v1378
    %v4983 = vunpack.c.l.b16 %v1379
    %v4984 = vunpack.c.l.b16 %v1380
    %v4985 = vunpack.c.l.b16 %v1381
    %v4986 = vunpack.c.l.b16 %v1382
    %v4987 = vunpack.c.l.b16 %v1383
    %v4988 = vunpack.c.l.b16 %v1384
    %v4989 = vunpack.c.l.b16 %v1385
    %v4990 = vunpack.c.l.b16 %v1386
    %v4991 = vunpack.c.l.b16 %v1387
    %v4992 = vunpack.c.l.b16 %v1388
    %v4993 = vunpack.c.l.b16 %v1389
    %v4994 = vunpack.c.l.b16 %v1390
    %v4995 = vunpack.c.l.b16 %v1391
    %v4996 = vunpack.c.l.b16 %v1392
    %v4997 = vunpack.c.l.b16 %v1393
    %v4998 = vunpack.c.l.b16 %v1394
    %v4999 = vunpack.c.l.b16 %v1395
    %v5000 = vunpack.c.l.b16 %v1396
    %v5001 = vunpack.c.l.b16 %v1397
    %v5002 = vunpack.c.l.b16 %v1398
    %v5003 = vunpack.c.l.b16 %v1399
    %v5004 = vunpack.c.l.b16 %v1400
    %v5005 = vunpack.c.l.b16 %v1401
    %v5006 = vunpack.c.l.b16 %v1402
    %v5007 = vunpack.c.l.b16 %v1403
    %v5008 = vunpack.c.l.b16 %v1404
    %v5009 = vunpack.c.l.b16 %v1405
    %v5010 = vunpack.c.l.b16 %v1406
    %v5011 = vunpack.c.l.b16 %v1407
    %v5012 = vunpack.c.l.b16 %v1408
    %v5013 = vunpack.c.l.b16 %v1409
    %v5014 = vunpack.c.l.b16 %v1410
    %v5015 = vunpack.c.l.b16 %v1411
    %v5016 = vunpack.c.l.b16 %v1412
    %v5017 = vunpack.c.l.b16 %v1413
    %v5018 = vunpack.c.l.b16 %v1414
    %v5019 = vunpack.c.l.b16 %v1415
    %v5020 = vunpack.c.l.b16 %v1416
    %v5021 = vunpack.c.l.b16 %v1417
    %v5022 = vunpack.c.l.b16 %v1418
    %v5023 = vunpack.c.l.b16 %v1419
    %v5024 = vunpack.c.l.b16 %v1420
    %v5025 = vunpack.c.l.b16 %v1421
    %v5026 = vunpack.c.l.b16 %v1422
    %v5027 = vunpack.c.l.b16 %v1423
    %v5028 = vunpack.c.l.b16 %v1424
    %v5029 = vunpack.c.l.b16 %v1425
    %v5030 = vunpack.c.l.b16 %v1426
    %v5031 = vunpack.c.l.b16 %v1427
    %v5032 = vunpack.c.l.b16 %v1428
    %v5033 = vunpack.c.l.b16 %v1429
    %v5034 = vunpack.c.l.b16 %v1430
    %v5035 = vunpack.c.l.b16 %v1431
    %v5036 = vunpack.c.l.b16 %v1432
    %v5037 = vunpack.c.l.b16 %v1433
    %v5038 = vunpack.c.l.b16 %v1434
    %v5039 = vunpack.c.l.b16 %v1435
    %v5040 = vunpack.c.l.b16 %v1436
    %v5041 = vunpack.c.l.b16 %v1437
    %v5042 = vunpack.c.l.b16 %v1438
    %v5043 = vunpack.c.l.b16 %v1439
    %v5044 = vunpack.c.l.b16 %v1440
    %v5045 = vunpack.c.l.b16 %v1441
    %v5046 = vunpack.c.l.b16 %v1442
    %v5047 = vunpack.c.l.b16 %v1443
    %v5048 = vunpack.c.l.b16 %v1444
    %v5049 = vunpack.c.l.b16 %v1445
    %v5050 = vunpack.c.l.b16 %v1446
    %v5051 = vunpack.c.l.b16 %v1447
    %v5052 = vunpack.c.l.b16 %v1448
    %v5053 = vunpack.c.l.b16 %v1449
    %v5054 = vunpack.c.l.b16 %v1450
    %v5055 = vunpack.c.l.b16 %v1451
    %v5056 = vunpack.c.l.b16 %v1452
    %v5057 = vunpack.c.l.b16 %v1453
    %v5058 = vunpack.c.l.b16 %v1454
    %v5059 = vunpack.c.l.b16 %v1455
    %v5060 = vunpack.c.l.b16 %v1456
    %v5061 = vunpack.c.l.b16 %v1457
    %v5062 = vunpack.c.l.b16 %v1458
    %v5063 = vunpack.c.l.b16 %v1459
    %v5064 = vunpack.c.l.b16 %v1460
    %v5065 = vunpack.c.l.b16 %v1461
    %v5066 = vunpack.c.l.b16 %v1462
    %v5067 = vunpack.c.l.b16 %v1463
    %v5068 = vunpack.c.l.b16 %v1464
    %v5069 = vunpack.c.l.b16 %v1465
    %v5070 = vunpack.c.l.b16 %v1466
    %v5071 = vunpack.c.l.b16 %v1467
    %v5072 = vunpack.c.l.b16 %v1468
    %v5073 = vunpack.c.l.b16 %v1469
    %v5074 = vunpack.c.l.b16 %v1470
    %v5075 = vunpack.c.l.b16 %v1471
    %v5076 = vunpack.c.l.b16 %v1472
    %v5077 = vunpack.c.l.b16 %v1473
    %v5078 = vunpack.c.l.b16 %v1474
    %v5079 = vunpack.c.l.b16 %v1475
    %v5080 = vunpack.c.l.b16 %v1476
    %v5081 = vunpack.c.l.b16 %v1477
    %v5082 = vunpack.c.l.b16 %v1478
    %v5083 = vunpack.c.l.b16 %v1479
    %v5084 = vunpack.c.l.b16 %v1480
    %v5085 = vunpack.c.l.b16 %v1481
    %v5086 = vunpack.c.l.b16 %v1482
    %v5087 = vunpack.c.l.b16 %v1483
    %v5088 = vunpack.c.l.b16 %v1484
    %v5089 = vunpack.c.l.b16 %v1485
    %v5090 = vunpack.c.l.b16 %v1486
    %v5091 = vunpack.c.l.b16 %v1487
    %v5092 = vunpack.c.l.b16 %v1488
    %v5093 = vunpack.c.l.b16 %v1489
    %v5094 = vunpack.c.l.b16 %v1490
    %v5095 = vunpack.c.l.b16 %v1491
    %v5096 = vunpack.c.l.b16 %v1492
    %v5097 = vunpack.c.l.b16 %v1493
    %v5098 = vunpack.c.l.b16 %v1494
    %v5099 = vunpack.c.l.b16 %v1495
    %v5100 = vunpack.c.l.b16 %v1496
    %v5101 = vunpack.c.l.b16 %v1497
    %v5102 = vunpack.c.l.b16 %v1498
    %v5103 = vunpack.c.l.b16 %v1499
    %v5104 = vunpack.c.l.b16 %v1500
    %v5105 = vunpack.c.l.b16 %v1501
    %v5106 = vunpack.c.l.b16 %v1502
    %v5107 = vunpack.c.l.b16 %v1503
    %v5108 = vunpack.c.l.b16 %v1504
    %v5109 = vunpack.c.l.b16 %v1505
    %v5110 = vunpack.c.l.b16 %v1506
    %v5111 = vunpack.c.l.b16 %v1507
    %v5112 = vunpack.c.l.b16 %v1508
    %v5113 = vunpack.c.l.b16 %v1509
    %v5114 = vunpack.c.l.b16 %v1510
    %v5115 = vunpack.c.l.b16 %v1511
    %v5116 = vunpack.c.l.b16 %v1512
    %v5117 = vunpack.c.l.b16 %v1513
    %v5118 = vunpack.c.l.b16 %v1514
    %v5119 = vunpack.c.l.b16 %v1515
    %v5120 = vunpack.c.l.b16 %v1516
    %v5121 = vunpack.c.l.b16 %v1517
    %v5122 = vunpack.c.l.b16 %v1518
    %v5123 = vunpack.c.l.b16 %v1519
    %v5124 = vunpack.c.l.b16 %v1520
    %v5125 = vunpack.c.l.b16 %v1521
    %v5126 = vunpack.c.l.b16 %v1522
    %v5127 = vunpack.c.l.b16 %v1523
    %v5128 = vunpack.c.l.b16 %v1524
    %v5129 = vunpack.c.l.b16 %v1525
    %v5130 = vunpack.c.l.b16 %v1526
    %v5131 = vunpack.c.l.b16 %v1527
    %v5132 = vunpack.c.l.b16 %v1528
    %v5133 = vunpack.c.l.b16 %v1529
    %v5134 = vunpack.c.l.b16 %v1530
    %v5135 = vunpack.c.l.b16 %v1531
    %v5136 = vunpack.c.l.b16 %v1532
    %v5137 = vunpack.c.l.b16 %v1533
    %v5138 = vunpack.c.l.b16 %v1534
    %v5139 = vunpack.c.l.b16 %v1535
    %v5140 = vunpack.c.l.b16 %v1536
    %v5141 = vunpack.c.l.b16 %v1537
    %v5142 = vunpack.c.l.b16 %v1538
    %v5143 = vunpack.c.l.b16 %v1539
    %v5144 = vunpack.c.l.b16 %v1540
    %v5145 = vunpack.c.l.b16 %v1541
    %v5146 = vunpack.c.l.b16 %v1542
    %v5147 = vunpack.c.l.b16 %v1543
    %v5148 = vunpack.c.l.b16 %v1544
    %v5149 = vunpack.c.l.b16 %v1545
    %v5150 = vunpack.c.l.b16 %v1546
    %v5151 = vunpack.c.l.b16 %v1547
    %v5152 = vunpack.c.l.b16 %v1548
    %v5153 = vunpack.c.l.b16 %v1549
    %v5154 = vunpack.c.l.b16 %v1550
    %v5155 = vunpack.c.l.b16 %v1551
    %v5156 = vunpack.c.l.b16 %v1552
    %v5157 = vunpack.c.l.b16 %v1553
    %v5158 = vunpack.c.l.b16 %v1554
    %v5159 = vunpack.c.l.b16 %v1555
    %v5160 = vunpack.c.l.b16 %v1556
    %v5161 = vunpack.c.l.b16 %v1557
    %v5162 = vunpack.c.l.b16 %v1558
    %v5163 = vunpack.c.l.b16 %v1559
    %v5164 = vunpack.c.l.b16 %v1560
    %v5165 = vunpack.c.l.b16 %v1561
    %v5166 = vunpack.c.l.b16 %v1562
    %v5167 = vunpack.c.l.b16 %v1563
    %v5168 = vunpack.c.l.b16 %v1564
    %v5169 = vunpack.c.l.b16 %v1565
    %v5170 = vunpack.c.l.b16 %v1566
    %v5171 = vunpack.c.l.b16 %v1567
    %v5172 = vunpack.c.l.b16 %v1568
    %v5173 = vunpack.c.l.b16 %v1569
    %v5174 = vunpack.c.l.b16 %v1570
    %v5175 = vunpack.c.l.b16 %v1571
    %v5176 = vunpack.c.l.b16 %v1572
    %v5177 = vunpack.c.l.b16 %v1573
    %v5178 = vunpack.c.l.b16 %v1574
    %v5179 = vunpack.c.l.b16 %v1575
    %v5180 = vunpack.c.l.b16 %v1576
    %v5181 = vunpack.c.l.b16 %v1577
    %v5182 = vunpack.c.l.b16 %v1578
    %v5183 = vunpack.c.l.b16 %v1579
    %v5184 = vunpack.c.l.b16 %v1580
    %v5185 = vunpack.c.l.b16 %v1581
    %v5186 = vunpack.c.l.b16 %v1582
    %v5187 = vunpack.c.l.b16 %v1583
    %v5188 = vunpack.c.l.b16 %v1584
    %v5189 = vunpack.c.l.b16 %v1585
    %v5190 = vunpack.c.l.b16 %v1586
    %v5191 = vunpack.c.l.b16 %v1587
    %v5192 = vunpack.c.l.b16 %v1588
    %v5193 = vunpack.c.l.b16 %v1589
    %v5194 = vunpack.c.l.b16 %v1590
    %v5195 = vunpack.c.l.b16 %v1591
    %v5196 = vunpack.c.l.b16 %v1592
    %v5197 = vunpack.c.l.b16 %v1593
    %v5198 = vunpack.c.l.b16 %v1594
    %v5199 = vunpack.c.l.b16 %v1595
    %v5200 = vunpack.c.l.b16 %v1596
    %v5201 = vunpack.c.l.b16 %v1597
    %v5202 = vunpack.c.l.b16 %v1598
    %v5203 = vunpack.c.l.b16 %v1599
    %v5204 = vunpack.c.l.b16 %v1600
    %v5205 = vunpack.c.l.b16 %v1601
    %v5206 = vunpack.c.l.b16 %v1602
    %v5207 = vunpack.c.l.b16 %v1603
    %v5208 = vunpack.c.l.b16 %v1604
    %v5209 = vunpack.c.l.b16 %v1605
    %v5210 = vunpack.c.l.b16 %v1606
    %v5211 = vunpack.c.l.b16 %v1607
    %v5212 = vunpack.c.l.b16 %v1608
    %v5213 = vunpack.c.l.b16 %v1609
    %v5214 = vunpack.c.l.b16 %v1610
    %v5215 = vunpack.c.l.b16 %v1611
    %v5216 = vunpack.c.l.b16 %v1612
    %v5217 = vunpack.c.l.b16 %v1613
    %v5218 = vunpack.c.l.b16 %v1614
    %v5219 = vunpack.c.l.b16 %v1615
    %v5220 = vunpack.c.l.b16 %v1616
    %v5221 = vunpack.c.l.b16 %v1617
    %v5222 = vunpack.c.l.b16 %v1618
    %v5223 = vunpack.c.l.b16 %v1619
    %v5224 = vunpack.c.l.b16 %v1620
    %v5225 = vunpack.c.l.b16 %v1621
    %v5226 = vunpack.c.l.b16 %v1622
    %v5227 = vunpack.c.l.b16 %v1623
    %v5228 = vunpack.c.l.b16 %v1624
    %v5229 = vunpack.c.l.b16 %v1625
    %v5230 = vunpack.c.l.b16 %v1626
    %v5231 = vunpack.c.l.b16 %v1627
    %v5232 = vunpack.c.l.b16 %v1628
    %v5233 = vunpack.c.l.b16 %v1629
    %v5234 = vunpack.c.l.b16 %v1630
    %v5235 = vunpack.c.l.b16 %v1631
    %v5236 = vunpack.c.l.b16 %v1632
    %v5237 = vunpack.c.l.b16 %v1633
    %v5238 = vunpack.c.l.b16 %v1634
    %v5239 = vunpack.c.l.b16 %v1635
    %v5240 = vunpack.c.l.b16 %v1636
    %v5241 = vunpack.c.l.b16 %v1637
    %v5242 = vunpack.c.l.b16 %v1638
    %v5243 = vunpack.c.l.b16 %v1639
    %v5244 = vunpack.c.l.b16 %v1640
    %v5245 = vunpack.c.l.b16 %v1641
    %v5246 = vunpack.c.l.b16 %v1642
    %v5247 = vunpack.c.l.b16 %v1643
    %v5248 = vunpack.c.l.b16 %v1644
    %v5249 = vunpack.c.l.b16 %v1645
    %v5250 = vunpack.c.l.b16 %v1646
    %v5251 = vunpack.c.l.b16 %v1647
    %v5252 = vunpack.c.l.b16 %v1648
    %v5253 = vunpack.c.l.b16 %v1649
    %v5254 = vunpack.c.l.b16 %v1650
    %v5255 = vunpack.c.l.b16 %v1651
    %v5256 = vunpack.c.l.b16 %v1652
    %v5257 = vunpack.c.l.b16 %v1653
    %v5258 = vunpack.c.l.b16 %v1654
    %v5259 = vunpack.c.l.b16 %v1655
    %v5260 = vunpack.c.l.b16 %v1656
    %v5261 = vunpack.c.l.b16 %v1657
    %v5262 = vunpack.c.l.b16 %v1658
    %v5263 = vunpack.c.l.b16 %v1659
    %v5264 = vunpack.c.l.b16 %v1660
    %v5265 = vunpack.c.l.b16 %v1661
    %v5266 = vunpack.c.l.b16 %v1662
    %v5267 = vunpack.c.l.b16 %v1663
    %v5268 = vunpack.c.l.b16 %v1664
    %v5269 = vunpack.c.l.b16 %v1665
    %v5270 = vunpack.c.l.b16 %v1666
    %v5271 = vunpack.c.l.b16 %v1667
    %v5272 = vunpack.c.l.b16 %v1668
    %v5273 = vunpack.c.l.b16 %v1669
    %v5274 = vunpack.c.l.b16 %v1670
    %v5275 = vunpack.c.l.b16 %v1671
    %v5276 = vunpack.c.l.b16 %v1672
    %v5277 = vunpack.c.l.b16 %v1673
    %v5278 = vunpack.c.l.b16 %v1674
    %v5279 = vunpack.c.l.b16 %v1675
    %v5280 = vunpack.c.l.b16 %v1676
    %v5281 = vunpack.c.l.b16 %v1677
    %v5282 = vunpack.c.l.b16 %v1678
    %v5283 = vunpack.c.l.b16 %v1679
    %v5284 = vunpack.c.l.b16 %v1680
    %v5285 = vunpack.c.l.b16 %v1681
    %v5286 = vunpack.c.l.b16 %v1682
    %v5287 = vunpack.c.l.b16 %v1683
    %v5288 = vunpack.c.l.b16 %v1684
    %v5289 = vunpack.c.l.b16 %v1685
    %v5290 = vunpack.c.l.b16 %v1686
    %v5291 = vunpack.c.l.b16 %v1687
    %v5292 = vunpack.c.l.b16 %v1688
    %v5293 = vunpack.c.l.b16 %v1689
    %v5294 = vunpack.c.l.b16 %v1690
    %v5295 = vunpack.c.l.b16 %v1691
    %v5296 = vunpack.c.l.b16 %v1692
    %v5297 = vunpack.c.l.b16 %v1693
    %v5298 = vunpack.c.l.b16 %v1694
    %v5299 = vunpack.c.l.b16 %v1695
    %v5300 = vunpack.c.l.b16 %v1696
    %v5301 = vunpack.c.l.b16 %v1697
    %v5302 = vunpack.c.l.b16 %v1698
    %v5303 = vunpack.c.l.b16 %v1699
    %v5304 = vunpack.c.l.b16 %v1700
    %v5305 = vunpack.c.l.b16 %v1701
    %v5306 = vunpack.c.l.b16 %v1702
    %v5307 = vunpack.c.l.b16 %v1703
    %v5308 = vunpack.c.l.b16 %v1704
    %v5309 = vunpack.c.l.b16 %v1705
    %v5310 = vunpack.c.l.b16 %v1706
    %v5311 = vunpack.c.l.b16 %v1707
    %v5312 = vunpack.c.l.b16 %v1708
    %v5313 = vunpack.c.l.b16 %v1709
    %v5314 = vunpack.c.l.b16 %v1710
    %v5315 = vunpack.c.l.b16 %v1711
    %v5316 = vunpack.c.l.b16 %v1712
    %v5317 = vunpack.c.l.b16 %v1713
    %v5318 = vunpack.c.l.b16 %v1714
    %v5319 = vunpack.c.l.b16 %v1715
    %v5320 = vunpack.c.l.b16 %v1716
    %v5321 = vunpack.c.l.b16 %v1717
    %v5322 = vunpack.c.l.b16 %v1718
    %v5323 = vunpack.c.l.b16 %v1719
    %v5324 = vunpack.c.l.b16 %v1720
    %v5325 = vunpack.c.l.b16 %v1721
    %v5326 = vunpack.c.l.b16 %v1722
    %v5327 = vunpack.c.l.b16 %v1723
    %v5328 = vunpack.c.l.b16 %v1724
    %v5329 = vunpack.c.l.b16 %v1725
    %v5330 = vunpack.c.l.b16 %v1726
    %v5331 = vunpack.c.l.b16 %v1727
    %v5332 = vunpack.c.l.b16 %v1728
    %v5333 = vunpack.c.l.b16 %v1729
    %v5334 = vunpack.c.l.b16 %v1730
    %v5335 = vunpack.c.l.b16 %v1731
    %v5336 = vunpack.c.l.b16 %v1732
    %v5337 = vunpack.c.l.b16 %v1733
    %v5338 = vunpack.c.l.b16 %v1734
    %v5339 = vunpack.c.l.b16 %v1735
    %v5340 = vunpack.c.l.b16 %v1736
    %v5341 = vunpack.c.l.b16 %v1737
    %v5342 = vunpack.c.l.b16 %v1738
    %v5343 = vunpack.c.l.b16 %v1739
    %v5344 = vunpack.c.l.b16 %v1740
    %v5345 = vunpack.c.l.b16 %v1741
    %v5346 = vunpack.c.l.b16 %v1742
    %v5347 = vunpack.c.l.b16 %v1743
    %v5348 = vunpack.c.l.b16 %v1744
    %v5349 = vunpack.c.l.b16 %v1745
    %v5350 = vunpack.c.l.b16 %v1746
    %v5351 = vunpack.c.l.b16 %v1747
    %v5352 = vunpack.c.l.b16 %v1748
    %v5353 = vunpack.c.l.b16 %v1749
    %v5354 = vunpack.c.l.b16 %v1750
    %v5355 = vunpack.c.l.b16 %v1751
    %v5356 = vunpack.c.l.b16 %v1752
    %v5357 = vunpack.c.l.b16 %v1753
    %v5358 = vunpack.c.l.b16 %v1754
    %v5359 = vunpack.c.l.b16 %v1755
    %v5360 = vunpack.c.l.b16 %v1756
    %v5361 = vunpack.c.l.b16 %v1757
    %v5362 = vunpack.c.l.b16 %v1758
    %v5363 = vunpack.c.l.b16 %v1759
    %v5364 = vunpack.c.l.b16 %v1760
    %v5365 = vunpack.c.l.b16 %v1761
    %v5366 = vunpack.c.l.b16 %v1762
    %v5367 = vunpack.c.l.b16 %v1763
    %v5368 = vunpack.c.l.b16 %v1764
    %v5369 = vunpack.c.l.b16 %v1765
    %v5370 = vunpack.c.l.b16 %v1766
    %v5371 = vunpack.c.l.b16 %v1767
    %v5372 = vunpack.c.l.b16 %v1768
    %v5373 = vunpack.c.l.b16 %v1769
    %v5374 = vunpack.c.l.b16 %v1770
    %v5375 = vunpack.c.l.b16 %v1771
    %v5376 = vunpack.c.l.b16 %v1772
    %v5377 = vunpack.c.l.b16 %v1773
    %v5378 = vunpack.c.l.b16 %v1774
    %v5379 = vunpack.c.l.b16 %v1775
    %v5380 = vunpack.c.l.b16 %v1776
    %v5381 = vunpack.c.l.b16 %v1777
    %v5382 = vunpack.c.l.b16 %v1778
    %v5383 = vunpack.c.l.b16 %v1779
    %v5384 = vunpack.c.l.b16 %v1780
    %v5385 = vunpack.c.l.b16 %v1781
    %v5386 = vunpack.c.l.b16 %v1782
    %v5387 = vunpack.c.l.b16 %v1783
    %v5388 = vunpack.c.l.b16 %v1784
    %v5389 = vunpack.c.l.b16 %v1785
    %v5390 = vunpack.c.l.b16 %v1786
    %v5391 = vunpack.c.l.b16 %v1787
    %v5392 = vunpack.c.l.b16 %v1788
    %v5393 = vunpack.c.l.b16 %v1789
    %v5394 = vunpack.c.l.b16 %v1790
    %v5395 = vunpack.c.l.b16 %v1791
    %v5396 = vunpack.c.l.b16 %v1792
    %v5397 = vunpack.c.l.b16 %v1793
    %v5398 = vunpack.c.l.b16 %v1794
    %v5399 = vunpack.c.l.b16 %v1795
    %v5400 = vunpack.c.l.b16 %v1796
    %v5401 = vunpack.c.l.b16 %v1797
    %v5402 = vunpack.c.l.b16 %v1798
    %v5403 = vunpack.c.l.b16 %v1799
    %v5404 = vunpack.c.l.b16 %v1800
    %v5405 = vunpack.c.l.b16 %v1801
    %v5406 = vunpack.c.l.b16 %v1802
    %v5407 = vunpack.c.l.b16 %v1803
    %v5408 = vunpack.c.l.b16 %v1804
    %v5409 = vunpack.c.l.b16 %v1805
    %v5410 = vunpack.c.l.b16 %v1806
    %v5411 = vunpack.c.l.b16 %v1807
    %v5412 = vunpack.c.l.b16 %v1808
    %v5413 = vunpack.c.l.b16 %v1809
    %v5414 = vunpack.c.l.b16 %v1810
    %v5415 = vunpack.c.l.b16 %v1811
    %v5416 = vunpack.c.l.b16 %v1812
    %v5417 = vunpack.c.l.b16 %v1813
    %v5418 = vunpack.c.l.b16 %v1814
    %v5419 = vunpack.c.l.b16 %v1815
    %v5420 = vunpack.c.l.b16 %v1816
    %v5421 = vunpack.c.l.b16 %v1817
    %v5422 = vunpack.c.l.b16 %v1818
    %v5423 = vunpack.c.l.b16 %v1819
    %v5424 = vunpack.c.l.b16 %v1820
    %v5425 = vunpack.c.l.b16 %v1821
    %v5426 = vunpack.c.l.b16 %v1822
    %v5427 = vunpack.c.l.b16 %v1823
    %v5428 = vunpack.c.l.b16 %v1824
    %v5429 = vunpack.c.l.b16 %v1825
    %v5430 = vunpack.c.l.b16 %v1826
    %v5431 = vunpack.c.l.b16 %v1827
    %v5432 = vunpack.c.l.b16 %v1828
    %v5433 = vunpack.c.l.b16 %v1829
    %v5434 = vunpack.c.l.b16 %v1830
    %v5435 = vunpack.c.l.b16 %v1831
    %v5436 = vunpack.c.l.b16 %v1832
    %v5437 = vunpack.c.l.b16 %v1833
    %v5438 = vunpack.c.l.b16 %v1834
    %v5439 = vunpack.c.l.b16 %v1835
    %v5440 = vunpack.c.l.b16 %v1836
    %v5441 = vunpack.c.l.b16 %v1837
    %v5442 = vunpack.c.l.b16 %v1838
    %v5443 = vunpack.c.l.b16 %v1839
    %v5444 = vunpack.c.l.b16 %v1840
    %v5445 = vunpack.c.l.b16 %v1841
    %v5446 = vunpack.c.l.b16 %v1842
    %v5447 = vunpack.c.l.b16 %v1843
    %v5448 = vunpack.c.l.b16 %v1844
    %v5449 = vunpack.c.l.b16 %v1845
    %v5450 = vunpack.c.l.b16 %v1846
    %v5451 = vunpack.c.l.b16 %v1847
    %v5452 = vunpack.c.l.b16 %v1848
    %v5453 = vunpack.c.l.b16 %v1849
    %v5454 = vunpack.c.l.b16 %v1850
    %v5455 = vunpack.c.l.b16 %v1851
    %v5456 = vunpack.c.l.b16 %v1852
    %v5457 = vunpack.c.l.b16 %v1853
    %v5458 = vunpack.c.l.b16 %v1854
    %v5459 = vunpack.c.l.b16 %v1855
    %v5460 = vunpack.c.l.b16 %v1856
    %v5461 = vunpack.c.l.b16 %v1857
    %v5462 = vunpack.c.l.b16 %v1858
    %v5463 = vunpack.c.l.b16 %v1859
    %v5464 = vunpack.c.l.b16 %v1860
    %v5465 = vunpack.c.l.b16 %v1861
    %v5466 = vunpack.c.l.b16 %v1862
    %v5467 = vunpack.c.l.b16 %v1863
    %v5468 = vunpack.c.l.b16 %v1864
    %v5469 = vunpack.c.l.b16 %v1865
    %v5470 = vunpack.c.l.b16 %v1866
    %v5471 = vunpack.c.l.b16 %v1867
    %v5472 = vunpack.c.l.b16 %v1868
    %v5473 = vunpack.c.l.b16 %v1869
    %v5474 = vunpack.c.l.b16 %v1870
    %v5475 = vunpack.c.l.b16 %v1871
    %v5476 = vunpack.c.l.b16 %v1872
    %v5477 = vunpack.c.l.b16 %v1873
    %v5478 = vunpack.c.l.b16 %v1874
    %v5479 = vunpack.c.l.b16 %v1875
    %v5480 = vunpack.c.l.b16 %v1876
    %v5481 = vunpack.c.l.b16 %v1877
    %v5482 = vunpack.c.l.b16 %v1878
    %v5483 = vunpack.c.l.b16 %v1879
    %v5484 = vunpack.c.l.b16 %v1880
    %v5485 = vunpack.c.l.b16 %v1881
    %v5486 = vunpack.c.l.b16 %v1882
    %v5487 = vunpack.c.l.b16 %v1883
    %v5488 = vunpack.c.l.b16 %v1884
    %v5489 = vunpack.c.l.b16 %v1885
    %v5490 = vunpack.c.l.b16 %v1886
    %v5491 = vunpack.c.l.b16 %v1887
    %v5492 = vunpack.c.l.b16 %v1888
    %v5493 = vunpack.c.l.b16 %v1889
    %v5494 = vunpack.c.l.b16 %v1890
    %v5495 = vunpack.c.l.b16 %v1891
    %v5496 = vunpack.c.l.b16 %v1892
    %v5497 = vunpack.c.l.b16 %v1893
    %v5498 = vunpack.c.l.b16 %v1894
    %v5499 = vunpack.c.l.b16 %v1895
    %v5500 = vunpack.c.l.b16 %v1896
    %v5501 = vunpack.c.l.b16 %v1897
    %v5502 = vunpack.c.l.b16 %v1898
    %v5503 = vunpack.c.l.b16 %v1899
    %v5504 = vunpack.c.l.b16 %v1900
    %v5505 = vunpack.c.l.b16 %v1901
    %v5506 = vunpack.c.l.b16 %v1902
    %v5507 = vunpack.c.l.b16 %v1903
    %v5508 = vunpack.c.l.b16 %v1904
    %v5509 = vunpack.c.l.b16 %v1905
    %v5510 = vunpack.c.l.b16 %v1906
    %v5511 = vunpack.c.l.b16 %v1907
    %v5512 = vunpack.c.l.b16 %v1908
    %v5513 = vunpack.c.l.b16 %v1909
    %v5514 = vunpack.c.l.b16 %v1910
    %v5515 = vunpack.c.l.b16 %v1911
    %v5516 = vunpack.c.l.b16 %v1912
    %v5517 = vunpack.c.l.b16 %v1913
    %v5518 = vunpack.c.l.b16 %v1914
    %v5519 = vunpack.c.l.b16 %v1915
    %v5520 = vunpack.c.l.b16 %v1916
    %v5521 = vunpack.c.l.b16 %v1917
    %v5522 = vunpack.c.l.b16 %v1918
    %v5523 = vunpack.c.l.b16 %v1919
    %v5524 = vunpack.c.l.b16 %v1920
    %v5525 = vunpack.c.l.b16 %v1921
    %v5526 = vunpack.c.l.b16 %v1922
    %v5527 = vunpack.c.l.b16 %v1923
    %v5528 = vunpack.c.l.b16 %v1924
    %v5529 = vunpack.c.l.b16 %v1925
    %v5530 = vunpack.c.l.b16 %v1926
    %v5531 = vunpack.c.l.b16 %v1927
    %v5532 = vunpack.c.l.b16 %v1928
    %v5533 = vunpack.c.l.b16 %v1929
    %v5534 = vunpack.c.l.b16 %v1930
    %v5535 = vunpack.c.l.b16 %v1931
    %v5536 = vunpack.c.l.b16 %v1932
    %v5537 = vunpack.c.l.b16 %v1933
    %v5538 = vunpack.c.l.b16 %v1934
    %v5539 = vunpack.c.l.b16 %v1935
    %v5540 = vunpack.c.l.b16 %v1936
    %v5541 = vunpack.c.l.b16 %v1937
    %v5542 = vunpack.c.l.b16 %v1938
    %v5543 = vunpack.c.l.b16 %v1939
    %v5544 = vunpack.c.l.b16 %v1940
    %v5545 = vunpack.c.l.b16 %v1941
    %v5546 = vunpack.c.l.b16 %v1942
    %v5547 = vunpack.c.l.b16 %v1943
    %v5548 = vunpack.c.l.b16 %v1944
    %v5549 = vunpack.c.l.b16 %v1945
    %v5550 = vunpack.c.l.b16 %v1946
    %v5551 = vunpack.c.l.b16 %v1947
    %v5552 = vunpack.c.l.b16 %v1948
    %v5553 = vunpack.c.l.b16 %v1949
    %v5554 = vunpack.c.l.b16 %v1950
    %v5555 = vunpack.c.l.b16 %v1951
    %v5556 = vunpack.c.l.b16 %v1952
    %v5557 = vunpack.c.l.b16 %v1953
    %v5558 = vunpack.c.l.b16 %v1954
    %v5559 = vunpack.c.l.b16 %v1955
    %v5560 = vunpack.c.l.b16 %v1956
    %v5561 = vunpack.c.l.b16 %v1957
    %v5562 = vunpack.c.l.b16 %v1958
    %v5563 = vunpack.c.l.b16 %v1959
    %v5564 = vunpack.c.l.b16 %v1960
    %v5565 = vunpack.c.l.b16 %v1961
    %v5566 = vunpack.c.l.b16 %v1962
    %v5567 = vunpack.c.l.b16 %v1963
    %v5568 = vunpack.c.l.b16 %v1964
    %v5569 = vunpack.c.l.b16 %v1965
    %v5570 = vunpack.c.l.b16 %v1966
    %v5571 = vunpack.c.l.b16 %v1967
    %v5572 = vunpack.c.l.b16 %v1968
    %v5573 = vunpack.c.l.b16 %v1969
    %v5574 = vunpack.c.l.b16 %v1970
    %v5575 = vunpack.c.l.b16 %v1971
    %v5576 = vunpack.c.l.b16 %v1972
    %v5577 = vunpack.c.l.b16 %v1973
    %v5578 = vunpack.c.l.b16 %v1974
    %v5579 = vunpack.c.l.b16 %v1975
    %v5580 = vunpack.c.l.b16 %v1976
    %v5581 = vunpack.c.l.b16 %v1977
    %v5582 = vunpack.c.l.b16 %v1978
    %v5583 = vunpack.c.l.b16 %v1979
    %v5584 = vunpack.c.l.b16 %v1980
    %v5585 = vunpack.c.l.b16 %v1981
    %v5586 = vunpack.c.l.b16 %v1982
    %v5587 = vunpack.c.l.b16 %v1983
    %v5588 = vunpack.c.l.b16 %v1984
    %v5589 = vunpack.c.l.b16 %v1985
    %v5590 = vunpack.c.l.b16 %v1986
    %v5591 = vunpack.c.l.b16 %v1987
    %v5592 = vunpack.c.l.b16 %v1988
    %v5593 = vunpack.c.l.b16 %v1989
    %v5594 = vunpack.c.l.b16 %v1990
    %v5595 = vunpack.c.l.b16 %v1991
    %v5596 = vunpack.c.l.b16 %v1992
    %v5597 = vunpack.c.l.b16 %v1993
    %v5598 = vunpack.c.l.b16 %v1994
    %v5599 = vunpack.c.l.b16 %v1995
    %v5600 = vunpack.c.l.b16 %v1996
    %v5601 = vunpack.c.l.b16 %v1997
    %v5602 = vunpack.c.l.b16 %v1998
    %v5603 = vunpack.c.l.b16 %v1999
    %v5604 = vunpack.c.l.b16 %v2000
    %v5605 = vunpack.c.l.b16 %v2001
    %v5606 = vunpack.c.l.b16 %v2002
    %v5607 = vunpack.c.l.b16 %v2003
    %v5608 = vunpack.c.l.b16 %v2004
    %v5609 = vunpack.c.l.b16 %v2005
    %v5610 = vunpack.c.l.b16 %v2006
    %v5611 = vunpack.c.l.b16 %v2007
    %v5612 = vunpack.c.l.b16 %v2008
    %v5613 = vunpack.c.l.b16 %v2009
    %v5614 = vunpack.c.l.b16 %v2010
    %v5615 = vunpack.c.l.b16 %v2011
    %v5616 = vunpack.c.l.b16 %v2012
    %v5617 = vunpack.c.l.b16 %v2013
    %v5618 = vunpack.c.l.b16 %v2014
    %v5619 = vunpack.c.l.b16 %v2015
    %v5620 = vunpack.c.l.b16 %v2016
    %v5621 = vunpack.c.l.b16 %v2017
    %v5622 = vunpack.c.l.b16 %v2018
    %v5623 = vunpack.c.l.b16 %v2019
    %v5624 = vunpack.c.l.b16 %v2020
    %v5625 = vunpack.c.l.b16 %v2021
    %v5626 = vunpack.c.l.b16 %v2022
    %v5627 = vunpack.c.l.b16 %v2023
    %v5628 = vunpack.c.l.b16 %v2024
    %v5629 = vunpack.c.l.b16 %v2025
    %v5630 = vunpack.c.l.b16 %v2026
    %v5631 = vunpack.c.l.b16 %v2027
    %v5632 = vunpack.c.l.b16 %v2028
    %v5633 = vunpack.c.l.b16 %v2029
    %v5634 = vunpack.c.l.b16 %v2030
    %v5635 = vunpack.c.l.b16 %v2031
    %v5636 = vunpack.c.l.b16 %v2032
    %v5637 = vunpack.c.l.b16 %v2033
    %v5638 = vunpack.c.l.b16 %v2034
    %v5639 = vunpack.c.l.b16 %v2035
    %v5640 = vunpack.c.l.b16 %v2036
    %v5641 = vunpack.c.l.b16 %v2037
    %v5642 = vunpack.c.l.b16 %v2038
    %v5643 = vunpack.c.l.b16 %v2039
    %v5644 = vunpack.c.l.b16 %v2040
    %v5645 = vunpack.c.l.b16 %v2041
    %v5646 = vunpack.c.l.b16 %v2042
    %v5647 = vunpack.c.l.b16 %v2043
    %v5648 = vunpack.c.l.b16 %v2044
    %v5649 = vunpack.c.l.b16 %v2045
    %v5650 = vunpack.c.l.b16 %v2046
    %v5651 = vunpack.c.l.b16 %v2047
    %v5652 = vunpack.c.l.b16 %v2048
    %v5653 = vunpack.c.l.b16 %v2049
    %v5654 = vunpack.c.l.b16 %v2050
    %v5655 = vunpack.c.l.b16 %v2051
    %v5656 = vunpack.c.l.b16 %v2052
    %v5657 = vunpack.c.l.b16 %v2053
    %v5658 = vunpack.c.l.b16 %v2054
    %v5659 = vunpack.c.l.b16 %v2055
    %v5660 = vunpack.c.l.b16 %v2056
    %v5661 = vunpack.c.l.b16 %v2057
    %v5662 = vunpack.c.l.b16 %v2058
    %v5663 = vunpack.c.l.b16 %v2059
    %v5664 = vunpack.c.l.b16 %v2060
    %v5665 = vunpack.c.l.b16 %v2061
    %v5666 = vunpack.c.l.b16 %v2062
    %v5667 = vunpack.c.l.b16 %v2063
    %v5668 = vunpack.c.l.b16 %v2064
    %v5669 = vunpack.c.l.b16 %v2065
    %v5670 = vunpack.c.l.b16 %v2066
    %v5671 = vunpack.c.l.b16 %v2067
    %v5672 = vunpack.c.l.b16 %v2068
    %v5673 = vunpack.c.l.b16 %v2069
    %v5674 = vunpack.c.l.b16 %v2070
    %v5675 = vunpack.c.l.b16 %v2071
    %v5676 = vunpack.c.l.b16 %v2072
    %v5677 = vunpack.c.l.b16 %v2073
    %v5678 = vunpack.c.l.b16 %v2074
    %v5679 = vunpack.c.l.b16 %v2075
    %v5680 = vunpack.c.l.b16 %v2076
    %v5681 = vunpack.c.l.b16 %v2077
    %v5682 = vunpack.c.l.b16 %v2078
    %v5683 = vunpack.c.l.b16 %v2079
    %v5684 = vunpack.c.l.b16 %v2080
    %v5685 = vunpack.c.l.b16 %v2081
    %v5686 = vunpack.c.l.b16 %v2082
    %v5687 = vunpack.c.l.b16 %v2083
    %v5688 = vunpack.c.l.b16 %v2084
    %v5689 = vunpack.c.l.b16 %v2085
    %v5690 = vunpack.c.l.b16 %v2086
    %v5691 = vunpack.c.l.b16 %v2087
    %v5692 = vunpack.c.l.b16 %v2088
    %v5693 = vunpack.c.l.b16 %v2089
    %v5694 = vunpack.c.l.b16 %v2090
    %v5695 = vunpack.c.l.b16 %v2091
    %v5696 = vunpack.c.l.b16 %v2092
    %v5697 = vunpack.c.l.b16 %v2093
    %v5698 = vunpack.c.l.b16 %v2094
    %v5699 = vunpack.c.l.b16 %v2095
    %v5700 = vunpack.c.l.b16 %v2096
    %v5701 = vunpack.c.l.b16 %v2097
    %v5702 = vunpack.c.l.b16 %v2098
    %v5703 = vunpack.c.l.b16 %v2099
    %v5704 = vunpack.c.l.b16 %v2100
    %v5705 = vunpack.c.l.b16 %v2101
    %v5706 = vunpack.c.l.b16 %v2102
    %v5707 = vunpack.c.l.b16 %v2103
    %v5708 = vunpack.c.l.b16 %v2104
    %v5709 = vunpack.c.l.b16 %v2105
    %v5710 = vunpack.c.l.b16 %v2106
    %v5711 = vunpack.c.l.b16 %v2107
    %v5712 = vunpack.c.l.b16 %v2108
    %v5713 = vunpack.c.l.b16 %v2109
    %v5714 = vunpack.c.l.b16 %v2110
    %v5715 = vunpack.c.l.b16 %v2111
    %v5716 = vunpack.c.l.b16 %v2112
    %v5717 = vunpack.c.l.b16 %v2113
    %v5718 = vunpack.c.l.b16 %v2114
    %v5719 = vunpack.c.l.b16 %v2115
    %v5720 = vunpack.c.l.b16 %v2116
    %v5721 = vunpack.c.l.b16 %v2117
    %v5722 = vunpack.c.l.b16 %v2118
    %v5723 = vunpack.c.l.b16 %v2119
    %v5724 = vunpack.c.l.b16 %v2120
    %v5725 = vunpack.c.l.b16 %v2121
    %v5726 = vunpack.c.l.b16 %v2122
    %v5727 = vunpack.c.l.b16 %v2123
    %v5728 = vunpack.c.l.b16 %v2124
    %v5729 = vunpack.c.l.b16 %v2125
    %v5730 = vunpack.c.l.b16 %v2126
    %v5731 = vunpack.c.l.b16 %v2127
    %v5732 = vunpack.c.l.b16 %v2128
    %v5733 = vunpack.c.l.b16 %v2129
    %v5734 = vunpack.c.l.b16 %v2130
    %v5735 = vunpack.c.l.b16 %v2131
    %v5736 = vunpack.c.l.b16 %v2132
    %v5737 = vunpack.c.l.b16 %v2133
    %v5738 = vunpack.c.l.b16 %v2134
    %v5739 = vunpack.c.l.b16 %v2135
    %v5740 = vunpack.c.l.b16 %v2136
    %v5741 = vunpack.c.l.b16 %v2137
    %v5742 = vunpack.c.l.b16 %v2138
    %v5743 = vunpack.c.l.b16 %v2139
    %v5744 = vunpack.c.l.b16 %v2140
    %v5745 = vpack.c.b16 %v3946, %v3945
    %v5746 = vpack.c.b16 %v3948, %v3947
    %v5747 = vpack.c.b16 %v3950, %v3949
    %v5748 = vpack.c.b16 %v3952, %v3951
    %v5749 = vpack.c.b16 %v3954, %v3953
    %v5750 = vpack.c.b16 %v3956, %v3955
    %v5751 = vpack.c.b16 %v3958, %v3957
    %v5752 = vpack.c.b16 %v3960, %v3959
    %v5753 = vpack.c.b16 %v3962, %v3961
    %v5754 = vpack.c.b16 %v3964, %v3963
    %v5755 = vpack.c.b16 %v3966, %v3965
    %v5756 = vpack.c.b16 %v3968, %v3967
    %v5757 = vpack.c.b16 %v3970, %v3969
    %v5758 = vpack.c.b16 %v3972, %v3971
    %v5759 = vpack.c.b16 %v3974, %v3973
    %v5760 = vpack.c.b16 %v3976, %v3975
    %v5761 = vpack.c.b16 %v3978, %v3977
    %v5762 = vpack.c.b16 %v3980, %v3979
    %v5763 = vpack.c.b16 %v3982, %v3981
    %v5764 = vpack.c.b16 %v3984, %v3983
    %v5765 = vpack.c.b16 %v3986, %v3985
    %v5766 = vpack.c.b16 %v3988, %v3987
    %v5767 = vpack.c.b16 %v3990, %v3989
    %v5768 = vpack.c.b16 %v3992, %v3991
    %v5769 = vpack.c.b16 %v3994, %v3993
    %v5770 = vpack.c.b16 %v3996, %v3995
    %v5771 = vpack.c.b16 %v3998, %v3997
    %v5772 = vpack.c.b16 %v4000, %v3999
    %v5773 = vpack.c.b16 %v4002, %v4001
    %v5774 = vpack.c.b16 %v4004, %v4003
    %v5775 = vpack.c.b16 %v4006, %v4005
    %v5776 = vpack.c.b16 %v4008, %v4007
    %v5777 = vpack.c.b16 %v4010, %v4009
    %v5778 = vpack.c.b16 %v4012, %v4011
    %v5779 = vpack.c.b16 %v4014, %v4013
    %v5780 = vpack.c.b16 %v4016, %v4015
    %v5781 = vpack.c.b16 %v4018, %v4017
    %v5782 = vpack.c.b16 %v4020, %v4019
    %v5783 = vpack.c.b16 %v4022, %v4021
    %v5784 = vpack.c.b16 %v4024, %v4023
    %v5785 = vpack.c.b16 %v4026, %v4025
    %v5786 = vpack.c.b16 %v4028, %v4027
    %v5787 = vpack.c.b16 %v4030, %v4029
    %v5788 = vpack.c.b16 %v4032, %v4031
    %v5789 = vpack.c.b16 %v4034, %v4033
    %v5790 = vpack.c.b16 %v4036, %v4035
    %v5791 = vpack.c.b16 %v4038, %v4037
    %v5792 = vpack.c.b16 %v4040, %v4039
    %v5793 = vpack.c.b16 %v4042, %v4041
    %v5794 = vpack.c.b16 %v4044, %v4043
    %v5795 = vpack.c.b16 %v4046, %v4045
    %v5796 = vpack.c.b16 %v4048, %v4047
    %v5797 = vpack.c.b16 %v4050, %v4049
    %v5798 = vpack.c.b16 %v4052, %v4051
    %v5799 = vpack.c.b16 %v4054, %v4053
    %v5800 = vpack.c.b16 %v4056, %v4055
    %v5801 = vpack.c.b16 %v4058, %v4057
    %v5802 = vpack.c.b16 %v4060, %v4059
    %v5803 = vpack.c.b16 %v4062, %v4061
    %v5804 = vpack.c.b16 %v4064, %v4063
    %v5805 = vpack.c.b16 %v4066, %v4065
    %v5806 = vpack.c.b16 %v4068, %v4067
    %v5807 = vpack.c.b16 %v4070, %v4069
    %v5808 = vpack.c.b16 %v4072, %v4071
    %v5809 = vpack.c.b16 %v4074, %v4073
    %v5810 = vpack.c.b16 %v4076, %v4075
    %v5811 = vpack.c.b16 %v4078, %v4077
    %v5812 = vpack.c.b16 %v4080, %v4079
    %v5813 = vpack.c.b16 %v4082, %v4081
    %v5814 = vpack.c.b16 %v4084, %v4083
    %v5815 = vpack.c.b16 %v4086, %v4085
    %v5816 = vpack.c.b16 %v4088, %v4087
    %v5817 = vpack.c.b16 %v4090, %v4089
    %v5818 = vpack.c.b16 %v4092, %v4091
    %v5819 = vpack.c.b16 %v4094, %v4093
    %v5820 = vpack.c.b16 %v4096, %v4095
    %v5821 = vpack.c.b16 %v4098, %v4097
    %v5822 = vpack.c.b16 %v4100, %v4099
    %v5823 = vpack.c.b16 %v4102, %v4101
    %v5824 = vpack.c.b16 %v4104, %v4103
    %v5825 = vpack.c.b16 %v4106, %v4105
    %v5826 = vpack.c.b16 %v4108, %v4107
    %v5827 = vpack.c.b16 %v4110, %v4109
    %v5828 = vpack.c.b16 %v4112, %v4111
    %v5829 = vpack.c.b16 %v4114, %v4113
    %v5830 = vpack.c.b16 %v4116, %v4115
    %v5831 = vpack.c.b16 %v4118, %v4117
    %v5832 = vpack.c.b16 %v4120, %v4119
    %v5833 = vpack.c.b16 %v4122, %v4121
    %v5834 = vpack.c.b16 %v4124, %v4123
    %v5835 = vpack.c.b16 %v4126, %v4125
    %v5836 = vpack.c.b16 %v4128, %v4127
    %v5837 = vpack.c.b16 %v4130, %v4129
    %v5838 = vpack.c.b16 %v4132, %v4131
    %v5839 = vpack.c.b16 %v4134, %v4133
    %v5840 = vpack.c.b16 %v4136, %v4135
    %v5841 = vpack.c.b16 %v4138, %v4137
    %v5842 = vpack.c.b16 %v4140, %v4139
    %v5843 = vpack.c.b16 %v4142, %v4141
    %v5844 = vpack.c.b16 %v4144, %v4143
    %v5845 = vpack.c.b16 %v4146, %v4145
    %v5846 = vpack.c.b16 %v4148, %v4147
    %v5847 = vpack.c.b16 %v4150, %v4149
    %v5848 = vpack.c.b16 %v4152, %v4151
    %v5849 = vpack.c.b16 %v4154, %v4153
    %v5850 = vpack.c.b16 %v4156, %v4155
    %v5851 = vpack.c.b16 %v4158, %v4157
    %v5852 = vpack.c.b16 %v4160, %v4159
    %v5853 = vpack.c.b16 %v4162, %v4161
    %v5854 = vpack.c.b16 %v4164, %v4163
    %v5855 = vpack.c.b16 %v4166, %v4165
    %v5856 = vpack.c.b16 %v4168, %v4167
    %v5857 = vpack.c.b16 %v4170, %v4169
    %v5858 = vpack.c.b16 %v4172, %v4171
    %v5859 = vpack.c.b16 %v4174, %v4173
    %v5860 = vpack.c.b16 %v4176, %v4175
    %v5861 = vpack.c.b16 %v4178, %v4177
    %v5862 = vpack.c.b16 %v4180, %v4179
    %v5863 = vpack.c.b16 %v4182, %v4181
    %v5864 = vpack.c.b16 %v4184, %v4183
    %v5865 = vpack.c.b16 %v4186, %v4185
    %v5866 = vpack.c.b16 %v4188, %v4187
    %v5867 = vpack.c.b16 %v4190, %v4189
    %v5868 = vpack.c.b16 %v4192, %v4191
    %v5869 = vpack.c.b16 %v4194, %v4193
    %v5870 = vpack.c.b16 %v4196, %v4195
    %v5871 = vpack.c.b16 %v4198, %v4197
    %v5872 = vpack.c.b16 %v4200, %v4199
    %v5873 = vpack.c.b16 %v4202, %v4201
    %v5874 = vpack.c.b16 %v4204, %v4203
    %v5875 = vpack.c.b16 %v4206, %v4205
    %v5876 = vpack.c.b16 %v4208, %v4207
    %v5877 = vpack.c.b16 %v4210, %v4209
    %v5878 = vpack.c.b16 %v4212, %v4211
    %v5879 = vpack.c.b16 %v4214, %v4213
    %v5880 = vpack.c.b16 %v4216, %v4215
    %v5881 = vpack.c.b16 %v4218, %v4217
    %v5882 = vpack.c.b16 %v4220, %v4219
    %v5883 = vpack.c.b16 %v4222, %v4221
    %v5884 = vpack.c.b16 %v4224, %v4223
    %v5885 = vpack.c.b16 %v4226, %v4225
    %v5886 = vpack.c.b16 %v4228, %v4227
    %v5887 = vpack.c.b16 %v4230, %v4229
    %v5888 = vpack.c.b16 %v4232, %v4231
    %v5889 = vpack.c.b16 %v4234, %v4233
    %v5890 = vpack.c.b16 %v4236, %v4235
    %v5891 = vpack.c.b16 %v4238, %v4237
    %v5892 = vpack.c.b16 %v4240, %v4239
    %v5893 = vpack.c.b16 %v4242, %v4241
    %v5894 = vpack.c.b16 %v4244, %v4243
    %v5895 = vpack.c.b16 %v4246, %v4245
    %v5896 = vpack.c.b16 %v4248, %v4247
    %v5897 = vpack.c.b16 %v4250, %v4249
    %v5898 = vpack.c.b16 %v4252, %v4251
    %v5899 = vpack.c.b16 %v4254, %v4253
    %v5900 = vpack.c.b16 %v4256, %v4255
    %v5901 = vpack.c.b16 %v4258, %v4257
    %v5902 = vpack.c.b16 %v4260, %v4259
    %v5903 = vpack.c.b16 %v4262, %v4261
    %v5904 = vpack.c.b16 %v4264, %v4263
    %v5905 = vpack.c.b16 %v4266, %v4265
    %v5906 = vpack.c.b16 %v4268, %v4267
    %v5907 = vpack.c.b16 %v4270, %v4269
    %v5908 = vpack.c.b16 %v4272, %v4271
    %v5909 = vpack.c.b16 %v4274, %v4273
    %v5910 = vpack.c.b16 %v4276, %v4275
    %v5911 = vpack.c.b16 %v4278, %v4277
    %v5912 = vpack.c.b16 %v4280, %v4279
    %v5913 = vpack.c.b16 %v4282, %v4281
    %v5914 = vpack.c.b16 %v4284, %v4283
    %v5915 = vpack.c.b16 %v4286, %v4285
    %v5916 = vpack.c.b16 %v4288, %v4287
    %v5917 = vpack.c.b16 %v4290, %v4289
    %v5918 = vpack.c.b16 %v4292, %v4291
    %v5919 = vpack.c.b16 %v4294, %v4293
    %v5920 = vpack.c.b16 %v4296, %v4295
    %v5921 = vpack.c.b16 %v4298, %v4297
    %v5922 = vpack.c.b16 %v4300, %v4299
    %v5923 = vpack.c.b16 %v4302, %v4301
    %v5924 = vpack.c.b16 %v4304, %v4303
    %v5925 = vpack.c.b16 %v4306, %v4305
    %v5926 = vpack.c.b16 %v4308, %v4307
    %v5927 = vpack.c.b16 %v4310, %v4309
    %v5928 = vpack.c.b16 %v4312, %v4311
    %v5929 = vpack.c.b16 %v4314, %v4313
    %v5930 = vpack.c.b16 %v4316, %v4315
    %v5931 = vpack.c.b16 %v4318, %v4317
    %v5932 = vpack.c.b16 %v4320, %v4319
    %v5933 = vpack.c.b16 %v4322, %v4321
    %v5934 = vpack.c.b16 %v4324, %v4323
    %v5935 = vpack.c.b16 %v4326, %v4325
    %v5936 = vpack.c.b16 %v4328, %v4327
    %v5937 = vpack.c.b16 %v4330, %v4329
    %v5938 = vpack.c.b16 %v4332, %v4331
    %v5939 = vpack.c.b16 %v4334, %v4333
    %v5940 = vpack.c.b16 %v4336, %v4335
    %v5941 = vpack.c.b16 %v4338, %v4337
    %v5942 = vpack.c.b16 %v4340, %v4339
    %v5943 = vpack.c.b16 %v4342, %v4341
    %v5944 = vpack.c.b16 %v4344, %v4343
    %v5945 = vpack.c.b16 %v4346, %v4345
    %v5946 = vpack.c.b16 %v4348, %v4347
    %v5947 = vpack.c.b16 %v4350, %v4349
    %v5948 = vpack.c.b16 %v4352, %v4351
    %v5949 = vpack.c.b16 %v4354, %v4353
    %v5950 = vpack.c.b16 %v4356, %v4355
    %v5951 = vpack.c.b16 %v4358, %v4357
    %v5952 = vpack.c.b16 %v4360, %v4359
    %v5953 = vpack.c.b16 %v4362, %v4361
    %v5954 = vpack.c.b16 %v4364, %v4363
    %v5955 = vpack.c.b16 %v4366, %v4365
    %v5956 = vpack.c.b16 %v4368, %v4367
    %v5957 = vpack.c.b16 %v4370, %v4369
    %v5958 = vpack.c.b16 %v4372, %v4371
    %v5959 = vpack.c.b16 %v4374, %v4373
    %v5960 = vpack.c.b16 %v4376, %v4375
    %v5961 = vpack.c.b16 %v4378, %v4377
    %v5962 = vpack.c.b16 %v4380, %v4379
    %v5963 = vpack.c.b16 %v4382, %v4381
    %v5964 = vpack.c.b16 %v4384, %v4383
    %v5965 = vpack.c.b16 %v4386, %v4385
    %v5966 = vpack.c.b16 %v4388, %v4387
    %v5967 = vpack.c.b16 %v4390, %v4389
    %v5968 = vpack.c.b16 %v4392, %v4391
    %v5969 = vpack.c.b16 %v4394, %v4393
    %v5970 = vpack.c.b16 %v4396, %v4395
    %v5971 = vpack.c.b16 %v4398, %v4397
    %v5972 = vpack.c.b16 %v4400, %v4399
    %v5973 = vpack.c.b16 %v4402, %v4401
    %v5974 = vpack.c.b16 %v4404, %v4403
    %v5975 = vpack.c.b16 %v4406, %v4405
    %v5976 = vpack.c.b16 %v4408, %v4407
    %v5977 = vpack.c.b16 %v4410, %v4409
    %v5978 = vpack.c.b16 %v4412, %v4411
    %v5979 = vpack.c.b16 %v4414, %v4413
    %v5980 = vpack.c.b16 %v4416, %v4415
    %v5981 = vpack.c.b16 %v4418, %v4417
    %v5982 = vpack.c.b16 %v4420, %v4419
    %v5983 = vpack.c.b16 %v4422, %v4421
    %v5984 = vpack.c.b16 %v4424, %v4423
    %v5985 = vpack.c.b16 %v4426, %v4425
    %v5986 = vpack.c.b16 %v4428, %v4427
    %v5987 = vpack.c.b16 %v4430, %v4429
    %v5988 = vpack.c.b16 %v4432, %v4431
    %v5989 = vpack.c.b16 %v4434, %v4433
    %v5990 = vpack.c.b16 %v4436, %v4435
    %v5991 = vpack.c.b16 %v4438, %v4437
    %v5992 = vpack.c.b16 %v4440, %v4439
    %v5993 = vpack.c.b16 %v4442, %v4441
    %v5994 = vpack.c.b16 %v4444, %v4443
    %v5995 = vpack.c.b16 %v4446, %v4445
    %v5996 = vpack.c.b16 %v4448, %v4447
    %v5997 = vpack.c.b16 %v4450, %v4449
    %v5998 = vpack.c.b16 %v4452, %v4451
    %v5999 = vpack.c.b16 %v4454, %v4453
    %v6000 = vpack.c.b16 %v4456, %v4455
    %v6001 = vpack.c.b16 %v4458, %v4457
    %v6002 = vpack.c.b16 %v4460, %v4459
    %v6003 = vpack.c.b16 %v4462, %v4461
    %v6004 = vpack.c.b16 %v4464, %v4463
    %v6005 = vpack.c.b16 %v4466, %v4465
    %v6006 = vpack.c.b16 %v4468, %v4467
    %v6007 = vpack.c.b16 %v4470, %v4469
    %v6008 = vpack.c.b16 %v4472, %v4471
    %v6009 = vpack.c.b16 %v4474, %v4473
    %v6010 = vpack.c.b16 %v4476, %v4475
    %v6011 = vpack.c.b16 %v4478, %v4477
    %v6012 = vpack.c.b16 %v4480, %v4479
    %v6013 = vpack.c.b16 %v4482, %v4481
    %v6014 = vpack.c.b16 %v4484, %v4483
    %v6015 = vpack.c.b16 %v4486, %v4485
    %v6016 = vpack.c.b16 %v4488, %v4487
    %v6017 = vpack.c.b16 %v4490, %v4489
    %v6018 = vpack.c.b16 %v4492, %v4491
    %v6019 = vpack.c.b16 %v4494, %v4493
    %v6020 = vpack.c.b16 %v4496, %v4495
    %v6021 = vpack.c.b16 %v4498, %v4497
    %v6022 = vpack.c.b16 %v4500, %v4499
    %v6023 = vpack.c.b16 %v4502, %v4501
    %v6024 = vpack.c.b16 %v4504, %v4503
    %v6025 = vpack.c.b16 %v4506, %v4505
    %v6026 = vpack.c.b16 %v4508, %v4507
    %v6027 = vpack.c.b16 %v4510, %v4509
    %v6028 = vpack.c.b16 %v4512, %v4511
    %v6029 = vpack.c.b16 %v4514, %v4513
    %v6030 = vpack.c.b16 %v4516, %v4515
    %v6031 = vpack.c.b16 %v4518, %v4517
    %v6032 = vpack.c.b16 %v4520, %v4519
    %v6033 = vpack.c.b16 %v4522, %v4521
    %v6034 = vpack.c.b16 %v4524, %v4523
    %v6035 = vpack.c.b16 %v4526, %v4525
    %v6036 = vpack.c.b16 %v4528, %v4527
    %v6037 = vpack.c.b16 %v4530, %v4529
    %v6038 = vpack.c.b16 %v4532, %v4531
    %v6039 = vpack.c.b16 %v4534, %v4533
    %v6040 = vpack.c.b16 %v4536, %v4535
    %v6041 = vpack.c.b16 %v4538, %v4537
    %v6042 = vpack.c.b16 %v4540, %v4539
    %v6043 = vpack.c.b16 %v4542, %v4541
    %v6044 = vpack.c.b16 %v4544, %v4543
    %v6045 = vpack.c.b16 %v4546, %v4545
    %v6046 = vpack.c.b16 %v4548, %v4547
    %v6047 = vpack.c.b16 %v4550, %v4549
    %v6048 = vpack.c.b16 %v4552, %v4551
    %v6049 = vpack.c.b16 %v4554, %v4553
    %v6050 = vpack.c.b16 %v4556, %v4555
    %v6051 = vpack.c.b16 %v4558, %v4557
    %v6052 = vpack.c.b16 %v4560, %v4559
    %v6053 = vpack.c.b16 %v4562, %v4561
    %v6054 = vpack.c.b16 %v4564, %v4563
    %v6055 = vpack.c.b16 %v4566, %v4565
    %v6056 = vpack.c.b16 %v4568, %v4567
    %v6057 = vpack.c.b16 %v4570, %v4569
    %v6058 = vpack.c.b16 %v4572, %v4571
    %v6059 = vpack.c.b16 %v4574, %v4573
    %v6060 = vpack.c.b16 %v4576, %v4575
    %v6061 = vpack.c.b16 %v4578, %v4577
    %v6062 = vpack.c.b16 %v4580, %v4579
    %v6063 = vpack.c.b16 %v4582, %v4581
    %v6064 = vpack.c.b16 %v4584, %v4583
    %v6065 = vpack.c.b16 %v4586, %v4585
    %v6066 = vpack.c.b16 %v4588, %v4587
    %v6067 = vpack.c.b16 %v4590, %v4589
    %v6068 = vpack.c.b16 %v4592, %v4591
    %v6069 = vpack.c.b16 %v4594, %v4593
    %v6070 = vpack.c.b16 %v4596, %v4595
    %v6071 = vpack.c.b16 %v4598, %v4597
    %v6072 = vpack.c.b16 %v4600, %v4599
    %v6073 = vpack.c.b16 %v4602, %v4601
    %v6074 = vpack.c.b16 %v4604, %v4603
    %v6075 = vpack.c.b16 %v4606, %v4605
    %v6076 = vpack.c.b16 %v4608, %v4607
    %v6077 = vpack.c.b16 %v4610, %v4609
    %v6078 = vpack.c.b16 %v4612, %v4611
    %v6079 = vpack.c.b16 %v4614, %v4613
    %v6080 = vpack.c.b16 %v4616, %v4615
    %v6081 = vpack.c.b16 %v4618, %v4617
    %v6082 = vpack.c.b16 %v4620, %v4619
    %v6083 = vpack.c.b16 %v4622, %v4621
    %v6084 = vpack.c.b16 %v4624, %v4623
    %v6085 = vpack.c.b16 %v4626, %v4625
    %v6086 = vpack.c.b16 %v4628, %v4627
    %v6087 = vpack.c.b16 %v4630, %v4629
    %v6088 = vpack.c.b16 %v4632, %v4631
    %v6089 = vpack.c.b16 %v4634, %v4633
    %v6090 = vpack.c.b16 %v4636, %v4635
    %v6091 = vpack.c.b16 %v4638, %v4637
    %v6092 = vpack.c.b16 %v4640, %v4639
    %v6093 = vpack.c.b16 %v4642, %v4641
    %v6094 = vpack.c.b16 %v4644, %v4643
    %v6095 = vpack.c.b16 %v4646, %v4645
    %v6096 = vpack.c.b16 %v4648, %v4647
    %v6097 = vpack.c.b16 %v4650, %v4649
    %v6098 = vpack.c.b16 %v4652, %v4651
    %v6099 = vpack.c.b16 %v4654, %v4653
    %v6100 = vpack.c.b16 %v4656, %v4655
    %v6101 = vpack.c.b16 %v4658, %v4657
    %v6102 = vpack.c.b16 %v4660, %v4659
    %v6103 = vpack.c.b16 %v4662, %v4661
    %v6104 = vpack.c.b16 %v4664, %v4663
    %v6105 = vpack.c.b16 %v4666, %v4665
    %v6106 = vpack.c.b16 %v4668, %v4667
    %v6107 = vpack.c.b16 %v4670, %v4669
    %v6108 = vpack.c.b16 %v4672, %v4671
    %v6109 = vpack.c.b16 %v4674, %v4673
    %v6110 = vpack.c.b16 %v4676, %v4675
    %v6111 = vpack.c.b16 %v4678, %v4677
    %v6112 = vpack.c.b16 %v4680, %v4679
    %v6113 = vpack.c.b16 %v4682, %v4681
    %v6114 = vpack.c.b16 %v4684, %v4683
    %v6115 = vpack.c.b16 %v4686, %v4685
    %v6116 = vpack.c.b16 %v4688, %v4687
    %v6117 = vpack.c.b16 %v4690, %v4689
    %v6118 = vpack.c.b16 %v4692, %v4691
    %v6119 = vpack.c.b16 %v4694, %v4693
    %v6120 = vpack.c.b16 %v4696, %v4695
    %v6121 = vpack.c.b16 %v4698, %v4697
    %v6122 = vpack.c.b16 %v4700, %v4699
    %v6123 = vpack.c.b16 %v4702, %v4701
    %v6124 = vpack.c.b16 %v4704, %v4703
    %v6125 = vpack.c.b16 %v4706, %v4705
    %v6126 = vpack.c.b16 %v4708, %v4707
    %v6127 = vpack.c.b16 %v4710, %v4709
    %v6128 = vpack.c.b16 %v4712, %v4711
    %v6129 = vpack.c.b16 %v4714, %v4713
    %v6130 = vpack.c.b16 %v4716, %v4715
    %v6131 = vpack.c.b16 %v4718, %v4717
    %v6132 = vpack.c.b16 %v4720, %v4719
    %v6133 = vpack.c.b16 %v4722, %v4721
    %v6134 = vpack.c.b16 %v4724, %v4723
    %v6135 = vpack.c.b16 %v4726, %v4725
    %v6136 = vpack.c.b16 %v4728, %v4727
    %v6137 = vpack.c.b16 %v4730, %v4729
    %v6138 = vpack.c.b16 %v4732, %v4731
    %v6139 = vpack.c.b16 %v4734, %v4733
    %v6140 = vpack.c.b16 %v4736, %v4735
    %v6141 = vpack.c.b16 %v4738, %v4737
    %v6142 = vpack.c.b16 %v4740, %v4739
    %v6143 = vpack.c.b16 %v4742, %v4741
    %v6144 = vpack.c.b16 %v4744, %v4743
    %v6145 = vpack.c.b16 %v4746, %v4745
    %v6146 = vpack.c.b16 %v4748, %v4747
    %v6147 = vpack.c.b16 %v4750, %v4749
    %v6148 = vpack.c.b16 %v4752, %v4751
    %v6149 = vpack.c.b16 %v4754, %v4753
    %v6150 = vpack.c.b16 %v4756, %v4755
    %v6151 = vpack.c.b16 %v4758, %v4757
    %v6152 = vpack.c.b16 %v4760, %v4759
    %v6153 = vpack.c.b16 %v4762, %v4761
    %v6154 = vpack.c.b16 %v4764, %v4763
    %v6155 = vpack.c.b16 %v4766, %v4765
    %v6156 = vpack.c.b16 %v4768, %v4767
    %v6157 = vpack.c.b16 %v4770, %v4769
    %v6158 = vpack.c.b16 %v4772, %v4771
    %v6159 = vpack.c.b16 %v4774, %v4773
    %v6160 = vpack.c.b16 %v4776, %v4775
    %v6161 = vpack.c.b16 %v4778, %v4777
    %v6162 = vpack.c.b16 %v4780, %v4779
    %v6163 = vpack.c.b16 %v4782, %v4781
    %v6164 = vpack.c.b16 %v4784, %v4783
    %v6165 = vpack.c.b16 %v4786, %v4785
    %v6166 = vpack.c.b16 %v4788, %v4787
    %v6167 = vpack.c.b16 %v4790, %v4789
    %v6168 = vpack.c.b16 %v4792, %v4791
    %v6169 = vpack.c.b16 %v4794, %v4793
    %v6170 = vpack.c.b16 %v4796, %v4795
    %v6171 = vpack.c.b16 %v4798, %v4797
    %v6172 = vpack.c.b16 %v4800, %v4799
    %v6173 = vpack.c.b16 %v4802, %v4801
    %v6174 = vpack.c.b16 %v4804, %v4803
    %v6175 = vpack.c.b16 %v4806, %v4805
    %v6176 = vpack.c.b16 %v4808, %v4807
    %v6177 = vpack.c.b16 %v4810, %v4809
    %v6178 = vpack.c.b16 %v4812, %v4811
    %v6179 = vpack.c.b16 %v4814, %v4813
    %v6180 = vpack.c.b16 %v4816, %v4815
    %v6181 = vpack.c.b16 %v4818, %v4817
    %v6182 = vpack.c.b16 %v4820, %v4819
    %v6183 = vpack.c.b16 %v4822, %v4821
    %v6184 = vpack.c.b16 %v4824, %v4823
    %v6185 = vpack.c.b16 %v4826, %v4825
    %v6186 = vpack.c.b16 %v4828, %v4827
    %v6187 = vpack.c.b16 %v4830, %v4829
    %v6188 = vpack.c.b16 %v4832, %v4831
    %v6189 = vpack.c.b16 %v4834, %v4833
    %v6190 = vpack.c.b16 %v4836, %v4835
    %v6191 = vpack.c.b16 %v4838, %v4837
    %v6192 = vpack.c.b16 %v4840, %v4839
    %v6193 = vpack.c.b16 %v4842, %v4841
    %v6194 = vpack.c.b16 %v4844, %v4843
    %v6195 = vpack.c.b16 %v4846, %v4845
    %v6196 = vpack.c.b16 %v4848, %v4847
    %v6197 = vpack.c.b16 %v4850, %v4849
    %v6198 = vpack.c.b16 %v4852, %v4851
    %v6199 = vpack.c.b16 %v4854, %v4853
    %v6200 = vpack.c.b16 %v4856, %v4855
    %v6201 = vpack.c.b16 %v4858, %v4857
    %v6202 = vpack.c.b16 %v4860, %v4859
    %v6203 = vpack.c.b16 %v4862, %v4861
    %v6204 = vpack.c.b16 %v4864, %v4863
    %v6205 = vpack.c.b16 %v4866, %v4865
    %v6206 = vpack.c.b16 %v4868, %v4867
    %v6207 = vpack.c.b16 %v4870, %v4869
    %v6208 = vpack.c.b16 %v4872, %v4871
    %v6209 = vpack.c.b16 %v4874, %v4873
    %v6210 = vpack.c.b16 %v4876, %v4875
    %v6211 = vpack.c.b16 %v4878, %v4877
    %v6212 = vpack.c.b16 %v4880, %v4879
    %v6213 = vpack.c.b16 %v4882, %v4881
    %v6214 = vpack.c.b16 %v4884, %v4883
    %v6215 = vpack.c.b16 %v4886, %v4885
    %v6216 = vpack.c.b16 %v4888, %v4887
    %v6217 = vpack.c.b16 %v4890, %v4889
    %v6218 = vpack.c.b16 %v4892, %v4891
    %v6219 = vpack.c.b16 %v4894, %v4893
    %v6220 = vpack.c.b16 %v4896, %v4895
    %v6221 = vpack.c.b16 %v4898, %v4897
    %v6222 = vpack.c.b16 %v4900, %v4899
    %v6223 = vpack.c.b16 %v4902, %v4901
    %v6224 = vpack.c.b16 %v4904, %v4903
    %v6225 = vpack.c.b16 %v4906, %v4905
    %v6226 = vpack.c.b16 %v4908, %v4907
    %v6227 = vpack.c.b16 %v4910, %v4909
    %v6228 = vpack.c.b16 %v4912, %v4911
    %v6229 = vpack.c.b16 %v4914, %v4913
    %v6230 = vpack.c.b16 %v4916, %v4915
    %v6231 = vpack.c.b16 %v4918, %v4917
    %v6232 = vpack.c.b16 %v4920, %v4919
    %v6233 = vpack.c.b16 %v4922, %v4921
    %v6234 = vpack.c.b16 %v4924, %v4923
    %v6235 = vpack.c.b16 %v4926, %v4925
    %v6236 = vpack.c.b16 %v4928, %v4927
    %v6237 = vpack.c.b16 %v4930, %v4929
    %v6238 = vpack.c.b16 %v4932, %v4931
    %v6239 = vpack.c.b16 %v4934, %v4933
    %v6240 = vpack.c.b16 %v4936, %v4935
    %v6241 = vpack.c.b16 %v4938, %v4937
    %v6242 = vpack.c.b16 %v4940, %v4939
    %v6243 = vpack.c.b16 %v4942, %v4941
    %v6244 = vpack.c.b16 %v4944, %v4943
    %v6245 = vpack.c.b16 %v4946, %v4945
    %v6246 = vpack.c.b16 %v4948, %v4947
    %v6247 = vpack.c.b16 %v4950, %v4949
    %v6248 = vpack.c.b16 %v4952, %v4951
    %v6249 = vpack.c.b16 %v4954, %v4953
    %v6250 = vpack.c.b16 %v4956, %v4955
    %v6251 = vpack.c.b16 %v4958, %v4957
    %v6252 = vpack.c.b16 %v4960, %v4959
    %v6253 = vpack.c.b16 %v4962, %v4961
    %v6254 = vpack.c.b16 %v4964, %v4963
    %v6255 = vpack.c.b16 %v4966, %v4965
    %v6256 = vpack.c.b16 %v4968, %v4967
    %v6257 = vpack.c.b16 %v4970, %v4969
    %v6258 = vpack.c.b16 %v4972, %v4971
    %v6259 = vpack.c.b16 %v4974, %v4973
    %v6260 = vpack.c.b16 %v4976, %v4975
    %v6261 = vpack.c.b16 %v4978, %v4977
    %v6262 = vpack.c.b16 %v4980, %v4979
    %v6263 = vpack.c.b16 %v4982, %v4981
    %v6264 = vpack.c.b16 %v4984, %v4983
    %v6265 = vpack.c.b16 %v4986, %v4985
    %v6266 = vpack.c.b16 %v4988, %v4987
    %v6267 = vpack.c.b16 %v4990, %v4989
    %v6268 = vpack.c.b16 %v4992, %v4991
    %v6269 = vpack.c.b16 %v4994, %v4993
    %v6270 = vpack.c.b16 %v4996, %v4995
    %v6271 = vpack.c.b16 %v4998, %v4997
    %v6272 = vpack.c.b16 %v5000, %v4999
    %v6273 = vpack.c.b16 %v5002, %v5001
    %v6274 = vpack.c.b16 %v5004, %v5003
    %v6275 = vpack.c.b16 %v5006, %v5005
    %v6276 = vpack.c.b16 %v5008, %v5007
    %v6277 = vpack.c.b16 %v5010, %v5009
    %v6278 = vpack.c.b16 %v5012, %v5011
    %v6279 = vpack.c.b16 %v5014, %v5013
    %v6280 = vpack.c.b16 %v5016, %v5015
    %v6281 = vpack.c.b16 %v5018, %v5017
    %v6282 = vpack.c.b16 %v5020, %v5019
    %v6283 = vpack.c.b16 %v5022, %v5021
    %v6284 = vpack.c.b16 %v5024, %v5023
    %v6285 = vpack.c.b16 %v5026, %v5025
    %v6286 = vpack.c.b16 %v5028, %v5027
    %v6287 = vpack.c.b16 %v5030, %v5029
    %v6288 = vpack.c.b16 %v5032, %v5031
    %v6289 = vpack.c.b16 %v5034, %v5033
    %v6290 = vpack.c.b16 %v5036, %v5035
    %v6291 = vpack.c.b16 %v5038, %v5037
    %v6292 = vpack.c.b16 %v5040, %v5039
    %v6293 = vpack.c.b16 %v5042, %v5041
    %v6294 = vpack.c.b16 %v5044, %v5043
    %v6295 = vpack.c.b16 %v5046, %v5045
    %v6296 = vpack.c.b16 %v5048, %v5047
    %v6297 = vpack.c.b16 %v5050, %v5049
    %v6298 = vpack.c.b16 %v5052, %v5051
    %v6299 = vpack.c.b16 %v5054, %v5053
    %v6300 = vpack.c.b16 %v5056, %v5055
    %v6301 = vpack.c.b16 %v5058, %v5057
    %v6302 = vpack.c.b16 %v5060, %v5059
    %v6303 = vpack.c.b16 %v5062, %v5061
    %v6304 = vpack.c.b16 %v5064, %v5063
    %v6305 = vpack.c.b16 %v5066, %v5065
    %v6306 = vpack.c.b16 %v5068, %v5067
    %v6307 = vpack.c.b16 %v5070, %v5069
    %v6308 = vpack.c.b16 %v5072, %v5071
    %v6309 = vpack.c.b16 %v5074, %v5073
    %v6310 = vpack.c.b16 %v5076, %v5075
    %v6311 = vpack.c.b16 %v5078, %v5077
    %v6312 = vpack.c.b16 %v5080, %v5079
    %v6313 = vpack.c.b16 %v5082, %v5081
    %v6314 = vpack.c.b16 %v5084, %v5083
    %v6315 = vpack.c.b16 %v5086, %v5085
    %v6316 = vpack.c.b16 %v5088, %v5087
    %v6317 = vpack.c.b16 %v5090, %v5089
    %v6318 = vpack.c.b16 %v5092, %v5091
    %v6319 = vpack.c.b16 %v5094, %v5093
    %v6320 = vpack.c.b16 %v5096, %v5095
    %v6321 = vpack.c.b16 %v5098, %v5097
    %v6322 = vpack.c.b16 %v5100, %v5099
    %v6323 = vpack.c.b16 %v5102, %v5101
    %v6324 = vpack.c.b16 %v5104, %v5103
    %v6325 = vpack.c.b16 %v5106, %v5105
    %v6326 = vpack.c.b16 %v5108, %v5107
    %v6327 = vpack.c.b16 %v5110, %v5109
    %v6328 = vpack.c.b16 %v5112, %v5111
    %v6329 = vpack.c.b16 %v5114, %v5113
    %v6330 = vpack.c.b16 %v5116, %v5115
    %v6331 = vpack.c.b16 %v5118, %v5117
    %v6332 = vpack.c.b16 %v5120, %v5119
    %v6333 = vpack.c.b16 %v5122, %v5121
    %v6334 = vpack.c.b16 %v5124, %v5123
    %v6335 = vpack.c.b16 %v5126, %v5125
    %v6336 = vpack.c.b16 %v5128, %v5127
    %v6337 = vpack.c.b16 %v5130, %v5129
    %v6338 = vpack.c.b16 %v5132, %v5131
    %v6339 = vpack.c.b16 %v5134, %v5133
    %v6340 = vpack.c.b16 %v5136, %v5135
    %v6341 = vpack.c.b16 %v5138, %v5137
    %v6342 = vpack.c.b16 %v5140, %v5139
    %v6343 = vpack.c.b16 %v5142, %v5141
    %v6344 = vpack.c.b16 %v5144, %v5143
    %v6345 = vpack.c.b16 %v5146, %v5145
    %v6346 = vpack.c.b16 %v5148, %v5147
    %v6347 = vpack.c.b16 %v5150, %v5149
    %v6348 = vpack.c.b16 %v5152, %v5151
    %v6349 = vpack.c.b16 %v5154, %v5153
    %v6350 = vpack.c.b16 %v5156, %v5155
    %v6351 = vpack.c.b16 %v5158, %v5157
    %v6352 = vpack.c.b16 %v5160, %v5159
    %v6353 = vpack.c.b16 %v5162, %v5161
    %v6354 = vpack.c.b16 %v5164, %v5163
    %v6355 = vpack.c.b16 %v5166, %v5165
    %v6356 = vpack.c.b16 %v5168, %v5167
    %v6357 = vpack.c.b16 %v5170, %v5169
    %v6358 = vpack.c.b16 %v5172, %v5171
    %v6359 = vpack.c.b16 %v5174, %v5173
    %v6360 = vpack.c.b16 %v5176, %v5175
    %v6361 = vpack.c.b16 %v5178, %v5177
    %v6362 = vpack.c.b16 %v5180, %v5179
    %v6363 = vpack.c.b16 %v5182, %v5181
    %v6364 = vpack.c.b16 %v5184, %v5183
    %v6365 = vpack.c.b16 %v5186, %v5185
    %v6366 = vpack.c.b16 %v5188, %v5187
    %v6367 = vpack.c.b16 %v5190, %v5189
    %v6368 = vpack.c.b16 %v5192, %v5191
    %v6369 = vpack.c.b16 %v5194, %v5193
    %v6370 = vpack.c.b16 %v5196, %v5195
    %v6371 = vpack.c.b16 %v5198, %v5197
    %v6372 = vpack.c.b16 %v5200, %v5199
    %v6373 = vpack.c.b16 %v5202, %v5201
    %v6374 = vpack.c.b16 %v5204, %v5203
    %v6375 = vpack.c.b16 %v5206, %v5205
    %v6376 = vpack.c.b16 %v5208, %v5207
    %v6377 = vpack.c.b16 %v5210, %v5209
    %v6378 = vpack.c.b16 %v5212, %v5211
    %v6379 = vpack.c.b16 %v5214, %v5213
    %v6380 = vpack.c.b16 %v5216, %v5215
    %v6381 = vpack.c.b16 %v5218, %v5217
    %v6382 = vpack.c.b16 %v5220, %v5219
    %v6383 = vpack.c.b16 %v5222, %v5221
    %v6384 = vpack.c.b16 %v5224, %v5223
    %v6385 = vpack.c.b16 %v5226, %v5225
    %v6386 = vpack.c.b16 %v5228, %v5227
    %v6387 = vpack.c.b16 %v5230, %v5229
    %v6388 = vpack.c.b16 %v5232, %v5231
    %v6389 = vpack.c.b16 %v5234, %v5233
    %v6390 = vpack.c.b16 %v5236, %v5235
    %v6391 = vpack.c.b16 %v5238, %v5237
    %v6392 = vpack.c.b16 %v5240, %v5239
    %v6393 = vpack.c.b16 %v5242, %v5241
    %v6394 = vpack.c.b16 %v5244, %v5243
    %v6395 = vpack.c.b16 %v5246, %v5245
    %v6396 = vpack.c.b16 %v5248, %v5247
    %v6397 = vpack.c.b16 %v5250, %v5249
    %v6398 = vpack.c.b16 %v5252, %v5251
    %v6399 = vpack.c.b16 %v5254, %v5253
    %v6400 = vpack.c.b16 %v5256, %v5255
    %v6401 = vpack.c.b16 %v5258, %v5257
    %v6402 = vpack.c.b16 %v5260, %v5259
    %v6403 = vpack.c.b16 %v5262, %v5261
    %v6404 = vpack.c.b16 %v5264, %v5263
    %v6405 = vpack.c.b16 %v5266, %v5265
    %v6406 = vpack.c.b16 %v5268, %v5267
    %v6407 = vpack.c.b16 %v5270, %v5269
    %v6408 = vpack.c.b16 %v5272, %v5271
    %v6409 = vpack.c.b16 %v5274, %v5273
    %v6410 = vpack.c.b16 %v5276, %v5275
    %v6411 = vpack.c.b16 %v5278, %v5277
    %v6412 = vpack.c.b16 %v5280, %v5279
    %v6413 = vpack.c.b16 %v5282, %v5281
    %v6414 = vpack.c.b16 %v5284, %v5283
    %v6415 = vpack.c.b16 %v5286, %v5285
    %v6416 = vpack.c.b16 %v5288, %v5287
    %v6417 = vpack.c.b16 %v5290, %v5289
    %v6418 = vpack.c.b16 %v5292, %v5291
    %v6419 = vpack.c.b16 %v5294, %v5293
    %v6420 = vpack.c.b16 %v5296, %v5295
    %v6421 = vpack.c.b16 %v5298, %v5297
    %v6422 = vpack.c.b16 %v5300, %v5299
    %v6423 = vpack.c.b16 %v5302, %v5301
    %v6424 = vpack.c.b16 %v5304, %v5303
    %v6425 = vpack.c.b16 %v5306, %v5305
    %v6426 = vpack.c.b16 %v5308, %v5307
    %v6427 = vpack.c.b16 %v5310, %v5309
    %v6428 = vpack.c.b16 %v5312, %v5311
    %v6429 = vpack.c.b16 %v5314, %v5313
    %v6430 = vpack.c.b16 %v5316, %v5315
    %v6431 = vpack.c.b16 %v5318, %v5317
    %v6432 = vpack.c.b16 %v5320, %v5319
    %v6433 = vpack.c.b16 %v5322, %v5321
    %v6434 = vpack.c.b16 %v5324, %v5323
    %v6435 = vpack.c.b16 %v5326, %v5325
    %v6436 = vpack.c.b16 %v5328, %v5327
    %v6437 = vpack.c.b16 %v5330, %v5329
    %v6438 = vpack.c.b16 %v5332, %v5331
    %v6439 = vpack.c.b16 %v5334, %v5333
    %v6440 = vpack.c.b16 %v5336, %v5335
    %v6441 = vpack.c.b16 %v5338, %v5337
    %v6442 = vpack.c.b16 %v5340, %v5339
    %v6443 = vpack.c.b16 %v5342, %v5341
    %v6444 = vpack.c.b16 %v5344, %v5343
    %v6445 = vpack.c.b16 %v5346, %v5345
    %v6446 = vpack.c.b16 %v5348, %v5347
    %v6447 = vpack.c.b16 %v5350, %v5349
    %v6448 = vpack.c.b16 %v5352, %v5351
    %v6449 = vpack.c.b16 %v5354, %v5353
    %v6450 = vpack.c.b16 %v5356, %v5355
    %v6451 = vpack.c.b16 %v5358, %v5357
    %v6452 = vpack.c.b16 %v5360, %v5359
    %v6453 = vpack.c.b16 %v5362, %v5361
    %v6454 = vpack.c.b16 %v5364, %v5363
    %v6455 = vpack.c.b16 %v5366, %v5365
    %v6456 = vpack.c.b16 %v5368, %v5367
    %v6457 = vpack.c.b16 %v5370, %v5369
    %v6458 = vpack.c.b16 %v5372, %v5371
    %v6459 = vpack.c.b16 %v5374, %v5373
    %v6460 = vpack.c.b16 %v5376, %v5375
    %v6461 = vpack.c.b16 %v5378, %v5377
    %v6462 = vpack.c.b16 %v5380, %v5379
    %v6463 = vpack.c.b16 %v5382, %v5381
    %v6464 = vpack.c.b16 %v5384, %v5383
    %v6465 = vpack.c.b16 %v5386, %v5385
    %v6466 = vpack.c.b16 %v5388, %v5387
    %v6467 = vpack.c.b16 %v5390, %v5389
    %v6468 = vpack.c.b16 %v5392, %v5391
    %v6469 = vpack.c.b16 %v5394, %v5393
    %v6470 = vpack.c.b16 %v5396, %v5395
    %v6471 = vpack.c.b16 %v5398, %v5397
    %v6472 = vpack.c.b16 %v5400, %v5399
    %v6473 = vpack.c.b16 %v5402, %v5401
    %v6474 = vpack.c.b16 %v5404, %v5403
    %v6475 = vpack.c.b16 %v5406, %v5405
    %v6476 = vpack.c.b16 %v5408, %v5407
    %v6477 = vpack.c.b16 %v5410, %v5409
    %v6478 = vpack.c.b16 %v5412, %v5411
    %v6479 = vpack.c.b16 %v5414, %v5413
    %v6480 = vpack.c.b16 %v5416, %v5415
    %v6481 = vpack.c.b16 %v5418, %v5417
    %v6482 = vpack.c.b16 %v5420, %v5419
    %v6483 = vpack.c.b16 %v5422, %v5421
    %v6484 = vpack.c.b16 %v5424, %v5423
    %v6485 = vpack.c.b16 %v5426, %v5425
    %v6486 = vpack.c.b16 %v5428, %v5427
    %v6487 = vpack.c.b16 %v5430, %v5429
    %v6488 = vpack.c.b16 %v5432, %v5431
    %v6489 = vpack.c.b16 %v5434, %v5433
    %v6490 = vpack.c.b16 %v5436, %v5435
    %v6491 = vpack.c.b16 %v5438, %v5437
    %v6492 = vpack.c.b16 %v5440, %v5439
    %v6493 = vpack.c.b16 %v5442, %v5441
    %v6494 = vpack.c.b16 %v5444, %v5443
    %v6495 = vpack.c.b16 %v5446, %v5445
    %v6496 = vpack.c.b16 %v5448, %v5447
    %v6497 = vpack.c.b16 %v5450, %v5449
    %v6498 = vpack.c.b16 %v5452, %v5451
    %v6499 = vpack.c.b16 %v5454, %v5453
    %v6500 = vpack.c.b16 %v5456, %v5455
    %v6501 = vpack.c.b16 %v5458, %v5457
    %v6502 = vpack.c.b16 %v5460, %v5459
    %v6503 = vpack.c.b16 %v5462, %v5461
    %v6504 = vpack.c.b16 %v5464, %v5463
    %v6505 = vpack.c.b16 %v5466, %v5465
    %v6506 = vpack.c.b16 %v5468, %v5467
    %v6507 = vpack.c.b16 %v5470, %v5469
    %v6508 = vpack.c.b16 %v5472, %v5471
    %v6509 = vpack.c.b16 %v5474, %v5473
    %v6510 = vpack.c.b16 %v5476, %v5475
    %v6511 = vpack.c.b16 %v5478, %v5477
    %v6512 = vpack.c.b16 %v5480, %v5479
    %v6513 = vpack.c.b16 %v5482, %v5481
    %v6514 = vpack.c.b16 %v5484, %v5483
    %v6515 = vpack.c.b16 %v5486, %v5485
    %v6516 = vpack.c.b16 %v5488, %v5487
    %v6517 = vpack.c.b16 %v5490, %v5489
    %v6518 = vpack.c.b16 %v5492, %v5491
    %v6519 = vpack.c.b16 %v5494, %v5493
    %v6520 = vpack.c.b16 %v5496, %v5495
    %v6521 = vpack.c.b16 %v5498, %v5497
    %v6522 = vpack.c.b16 %v5500, %v5499
    %v6523 = vpack.c.b16 %v5502, %v5501
    %v6524 = vpack.c.b16 %v5504, %v5503
    %v6525 = vpack.c.b16 %v5506, %v5505
    %v6526 = vpack.c.b16 %v5508, %v5507
    %v6527 = vpack.c.b16 %v5510, %v5509
    %v6528 = vpack.c.b16 %v5512, %v5511
    %v6529 = vpack.c.b16 %v5514, %v5513
    %v6530 = vpack.c.b16 %v5516, %v5515
    %v6531 = vpack.c.b16 %v5518, %v5517
    %v6532 = vpack.c.b16 %v5520, %v5519
    %v6533 = vpack.c.b16 %v5522, %v5521
    %v6534 = vpack.c.b16 %v5524, %v5523
    %v6535 = vpack.c.b16 %v5526, %v5525
    %v6536 = vpack.c.b16 %v5528, %v5527
    %v6537 = vpack.c.b16 %v5530, %v5529
    %v6538 = vpack.c.b16 %v5532, %v5531
    %v6539 = vpack.c.b16 %v5534, %v5533
    %v6540 = vpack.c.b16 %v5536, %v5535
    %v6541 = vpack.c.b16 %v5538, %v5537
    %v6542 = vpack.c.b16 %v5540, %v5539
    %v6543 = vpack.c.b16 %v5542, %v5541
    %v6544 = vpack.c.b16 %v5544, %v5543
    %v6545 = vpack.c.b16 %v5546, %v5545
    %v6546 = vpack.c.b16 %v5548, %v5547
    %v6547 = vpack.c.b16 %v5550, %v5549
    %v6548 = vpack.c.b16 %v5552, %v5551
    %v6549 = vpack.c.b16 %v5554, %v5553
    %v6550 = vpack.c.b16 %v5556, %v5555
    %v6551 = vpack.c.b16 %v5558, %v5557
    %v6552 = vpack.c.b16 %v5560, %v5559
    %v6553 = vpack.c.b16 %v5562, %v5561
    %v6554 = vpack.c.b16 %v5564, %v5563
    %v6555 = vpack.c.b16 %v5566, %v5565
    %v6556 = vpack.c.b16 %v5568, %v5567
    %v6557 = vpack.c.b16 %v5570, %v5569
    %v6558 = vpack.c.b16 %v5572, %v5571
    %v6559 = vpack.c.b16 %v5574, %v5573
    %v6560 = vpack.c.b16 %v5576, %v5575
    %v6561 = vpack.c.b16 %v5578, %v5577
    %v6562 = vpack.c.b16 %v5580, %v5579
    %v6563 = vpack.c.b16 %v5582, %v5581
    %v6564 = vpack.c.b16 %v5584, %v5583
    %v6565 = vpack.c.b16 %v5586, %v5585
    %v6566 = vpack.c.b16 %v5588, %v5587
    %v6567 = vpack.c.b16 %v5590, %v5589
    %v6568 = vpack.c.b16 %v5592, %v5591
    %v6569 = vpack.c.b16 %v5594, %v5593
    %v6570 = vpack.c.b16 %v5596, %v5595
    %v6571 = vpack.c.b16 %v5598, %v5597
    %v6572 = vpack.c.b16 %v5600, %v5599
    %v6573 = vpack.c.b16 %v5602, %v5601
    %v6574 = vpack.c.b16 %v5604, %v5603
    %v6575 = vpack.c.b16 %v5606, %v5605
    %v6576 = vpack.c.b16 %v5608, %v5607
    %v6577 = vpack.c.b16 %v5610, %v5609
    %v6578 = vpack.c.b16 %v5612, %v5611
    %v6579 = vpack.c.b16 %v5614, %v5613
    %v6580 = vpack.c.b16 %v5616, %v5615
    %v6581 = vpack.c.b16 %v5618, %v5617
    %v6582 = vpack.c.b16 %v5620, %v5619
    %v6583 = vpack.c.b16 %v5622, %v5621
    %v6584 = vpack.c.b16 %v5624, %v5623
    %v6585 = vpack.c.b16 %v5626, %v5625
    %v6586 = vpack.c.b16 %v5628, %v5627
    %v6587 = vpack.c.b16 %v5630, %v5629
    %v6588 = vpack.c.b16 %v5632, %v5631
    %v6589 = vpack.c.b16 %v5634, %v5633
    %v6590 = vpack.c.b16 %v5636, %v5635
    %v6591 = vpack.c.b16 %v5638, %v5637
    %v6592 = vpack.c.b16 %v5640, %v5639
    %v6593 = vpack.c.b16 %v5642, %v5641
    %v6594 = vpack.c.b16 %v5644, %v5643
    %v6595 = vpack.c.b16 %v5646, %v5645
    %v6596 = vpack.c.b16 %v5648, %v5647
    %v6597 = vpack.c.b16 %v5650, %v5649
    %v6598 = vpack.c.b16 %v5652, %v5651
    %v6599 = vpack.c.b16 %v5654, %v5653
    %v6600 = vpack.c.b16 %v5656, %v5655
    %v6601 = vpack.c.b16 %v5658, %v5657
    %v6602 = vpack.c.b16 %v5660, %v5659
    %v6603 = vpack.c.b16 %v5662, %v5661
    %v6604 = vpack.c.b16 %v5664, %v5663
    %v6605 = vpack.c.b16 %v5666, %v5665
    %v6606 = vpack.c.b16 %v5668, %v5667
    %v6607 = vpack.c.b16 %v5670, %v5669
    %v6608 = vpack.c.b16 %v5672, %v5671
    %v6609 = vpack.c.b16 %v5674, %v5673
    %v6610 = vpack.c.b16 %v5676, %v5675
    %v6611 = vpack.c.b16 %v5678, %v5677
    %v6612 = vpack.c.b16 %v5680, %v5679
    %v6613 = vpack.c.b16 %v5682, %v5681
    %v6614 = vpack.c.b16 %v5684, %v5683
    %v6615 = vpack.c.b16 %v5686, %v5685
    %v6616 = vpack.c.b16 %v5688, %v5687
    %v6617 = vpack.c.b16 %v5690, %v5689
    %v6618 = vpack.c.b16 %v5692, %v5691
    %v6619 = vpack.c.b16 %v5694, %v5693
    %v6620 = vpack.c.b16 %v5696, %v5695
    %v6621 = vpack.c.b16 %v5698, %v5697
    %v6622 = vpack.c.b16 %v5700, %v5699
    %v6623 = vpack.c.b16 %v5702, %v5701
    %v6624 = vpack.c.b16 %v5704, %v5703
    %v6625 = vpack.c.b16 %v5706, %v5705
    %v6626 = vpack.c.b16 %v5708, %v5707
    %v6627 = vpack.c.b16 %v5710, %v5709
    %v6628 = vpack.c.b16 %v5712, %v5711
    %v6629 = vpack.c.b16 %v5714, %v5713
    %v6630 = vpack.c.b16 %v5716, %v5715
    %v6631 = vpack.c.b16 %v5718, %v5717
    %v6632 = vpack.c.b16 %v5720, %v5719
    %v6633 = vpack.c.b16 %v5722, %v5721
    %v6634 = vpack.c.b16 %v5724, %v5723
    %v6635 = vpack.c.b16 %v5726, %v5725
    %v6636 = vpack.c.b16 %v5728, %v5727
    %v6637 = vpack.c.b16 %v5730, %v5729
    %v6638 = vpack.c.b16 %v5732, %v5731
    %v6639 = vpack.c.b16 %v5734, %v5733
    %v6640 = vpack.c.b16 %v5736, %v5735
    %v6641 = vpack.c.b16 %v5738, %v5737
    %v6642 = vpack.c.b16 %v5740, %v5739
    %v6643 = vpack.c.b16 %v5742, %v5741
    %v6644 = vpack.c.b16 %v5744, %v5743
    %vm7545 = vcmask 523264
    %v7547 = vsel %vm7545, %v340, 0
    %7549 = vmatpush.bf16.msra.mxu0 %v5752
    %7550 = vmatpush.bf16.msra.mxu0 %v5751
    %7551 = vmatpush.bf16.msra.mxu0 %v5750
    %7552 = vmatpush.bf16.msra.mxu0 %v5749
    %7553 = vmatpush.bf16.msra.mxu0 %v5748
    %7554 = vmatpush.bf16.msra.mxu0 %v5747
    %7555 = vmatpush.bf16.msra.mxu0 %v5746
    %7556 = vmatpush.bf16.msra.mxu0 %v5745
    %7557 = vmatmul.bf16.gmra.mxu0 %v228
    %v7558 = vpop.f32.mrf.mxu0
    %v7559 = vadd.f32 %v2143, %v7558
    %v7560 = vpop.f32.mrf.mxu0
    %7561 = vdwg.mxu0
    %7562 = vmatpush.bf16.msra.mxu0 %v5760
    %7563 = vmatpush.bf16.msra.mxu0 %v5759
    %7564 = vmatpush.bf16.msra.mxu0 %v5758
    %7565 = vmatpush.bf16.msra.mxu0 %v5757
    %7566 = vmatpush.bf16.msra.mxu0 %v5756
    %7567 = vmatpush.bf16.msra.mxu0 %v5755
    %7568 = vmatpush.bf16.msra.mxu0 %v5754
    %7569 = vmatpush.bf16.msra.mxu0 %v5753
    %7570 = vmatmul.bf16.gmra.mxu0 %v229
    %v7571 = vpop.f32.mrf.mxu0
    %v7572 = vadd.f32 %v7559, %v7571
    %v7573 = vpop.f32.mrf.mxu0
    %7574 = vdwg.mxu0
    %7575 = vmatpush.bf16.msra.mxu0 %v5768
    %7576 = vmatpush.bf16.msra.mxu0 %v5767
    %7577 = vmatpush.bf16.msra.mxu0 %v5766
    %7578 = vmatpush.bf16.msra.mxu0 %v5765
    %7579 = vmatpush.bf16.msra.mxu0 %v5764
    %7580 = vmatpush.bf16.msra.mxu0 %v5763
    %7581 = vmatpush.bf16.msra.mxu0 %v5762
    %7582 = vmatpush.bf16.msra.mxu0 %v5761
    %7583 = vmatmul.bf16.gmra.mxu0 %v230
    %v7584 = vpop.f32.mrf.mxu0
    %v7585 = vadd.f32 %v7572, %v7584
    %v7586 = vpop.f32.mrf.mxu0
    %7587 = vdwg.mxu0
    %7588 = vmatpush.bf16.msra.mxu0 %v5776
    %7589 = vmatpush.bf16.msra.mxu0 %v5775
    %7590 = vmatpush.bf16.msra.mxu0 %v5774
    %7591 = vmatpush.bf16.msra.mxu0 %v5773
    %7592 = vmatpush.bf16.msra.mxu0 %v5772
    %7593 = vmatpush.bf16.msra.mxu0 %v5771
    %7594 = vmatpush.bf16.msra.mxu0 %v5770
    %7595 = vmatpush.bf16.msra.mxu0 %v5769
    %7596 = vmatmul.bf16.gmra.mxu0 %v231
    %v7597 = vpop.f32.mrf.mxu0
    %v7598 = vadd.f32 %v7585, %v7597
    %v7599 = vpop.f32.mrf.mxu0
    %7600 = vdwg.mxu0
    %7601 = vmatpush.bf16.msra.mxu0 %v5784
    %7602 = vmatpush.bf16.msra.mxu0 %v5783
    %7603 = vmatpush.bf16.msra.mxu0 %v5782
    %7604 = vmatpush.bf16.msra.mxu0 %v5781
    %7605 = vmatpush.bf16.msra.mxu0 %v5780
    %7606 = vmatpush.bf16.msra.mxu0 %v5779
    %7607 = vmatpush.bf16.msra.mxu0 %v5778
    %7608 = vmatpush.bf16.msra.mxu0 %v5777
    %7609 = vmatmul.bf16.gmra.mxu0 %v232
    %v7610 = vpop.f32.mrf.mxu0
    %v7611 = vadd.f32 %v7598, %v7610
    %v7612 = vpop.f32.mrf.mxu0
    %7613 = vdwg.mxu0
    %7614 = vmatpush.bf16.msra.mxu0 %v5792
    %7615 = vmatpush.bf16.msra.mxu0 %v5791
    %7616 = vmatpush.bf16.msra.mxu0 %v5790
    %7617 = vmatpush.bf16.msra.mxu0 %v5789
    %7618 = vmatpush.bf16.msra.mxu0 %v5788
    %7619 = vmatpush.bf16.msra.mxu0 %v5787
    %7620 = vmatpush.bf16.msra.mxu0 %v5786
    %7621 = vmatpush.bf16.msra.mxu0 %v5785
    %7622 = vmatmul.bf16.gmra.mxu0 %v233
    %v7623 = vpop.f32.mrf.mxu0
    %v7624 = vadd.f32 %v7611, %v7623
    %v7625 = vpop.f32.mrf.mxu0
    %7626 = vdwg.mxu0
    %7627 = vmatpush.bf16.msra.mxu0 %v5800
    %7628 = vmatpush.bf16.msra.mxu0 %v5799
    %7629 = vmatpush.bf16.msra.mxu0 %v5798
    %7630 = vmatpush.bf16.msra.mxu0 %v5797
    %7631 = vmatpush.bf16.msra.mxu0 %v5796
    %7632 = vmatpush.bf16.msra.mxu0 %v5795
    %7633 = vmatpush.bf16.msra.mxu0 %v5794
    %7634 = vmatpush.bf16.msra.mxu0 %v5793
    %7635 = vmatmul.bf16.gmra.mxu0 %v234
    %v7636 = vpop.f32.mrf.mxu0
    %v7637 = vadd.f32 %v7624, %v7636
    %v7638 = vpop.f32.mrf.mxu0
    %7639 = vdwg.mxu0
    %7640 = vmatpush.bf16.msra.mxu0 %v5808
    %7641 = vmatpush.bf16.msra.mxu0 %v5807
    %7642 = vmatpush.bf16.msra.mxu0 %v5806
    %7643 = vmatpush.bf16.msra.mxu0 %v5805
    %7644 = vmatpush.bf16.msra.mxu0 %v5804
    %7645 = vmatpush.bf16.msra.mxu0 %v5803
    %7646 = vmatpush.bf16.msra.mxu0 %v5802
    %7647 = vmatpush.bf16.msra.mxu0 %v5801
    %7648 = vmatmul.bf16.gmra.mxu0 %v235
    %v7649 = vpop.f32.mrf.mxu0
    %v7650 = vadd.f32 %v7637, %v7649
    %v7651 = vpop.f32.mrf.mxu0
    %7652 = vdwg.mxu0
    %7653 = vmatpush.bf16.msra.mxu0 %v5816
    %7654 = vmatpush.bf16.msra.mxu0 %v5815
    %7655 = vmatpush.bf16.msra.mxu0 %v5814
    %7656 = vmatpush.bf16.msra.mxu0 %v5813
    %7657 = vmatpush.bf16.msra.mxu0 %v5812
    %7658 = vmatpush.bf16.msra.mxu0 %v5811
    %7659 = vmatpush.bf16.msra.mxu0 %v5810
    %7660 = vmatpush.bf16.msra.mxu0 %v5809
    %7661 = vmatmul.bf16.gmra.mxu0 %v236
    %v7662 = vpop.f32.mrf.mxu0
    %v7663 = vadd.f32 %v7650, %v7662
    %v7664 = vpop.f32.mrf.mxu0
    %7665 = vdwg.mxu0
    %7666 = vmatpush.bf16.msra.mxu0 %v5824
    %7667 = vmatpush.bf16.msra.mxu0 %v5823
    %7668 = vmatpush.bf16.msra.mxu0 %v5822
    %7669 = vmatpush.bf16.msra.mxu0 %v5821
    %7670 = vmatpush.bf16.msra.mxu0 %v5820
    %7671 = vmatpush.bf16.msra.mxu0 %v5819
    %7672 = vmatpush.bf16.msra.mxu0 %v5818
    %7673 = vmatpush.bf16.msra.mxu0 %v5817
    %7674 = vmatmul.bf16.gmra.mxu0 %v237
    %v7675 = vpop.f32.mrf.mxu0
    %v7676 = vadd.f32 %v7663, %v7675
    %v7677 = vpop.f32.mrf.mxu0
    %7678 = vdwg.mxu0
    %7679 = vmatpush.bf16.msra.mxu0 %v5832
    %7680 = vmatpush.bf16.msra.mxu0 %v5831
    %7681 = vmatpush.bf16.msra.mxu0 %v5830
    %7682 = vmatpush.bf16.msra.mxu0 %v5829
    %7683 = vmatpush.bf16.msra.mxu0 %v5828
    %7684 = vmatpush.bf16.msra.mxu0 %v5827
    %7685 = vmatpush.bf16.msra.mxu0 %v5826
    %7686 = vmatpush.bf16.msra.mxu0 %v5825
    %7687 = vmatmul.bf16.gmra.mxu0 %v238
    %v7688 = vpop.f32.mrf.mxu0
    %v7689 = vadd.f32 %v7676, %v7688
    %v7690 = vpop.f32.mrf.mxu0
    %7691 = vdwg.mxu0
    %7692 = vmatpush.bf16.msra.mxu0 %v5840
    %7693 = vmatpush.bf16.msra.mxu0 %v5839
    %7694 = vmatpush.bf16.msra.mxu0 %v5838
    %7695 = vmatpush.bf16.msra.mxu0 %v5837
    %7696 = vmatpush.bf16.msra.mxu0 %v5836
    %7697 = vmatpush.bf16.msra.mxu0 %v5835
    %7698 = vmatpush.bf16.msra.mxu0 %v5834
    %7699 = vmatpush.bf16.msra.mxu0 %v5833
    %7700 = vmatmul.bf16.gmra.mxu0 %v239
    %v7701 = vpop.f32.mrf.mxu0
    %v7702 = vadd.f32 %v7689, %v7701
    %v7703 = vpop.f32.mrf.mxu0
    %7704 = vdwg.mxu0
    %7705 = vmatpush.bf16.msra.mxu0 %v5848
    %7706 = vmatpush.bf16.msra.mxu0 %v5847
    %7707 = vmatpush.bf16.msra.mxu0 %v5846
    %7708 = vmatpush.bf16.msra.mxu0 %v5845
    %7709 = vmatpush.bf16.msra.mxu0 %v5844
    %7710 = vmatpush.bf16.msra.mxu0 %v5843
    %7711 = vmatpush.bf16.msra.mxu0 %v5842
    %7712 = vmatpush.bf16.msra.mxu0 %v5841
    %7713 = vmatmul.bf16.gmra.mxu0 %v240
    %v7714 = vpop.f32.mrf.mxu0
    %v7715 = vadd.f32 %v7702, %v7714
    %v7716 = vpop.f32.mrf.mxu0
    %7717 = vdwg.mxu0
    %7718 = vmatpush.bf16.msra.mxu0 %v5856
    %7719 = vmatpush.bf16.msra.mxu0 %v5855
    %7720 = vmatpush.bf16.msra.mxu0 %v5854
    %7721 = vmatpush.bf16.msra.mxu0 %v5853
    %7722 = vmatpush.bf16.msra.mxu0 %v5852
    %7723 = vmatpush.bf16.msra.mxu0 %v5851
    %7724 = vmatpush.bf16.msra.mxu0 %v5850
    %7725 = vmatpush.bf16.msra.mxu0 %v5849
    %7726 = vmatmul.bf16.gmra.mxu0 %v241
    %v7727 = vpop.f32.mrf.mxu0
    %v7728 = vadd.f32 %v7715, %v7727
    %v7729 = vpop.f32.mrf.mxu0
    %7730 = vdwg.mxu0
    %7731 = vmatpush.bf16.msra.mxu0 %v5864
    %7732 = vmatpush.bf16.msra.mxu0 %v5863
    %7733 = vmatpush.bf16.msra.mxu0 %v5862
    %7734 = vmatpush.bf16.msra.mxu0 %v5861
    %7735 = vmatpush.bf16.msra.mxu0 %v5860
    %7736 = vmatpush.bf16.msra.mxu0 %v5859
    %7737 = vmatpush.bf16.msra.mxu0 %v5858
    %7738 = vmatpush.bf16.msra.mxu0 %v5857
    %7739 = vmatmul.bf16.gmra.mxu0 %v242
    %v7740 = vpop.f32.mrf.mxu0
    %v7741 = vadd.f32 %v7728, %v7740
    %v7742 = vpop.f32.mrf.mxu0
    %7743 = vdwg.mxu0
    %7744 = vmatpush.bf16.msra.mxu0 %v5872
    %7745 = vmatpush.bf16.msra.mxu0 %v5871
    %7746 = vmatpush.bf16.msra.mxu0 %v5870
    %7747 = vmatpush.bf16.msra.mxu0 %v5869
    %7748 = vmatpush.bf16.msra.mxu0 %v5868
    %7749 = vmatpush.bf16.msra.mxu0 %v5867
    %7750 = vmatpush.bf16.msra.mxu0 %v5866
    %7751 = vmatpush.bf16.msra.mxu0 %v5865
    %7752 = vmatmul.bf16.gmra.mxu0 %v243
    %v7753 = vpop.f32.mrf.mxu0
    %v7754 = vadd.f32 %v7741, %v7753
    %v7755 = vpop.f32.mrf.mxu0
    %7756 = vdwg.mxu0
    %7757 = vmatpush.bf16.msra.mxu0 %v5880
    %7758 = vmatpush.bf16.msra.mxu0 %v5879
    %7759 = vmatpush.bf16.msra.mxu0 %v5878
    %7760 = vmatpush.bf16.msra.mxu0 %v5877
    %7761 = vmatpush.bf16.msra.mxu0 %v5876
    %7762 = vmatpush.bf16.msra.mxu0 %v5875
    %7763 = vmatpush.bf16.msra.mxu0 %v5874
    %7764 = vmatpush.bf16.msra.mxu0 %v5873
    %7765 = vmatmul.bf16.gmra.mxu0 %v244
    %v7766 = vpop.f32.mrf.mxu0
    %v7767 = vadd.f32 %v7754, %v7766
    %v7768 = vpop.f32.mrf.mxu0
    %7769 = vdwg.mxu0
    %7770 = vmatpush.bf16.msra.mxu0 %v5888
    %7771 = vmatpush.bf16.msra.mxu0 %v5887
    %7772 = vmatpush.bf16.msra.mxu0 %v5886
    %7773 = vmatpush.bf16.msra.mxu0 %v5885
    %7774 = vmatpush.bf16.msra.mxu0 %v5884
    %7775 = vmatpush.bf16.msra.mxu0 %v5883
    %7776 = vmatpush.bf16.msra.mxu0 %v5882
    %7777 = vmatpush.bf16.msra.mxu0 %v5881
    %7778 = vmatmul.bf16.gmra.mxu0 %v245
    %v7779 = vpop.f32.mrf.mxu0
    %v7780 = vadd.f32 %v7767, %v7779
    %v7781 = vpop.f32.mrf.mxu0
    %7782 = vdwg.mxu0
    %7783 = vmatpush.bf16.msra.mxu0 %v5896
    %7784 = vmatpush.bf16.msra.mxu0 %v5895
    %7785 = vmatpush.bf16.msra.mxu0 %v5894
    %7786 = vmatpush.bf16.msra.mxu0 %v5893
    %7787 = vmatpush.bf16.msra.mxu0 %v5892
    %7788 = vmatpush.bf16.msra.mxu0 %v5891
    %7789 = vmatpush.bf16.msra.mxu0 %v5890
    %7790 = vmatpush.bf16.msra.mxu0 %v5889
    %7791 = vmatmul.bf16.gmra.mxu0 %v246
    %v7792 = vpop.f32.mrf.mxu0
    %v7793 = vadd.f32 %v7780, %v7792
    %v7794 = vpop.f32.mrf.mxu0
    %7795 = vdwg.mxu0
    %7796 = vmatpush.bf16.msra.mxu0 %v5904
    %7797 = vmatpush.bf16.msra.mxu0 %v5903
    %7798 = vmatpush.bf16.msra.mxu0 %v5902
    %7799 = vmatpush.bf16.msra.mxu0 %v5901
    %7800 = vmatpush.bf16.msra.mxu0 %v5900
    %7801 = vmatpush.bf16.msra.mxu0 %v5899
    %7802 = vmatpush.bf16.msra.mxu0 %v5898
    %7803 = vmatpush.bf16.msra.mxu0 %v5897
    %7804 = vmatmul.bf16.gmra.mxu0 %v247
    %v7805 = vpop.f32.mrf.mxu0
    %v7806 = vadd.f32 %v7793, %v7805
    %v7807 = vpop.f32.mrf.mxu0
    %7808 = vdwg.mxu0
    %7809 = vmatpush.bf16.msra.mxu0 %v5912
    %7810 = vmatpush.bf16.msra.mxu0 %v5911
    %7811 = vmatpush.bf16.msra.mxu0 %v5910
    %7812 = vmatpush.bf16.msra.mxu0 %v5909
    %7813 = vmatpush.bf16.msra.mxu0 %v5908
    %7814 = vmatpush.bf16.msra.mxu0 %v5907
    %7815 = vmatpush.bf16.msra.mxu0 %v5906
    %7816 = vmatpush.bf16.msra.mxu0 %v5905
    %7817 = vmatmul.bf16.gmra.mxu0 %v248
    %v7818 = vpop.f32.mrf.mxu0
    %v7819 = vadd.f32 %v7806, %v7818
    %v7820 = vpop.f32.mrf.mxu0
    %7821 = vdwg.mxu0
    %7822 = vmatpush.bf16.msra.mxu0 %v5920
    %7823 = vmatpush.bf16.msra.mxu0 %v5919
    %7824 = vmatpush.bf16.msra.mxu0 %v5918
    %7825 = vmatpush.bf16.msra.mxu0 %v5917
    %7826 = vmatpush.bf16.msra.mxu0 %v5916
    %7827 = vmatpush.bf16.msra.mxu0 %v5915
    %7828 = vmatpush.bf16.msra.mxu0 %v5914
    %7829 = vmatpush.bf16.msra.mxu0 %v5913
    %7830 = vmatmul.bf16.gmra.mxu0 %v249
    %v7831 = vpop.f32.mrf.mxu0
    %v7832 = vadd.f32 %v7819, %v7831
    %v7833 = vpop.f32.mrf.mxu0
    %7834 = vdwg.mxu0
    %7835 = vmatpush.bf16.msra.mxu0 %v5928
    %7836 = vmatpush.bf16.msra.mxu0 %v5927
    %7837 = vmatpush.bf16.msra.mxu0 %v5926
    %7838 = vmatpush.bf16.msra.mxu0 %v5925
    %7839 = vmatpush.bf16.msra.mxu0 %v5924
    %7840 = vmatpush.bf16.msra.mxu0 %v5923
    %7841 = vmatpush.bf16.msra.mxu0 %v5922
    %7842 = vmatpush.bf16.msra.mxu0 %v5921
    %7843 = vmatmul.bf16.gmra.mxu0 %v250
    %v7844 = vpop.f32.mrf.mxu0
    %v7845 = vadd.f32 %v7832, %v7844
    %v7846 = vpop.f32.mrf.mxu0
    %7847 = vdwg.mxu0
    %7848 = vmatpush.bf16.msra.mxu0 %v5936
    %7849 = vmatpush.bf16.msra.mxu0 %v5935
    %7850 = vmatpush.bf16.msra.mxu0 %v5934
    %7851 = vmatpush.bf16.msra.mxu0 %v5933
    %7852 = vmatpush.bf16.msra.mxu0 %v5932
    %7853 = vmatpush.bf16.msra.mxu0 %v5931
    %7854 = vmatpush.bf16.msra.mxu0 %v5930
    %7855 = vmatpush.bf16.msra.mxu0 %v5929
    %7856 = vmatmul.bf16.gmra.mxu0 %v251
    %v7857 = vpop.f32.mrf.mxu0
    %v7858 = vadd.f32 %v7845, %v7857
    %v7859 = vpop.f32.mrf.mxu0
    %7860 = vdwg.mxu0
    %7861 = vmatpush.bf16.msra.mxu0 %v5944
    %7862 = vmatpush.bf16.msra.mxu0 %v5943
    %7863 = vmatpush.bf16.msra.mxu0 %v5942
    %7864 = vmatpush.bf16.msra.mxu0 %v5941
    %7865 = vmatpush.bf16.msra.mxu0 %v5940
    %7866 = vmatpush.bf16.msra.mxu0 %v5939
    %7867 = vmatpush.bf16.msra.mxu0 %v5938
    %7868 = vmatpush.bf16.msra.mxu0 %v5937
    %7869 = vmatmul.bf16.gmra.mxu0 %v252
    %v7870 = vpop.f32.mrf.mxu0
    %v7871 = vadd.f32 %v7858, %v7870
    %v7872 = vpop.f32.mrf.mxu0
    %7873 = vdwg.mxu0
    %7874 = vmatpush.bf16.msra.mxu0 %v5952
    %7875 = vmatpush.bf16.msra.mxu0 %v5951
    %7876 = vmatpush.bf16.msra.mxu0 %v5950
    %7877 = vmatpush.bf16.msra.mxu0 %v5949
    %7878 = vmatpush.bf16.msra.mxu0 %v5948
    %7879 = vmatpush.bf16.msra.mxu0 %v5947
    %7880 = vmatpush.bf16.msra.mxu0 %v5946
    %7881 = vmatpush.bf16.msra.mxu0 %v5945
    %7882 = vmatmul.bf16.gmra.mxu0 %v253
    %v7883 = vpop.f32.mrf.mxu0
    %v7884 = vadd.f32 %v7871, %v7883
    %v7885 = vpop.f32.mrf.mxu0
    %7886 = vdwg.mxu0
    %7887 = vmatpush.bf16.msra.mxu0 %v5960
    %7888 = vmatpush.bf16.msra.mxu0 %v5959
    %7889 = vmatpush.bf16.msra.mxu0 %v5958
    %7890 = vmatpush.bf16.msra.mxu0 %v5957
    %7891 = vmatpush.bf16.msra.mxu0 %v5956
    %7892 = vmatpush.bf16.msra.mxu0 %v5955
    %7893 = vmatpush.bf16.msra.mxu0 %v5954
    %7894 = vmatpush.bf16.msra.mxu0 %v5953
    %7895 = vmatmul.bf16.gmra.mxu0 %v254
    %v7896 = vpop.f32.mrf.mxu0
    %v7897 = vadd.f32 %v7884, %v7896
    %v7898 = vpop.f32.mrf.mxu0
    %7899 = vdwg.mxu0
    %7900 = vmatpush.bf16.msra.mxu0 %v5968
    %7901 = vmatpush.bf16.msra.mxu0 %v5967
    %7902 = vmatpush.bf16.msra.mxu0 %v5966
    %7903 = vmatpush.bf16.msra.mxu0 %v5965
    %7904 = vmatpush.bf16.msra.mxu0 %v5964
    %7905 = vmatpush.bf16.msra.mxu0 %v5963
    %7906 = vmatpush.bf16.msra.mxu0 %v5962
    %7907 = vmatpush.bf16.msra.mxu0 %v5961
    %7908 = vmatmul.bf16.gmra.mxu0 %v255
    %v7909 = vpop.f32.mrf.mxu0
    %v7910 = vadd.f32 %v7897, %v7909
    %v7911 = vpop.f32.mrf.mxu0
    %7912 = vdwg.mxu0
    %7913 = vmatpush.bf16.msra.mxu0 %v5976
    %7914 = vmatpush.bf16.msra.mxu0 %v5975
    %7915 = vmatpush.bf16.msra.mxu0 %v5974
    %7916 = vmatpush.bf16.msra.mxu0 %v5973
    %7917 = vmatpush.bf16.msra.mxu0 %v5972
    %7918 = vmatpush.bf16.msra.mxu0 %v5971
    %7919 = vmatpush.bf16.msra.mxu0 %v5970
    %7920 = vmatpush.bf16.msra.mxu0 %v5969
    %7921 = vmatmul.bf16.gmra.mxu0 %v256
    %v7922 = vpop.f32.mrf.mxu0
    %v7923 = vadd.f32 %v7910, %v7922
    %v7924 = vpop.f32.mrf.mxu0
    %7925 = vdwg.mxu0
    %7926 = vmatpush.bf16.msra.mxu0 %v5984
    %7927 = vmatpush.bf16.msra.mxu0 %v5983
    %7928 = vmatpush.bf16.msra.mxu0 %v5982
    %7929 = vmatpush.bf16.msra.mxu0 %v5981
    %7930 = vmatpush.bf16.msra.mxu0 %v5980
    %7931 = vmatpush.bf16.msra.mxu0 %v5979
    %7932 = vmatpush.bf16.msra.mxu0 %v5978
    %7933 = vmatpush.bf16.msra.mxu0 %v5977
    %7934 = vmatmul.bf16.gmra.mxu0 %v257
    %v7935 = vpop.f32.mrf.mxu0
    %v7936 = vadd.f32 %v7923, %v7935
    %v7937 = vpop.f32.mrf.mxu0
    %7938 = vdwg.mxu0
    %7939 = vmatpush.bf16.msra.mxu0 %v5992
    %7940 = vmatpush.bf16.msra.mxu0 %v5991
    %7941 = vmatpush.bf16.msra.mxu0 %v5990
    %7942 = vmatpush.bf16.msra.mxu0 %v5989
    %7943 = vmatpush.bf16.msra.mxu0 %v5988
    %7944 = vmatpush.bf16.msra.mxu0 %v5987
    %7945 = vmatpush.bf16.msra.mxu0 %v5986
    %7946 = vmatpush.bf16.msra.mxu0 %v5985
    %7947 = vmatmul.bf16.gmra.mxu0 %v258
    %v7948 = vpop.f32.mrf.mxu0
    %v7949 = vadd.f32 %v7936, %v7948
    %v7950 = vpop.f32.mrf.mxu0
    %7951 = vdwg.mxu0
    %7952 = vmatpush.bf16.msra.mxu0 %v6000
    %7953 = vmatpush.bf16.msra.mxu0 %v5999
    %7954 = vmatpush.bf16.msra.mxu0 %v5998
    %7955 = vmatpush.bf16.msra.mxu0 %v5997
    %7956 = vmatpush.bf16.msra.mxu0 %v5996
    %7957 = vmatpush.bf16.msra.mxu0 %v5995
    %7958 = vmatpush.bf16.msra.mxu0 %v5994
    %7959 = vmatpush.bf16.msra.mxu0 %v5993
    %7960 = vmatmul.bf16.gmra.mxu0 %v259
    %v7961 = vpop.f32.mrf.mxu0
    %v7962 = vadd.f32 %v7949, %v7961
    %v7963 = vpop.f32.mrf.mxu0
    %7964 = vdwg.mxu0
    %7965 = vmatpush.bf16.msra.mxu0 %v6008
    %7966 = vmatpush.bf16.msra.mxu0 %v6007
    %7967 = vmatpush.bf16.msra.mxu0 %v6006
    %7968 = vmatpush.bf16.msra.mxu0 %v6005
    %7969 = vmatpush.bf16.msra.mxu0 %v6004
    %7970 = vmatpush.bf16.msra.mxu0 %v6003
    %7971 = vmatpush.bf16.msra.mxu0 %v6002
    %7972 = vmatpush.bf16.msra.mxu0 %v6001
    %7973 = vmatmul.bf16.gmra.mxu0 %v260
    %v7974 = vpop.f32.mrf.mxu0
    %v7975 = vadd.f32 %v7962, %v7974
    %v7976 = vpop.f32.mrf.mxu0
    %7977 = vdwg.mxu0
    %7978 = vmatpush.bf16.msra.mxu0 %v6016
    %7979 = vmatpush.bf16.msra.mxu0 %v6015
    %7980 = vmatpush.bf16.msra.mxu0 %v6014
    %7981 = vmatpush.bf16.msra.mxu0 %v6013
    %7982 = vmatpush.bf16.msra.mxu0 %v6012
    %7983 = vmatpush.bf16.msra.mxu0 %v6011
    %7984 = vmatpush.bf16.msra.mxu0 %v6010
    %7985 = vmatpush.bf16.msra.mxu0 %v6009
    %7986 = vmatmul.bf16.gmra.mxu0 %v261
    %v7987 = vpop.f32.mrf.mxu0
    %v7988 = vadd.f32 %v7975, %v7987
    %v7989 = vpop.f32.mrf.mxu0
    %7990 = vdwg.mxu0
    %7991 = vmatpush.bf16.msra.mxu0 %v6024
    %7992 = vmatpush.bf16.msra.mxu0 %v6023
    %7993 = vmatpush.bf16.msra.mxu0 %v6022
    %7994 = vmatpush.bf16.msra.mxu0 %v6021
    %7995 = vmatpush.bf16.msra.mxu0 %v6020
    %7996 = vmatpush.bf16.msra.mxu0 %v6019
    %7997 = vmatpush.bf16.msra.mxu0 %v6018
    %7998 = vmatpush.bf16.msra.mxu0 %v6017
    %7999 = vmatmul.bf16.gmra.mxu0 %v262
    %v8000 = vpop.f32.mrf.mxu0
    %v8001 = vadd.f32 %v7988, %v8000
    %v8002 = vpop.f32.mrf.mxu0
    %8003 = vdwg.mxu0
    %8004 = vmatpush.bf16.msra.mxu0 %v6032
    %8005 = vmatpush.bf16.msra.mxu0 %v6031
    %8006 = vmatpush.bf16.msra.mxu0 %v6030
    %8007 = vmatpush.bf16.msra.mxu0 %v6029
    %8008 = vmatpush.bf16.msra.mxu0 %v6028
    %8009 = vmatpush.bf16.msra.mxu0 %v6027
    %8010 = vmatpush.bf16.msra.mxu0 %v6026
    %8011 = vmatpush.bf16.msra.mxu0 %v6025
    %8012 = vmatmul.bf16.gmra.mxu0 %v263
    %v8013 = vpop.f32.mrf.mxu0
    %v8014 = vadd.f32 %v8001, %v8013
    %v8015 = vpop.f32.mrf.mxu0
    %8016 = vdwg.mxu0
    %8017 = vmatpush.bf16.msra.mxu0 %v6040
    %8018 = vmatpush.bf16.msra.mxu0 %v6039
    %8019 = vmatpush.bf16.msra.mxu0 %v6038
    %8020 = vmatpush.bf16.msra.mxu0 %v6037
    %8021 = vmatpush.bf16.msra.mxu0 %v6036
    %8022 = vmatpush.bf16.msra.mxu0 %v6035
    %8023 = vmatpush.bf16.msra.mxu0 %v6034
    %8024 = vmatpush.bf16.msra.mxu0 %v6033
    %8025 = vmatmul.bf16.gmra.mxu0 %v264
    %v8026 = vpop.f32.mrf.mxu0
    %v8027 = vadd.f32 %v8014, %v8026
    %v8028 = vpop.f32.mrf.mxu0
    %8029 = vdwg.mxu0
    %8030 = vmatpush.bf16.msra.mxu0 %v6048
    %8031 = vmatpush.bf16.msra.mxu0 %v6047
    %8032 = vmatpush.bf16.msra.mxu0 %v6046
    %8033 = vmatpush.bf16.msra.mxu0 %v6045
    %8034 = vmatpush.bf16.msra.mxu0 %v6044
    %8035 = vmatpush.bf16.msra.mxu0 %v6043
    %8036 = vmatpush.bf16.msra.mxu0 %v6042
    %8037 = vmatpush.bf16.msra.mxu0 %v6041
    %8038 = vmatmul.bf16.gmra.mxu0 %v265
    %v8039 = vpop.f32.mrf.mxu0
    %v8040 = vadd.f32 %v8027, %v8039
    %v8041 = vpop.f32.mrf.mxu0
    %8042 = vdwg.mxu0
    %8043 = vmatpush.bf16.msra.mxu0 %v6056
    %8044 = vmatpush.bf16.msra.mxu0 %v6055
    %8045 = vmatpush.bf16.msra.mxu0 %v6054
    %8046 = vmatpush.bf16.msra.mxu0 %v6053
    %8047 = vmatpush.bf16.msra.mxu0 %v6052
    %8048 = vmatpush.bf16.msra.mxu0 %v6051
    %8049 = vmatpush.bf16.msra.mxu0 %v6050
    %8050 = vmatpush.bf16.msra.mxu0 %v6049
    %8051 = vmatmul.bf16.gmra.mxu0 %v266
    %v8052 = vpop.f32.mrf.mxu0
    %v8053 = vadd.f32 %v8040, %v8052
    %v8054 = vpop.f32.mrf.mxu0
    %8055 = vdwg.mxu0
    %8056 = vmatpush.bf16.msra.mxu0 %v6064
    %8057 = vmatpush.bf16.msra.mxu0 %v6063
    %8058 = vmatpush.bf16.msra.mxu0 %v6062
    %8059 = vmatpush.bf16.msra.mxu0 %v6061
    %8060 = vmatpush.bf16.msra.mxu0 %v6060
    %8061 = vmatpush.bf16.msra.mxu0 %v6059
    %8062 = vmatpush.bf16.msra.mxu0 %v6058
    %8063 = vmatpush.bf16.msra.mxu0 %v6057
    %8064 = vmatmul.bf16.gmra.mxu0 %v267
    %v8065 = vpop.f32.mrf.mxu0
    %v8066 = vadd.f32 %v8053, %v8065
    %v8067 = vpop.f32.mrf.mxu0
    %8068 = vdwg.mxu0
    %8069 = vmatpush.bf16.msra.mxu0 %v6072
    %8070 = vmatpush.bf16.msra.mxu0 %v6071
    %8071 = vmatpush.bf16.msra.mxu0 %v6070
    %8072 = vmatpush.bf16.msra.mxu0 %v6069
    %8073 = vmatpush.bf16.msra.mxu0 %v6068
    %8074 = vmatpush.bf16.msra.mxu0 %v6067
    %8075 = vmatpush.bf16.msra.mxu0 %v6066
    %8076 = vmatpush.bf16.msra.mxu0 %v6065
    %8077 = vmatmul.bf16.gmra.mxu0 %v268
    %v8078 = vpop.f32.mrf.mxu0
    %v8079 = vadd.f32 %v8066, %v8078
    %v8080 = vpop.f32.mrf.mxu0
    %8081 = vdwg.mxu0
    %8082 = vmatpush.bf16.msra.mxu0 %v6080
    %8083 = vmatpush.bf16.msra.mxu0 %v6079
    %8084 = vmatpush.bf16.msra.mxu0 %v6078
    %8085 = vmatpush.bf16.msra.mxu0 %v6077
    %8086 = vmatpush.bf16.msra.mxu0 %v6076
    %8087 = vmatpush.bf16.msra.mxu0 %v6075
    %8088 = vmatpush.bf16.msra.mxu0 %v6074
    %8089 = vmatpush.bf16.msra.mxu0 %v6073
    %8090 = vmatmul.bf16.gmra.mxu0 %v269
    %v8091 = vpop.f32.mrf.mxu0
    %v8092 = vadd.f32 %v8079, %v8091
    %v8093 = vpop.f32.mrf.mxu0
    %8094 = vdwg.mxu0
    %8095 = vmatpush.bf16.msra.mxu0 %v6088
    %8096 = vmatpush.bf16.msra.mxu0 %v6087
    %8097 = vmatpush.bf16.msra.mxu0 %v6086
    %8098 = vmatpush.bf16.msra.mxu0 %v6085
    %8099 = vmatpush.bf16.msra.mxu0 %v6084
    %8100 = vmatpush.bf16.msra.mxu0 %v6083
    %8101 = vmatpush.bf16.msra.mxu0 %v6082
    %8102 = vmatpush.bf16.msra.mxu0 %v6081
    %8103 = vmatmul.bf16.gmra.mxu0 %v270
    %v8104 = vpop.f32.mrf.mxu0
    %v8105 = vadd.f32 %v8092, %v8104
    %v8106 = vpop.f32.mrf.mxu0
    %8107 = vdwg.mxu0
    %8108 = vmatpush.bf16.msra.mxu0 %v6096
    %8109 = vmatpush.bf16.msra.mxu0 %v6095
    %8110 = vmatpush.bf16.msra.mxu0 %v6094
    %8111 = vmatpush.bf16.msra.mxu0 %v6093
    %8112 = vmatpush.bf16.msra.mxu0 %v6092
    %8113 = vmatpush.bf16.msra.mxu0 %v6091
    %8114 = vmatpush.bf16.msra.mxu0 %v6090
    %8115 = vmatpush.bf16.msra.mxu0 %v6089
    %8116 = vmatmul.bf16.gmra.mxu0 %v271
    %v8117 = vpop.f32.mrf.mxu0
    %v8118 = vadd.f32 %v8105, %v8117
    %v8119 = vpop.f32.mrf.mxu0
    %8120 = vdwg.mxu0
    %8121 = vmatpush.bf16.msra.mxu0 %v6104
    %8122 = vmatpush.bf16.msra.mxu0 %v6103
    %8123 = vmatpush.bf16.msra.mxu0 %v6102
    %8124 = vmatpush.bf16.msra.mxu0 %v6101
    %8125 = vmatpush.bf16.msra.mxu0 %v6100
    %8126 = vmatpush.bf16.msra.mxu0 %v6099
    %8127 = vmatpush.bf16.msra.mxu0 %v6098
    %8128 = vmatpush.bf16.msra.mxu0 %v6097
    %8129 = vmatmul.bf16.gmra.mxu0 %v272
    %v8130 = vpop.f32.mrf.mxu0
    %v8131 = vadd.f32 %v8118, %v8130
    %v8132 = vpop.f32.mrf.mxu0
    %8133 = vdwg.mxu0
    %8134 = vmatpush.bf16.msra.mxu0 %v6112
    %8135 = vmatpush.bf16.msra.mxu0 %v6111
    %8136 = vmatpush.bf16.msra.mxu0 %v6110
    %8137 = vmatpush.bf16.msra.mxu0 %v6109
    %8138 = vmatpush.bf16.msra.mxu0 %v6108
    %8139 = vmatpush.bf16.msra.mxu0 %v6107
    %8140 = vmatpush.bf16.msra.mxu0 %v6106
    %8141 = vmatpush.bf16.msra.mxu0 %v6105
    %8142 = vmatmul.bf16.gmra.mxu0 %v273
    %v8143 = vpop.f32.mrf.mxu0
    %v8144 = vadd.f32 %v8131, %v8143
    %v8145 = vpop.f32.mrf.mxu0
    %8146 = vdwg.mxu0
    %8147 = vmatpush.bf16.msra.mxu0 %v6120
    %8148 = vmatpush.bf16.msra.mxu0 %v6119
    %8149 = vmatpush.bf16.msra.mxu0 %v6118
    %8150 = vmatpush.bf16.msra.mxu0 %v6117
    %8151 = vmatpush.bf16.msra.mxu0 %v6116
    %8152 = vmatpush.bf16.msra.mxu0 %v6115
    %8153 = vmatpush.bf16.msra.mxu0 %v6114
    %8154 = vmatpush.bf16.msra.mxu0 %v6113
    %8155 = vmatmul.bf16.gmra.mxu0 %v274
    %v8156 = vpop.f32.mrf.mxu0
    %v8157 = vadd.f32 %v8144, %v8156
    %v8158 = vpop.f32.mrf.mxu0
    %8159 = vdwg.mxu0
    %8160 = vmatpush.bf16.msra.mxu0 %v6128
    %8161 = vmatpush.bf16.msra.mxu0 %v6127
    %8162 = vmatpush.bf16.msra.mxu0 %v6126
    %8163 = vmatpush.bf16.msra.mxu0 %v6125
    %8164 = vmatpush.bf16.msra.mxu0 %v6124
    %8165 = vmatpush.bf16.msra.mxu0 %v6123
    %8166 = vmatpush.bf16.msra.mxu0 %v6122
    %8167 = vmatpush.bf16.msra.mxu0 %v6121
    %8168 = vmatmul.bf16.gmra.mxu0 %v275
    %v8169 = vpop.f32.mrf.mxu0
    %v8170 = vadd.f32 %v8157, %v8169
    %v8171 = vpop.f32.mrf.mxu0
    %8172 = vdwg.mxu0
    %8173 = vmatpush.bf16.msra.mxu0 %v6136
    %8174 = vmatpush.bf16.msra.mxu0 %v6135
    %8175 = vmatpush.bf16.msra.mxu0 %v6134
    %8176 = vmatpush.bf16.msra.mxu0 %v6133
    %8177 = vmatpush.bf16.msra.mxu0 %v6132
    %8178 = vmatpush.bf16.msra.mxu0 %v6131
    %8179 = vmatpush.bf16.msra.mxu0 %v6130
    %8180 = vmatpush.bf16.msra.mxu0 %v6129
    %8181 = vmatmul.bf16.gmra.mxu0 %v276
    %v8182 = vpop.f32.mrf.mxu0
    %v8183 = vadd.f32 %v8170, %v8182
    %v8184 = vpop.f32.mrf.mxu0
    %8185 = vdwg.mxu0
    %8186 = vmatpush.bf16.msra.mxu0 %v6144
    %8187 = vmatpush.bf16.msra.mxu0 %v6143
    %8188 = vmatpush.bf16.msra.mxu0 %v6142
    %8189 = vmatpush.bf16.msra.mxu0 %v6141
    %8190 = vmatpush.bf16.msra.mxu0 %v6140
    %8191 = vmatpush.bf16.msra.mxu0 %v6139
    %8192 = vmatpush.bf16.msra.mxu0 %v6138
    %8193 = vmatpush.bf16.msra.mxu0 %v6137
    %8194 = vmatmul.bf16.gmra.mxu0 %v277
    %v8195 = vpop.f32.mrf.mxu0
    %v8196 = vadd.f32 %v8183, %v8195
    %v8197 = vpop.f32.mrf.mxu0
    %8198 = vdwg.mxu0
    %8199 = vmatpush.bf16.msra.mxu0 %v6152
    %8200 = vmatpush.bf16.msra.mxu0 %v6151
    %8201 = vmatpush.bf16.msra.mxu0 %v6150
    %8202 = vmatpush.bf16.msra.mxu0 %v6149
    %8203 = vmatpush.bf16.msra.mxu0 %v6148
    %8204 = vmatpush.bf16.msra.mxu0 %v6147
    %8205 = vmatpush.bf16.msra.mxu0 %v6146
    %8206 = vmatpush.bf16.msra.mxu0 %v6145
    %8207 = vmatmul.bf16.gmra.mxu0 %v278
    %v8208 = vpop.f32.mrf.mxu0
    %v8209 = vadd.f32 %v8196, %v8208
    %v8210 = vpop.f32.mrf.mxu0
    %8211 = vdwg.mxu0
    %8212 = vmatpush.bf16.msra.mxu0 %v6160
    %8213 = vmatpush.bf16.msra.mxu0 %v6159
    %8214 = vmatpush.bf16.msra.mxu0 %v6158
    %8215 = vmatpush.bf16.msra.mxu0 %v6157
    %8216 = vmatpush.bf16.msra.mxu0 %v6156
    %8217 = vmatpush.bf16.msra.mxu0 %v6155
    %8218 = vmatpush.bf16.msra.mxu0 %v6154
    %8219 = vmatpush.bf16.msra.mxu0 %v6153
    %8220 = vmatmul.bf16.gmra.mxu0 %v279
    %v8221 = vpop.f32.mrf.mxu0
    %v8222 = vadd.f32 %v8209, %v8221
    %v8223 = vpop.f32.mrf.mxu0
    %8224 = vdwg.mxu0
    %8225 = vmatpush.bf16.msra.mxu0 %v6168
    %8226 = vmatpush.bf16.msra.mxu0 %v6167
    %8227 = vmatpush.bf16.msra.mxu0 %v6166
    %8228 = vmatpush.bf16.msra.mxu0 %v6165
    %8229 = vmatpush.bf16.msra.mxu0 %v6164
    %8230 = vmatpush.bf16.msra.mxu0 %v6163
    %8231 = vmatpush.bf16.msra.mxu0 %v6162
    %8232 = vmatpush.bf16.msra.mxu0 %v6161
    %8233 = vmatmul.bf16.gmra.mxu0 %v280
    %v8234 = vpop.f32.mrf.mxu0
    %v8235 = vadd.f32 %v8222, %v8234
    %v8236 = vpop.f32.mrf.mxu0
    %8237 = vdwg.mxu0
    %8238 = vmatpush.bf16.msra.mxu0 %v6176
    %8239 = vmatpush.bf16.msra.mxu0 %v6175
    %8240 = vmatpush.bf16.msra.mxu0 %v6174
    %8241 = vmatpush.bf16.msra.mxu0 %v6173
    %8242 = vmatpush.bf16.msra.mxu0 %v6172
    %8243 = vmatpush.bf16.msra.mxu0 %v6171
    %8244 = vmatpush.bf16.msra.mxu0 %v6170
    %8245 = vmatpush.bf16.msra.mxu0 %v6169
    %8246 = vmatmul.bf16.gmra.mxu0 %v281
    %v8247 = vpop.f32.mrf.mxu0
    %v8248 = vadd.f32 %v8235, %v8247
    %v8249 = vpop.f32.mrf.mxu0
    %8250 = vdwg.mxu0
    %8251 = vmatpush.bf16.msra.mxu0 %v6184
    %8252 = vmatpush.bf16.msra.mxu0 %v6183
    %8253 = vmatpush.bf16.msra.mxu0 %v6182
    %8254 = vmatpush.bf16.msra.mxu0 %v6181
    %8255 = vmatpush.bf16.msra.mxu0 %v6180
    %8256 = vmatpush.bf16.msra.mxu0 %v6179
    %8257 = vmatpush.bf16.msra.mxu0 %v6178
    %8258 = vmatpush.bf16.msra.mxu0 %v6177
    %8259 = vmatmul.bf16.gmra.mxu0 %v282
    %v8260 = vpop.f32.mrf.mxu0
    %v8261 = vadd.f32 %v8248, %v8260
    %v8262 = vpop.f32.mrf.mxu0
    %8263 = vdwg.mxu0
    %8264 = vmatpush.bf16.msra.mxu0 %v6192
    %8265 = vmatpush.bf16.msra.mxu0 %v6191
    %8266 = vmatpush.bf16.msra.mxu0 %v6190
    %8267 = vmatpush.bf16.msra.mxu0 %v6189
    %8268 = vmatpush.bf16.msra.mxu0 %v6188
    %8269 = vmatpush.bf16.msra.mxu0 %v6187
    %8270 = vmatpush.bf16.msra.mxu0 %v6186
    %8271 = vmatpush.bf16.msra.mxu0 %v6185
    %8272 = vmatmul.bf16.gmra.mxu0 %v283
    %v8273 = vpop.f32.mrf.mxu0
    %v8274 = vadd.f32 %v8261, %v8273
    %v8275 = vpop.f32.mrf.mxu0
    %8276 = vdwg.mxu0
    %8277 = vmatpush.bf16.msra.mxu0 %v6200
    %8278 = vmatpush.bf16.msra.mxu0 %v6199
    %8279 = vmatpush.bf16.msra.mxu0 %v6198
    %8280 = vmatpush.bf16.msra.mxu0 %v6197
    %8281 = vmatpush.bf16.msra.mxu0 %v6196
    %8282 = vmatpush.bf16.msra.mxu0 %v6195
    %8283 = vmatpush.bf16.msra.mxu0 %v6194
    %8284 = vmatpush.bf16.msra.mxu0 %v6193
    %8285 = vmatmul.bf16.gmra.mxu0 %v284
    %v8286 = vpop.f32.mrf.mxu0
    %v8287 = vadd.f32 %v8274, %v8286
    %v8288 = vpop.f32.mrf.mxu0
    %8289 = vdwg.mxu0
    %8290 = vmatpush.bf16.msra.mxu0 %v6208
    %8291 = vmatpush.bf16.msra.mxu0 %v6207
    %8292 = vmatpush.bf16.msra.mxu0 %v6206
    %8293 = vmatpush.bf16.msra.mxu0 %v6205
    %8294 = vmatpush.bf16.msra.mxu0 %v6204
    %8295 = vmatpush.bf16.msra.mxu0 %v6203
    %8296 = vmatpush.bf16.msra.mxu0 %v6202
    %8297 = vmatpush.bf16.msra.mxu0 %v6201
    %8298 = vmatmul.bf16.gmra.mxu0 %v285
    %v8299 = vpop.f32.mrf.mxu0
    %v8300 = vadd.f32 %v8287, %v8299
    %v8301 = vpop.f32.mrf.mxu0
    %8302 = vdwg.mxu0
    %8303 = vmatpush.bf16.msra.mxu0 %v6216
    %8304 = vmatpush.bf16.msra.mxu0 %v6215
    %8305 = vmatpush.bf16.msra.mxu0 %v6214
    %8306 = vmatpush.bf16.msra.mxu0 %v6213
    %8307 = vmatpush.bf16.msra.mxu0 %v6212
    %8308 = vmatpush.bf16.msra.mxu0 %v6211
    %8309 = vmatpush.bf16.msra.mxu0 %v6210
    %8310 = vmatpush.bf16.msra.mxu0 %v6209
    %8311 = vmatmul.bf16.gmra.mxu0 %v286
    %v8312 = vpop.f32.mrf.mxu0
    %v8313 = vadd.f32 %v8300, %v8312
    %v8314 = vpop.f32.mrf.mxu0
    %8315 = vdwg.mxu0
    %8316 = vmatpush.bf16.msra.mxu0 %v6224
    %8317 = vmatpush.bf16.msra.mxu0 %v6223
    %8318 = vmatpush.bf16.msra.mxu0 %v6222
    %8319 = vmatpush.bf16.msra.mxu0 %v6221
    %8320 = vmatpush.bf16.msra.mxu0 %v6220
    %8321 = vmatpush.bf16.msra.mxu0 %v6219
    %8322 = vmatpush.bf16.msra.mxu0 %v6218
    %8323 = vmatpush.bf16.msra.mxu0 %v6217
    %8324 = vmatmul.bf16.gmra.mxu0 %v287
    %v8325 = vpop.f32.mrf.mxu0
    %v8326 = vadd.f32 %v8313, %v8325
    %v8327 = vpop.f32.mrf.mxu0
    %8328 = vdwg.mxu0
    %8329 = vmatpush.bf16.msra.mxu0 %v6232
    %8330 = vmatpush.bf16.msra.mxu0 %v6231
    %8331 = vmatpush.bf16.msra.mxu0 %v6230
    %8332 = vmatpush.bf16.msra.mxu0 %v6229
    %8333 = vmatpush.bf16.msra.mxu0 %v6228
    %8334 = vmatpush.bf16.msra.mxu0 %v6227
    %8335 = vmatpush.bf16.msra.mxu0 %v6226
    %8336 = vmatpush.bf16.msra.mxu0 %v6225
    %8337 = vmatmul.bf16.gmra.mxu0 %v288
    %v8338 = vpop.f32.mrf.mxu0
    %v8339 = vadd.f32 %v8326, %v8338
    %v8340 = vpop.f32.mrf.mxu0
    %8341 = vdwg.mxu0
    %8342 = vmatpush.bf16.msra.mxu0 %v6240
    %8343 = vmatpush.bf16.msra.mxu0 %v6239
    %8344 = vmatpush.bf16.msra.mxu0 %v6238
    %8345 = vmatpush.bf16.msra.mxu0 %v6237
    %8346 = vmatpush.bf16.msra.mxu0 %v6236
    %8347 = vmatpush.bf16.msra.mxu0 %v6235
    %8348 = vmatpush.bf16.msra.mxu0 %v6234
    %8349 = vmatpush.bf16.msra.mxu0 %v6233
    %8350 = vmatmul.bf16.gmra.mxu0 %v289
    %v8351 = vpop.f32.mrf.mxu0
    %v8352 = vadd.f32 %v8339, %v8351
    %v8353 = vpop.f32.mrf.mxu0
    %8354 = vdwg.mxu0
    %8355 = vmatpush.bf16.msra.mxu0 %v6248
    %8356 = vmatpush.bf16.msra.mxu0 %v6247
    %8357 = vmatpush.bf16.msra.mxu0 %v6246
    %8358 = vmatpush.bf16.msra.mxu0 %v6245
    %8359 = vmatpush.bf16.msra.mxu0 %v6244
    %8360 = vmatpush.bf16.msra.mxu0 %v6243
    %8361 = vmatpush.bf16.msra.mxu0 %v6242
    %8362 = vmatpush.bf16.msra.mxu0 %v6241
    %8363 = vmatmul.bf16.gmra.mxu0 %v290
    %v8364 = vpop.f32.mrf.mxu0
    %v8365 = vadd.f32 %v8352, %v8364
    %v8366 = vpop.f32.mrf.mxu0
    %8367 = vdwg.mxu0
    %8368 = vmatpush.bf16.msra.mxu0 %v6256
    %8369 = vmatpush.bf16.msra.mxu0 %v6255
    %8370 = vmatpush.bf16.msra.mxu0 %v6254
    %8371 = vmatpush.bf16.msra.mxu0 %v6253
    %8372 = vmatpush.bf16.msra.mxu0 %v6252
    %8373 = vmatpush.bf16.msra.mxu0 %v6251
    %8374 = vmatpush.bf16.msra.mxu0 %v6250
    %8375 = vmatpush.bf16.msra.mxu0 %v6249
    %8376 = vmatmul.bf16.gmra.mxu0 %v291
    %v8377 = vpop.f32.mrf.mxu0
    %v8378 = vadd.f32 %v8365, %v8377
    %v8379 = vpop.f32.mrf.mxu0
    %8380 = vdwg.mxu0
    %8381 = vmatpush.bf16.msra.mxu0 %v6264
    %8382 = vmatpush.bf16.msra.mxu0 %v6263
    %8383 = vmatpush.bf16.msra.mxu0 %v6262
    %8384 = vmatpush.bf16.msra.mxu0 %v6261
    %8385 = vmatpush.bf16.msra.mxu0 %v6260
    %8386 = vmatpush.bf16.msra.mxu0 %v6259
    %8387 = vmatpush.bf16.msra.mxu0 %v6258
    %8388 = vmatpush.bf16.msra.mxu0 %v6257
    %8389 = vmatmul.bf16.gmra.mxu0 %v292
    %v8390 = vpop.f32.mrf.mxu0
    %v8391 = vadd.f32 %v8378, %v8390
    %v8392 = vpop.f32.mrf.mxu0
    %8393 = vdwg.mxu0
    %8394 = vmatpush.bf16.msra.mxu0 %v6272
    %8395 = vmatpush.bf16.msra.mxu0 %v6271
    %8396 = vmatpush.bf16.msra.mxu0 %v6270
    %8397 = vmatpush.bf16.msra.mxu0 %v6269
    %8398 = vmatpush.bf16.msra.mxu0 %v6268
    %8399 = vmatpush.bf16.msra.mxu0 %v6267
    %8400 = vmatpush.bf16.msra.mxu0 %v6266
    %8401 = vmatpush.bf16.msra.mxu0 %v6265
    %8402 = vmatmul.bf16.gmra.mxu0 %v293
    %v8403 = vpop.f32.mrf.mxu0
    %v8404 = vadd.f32 %v8391, %v8403
    %v8405 = vpop.f32.mrf.mxu0
    %8406 = vdwg.mxu0
    %8407 = vmatpush.bf16.msra.mxu0 %v6280
    %8408 = vmatpush.bf16.msra.mxu0 %v6279
    %8409 = vmatpush.bf16.msra.mxu0 %v6278
    %8410 = vmatpush.bf16.msra.mxu0 %v6277
    %8411 = vmatpush.bf16.msra.mxu0 %v6276
    %8412 = vmatpush.bf16.msra.mxu0 %v6275
    %8413 = vmatpush.bf16.msra.mxu0 %v6274
    %8414 = vmatpush.bf16.msra.mxu0 %v6273
    %8415 = vmatmul.bf16.gmra.mxu0 %v294
    %v8416 = vpop.f32.mrf.mxu0
    %v8417 = vadd.f32 %v8404, %v8416
    %v8418 = vpop.f32.mrf.mxu0
    %8419 = vdwg.mxu0
    %8420 = vmatpush.bf16.msra.mxu0 %v6288
    %8421 = vmatpush.bf16.msra.mxu0 %v6287
    %8422 = vmatpush.bf16.msra.mxu0 %v6286
    %8423 = vmatpush.bf16.msra.mxu0 %v6285
    %8424 = vmatpush.bf16.msra.mxu0 %v6284
    %8425 = vmatpush.bf16.msra.mxu0 %v6283
    %8426 = vmatpush.bf16.msra.mxu0 %v6282
    %8427 = vmatpush.bf16.msra.mxu0 %v6281
    %8428 = vmatmul.bf16.gmra.mxu0 %v295
    %v8429 = vpop.f32.mrf.mxu0
    %v8430 = vadd.f32 %v8417, %v8429
    %v8431 = vpop.f32.mrf.mxu0
    %8432 = vdwg.mxu0
    %8433 = vmatpush.bf16.msra.mxu0 %v6296
    %8434 = vmatpush.bf16.msra.mxu0 %v6295
    %8435 = vmatpush.bf16.msra.mxu0 %v6294
    %8436 = vmatpush.bf16.msra.mxu0 %v6293
    %8437 = vmatpush.bf16.msra.mxu0 %v6292
    %8438 = vmatpush.bf16.msra.mxu0 %v6291
    %8439 = vmatpush.bf16.msra.mxu0 %v6290
    %8440 = vmatpush.bf16.msra.mxu0 %v6289
    %8441 = vmatmul.bf16.gmra.mxu0 %v296
    %v8442 = vpop.f32.mrf.mxu0
    %v8443 = vadd.f32 %v8430, %v8442
    %v8444 = vpop.f32.mrf.mxu0
    %8445 = vdwg.mxu0
    %8446 = vmatpush.bf16.msra.mxu0 %v6304
    %8447 = vmatpush.bf16.msra.mxu0 %v6303
    %8448 = vmatpush.bf16.msra.mxu0 %v6302
    %8449 = vmatpush.bf16.msra.mxu0 %v6301
    %8450 = vmatpush.bf16.msra.mxu0 %v6300
    %8451 = vmatpush.bf16.msra.mxu0 %v6299
    %8452 = vmatpush.bf16.msra.mxu0 %v6298
    %8453 = vmatpush.bf16.msra.mxu0 %v6297
    %8454 = vmatmul.bf16.gmra.mxu0 %v297
    %v8455 = vpop.f32.mrf.mxu0
    %v8456 = vadd.f32 %v8443, %v8455
    %v8457 = vpop.f32.mrf.mxu0
    %8458 = vdwg.mxu0
    %8459 = vmatpush.bf16.msra.mxu0 %v6312
    %8460 = vmatpush.bf16.msra.mxu0 %v6311
    %8461 = vmatpush.bf16.msra.mxu0 %v6310
    %8462 = vmatpush.bf16.msra.mxu0 %v6309
    %8463 = vmatpush.bf16.msra.mxu0 %v6308
    %8464 = vmatpush.bf16.msra.mxu0 %v6307
    %8465 = vmatpush.bf16.msra.mxu0 %v6306
    %8466 = vmatpush.bf16.msra.mxu0 %v6305
    %8467 = vmatmul.bf16.gmra.mxu0 %v298
    %v8468 = vpop.f32.mrf.mxu0
    %v8469 = vadd.f32 %v8456, %v8468
    %v8470 = vpop.f32.mrf.mxu0
    %8471 = vdwg.mxu0
    %8472 = vmatpush.bf16.msra.mxu0 %v6320
    %8473 = vmatpush.bf16.msra.mxu0 %v6319
    %8474 = vmatpush.bf16.msra.mxu0 %v6318
    %8475 = vmatpush.bf16.msra.mxu0 %v6317
    %8476 = vmatpush.bf16.msra.mxu0 %v6316
    %8477 = vmatpush.bf16.msra.mxu0 %v6315
    %8478 = vmatpush.bf16.msra.mxu0 %v6314
    %8479 = vmatpush.bf16.msra.mxu0 %v6313
    %8480 = vmatmul.bf16.gmra.mxu0 %v299
    %v8481 = vpop.f32.mrf.mxu0
    %v8482 = vadd.f32 %v8469, %v8481
    %v8483 = vpop.f32.mrf.mxu0
    %8484 = vdwg.mxu0
    %8485 = vmatpush.bf16.msra.mxu0 %v6328
    %8486 = vmatpush.bf16.msra.mxu0 %v6327
    %8487 = vmatpush.bf16.msra.mxu0 %v6326
    %8488 = vmatpush.bf16.msra.mxu0 %v6325
    %8489 = vmatpush.bf16.msra.mxu0 %v6324
    %8490 = vmatpush.bf16.msra.mxu0 %v6323
    %8491 = vmatpush.bf16.msra.mxu0 %v6322
    %8492 = vmatpush.bf16.msra.mxu0 %v6321
    %8493 = vmatmul.bf16.gmra.mxu0 %v300
    %v8494 = vpop.f32.mrf.mxu0
    %v8495 = vadd.f32 %v8482, %v8494
    %v8496 = vpop.f32.mrf.mxu0
    %8497 = vdwg.mxu0
    %8498 = vmatpush.bf16.msra.mxu0 %v6336
    %8499 = vmatpush.bf16.msra.mxu0 %v6335
    %8500 = vmatpush.bf16.msra.mxu0 %v6334
    %8501 = vmatpush.bf16.msra.mxu0 %v6333
    %8502 = vmatpush.bf16.msra.mxu0 %v6332
    %8503 = vmatpush.bf16.msra.mxu0 %v6331
    %8504 = vmatpush.bf16.msra.mxu0 %v6330
    %8505 = vmatpush.bf16.msra.mxu0 %v6329
    %8506 = vmatmul.bf16.gmra.mxu0 %v301
    %v8507 = vpop.f32.mrf.mxu0
    %v8508 = vadd.f32 %v8495, %v8507
    %v8509 = vpop.f32.mrf.mxu0
    %8510 = vdwg.mxu0
    %8511 = vmatpush.bf16.msra.mxu0 %v6344
    %8512 = vmatpush.bf16.msra.mxu0 %v6343
    %8513 = vmatpush.bf16.msra.mxu0 %v6342
    %8514 = vmatpush.bf16.msra.mxu0 %v6341
    %8515 = vmatpush.bf16.msra.mxu0 %v6340
    %8516 = vmatpush.bf16.msra.mxu0 %v6339
    %8517 = vmatpush.bf16.msra.mxu0 %v6338
    %8518 = vmatpush.bf16.msra.mxu0 %v6337
    %8519 = vmatmul.bf16.gmra.mxu0 %v302
    %v8520 = vpop.f32.mrf.mxu0
    %v8521 = vadd.f32 %v8508, %v8520
    %v8522 = vpop.f32.mrf.mxu0
    %8523 = vdwg.mxu0
    %8524 = vmatpush.bf16.msra.mxu0 %v6352
    %8525 = vmatpush.bf16.msra.mxu0 %v6351
    %8526 = vmatpush.bf16.msra.mxu0 %v6350
    %8527 = vmatpush.bf16.msra.mxu0 %v6349
    %8528 = vmatpush.bf16.msra.mxu0 %v6348
    %8529 = vmatpush.bf16.msra.mxu0 %v6347
    %8530 = vmatpush.bf16.msra.mxu0 %v6346
    %8531 = vmatpush.bf16.msra.mxu0 %v6345
    %8532 = vmatmul.bf16.gmra.mxu0 %v303
    %v8533 = vpop.f32.mrf.mxu0
    %v8534 = vadd.f32 %v8521, %v8533
    %v8535 = vpop.f32.mrf.mxu0
    %8536 = vdwg.mxu0
    %8537 = vmatpush.bf16.msra.mxu0 %v6360
    %8538 = vmatpush.bf16.msra.mxu0 %v6359
    %8539 = vmatpush.bf16.msra.mxu0 %v6358
    %8540 = vmatpush.bf16.msra.mxu0 %v6357
    %8541 = vmatpush.bf16.msra.mxu0 %v6356
    %8542 = vmatpush.bf16.msra.mxu0 %v6355
    %8543 = vmatpush.bf16.msra.mxu0 %v6354
    %8544 = vmatpush.bf16.msra.mxu0 %v6353
    %8545 = vmatmul.bf16.gmra.mxu0 %v304
    %v8546 = vpop.f32.mrf.mxu0
    %v8547 = vadd.f32 %v8534, %v8546
    %v8548 = vpop.f32.mrf.mxu0
    %8549 = vdwg.mxu0
    %8550 = vmatpush.bf16.msra.mxu0 %v6368
    %8551 = vmatpush.bf16.msra.mxu0 %v6367
    %8552 = vmatpush.bf16.msra.mxu0 %v6366
    %8553 = vmatpush.bf16.msra.mxu0 %v6365
    %8554 = vmatpush.bf16.msra.mxu0 %v6364
    %8555 = vmatpush.bf16.msra.mxu0 %v6363
    %8556 = vmatpush.bf16.msra.mxu0 %v6362
    %8557 = vmatpush.bf16.msra.mxu0 %v6361
    %8558 = vmatmul.bf16.gmra.mxu0 %v305
    %v8559 = vpop.f32.mrf.mxu0
    %v8560 = vadd.f32 %v8547, %v8559
    %v8561 = vpop.f32.mrf.mxu0
    %8562 = vdwg.mxu0
    %8563 = vmatpush.bf16.msra.mxu0 %v6376
    %8564 = vmatpush.bf16.msra.mxu0 %v6375
    %8565 = vmatpush.bf16.msra.mxu0 %v6374
    %8566 = vmatpush.bf16.msra.mxu0 %v6373
    %8567 = vmatpush.bf16.msra.mxu0 %v6372
    %8568 = vmatpush.bf16.msra.mxu0 %v6371
    %8569 = vmatpush.bf16.msra.mxu0 %v6370
    %8570 = vmatpush.bf16.msra.mxu0 %v6369
    %8571 = vmatmul.bf16.gmra.mxu0 %v306
    %v8572 = vpop.f32.mrf.mxu0
    %v8573 = vadd.f32 %v8560, %v8572
    %v8574 = vpop.f32.mrf.mxu0
    %8575 = vdwg.mxu0
    %8576 = vmatpush.bf16.msra.mxu0 %v6384
    %8577 = vmatpush.bf16.msra.mxu0 %v6383
    %8578 = vmatpush.bf16.msra.mxu0 %v6382
    %8579 = vmatpush.bf16.msra.mxu0 %v6381
    %8580 = vmatpush.bf16.msra.mxu0 %v6380
    %8581 = vmatpush.bf16.msra.mxu0 %v6379
    %8582 = vmatpush.bf16.msra.mxu0 %v6378
    %8583 = vmatpush.bf16.msra.mxu0 %v6377
    %8584 = vmatmul.bf16.gmra.mxu0 %v307
    %v8585 = vpop.f32.mrf.mxu0
    %v8586 = vadd.f32 %v8573, %v8585
    %v8587 = vpop.f32.mrf.mxu0
    %8588 = vdwg.mxu0
    %8589 = vmatpush.bf16.msra.mxu0 %v6392
    %8590 = vmatpush.bf16.msra.mxu0 %v6391
    %8591 = vmatpush.bf16.msra.mxu0 %v6390
    %8592 = vmatpush.bf16.msra.mxu0 %v6389
    %8593 = vmatpush.bf16.msra.mxu0 %v6388
    %8594 = vmatpush.bf16.msra.mxu0 %v6387
    %8595 = vmatpush.bf16.msra.mxu0 %v6386
    %8596 = vmatpush.bf16.msra.mxu0 %v6385
    %8597 = vmatmul.bf16.gmra.mxu0 %v308
    %v8598 = vpop.f32.mrf.mxu0
    %v8599 = vadd.f32 %v8586, %v8598
    %v8600 = vpop.f32.mrf.mxu0
    %8601 = vdwg.mxu0
    %8602 = vmatpush.bf16.msra.mxu0 %v6400
    %8603 = vmatpush.bf16.msra.mxu0 %v6399
    %8604 = vmatpush.bf16.msra.mxu0 %v6398
    %8605 = vmatpush.bf16.msra.mxu0 %v6397
    %8606 = vmatpush.bf16.msra.mxu0 %v6396
    %8607 = vmatpush.bf16.msra.mxu0 %v6395
    %8608 = vmatpush.bf16.msra.mxu0 %v6394
    %8609 = vmatpush.bf16.msra.mxu0 %v6393
    %8610 = vmatmul.bf16.gmra.mxu0 %v309
    %v8611 = vpop.f32.mrf.mxu0
    %v8612 = vadd.f32 %v8599, %v8611
    %v8613 = vpop.f32.mrf.mxu0
    %8614 = vdwg.mxu0
    %8615 = vmatpush.bf16.msra.mxu0 %v6408
    %8616 = vmatpush.bf16.msra.mxu0 %v6407
    %8617 = vmatpush.bf16.msra.mxu0 %v6406
    %8618 = vmatpush.bf16.msra.mxu0 %v6405
    %8619 = vmatpush.bf16.msra.mxu0 %v6404
    %8620 = vmatpush.bf16.msra.mxu0 %v6403
    %8621 = vmatpush.bf16.msra.mxu0 %v6402
    %8622 = vmatpush.bf16.msra.mxu0 %v6401
    %8623 = vmatmul.bf16.gmra.mxu0 %v310
    %v8624 = vpop.f32.mrf.mxu0
    %v8625 = vadd.f32 %v8612, %v8624
    %v8626 = vpop.f32.mrf.mxu0
    %8627 = vdwg.mxu0
    %8628 = vmatpush.bf16.msra.mxu0 %v6416
    %8629 = vmatpush.bf16.msra.mxu0 %v6415
    %8630 = vmatpush.bf16.msra.mxu0 %v6414
    %8631 = vmatpush.bf16.msra.mxu0 %v6413
    %8632 = vmatpush.bf16.msra.mxu0 %v6412
    %8633 = vmatpush.bf16.msra.mxu0 %v6411
    %8634 = vmatpush.bf16.msra.mxu0 %v6410
    %8635 = vmatpush.bf16.msra.mxu0 %v6409
    %8636 = vmatmul.bf16.gmra.mxu0 %v311
    %v8637 = vpop.f32.mrf.mxu0
    %v8638 = vadd.f32 %v8625, %v8637
    %v8639 = vpop.f32.mrf.mxu0
    %8640 = vdwg.mxu0
    %8641 = vmatpush.bf16.msra.mxu0 %v6424
    %8642 = vmatpush.bf16.msra.mxu0 %v6423
    %8643 = vmatpush.bf16.msra.mxu0 %v6422
    %8644 = vmatpush.bf16.msra.mxu0 %v6421
    %8645 = vmatpush.bf16.msra.mxu0 %v6420
    %8646 = vmatpush.bf16.msra.mxu0 %v6419
    %8647 = vmatpush.bf16.msra.mxu0 %v6418
    %8648 = vmatpush.bf16.msra.mxu0 %v6417
    %8649 = vmatmul.bf16.gmra.mxu0 %v312
    %v8650 = vpop.f32.mrf.mxu0
    %v8651 = vadd.f32 %v8638, %v8650
    %v8652 = vpop.f32.mrf.mxu0
    %8653 = vdwg.mxu0
    %8654 = vmatpush.bf16.msra.mxu0 %v6432
    %8655 = vmatpush.bf16.msra.mxu0 %v6431
    %8656 = vmatpush.bf16.msra.mxu0 %v6430
    %8657 = vmatpush.bf16.msra.mxu0 %v6429
    %8658 = vmatpush.bf16.msra.mxu0 %v6428
    %8659 = vmatpush.bf16.msra.mxu0 %v6427
    %8660 = vmatpush.bf16.msra.mxu0 %v6426
    %8661 = vmatpush.bf16.msra.mxu0 %v6425
    %8662 = vmatmul.bf16.gmra.mxu0 %v313
    %v8663 = vpop.f32.mrf.mxu0
    %v8664 = vadd.f32 %v8651, %v8663
    %v8665 = vpop.f32.mrf.mxu0
    %8666 = vdwg.mxu0
    %8667 = vmatpush.bf16.msra.mxu0 %v6440
    %8668 = vmatpush.bf16.msra.mxu0 %v6439
    %8669 = vmatpush.bf16.msra.mxu0 %v6438
    %8670 = vmatpush.bf16.msra.mxu0 %v6437
    %8671 = vmatpush.bf16.msra.mxu0 %v6436
    %8672 = vmatpush.bf16.msra.mxu0 %v6435
    %8673 = vmatpush.bf16.msra.mxu0 %v6434
    %8674 = vmatpush.bf16.msra.mxu0 %v6433
    %8675 = vmatmul.bf16.gmra.mxu0 %v314
    %v8676 = vpop.f32.mrf.mxu0
    %v8677 = vadd.f32 %v8664, %v8676
    %v8678 = vpop.f32.mrf.mxu0
    %8679 = vdwg.mxu0
    %8680 = vmatpush.bf16.msra.mxu0 %v6448
    %8681 = vmatpush.bf16.msra.mxu0 %v6447
    %8682 = vmatpush.bf16.msra.mxu0 %v6446
    %8683 = vmatpush.bf16.msra.mxu0 %v6445
    %8684 = vmatpush.bf16.msra.mxu0 %v6444
    %8685 = vmatpush.bf16.msra.mxu0 %v6443
    %8686 = vmatpush.bf16.msra.mxu0 %v6442
    %8687 = vmatpush.bf16.msra.mxu0 %v6441
    %8688 = vmatmul.bf16.gmra.mxu0 %v315
    %v8689 = vpop.f32.mrf.mxu0
    %v8690 = vadd.f32 %v8677, %v8689
    %v8691 = vpop.f32.mrf.mxu0
    %8692 = vdwg.mxu0
    %8693 = vmatpush.bf16.msra.mxu0 %v6456
    %8694 = vmatpush.bf16.msra.mxu0 %v6455
    %8695 = vmatpush.bf16.msra.mxu0 %v6454
    %8696 = vmatpush.bf16.msra.mxu0 %v6453
    %8697 = vmatpush.bf16.msra.mxu0 %v6452
    %8698 = vmatpush.bf16.msra.mxu0 %v6451
    %8699 = vmatpush.bf16.msra.mxu0 %v6450
    %8700 = vmatpush.bf16.msra.mxu0 %v6449
    %8701 = vmatmul.bf16.gmra.mxu0 %v316
    %v8702 = vpop.f32.mrf.mxu0
    %v8703 = vadd.f32 %v8690, %v8702
    %v8704 = vpop.f32.mrf.mxu0
    %8705 = vdwg.mxu0
    %8706 = vmatpush.bf16.msra.mxu0 %v6464
    %8707 = vmatpush.bf16.msra.mxu0 %v6463
    %8708 = vmatpush.bf16.msra.mxu0 %v6462
    %8709 = vmatpush.bf16.msra.mxu0 %v6461
    %8710 = vmatpush.bf16.msra.mxu0 %v6460
    %8711 = vmatpush.bf16.msra.mxu0 %v6459
    %8712 = vmatpush.bf16.msra.mxu0 %v6458
    %8713 = vmatpush.bf16.msra.mxu0 %v6457
    %8714 = vmatmul.bf16.gmra.mxu0 %v317
    %v8715 = vpop.f32.mrf.mxu0
    %v8716 = vadd.f32 %v8703, %v8715
    %v8717 = vpop.f32.mrf.mxu0
    %8718 = vdwg.mxu0
    %8719 = vmatpush.bf16.msra.mxu0 %v6472
    %8720 = vmatpush.bf16.msra.mxu0 %v6471
    %8721 = vmatpush.bf16.msra.mxu0 %v6470
    %8722 = vmatpush.bf16.msra.mxu0 %v6469
    %8723 = vmatpush.bf16.msra.mxu0 %v6468
    %8724 = vmatpush.bf16.msra.mxu0 %v6467
    %8725 = vmatpush.bf16.msra.mxu0 %v6466
    %8726 = vmatpush.bf16.msra.mxu0 %v6465
    %8727 = vmatmul.bf16.gmra.mxu0 %v318
    %v8728 = vpop.f32.mrf.mxu0
    %v8729 = vadd.f32 %v8716, %v8728
    %v8730 = vpop.f32.mrf.mxu0
    %8731 = vdwg.mxu0
    %8732 = vmatpush.bf16.msra.mxu0 %v6480
    %8733 = vmatpush.bf16.msra.mxu0 %v6479
    %8734 = vmatpush.bf16.msra.mxu0 %v6478
    %8735 = vmatpush.bf16.msra.mxu0 %v6477
    %8736 = vmatpush.bf16.msra.mxu0 %v6476
    %8737 = vmatpush.bf16.msra.mxu0 %v6475
    %8738 = vmatpush.bf16.msra.mxu0 %v6474
    %8739 = vmatpush.bf16.msra.mxu0 %v6473
    %8740 = vmatmul.bf16.gmra.mxu0 %v319
    %v8741 = vpop.f32.mrf.mxu0
    %v8742 = vadd.f32 %v8729, %v8741
    %v8743 = vpop.f32.mrf.mxu0
    %8744 = vdwg.mxu0
    %8745 = vmatpush.bf16.msra.mxu0 %v6488
    %8746 = vmatpush.bf16.msra.mxu0 %v6487
    %8747 = vmatpush.bf16.msra.mxu0 %v6486
    %8748 = vmatpush.bf16.msra.mxu0 %v6485
    %8749 = vmatpush.bf16.msra.mxu0 %v6484
    %8750 = vmatpush.bf16.msra.mxu0 %v6483
    %8751 = vmatpush.bf16.msra.mxu0 %v6482
    %8752 = vmatpush.bf16.msra.mxu0 %v6481
    %8753 = vmatmul.bf16.gmra.mxu0 %v320
    %v8754 = vpop.f32.mrf.mxu0
    %v8755 = vadd.f32 %v8742, %v8754
    %v8756 = vpop.f32.mrf.mxu0
    %8757 = vdwg.mxu0
    %8758 = vmatpush.bf16.msra.mxu0 %v6496
    %8759 = vmatpush.bf16.msra.mxu0 %v6495
    %8760 = vmatpush.bf16.msra.mxu0 %v6494
    %8761 = vmatpush.bf16.msra.mxu0 %v6493
    %8762 = vmatpush.bf16.msra.mxu0 %v6492
    %8763 = vmatpush.bf16.msra.mxu0 %v6491
    %8764 = vmatpush.bf16.msra.mxu0 %v6490
    %8765 = vmatpush.bf16.msra.mxu0 %v6489
    %8766 = vmatmul.bf16.gmra.mxu0 %v321
    %v8767 = vpop.f32.mrf.mxu0
    %v8768 = vadd.f32 %v8755, %v8767
    %v8769 = vpop.f32.mrf.mxu0
    %8770 = vdwg.mxu0
    %8771 = vmatpush.bf16.msra.mxu0 %v6504
    %8772 = vmatpush.bf16.msra.mxu0 %v6503
    %8773 = vmatpush.bf16.msra.mxu0 %v6502
    %8774 = vmatpush.bf16.msra.mxu0 %v6501
    %8775 = vmatpush.bf16.msra.mxu0 %v6500
    %8776 = vmatpush.bf16.msra.mxu0 %v6499
    %8777 = vmatpush.bf16.msra.mxu0 %v6498
    %8778 = vmatpush.bf16.msra.mxu0 %v6497
    %8779 = vmatmul.bf16.gmra.mxu0 %v322
    %v8780 = vpop.f32.mrf.mxu0
    %v8781 = vadd.f32 %v8768, %v8780
    %v8782 = vpop.f32.mrf.mxu0
    %8783 = vdwg.mxu0
    %8784 = vmatpush.bf16.msra.mxu0 %v6512
    %8785 = vmatpush.bf16.msra.mxu0 %v6511
    %8786 = vmatpush.bf16.msra.mxu0 %v6510
    %8787 = vmatpush.bf16.msra.mxu0 %v6509
    %8788 = vmatpush.bf16.msra.mxu0 %v6508
    %8789 = vmatpush.bf16.msra.mxu0 %v6507
    %8790 = vmatpush.bf16.msra.mxu0 %v6506
    %8791 = vmatpush.bf16.msra.mxu0 %v6505
    %8792 = vmatmul.bf16.gmra.mxu0 %v323
    %v8793 = vpop.f32.mrf.mxu0
    %v8794 = vadd.f32 %v8781, %v8793
    %v8795 = vpop.f32.mrf.mxu0
    %8796 = vdwg.mxu0
    %8797 = vmatpush.bf16.msra.mxu0 %v6520
    %8798 = vmatpush.bf16.msra.mxu0 %v6519
    %8799 = vmatpush.bf16.msra.mxu0 %v6518
    %8800 = vmatpush.bf16.msra.mxu0 %v6517
    %8801 = vmatpush.bf16.msra.mxu0 %v6516
    %8802 = vmatpush.bf16.msra.mxu0 %v6515
    %8803 = vmatpush.bf16.msra.mxu0 %v6514
    %8804 = vmatpush.bf16.msra.mxu0 %v6513
    %8805 = vmatmul.bf16.gmra.mxu0 %v324
    %v8806 = vpop.f32.mrf.mxu0
    %v8807 = vadd.f32 %v8794, %v8806
    %v8808 = vpop.f32.mrf.mxu0
    %8809 = vdwg.mxu0
    %8810 = vmatpush.bf16.msra.mxu0 %v6528
    %8811 = vmatpush.bf16.msra.mxu0 %v6527
    %8812 = vmatpush.bf16.msra.mxu0 %v6526
    %8813 = vmatpush.bf16.msra.mxu0 %v6525
    %8814 = vmatpush.bf16.msra.mxu0 %v6524
    %8815 = vmatpush.bf16.msra.mxu0 %v6523
    %8816 = vmatpush.bf16.msra.mxu0 %v6522
    %8817 = vmatpush.bf16.msra.mxu0 %v6521
    %8818 = vmatmul.bf16.gmra.mxu0 %v325
    %v8819 = vpop.f32.mrf.mxu0
    %v8820 = vadd.f32 %v8807, %v8819
    %v8821 = vpop.f32.mrf.mxu0
    %8822 = vdwg.mxu0
    %8823 = vmatpush.bf16.msra.mxu0 %v6536
    %8824 = vmatpush.bf16.msra.mxu0 %v6535
    %8825 = vmatpush.bf16.msra.mxu0 %v6534
    %8826 = vmatpush.bf16.msra.mxu0 %v6533
    %8827 = vmatpush.bf16.msra.mxu0 %v6532
    %8828 = vmatpush.bf16.msra.mxu0 %v6531
    %8829 = vmatpush.bf16.msra.mxu0 %v6530
    %8830 = vmatpush.bf16.msra.mxu0 %v6529
    %8831 = vmatmul.bf16.gmra.mxu0 %v326
    %v8832 = vpop.f32.mrf.mxu0
    %v8833 = vadd.f32 %v8820, %v8832
    %v8834 = vpop.f32.mrf.mxu0
    %8835 = vdwg.mxu0
    %8836 = vmatpush.bf16.msra.mxu0 %v6544
    %8837 = vmatpush.bf16.msra.mxu0 %v6543
    %8838 = vmatpush.bf16.msra.mxu0 %v6542
    %8839 = vmatpush.bf16.msra.mxu0 %v6541
    %8840 = vmatpush.bf16.msra.mxu0 %v6540
    %8841 = vmatpush.bf16.msra.mxu0 %v6539
    %8842 = vmatpush.bf16.msra.mxu0 %v6538
    %8843 = vmatpush.bf16.msra.mxu0 %v6537
    %8844 = vmatmul.bf16.gmra.mxu0 %v327
    %v8845 = vpop.f32.mrf.mxu0
    %v8846 = vadd.f32 %v8833, %v8845
    %v8847 = vpop.f32.mrf.mxu0
    %8848 = vdwg.mxu0
    %8849 = vmatpush.bf16.msra.mxu0 %v6552
    %8850 = vmatpush.bf16.msra.mxu0 %v6551
    %8851 = vmatpush.bf16.msra.mxu0 %v6550
    %8852 = vmatpush.bf16.msra.mxu0 %v6549
    %8853 = vmatpush.bf16.msra.mxu0 %v6548
    %8854 = vmatpush.bf16.msra.mxu0 %v6547
    %8855 = vmatpush.bf16.msra.mxu0 %v6546
    %8856 = vmatpush.bf16.msra.mxu0 %v6545
    %8857 = vmatmul.bf16.gmra.mxu0 %v328
    %v8858 = vpop.f32.mrf.mxu0
    %v8859 = vadd.f32 %v8846, %v8858
    %v8860 = vpop.f32.mrf.mxu0
    %8861 = vdwg.mxu0
    %8862 = vmatpush.bf16.msra.mxu0 %v6560
    %8863 = vmatpush.bf16.msra.mxu0 %v6559
    %8864 = vmatpush.bf16.msra.mxu0 %v6558
    %8865 = vmatpush.bf16.msra.mxu0 %v6557
    %8866 = vmatpush.bf16.msra.mxu0 %v6556
    %8867 = vmatpush.bf16.msra.mxu0 %v6555
    %8868 = vmatpush.bf16.msra.mxu0 %v6554
    %8869 = vmatpush.bf16.msra.mxu0 %v6553
    %8870 = vmatmul.bf16.gmra.mxu0 %v329
    %v8871 = vpop.f32.mrf.mxu0
    %v8872 = vadd.f32 %v8859, %v8871
    %v8873 = vpop.f32.mrf.mxu0
    %8874 = vdwg.mxu0
    %8875 = vmatpush.bf16.msra.mxu0 %v6568
    %8876 = vmatpush.bf16.msra.mxu0 %v6567
    %8877 = vmatpush.bf16.msra.mxu0 %v6566
    %8878 = vmatpush.bf16.msra.mxu0 %v6565
    %8879 = vmatpush.bf16.msra.mxu0 %v6564
    %8880 = vmatpush.bf16.msra.mxu0 %v6563
    %8881 = vmatpush.bf16.msra.mxu0 %v6562
    %8882 = vmatpush.bf16.msra.mxu0 %v6561
    %8883 = vmatmul.bf16.gmra.mxu0 %v330
    %v8884 = vpop.f32.mrf.mxu0
    %v8885 = vadd.f32 %v8872, %v8884
    %v8886 = vpop.f32.mrf.mxu0
    %8887 = vdwg.mxu0
    %8888 = vmatpush.bf16.msra.mxu0 %v6576
    %8889 = vmatpush.bf16.msra.mxu0 %v6575
    %8890 = vmatpush.bf16.msra.mxu0 %v6574
    %8891 = vmatpush.bf16.msra.mxu0 %v6573
    %8892 = vmatpush.bf16.msra.mxu0 %v6572
    %8893 = vmatpush.bf16.msra.mxu0 %v6571
    %8894 = vmatpush.bf16.msra.mxu0 %v6570
    %8895 = vmatpush.bf16.msra.mxu0 %v6569
    %8896 = vmatmul.bf16.gmra.mxu0 %v331
    %v8897 = vpop.f32.mrf.mxu0
    %v8898 = vadd.f32 %v8885, %v8897
    %v8899 = vpop.f32.mrf.mxu0
    %8900 = vdwg.mxu0
    %8901 = vmatpush.bf16.msra.mxu0 %v6584
    %8902 = vmatpush.bf16.msra.mxu0 %v6583
    %8903 = vmatpush.bf16.msra.mxu0 %v6582
    %8904 = vmatpush.bf16.msra.mxu0 %v6581
    %8905 = vmatpush.bf16.msra.mxu0 %v6580
    %8906 = vmatpush.bf16.msra.mxu0 %v6579
    %8907 = vmatpush.bf16.msra.mxu0 %v6578
    %8908 = vmatpush.bf16.msra.mxu0 %v6577
    %8909 = vmatmul.bf16.gmra.mxu0 %v332
    %v8910 = vpop.f32.mrf.mxu0
    %v8911 = vadd.f32 %v8898, %v8910
    %v8912 = vpop.f32.mrf.mxu0
    %8913 = vdwg.mxu0
    %8914 = vmatpush.bf16.msra.mxu0 %v6592
    %8915 = vmatpush.bf16.msra.mxu0 %v6591
    %8916 = vmatpush.bf16.msra.mxu0 %v6590
    %8917 = vmatpush.bf16.msra.mxu0 %v6589
    %8918 = vmatpush.bf16.msra.mxu0 %v6588
    %8919 = vmatpush.bf16.msra.mxu0 %v6587
    %8920 = vmatpush.bf16.msra.mxu0 %v6586
    %8921 = vmatpush.bf16.msra.mxu0 %v6585
    %8922 = vmatmul.bf16.gmra.mxu0 %v333
    %v8923 = vpop.f32.mrf.mxu0
    %v8924 = vadd.f32 %v8911, %v8923
    %v8925 = vpop.f32.mrf.mxu0
    %8926 = vdwg.mxu0
    %8927 = vmatpush.bf16.msra.mxu0 %v6600
    %8928 = vmatpush.bf16.msra.mxu0 %v6599
    %8929 = vmatpush.bf16.msra.mxu0 %v6598
    %8930 = vmatpush.bf16.msra.mxu0 %v6597
    %8931 = vmatpush.bf16.msra.mxu0 %v6596
    %8932 = vmatpush.bf16.msra.mxu0 %v6595
    %8933 = vmatpush.bf16.msra.mxu0 %v6594
    %8934 = vmatpush.bf16.msra.mxu0 %v6593
    %8935 = vmatmul.bf16.gmra.mxu0 %v334
    %v8936 = vpop.f32.mrf.mxu0
    %v8937 = vadd.f32 %v8924, %v8936
    %v8938 = vpop.f32.mrf.mxu0
    %8939 = vdwg.mxu0
    %8940 = vmatpush.bf16.msra.mxu0 %v6608
    %8941 = vmatpush.bf16.msra.mxu0 %v6607
    %8942 = vmatpush.bf16.msra.mxu0 %v6606
    %8943 = vmatpush.bf16.msra.mxu0 %v6605
    %8944 = vmatpush.bf16.msra.mxu0 %v6604
    %8945 = vmatpush.bf16.msra.mxu0 %v6603
    %8946 = vmatpush.bf16.msra.mxu0 %v6602
    %8947 = vmatpush.bf16.msra.mxu0 %v6601
    %8948 = vmatmul.bf16.gmra.mxu0 %v335
    %v8949 = vpop.f32.mrf.mxu0
    %v8950 = vadd.f32 %v8937, %v8949
    %v8951 = vpop.f32.mrf.mxu0
    %8952 = vdwg.mxu0
    %8953 = vmatpush.bf16.msra.mxu0 %v6616
    %8954 = vmatpush.bf16.msra.mxu0 %v6615
    %8955 = vmatpush.bf16.msra.mxu0 %v6614
    %8956 = vmatpush.bf16.msra.mxu0 %v6613
    %8957 = vmatpush.bf16.msra.mxu0 %v6612
    %8958 = vmatpush.bf16.msra.mxu0 %v6611
    %8959 = vmatpush.bf16.msra.mxu0 %v6610
    %8960 = vmatpush.bf16.msra.mxu0 %v6609
    %8961 = vmatmul.bf16.gmra.mxu0 %v336
    %v8962 = vpop.f32.mrf.mxu0
    %v8963 = vadd.f32 %v8950, %v8962
    %v8964 = vpop.f32.mrf.mxu0
    %8965 = vdwg.mxu0
    %8966 = vmatpush.bf16.msra.mxu0 %v6624
    %8967 = vmatpush.bf16.msra.mxu0 %v6623
    %8968 = vmatpush.bf16.msra.mxu0 %v6622
    %8969 = vmatpush.bf16.msra.mxu0 %v6621
    %8970 = vmatpush.bf16.msra.mxu0 %v6620
    %8971 = vmatpush.bf16.msra.mxu0 %v6619
    %8972 = vmatpush.bf16.msra.mxu0 %v6618
    %8973 = vmatpush.bf16.msra.mxu0 %v6617
    %8974 = vmatmul.bf16.gmra.mxu0 %v337
    %v8975 = vpop.f32.mrf.mxu0
    %v8976 = vadd.f32 %v8963, %v8975
    %v8977 = vpop.f32.mrf.mxu0
    %8978 = vdwg.mxu0
    %8979 = vmatpush.bf16.msra.mxu0 %v6632
    %8980 = vmatpush.bf16.msra.mxu0 %v6631
    %8981 = vmatpush.bf16.msra.mxu0 %v6630
    %8982 = vmatpush.bf16.msra.mxu0 %v6629
    %8983 = vmatpush.bf16.msra.mxu0 %v6628
    %8984 = vmatpush.bf16.msra.mxu0 %v6627
    %8985 = vmatpush.bf16.msra.mxu0 %v6626
    %8986 = vmatpush.bf16.msra.mxu0 %v6625
    %8987 = vmatmul.bf16.gmra.mxu0 %v338
    %v8988 = vpop.f32.mrf.mxu0
    %v8989 = vadd.f32 %v8976, %v8988
    %v8990 = vpop.f32.mrf.mxu0
    %8991 = vdwg.mxu0
    %8992 = vmatpush.bf16.msra.mxu0 %v6640
    %8993 = vmatpush.bf16.msra.mxu0 %v6639
    %8994 = vmatpush.bf16.msra.mxu0 %v6638
    %8995 = vmatpush.bf16.msra.mxu0 %v6637
    %8996 = vmatpush.bf16.msra.mxu0 %v6636
    %8997 = vmatpush.bf16.msra.mxu0 %v6635
    %8998 = vmatpush.bf16.msra.mxu0 %v6634
    %8999 = vmatpush.bf16.msra.mxu0 %v6633
    %9000 = vmatmul.bf16.gmra.mxu0 %v339
    %v9001 = vpop.f32.mrf.mxu0
    %v9002 = vadd.f32 %v8989, %v9001
    %v9003 = vpop.f32.mrf.mxu0
    %9004 = vdwg.mxu0
    %9005 = vmatpush.bf16.msra.mxu0 0
    %9006 = vmatpush.bf16.msra.mxu0 0
    %9007 = vmatpush.bf16.msra.mxu0 0
    %9008 = vmatpush.bf16.msra.mxu0 0
    %9009 = vmatpush.bf16.msra.mxu0 %v6644
    %9010 = vmatpush.bf16.msra.mxu0 %v6643
    %9011 = vmatpush.bf16.msra.mxu0 %v6642
    %9012 = vmatpush.bf16.msra.mxu0 %v6641
    %9013 = vmatmul.bf16.gmra.mxu0 %v7547
    %v9014 = vpop.f32.mrf.mxu0
    %v9015 = vadd.f32 %v9002, %v9014
    %v9016 = vpop.f32.mrf.mxu0
    %9017 = vdwg.mxu0
    %v9018 = vmax.f32 %v9015, 0.0
    %v9019 = vpack.c.bf16 %v9018, %v9018
    %v9020 = vld [vmem:[#allocation6] sm:$0xf]
    %v9021 = vld [vmem:[#allocation6 + $0x4] sm:$0xf]
    %v9022 = vld [vmem:[#allocation6 + $0x8] sm:$0xf]
    %v9023 = vld [vmem:[#allocation6 + $0xc] sm:$0xf]
    %v9024 = vld [vmem:[#allocation6 + $0x10] sm:$0xf]
    %v9025 = vld [vmem:[#allocation6 + $0x14] sm:$0xf]
    %v9026 = vld [vmem:[#allocation6 + $0x18] sm:$0xf]
    %v9027 = vld [vmem:[#allocation6 + $0x1c] sm:$0xf]
    %v9028 = vld [vmem:[#allocation6 + $0x20] sm:$0xf]
    %v9029 = vld [vmem:[#allocation6 + $0x24] sm:$0xf]
    %v9030 = vld [vmem:[#allocation6 + $0x28] sm:$0xf]
    %v9031 = vld [vmem:[#allocation6 + $0x2c] sm:$0xf]
    %v9032 = vld [vmem:[#allocation6 + $0x30] sm:$0xf]
    %v9033 = vld [vmem:[#allocation6 + $0x34] sm:$0xf]
    %v9034 = vld [vmem:[#allocation6 + $0x38] sm:$0xf]
    %v9035 = vld [vmem:[#allocation6 + $0x3c] sm:$0xf]
    %v9036 = vld [vmem:[#allocation7] sm:$0x1]
    %v9038 = vperm.slane %v9036, 0
    %v9056 = vunpack.c.l.b16 %v9020
    %v9057 = vunpack.c.l.b16 %v9021
    %v9058 = vunpack.c.l.b16 %v9022
    %v9059 = vunpack.c.l.b16 %v9023
    %v9060 = vunpack.c.l.b16 %v9024
    %v9061 = vunpack.c.l.b16 %v9025
    %v9062 = vunpack.c.l.b16 %v9026
    %v9063 = vunpack.c.l.b16 %v9027
    %v9064 = vunpack.c.l.b16 %v9028
    %v9065 = vunpack.c.l.b16 %v9029
    %v9066 = vunpack.c.l.b16 %v9030
    %v9067 = vunpack.c.l.b16 %v9031
    %v9068 = vunpack.c.l.b16 %v9032
    %v9069 = vunpack.c.l.b16 %v9033
    %v9070 = vunpack.c.l.b16 %v9034
    %v9071 = vunpack.c.l.b16 %v9035
    %v9072 = vpack.c.b16 %v9057, %v9056
    %v9073 = vpack.c.b16 %v9059, %v9058
    %v9074 = vpack.c.b16 %v9061, %v9060
    %v9075 = vpack.c.b16 %v9063, %v9062
    %v9076 = vpack.c.b16 %v9065, %v9064
    %v9077 = vpack.c.b16 %v9067, %v9066
    %v9078 = vpack.c.b16 %v9069, %v9068
    %v9079 = vpack.c.b16 %v9071, %v9070
    %9088 = vmatpush.bf16.msra.mxu0 %v9079
    %9089 = vmatpush.bf16.msra.mxu0 %v9078
    %9090 = vmatpush.bf16.msra.mxu0 %v9077
    %9091 = vmatpush.bf16.msra.mxu0 %v9076
    %9092 = vmatpush.bf16.msra.mxu0 %v9075
    %9093 = vmatpush.bf16.msra.mxu0 %v9074
    %9094 = vmatpush.bf16.msra.mxu0 %v9073
    %9095 = vmatpush.bf16.msra.mxu0 %v9072
    %9096 = vmatmul.bf16.gmra.mxu0 %v9019
    %v9097 = vpop.f32.mrf.mxu0
    %v9098 = vadd.f32 %v9038, %v9097
    %v9099 = vpop.f32.mrf.mxu0
    %9100 = vdwg.mxu0
    %v9101 = vmax.f32 %v9098, 0.0
    %v9102 = vpack.c.bf16 %v9101, %v9101
    %v9103 = vld [vmem:[#allocation9] sm:$0xf]
    %v9104 = vld [vmem:[#allocation9 + $0x4] sm:$0xf]
    %v9105 = vld [vmem:[#allocation9 + $0x8] sm:$0xf]
    %v9106 = vld [vmem:[#allocation9 + $0xc] sm:$0xf]
    %v9107 = vld [vmem:[#allocation9 + $0x10] sm:$0xf]
    %v9108 = vld [vmem:[#allocation9 + $0x14] sm:$0xf]
    %v9109 = vld [vmem:[#allocation9 + $0x18] sm:$0xf]
    %v9110 = vld [vmem:[#allocation9 + $0x1c] sm:$0xf]
    %v9111 = vld [vmem:[#allocation9 + $0x20] sm:$0xf]
    %v9112 = vld [vmem:[#allocation9 + $0x24] sm:$0xf]
    %v9113 = vld [vmem:[#allocation9 + $0x28] sm:$0xf]
    %v9114 = vld [vmem:[#allocation9 + $0x2c] sm:$0xf]
    %v9115 = vld [vmem:[#allocation9 + $0x30] sm:$0xf]
    %v9116 = vld [vmem:[#allocation9 + $0x34] sm:$0xf]
    %v9117 = vld [vmem:[#allocation9 + $0x38] sm:$0xf]
    %v9118 = vld [vmem:[#allocation9 + $0x3c] sm:$0xf]
    %v9119 = vld [vmem:[#allocation10] sm:$0x1]
    %v9121 = vperm.slane %v9119, 0
    %v9139 = vunpack.c.l.b16 %v9103
    %v9140 = vunpack.c.l.b16 %v9104
    %v9141 = vunpack.c.l.b16 %v9105
    %v9142 = vunpack.c.l.b16 %v9106
    %v9143 = vunpack.c.l.b16 %v9107
    %v9144 = vunpack.c.l.b16 %v9108
    %v9145 = vunpack.c.l.b16 %v9109
    %v9146 = vunpack.c.l.b16 %v9110
    %v9147 = vunpack.c.l.b16 %v9111
    %v9148 = vunpack.c.l.b16 %v9112
    %v9149 = vunpack.c.l.b16 %v9113
    %v9150 = vunpack.c.l.b16 %v9114
    %v9151 = vunpack.c.l.b16 %v9115
    %v9152 = vunpack.c.l.b16 %v9116
    %v9153 = vunpack.c.l.b16 %v9117
    %v9154 = vunpack.c.l.b16 %v9118
    %v9155 = vpack.c.b16 %v9140, %v9139
    %v9156 = vpack.c.b16 %v9142, %v9141
    %v9157 = vpack.c.b16 %v9144, %v9143
    %v9158 = vpack.c.b16 %v9146, %v9145
    %v9159 = vpack.c.b16 %v9148, %v9147
    %v9160 = vpack.c.b16 %v9150, %v9149
    %v9161 = vpack.c.b16 %v9152, %v9151
    %v9162 = vpack.c.b16 %v9154, %v9153
    %9171 = vmatpush.bf16.msra.mxu0 %v9162
    %9172 = vmatpush.bf16.msra.mxu0 %v9161
    %9173 = vmatpush.bf16.msra.mxu0 %v9160
    %9174 = vmatpush.bf16.msra.mxu0 %v9159
    %9175 = vmatpush.bf16.msra.mxu0 %v9158
    %9176 = vmatpush.bf16.msra.mxu0 %v9157
    %9177 = vmatpush.bf16.msra.mxu0 %v9156
    %9178 = vmatpush.bf16.msra.mxu0 %v9155
    %9179 = vmatmul.bf16.gmra.mxu0 %v9102
    %v9180 = vpop.f32.mrf.mxu0
    %v9181 = vadd.f32 %v9121, %v9180
    %v9182 = vpop.f32.mrf.mxu0
    %9183 = vdwg.mxu0
    %9184 = vst [vmem:[%s7] sm:$0xff] %v9181
    // Predicated region
    $region54: #{cnn_network_forward.1} parent=1 // pred_check
      _
    $region55: #{cnn_network_forward.1} parent=1 // pred_check_branch
      %9186 = sbr.rel (0) target = $region57
    $region56: #{cnn_network_forward.1} parent=1 // pred_region
      _
    $region57: #{cnn_network_forward.1} parent=1 // pred_fallthru
      _
    // Predicated region
    $region58: #{cnn_network_forward.1} parent=1 // pred_check
      _
    $region59: #{cnn_network_forward.1} parent=1 // pred_check_branch
      %9188 = sbr.rel (0) target = $region61
    $region60: #{cnn_network_forward.1} parent=1 // pred_region
      _
    $region61: #{cnn_network_forward.1} parent=1 // pred_fallthru
      _
    %9189 = vsyncpa [#allocation3], 1
    %9190 = vsyncpa [#allocation5], 1
    %9191 = vsyncpa [#allocation8], 1
    %9192 = vsyncpa [#allocation11], 1

</llo_original>
